<compile_context>
chip_gen: v7x
topology: tpu7x:2x2x1
jax: 0.10.0
libtpu: 0.0.40
codegen_flags: <defaults>
</compile_context>

<pallas_src>
import math

import jax
import jax.numpy as jnp
from jax.experimental import pallas as pl
from jax.experimental.pallas import tpu as pltpu

# ---- small, module-consistent shapes -------------------------------------
L = 8            # sequence length (unbatched attention input)
D = 64           # embed_dim == num_features  (orig: 768/512; shrunk, kept equal)
C = 8            # num_classes                (orig: 100)
TEMP = 25.0      # temperature
HALF_C = C // 2
NUM_PROJ = 5     # [q_seen | k_seen | v_seen | q_unseen | k_unseen]
PAD = 128        # per-projection-segment lane stride (tile-aligned slices)
SLAB_W = 128     # lane-dense packed output width: [out | w1 | 1-w2 | zero pad]
TB = 32          # samples per grid step (M = TB*L = 256 MXU rows)


def pim_kernel(x_ref, wproj_ref, bproj_ref, wout_ref, bout_ref, slab_ref):
    tb = x_ref.shape[0]
    x2 = x_ref[...].reshape(tb * L, D)                         # bf16 (TB*L, D)

    # One fused projection matmul over all TB samples. Scale and usable biases are
    # pre-folded host-side; key biases dropped (softmax shift-invariance).
    proj = jnp.dot(x2, wproj_ref[...],
                   preferred_element_type=jnp.float32) + bproj_ref[...]  # (TB*L, 5*128)

    def seg(i):  # 128-lane-aligned slice -> tile-exact view, no relayout
        return proj[:, i * PAD:(i + 1) * PAD].reshape(tb, L, PAD)

    q_s, k_s, v_s, q_u, k_u = (seg(i) for i in range(NUM_PROJ))

    def softmax_rows(s):
        s = s - jnp.max(s, axis=-1, keepdims=True)             # numerically stable
        p = jnp.exp(s)
        inv = pl.reciprocal(jnp.sum(p, axis=-1, keepdims=True), approx=True)
        return p * inv

    w1 = softmax_rows(jnp.einsum('bqd,bkd->bqk', q_s, k_s,
                                 preferred_element_type=jnp.float32))    # (TB,L,L)
    w2 = softmax_rows(jnp.einsum('bqd,bkd->bqk', q_u, k_u,
                                 preferred_element_type=jnp.float32))

    # seen branch: attention context, then (out_proj o classifier o *temp), fused.
    a1 = jnp.einsum('bqk,bkd->bqd', w1, v_s,
                    preferred_element_type=jnp.float32)                  # (TB,L,128)
    logits = (jnp.dot(a1.reshape(tb * L, PAD), wout_ref[...],
                      preferred_element_type=jnp.float32)
              + bout_ref[...]).reshape(tb, L, HALF_C)                    # (TB,L,C//2)

    # Build the lane-dense slab in registers and do a single full-width store.
    zpad = jnp.zeros((tb, L, SLAB_W - HALF_C - 2 * L), jnp.float32)
    slab_ref[...] = jnp.concatenate([logits, w1, 1.0 - w2, zpad], axis=-1)


def _fuse_params(p):
    """Host-side algebraic fusion of the module parameters (weights are (in, out)).

    Each projection segment is zero-padded to a 128-lane stride so in-kernel
    slices are (8,128)-tile aligned; wout is zero-row padded to match.
    """
    scale = 1.0 / math.sqrt(D)                         # head_dim = D (single head)

    def pad_w(w):                                      # (D, D) -> (D, 128)
        return jnp.pad(w, ((0, 0), (0, PAD - D)))

    def pad_b(b):                                      # (1, D) -> (1, 128)
        return jnp.pad(b, ((0, 0), (0, PAD - D)))

    zeros_b = jnp.zeros((1, PAD), jnp.float32)
    # [q_s | k_s | v_s | q_u | k_u]; scale folded into q columns, key biases
    # dropped (b_k only shifts every score in a row -> softmax invariant).
    wproj = jnp.concatenate(
        [pad_w(p["wq_s"] * scale), pad_w(p["wk_s"]), pad_w(p["wv_s"]),
         pad_w(p["wq_u"] * scale), pad_w(p["wk_u"])], axis=1)      # (D, 5*128)
    bproj = jnp.concatenate(
        [pad_b(p["bq_s"] * scale), zeros_b, pad_b(p["bv_s"]),
         pad_b(p["bq_u"] * scale), zeros_b], axis=1)               # (1, 5*128)
    # out_proj o partitioner_seen o temperature, fused; zero rows for the padded
    # (all-zero) lanes 64..127 of the attention context.
    wout = jnp.pad((p["wo_s"] @ p["wcls_s"]) * TEMP,
                   ((0, PAD - D), (0, 0)))                         # (128, C//2)
    bout = (p["bo_s"] @ p["wcls_s"]) * TEMP                        # (1, C//2)
    # bf16 MXU feed for the dominant matmul; accumulation stays f32 in-kernel.
    return wproj.astype(jnp.bfloat16), bproj, wout, bout


def pim_partitioner_forward(x, params, tb=TB):
    """Returns (x, out, attn_weights_1, 1 - attn_weights_2).

    x: (L, D) single sample, or (B, L, D) batch of independent samples.
    Processes `tb` samples per grid step; batch is zero-padded up to a multiple
    of `tb` (padding results are discarded).
    """
    squeeze = x.ndim == 2
    xb = x[None] if squeeze else x
    B = xb.shape[0]
    tb = max(1, min(tb, B))
    B_pad = pl.cdiv(B, tb) * tb

    xk = xb.astype(jnp.bfloat16)
    if B_pad != B:
        xk = jnp.concatenate(
            [xk, jnp.zeros((B_pad - B, L, D), jnp.bfloat16)], axis=0)

    wproj, bproj, wout, bout = _fuse_params(params)

    grid_spec = pltpu.PrefetchScalarGridSpec(
        num_scalar_prefetch=0,
        grid=(B_pad // tb,),
        in_specs=[
            pl.BlockSpec((tb, L, D), lambda b: (b, 0, 0)),
            pl.BlockSpec((D, NUM_PROJ * PAD), lambda b: (0, 0)),   # resident weights
            pl.BlockSpec((1, NUM_PROJ * PAD), lambda b: (0, 0)),
            pl.BlockSpec((PAD, HALF_C), lambda b: (0, 0)),
            pl.BlockSpec((1, HALF_C), lambda b: (0, 0)),
        ],
        out_specs=pl.BlockSpec((tb, L, SLAB_W), lambda b: (b, 0, 0)),
    )
    slab = pl.pallas_call(
        pim_kernel,
        out_shape=jax.ShapeDtypeStruct((B_pad, L, SLAB_W), jnp.float32),
        grid_spec=grid_spec,
        compiler_params=pltpu.CompilerParams(dimension_semantics=("parallel",)),
    )(xk, wproj, bproj, wout, bout)

    out = slab[:B, :, :HALF_C]
    aw1 = slab[:B, :, HALF_C:HALF_C + L]
    aw2c = slab[:B, :, HALF_C + L:HALF_C + 2 * L]
    if squeeze:
        out, aw1, aw2c = out[0], aw1[0], aw2c[0]
    return x, out, aw1, aw2c


def _ref_forward(x, p):
    """Pure-JAX f32 reference (unfused, q/k/v biases all applied) for one sample."""
    def attn(wq, wk, wv, bq, bk, bv):
        q = x @ wq + bq
        k = x @ wk + bk
        v = x @ wv + bv
        s = (q / math.sqrt(D)) @ k.T
        w = jax.nn.softmax(s, axis=-1)
        return w @ v, w
    a1, w1 = attn(p["wq_s"], p["wk_s"], p["wv_s"], p["bq_s"], p["bk_s"], p["bv_s"])
    _, w2 = attn(p["wq_u"], p["wk_u"], p["wv_u"], p["bq_u"], p["bk_u"], p["bv_u"])
    seen = a1 @ p["wo_s"] + p["bo_s"]
    out = (seen @ p["wcls_s"]) * TEMP
    return x, out, w1, 1.0 - w2


def _make_params(key):
    """Deterministic synthetic parameters.

    PyTorch stores Linear / in_proj weights as (out, in); here they are already
    transposed to (in, out) so everything is plain x @ w. Biases are (1, dim)
    rows. All biases (including the key biases the kernel drops algebraically)
    are nonzero so the reference check is meaningful.
    """
    ks = jax.random.split(key, 18)
    n = lambda k, shape: (0.05 * jax.random.normal(k, shape)).astype(jnp.float32)
    return {
        # seen MultiheadAttention
        "wq_s": n(ks[0], (D, D)), "wk_s": n(ks[1], (D, D)), "wv_s": n(ks[2], (D, D)),
        "bq_s": n(ks[3], (1, D)), "bk_s": n(ks[4], (1, D)), "bv_s": n(ks[5], (1, D)),
        "wo_s": n(ks[6], (D, D)), "bo_s": n(ks[7], (1, D)),
        # partitioner_seen: Linear(D, C//2, bias=False), transposed
        "wcls_s": n(ks[8], (D, HALF_C)),
        # unseen MultiheadAttention (only its softmax weights reach the output;
        # wv_u / bv_u exist in the module but are dead w.r.t. the outputs)
        "wq_u": n(ks[9], (D, D)), "wk_u": n(ks[10], (D, D)), "wv_u": n(ks[11], (D, D)),
        "bq_u": n(ks[12], (1, D)), "bk_u": n(ks[13], (1, D)), "bv_u": n(ks[14], (1, D)),
    }


if __name__ == "__main__":
    key = jax.random.PRNGKey(0)
    kx, kp = jax.random.split(key)
    B = 128                                           # 4 grid steps of TB=32
    x = jax.random.normal(kx, (B, L, D), dtype=jnp.float32)
    params = _make_params(kp)

    x_out, out, aw1, aw2c = pim_partitioner_forward(x, params)
    jax.block_until_ready((x_out, out, aw1, aw2c))

    assert out.shape == (B, L, HALF_C)
    assert aw1.shape == (B, L, L) and aw2c.shape == (B, L, L)

    # correctness check against pure-JAX f32 reference (kernel feeds the MXU in
    # bf16 and uses approx reciprocal, so tolerances are loosened accordingly)
    _, rout, rw1, rw2c = jax.vmap(lambda xs: _ref_forward(xs, params))(x)
    assert jnp.allclose(out, rout, atol=5e-2, rtol=5e-2)
    assert jnp.allclose(aw1, rw1, atol=1e-2, rtol=1e-2)
    assert jnp.allclose(aw2c, rw2c, atol=1e-2, rtol=1e-2)
    assert jnp.array_equal(x_out, x)

    print("KERNEL_OK")
</pallas_src>

<mosaic_0001>
module attributes {stable_mosaic.version = 11 : i64} {
  func.func @pim_kernel(%arg0: i32, %arg1: memref<32x8x64xbf16, #tpu.memory_space<vmem>>, %arg2: memref<64x640xbf16, #tpu.memory_space<vmem>>, %arg3: memref<1x640xf32, #tpu.memory_space<vmem>>, %arg4: memref<128x4xf32, #tpu.memory_space<vmem>>, %arg5: memref<1x4xf32, #tpu.memory_space<vmem>>, %arg6: memref<32x8x128xf32, #tpu.memory_space<vmem>>) attributes {dimension_semantics = [#tpu.dimension_semantics<parallel>], iteration_bounds = array<i64: 4>, scalar_prefetch = 0 : i64, scratch_operands = 0 : i64, tpu.core_type = #tpu.core_type<tc>, window_params = [{transform_indices = @transform_0, window_bounds = array<i64: 32, 8, 64>}, {pipeline_mode = #tpu.pipeline_mode<synchronous>, transform_indices = @transform_1, window_bounds = array<i64: 64, 640>}, {pipeline_mode = #tpu.pipeline_mode<synchronous>, transform_indices = @transform_2, window_bounds = array<i64: 1, 640>}, {pipeline_mode = #tpu.pipeline_mode<synchronous>, transform_indices = @transform_3, window_bounds = array<i64: 128, 4>}, {pipeline_mode = #tpu.pipeline_mode<synchronous>, transform_indices = @transform_4, window_bounds = array<i64: 1, 4>}, {transform_indices = @transform_5, window_bounds = array<i64: 32, 8, 128>}]} {
    %c0 = arith.constant 0 : index
    %c0_0 = arith.constant 0 : index
    %c0_1 = arith.constant 0 : index
    %0 = vector.load %arg1[%c0, %c0_0, %c0_1] : memref<32x8x64xbf16, #tpu.memory_space<vmem>>, vector<32x8x64xbf16>
    %1 = vector.shape_cast %0 : vector<32x8x64xbf16> to vector<256x64xbf16>
    %c0_2 = arith.constant 0 : index
    %c0_3 = arith.constant 0 : index
    %2 = vector.load %arg2[%c0_2, %c0_3] : memref<64x640xbf16, #tpu.memory_space<vmem>>, vector<64x640xbf16>
    %cst = arith.constant dense<0.000000e+00> : vector<256x640xf32>
    %3 = tpu.matmul %1, %2, %cst {dimension_numbers = #tpu.dot_dimension_numbers<[1], [0], [0], [1], [0, 0, 1, 1], [], []>} : vector<256x64xbf16>, vector<64x640xbf16>, vector<256x640xf32> -> vector<256x640xf32>
    %c0_4 = arith.constant 0 : index
    %c0_5 = arith.constant 0 : index
    %4 = vector.load %arg3[%c0_4, %c0_5] : memref<1x640xf32, #tpu.memory_space<vmem>>, vector<1x640xf32>
    %5 = vector.broadcast %4 : vector<1x640xf32> to vector<256x640xf32>
    %6 = arith.addf %3, %5 : vector<256x640xf32>
    %7 = vector.extract_strided_slice %6 {offsets = [0, 0], sizes = [256, 128], strides = [1, 1]} : vector<256x640xf32> to vector<256x128xf32>
    %8 = vector.shape_cast %7 : vector<256x128xf32> to vector<32x8x128xf32>
    %9 = vector.extract_strided_slice %6 {offsets = [0, 128], sizes = [256, 128], strides = [1, 1]} : vector<256x640xf32> to vector<256x128xf32>
    %10 = vector.shape_cast %9 : vector<256x128xf32> to vector<32x8x128xf32>
    %11 = vector.extract_strided_slice %6 {offsets = [0, 256], sizes = [256, 128], strides = [1, 1]} : vector<256x640xf32> to vector<256x128xf32>
    %12 = vector.shape_cast %11 : vector<256x128xf32> to vector<32x8x128xf32>
    %13 = vector.extract_strided_slice %6 {offsets = [0, 384], sizes = [256, 128], strides = [1, 1]} : vector<256x640xf32> to vector<256x128xf32>
    %14 = vector.shape_cast %13 : vector<256x128xf32> to vector<32x8x128xf32>
    %15 = vector.extract_strided_slice %6 {offsets = [0, 512], sizes = [256, 128], strides = [1, 1]} : vector<256x640xf32> to vector<256x128xf32>
    %16 = vector.shape_cast %15 : vector<256x128xf32> to vector<32x8x128xf32>
    "tpu.trace_start"() <{level = 10 : i32, message = "bqd,bkd->bqk"}> : () -> ()
    %cst_6 = arith.constant dense<0.000000e+00> : vector<32x8x8xf32>
    %17 = tpu.matmul %8, %10, %cst_6 {dimension_numbers = #tpu.dot_dimension_numbers<[2], [2], [1], [1], [0, 0, 0, 1, 1, 1], [0], [0]>} : vector<32x8x128xf32>, vector<32x8x128xf32>, vector<32x8x8xf32> -> vector<32x8x8xf32>
    "tpu.trace_stop"() : () -> ()
    %cst_7 = arith.constant dense<0xFF800000> : vector<32x8xf32>
    %18 = vector.multi_reduction <maximumf>, %17, %cst_7 [2] : vector<32x8x8xf32> to vector<32x8xf32>
    %19 = vector.shape_cast %18 : vector<32x8xf32> to vector<32x8x1xf32>
    %20 = vector.broadcast %19 : vector<32x8x1xf32> to vector<32x8x8xf32>
    %21 = arith.subf %17, %20 : vector<32x8x8xf32>
    %22 = math.exp %21 : vector<32x8x8xf32>
    %cst_8 = arith.constant dense<0.000000e+00> : vector<32x8xf32>
    %23 = vector.multi_reduction <add>, %22, %cst_8 [2] : vector<32x8x8xf32> to vector<32x8xf32>
    %24 = vector.shape_cast %23 : vector<32x8xf32> to vector<32x8x1xf32>
    %25 = tpu.reciprocal %24 {approx = true} : vector<32x8x1xf32> -> vector<32x8x1xf32>
    %26 = vector.broadcast %25 : vector<32x8x1xf32> to vector<32x8x8xf32>
    %27 = arith.mulf %22, %26 : vector<32x8x8xf32>
    "tpu.trace_start"() <{level = 10 : i32, message = "bqd,bkd->bqk"}> : () -> ()
    %cst_9 = arith.constant dense<0.000000e+00> : vector<32x8x8xf32>
    %28 = tpu.matmul %14, %16, %cst_9 {dimension_numbers = #tpu.dot_dimension_numbers<[2], [2], [1], [1], [0, 0, 0, 1, 1, 1], [0], [0]>} : vector<32x8x128xf32>, vector<32x8x128xf32>, vector<32x8x8xf32> -> vector<32x8x8xf32>
    "tpu.trace_stop"() : () -> ()
    %cst_10 = arith.constant dense<0xFF800000> : vector<32x8xf32>
    %29 = vector.multi_reduction <maximumf>, %28, %cst_10 [2] : vector<32x8x8xf32> to vector<32x8xf32>
    %30 = vector.shape_cast %29 : vector<32x8xf32> to vector<32x8x1xf32>
    %31 = vector.broadcast %30 : vector<32x8x1xf32> to vector<32x8x8xf32>
    %32 = arith.subf %28, %31 : vector<32x8x8xf32>
    %33 = math.exp %32 : vector<32x8x8xf32>
    %cst_11 = arith.constant dense<0.000000e+00> : vector<32x8xf32>
    %34 = vector.multi_reduction <add>, %33, %cst_11 [2] : vector<32x8x8xf32> to vector<32x8xf32>
    %35 = vector.shape_cast %34 : vector<32x8xf32> to vector<32x8x1xf32>
    %36 = tpu.reciprocal %35 {approx = true} : vector<32x8x1xf32> -> vector<32x8x1xf32>
    %37 = vector.broadcast %36 : vector<32x8x1xf32> to vector<32x8x8xf32>
    %38 = arith.mulf %33, %37 : vector<32x8x8xf32>
    "tpu.trace_start"() <{level = 10 : i32, message = "bqk,bkd->bqd"}> : () -> ()
    %cst_12 = arith.constant dense<0.000000e+00> : vector<32x8x128xf32>
    %39 = tpu.matmul %27, %12, %cst_12 {dimension_numbers = #tpu.dot_dimension_numbers<[2], [1], [1], [2], [0, 0, 0, 1, 1, 2], [0], [0]>} : vector<32x8x8xf32>, vector<32x8x128xf32>, vector<32x8x128xf32> -> vector<32x8x128xf32>
    "tpu.trace_stop"() : () -> ()
    %40 = vector.shape_cast %39 : vector<32x8x128xf32> to vector<256x128xf32>
    %c0_13 = arith.constant 0 : index
    %c0_14 = arith.constant 0 : index
    %41 = vector.load %arg4[%c0_13, %c0_14] : memref<128x4xf32, #tpu.memory_space<vmem>>, vector<128x4xf32>
    %cst_15 = arith.constant dense<0.000000e+00> : vector<256x4xf32>
    %42 = tpu.matmul %40, %41, %cst_15 {dimension_numbers = #tpu.dot_dimension_numbers<[1], [0], [0], [1], [0, 0, 1, 1], [], []>} : vector<256x128xf32>, vector<128x4xf32>, vector<256x4xf32> -> vector<256x4xf32>
    %c0_16 = arith.constant 0 : index
    %c0_17 = arith.constant 0 : index
    %43 = vector.load %arg5[%c0_16, %c0_17] : memref<1x4xf32, #tpu.memory_space<vmem>>, vector<1x4xf32>
    %44 = vector.broadcast %43 : vector<1x4xf32> to vector<256x4xf32>
    %45 = arith.addf %42, %44 : vector<256x4xf32>
    %46 = vector.shape_cast %45 : vector<256x4xf32> to vector<32x8x4xf32>
    %cst_18 = arith.constant 0.000000e+00 : f32
    %47 = vector.broadcast %cst_18 : f32 to vector<32x8x108xf32>
    %cst_19 = arith.constant 1.000000e+00 : f32
    %48 = vector.broadcast %cst_19 : f32 to vector<32x8x8xf32>
    %49 = arith.subf %48, %38 : vector<32x8x8xf32>
    %50 = tpu.concatenate %46, %27, %49, %47 in 2 : vector<32x8x4xf32>, vector<32x8x8xf32>, vector<32x8x8xf32>, vector<32x8x108xf32> -> vector<32x8x128xf32>
    %c0_20 = arith.constant 0 : index
    %c0_21 = arith.constant 0 : index
    %c0_22 = arith.constant 0 : index
    %51 = vector.load %arg6[%c0_20, %c0_21, %c0_22] : memref<32x8x128xf32, #tpu.memory_space<vmem>>, vector<32x8x128xf32>
    tpu.vector_store %arg6[%c0_20, %c0_21, %c0_22], %50 {strides = array<i32>} : memref<32x8x128xf32, #tpu.memory_space<vmem>>, vector<32x8x128xf32>,
    return
  }
  func.func @transform_0(%arg0: i32) -> (i32, i32, i32) {
    %c0_i32 = arith.constant 0 : i32
    %c0_i32_0 = arith.constant 0 : i32
    %c0_i32_1 = arith.constant 0 : i32
    return %arg0, %c0_i32, %c0_i32_0 : i32, i32, i32
  }
  func.func @transform_1(%arg0: i32) -> (i32, i32) {
    %c0_i32 = arith.constant 0 : i32
    %c0_i32_0 = arith.constant 0 : i32
    %c0_i32_1 = arith.constant 0 : i32
    return %c0_i32, %c0_i32_0 : i32, i32
  }
  func.func @transform_2(%arg0: i32) -> (i32, i32) {
    %c0_i32 = arith.constant 0 : i32
    %c0_i32_0 = arith.constant 0 : i32
    %c0_i32_1 = arith.constant 0 : i32
    return %c0_i32, %c0_i32_0 : i32, i32
  }
  func.func @transform_3(%arg0: i32) -> (i32, i32) {
    %c0_i32 = arith.constant 0 : i32
    %c0_i32_0 = arith.constant 0 : i32
    %c0_i32_1 = arith.constant 0 : i32
    return %c0_i32, %c0_i32_0 : i32, i32
  }
  func.func @transform_4(%arg0: i32) -> (i32, i32) {
    %c0_i32 = arith.constant 0 : i32
    %c0_i32_0 = arith.constant 0 : i32
    %c0_i32_1 = arith.constant 0 : i32
    return %c0_i32, %c0_i32_0 : i32, i32
  }
  func.func @transform_5(%arg0: i32) -> (i32, i32, i32) {
    %c0_i32 = arith.constant 0 : i32
    %c0_i32_0 = arith.constant 0 : i32
    %c0_i32_1 = arith.constant 0 : i32
    return %arg0, %c0_i32, %c0_i32_0 : i32, i32, i32
  }
}

</mosaic_0001>

<llo_original>
// kernel: tpu_custom_call.1
$region0: #{tpu_custom_call.1}
  #allocation0 [shape = 'u32[]', space=smem, size = 0x4, offset = 0x4, fixed_abs, tag = 'smem constant byte address 0x4 - core index']
  #allocation1 [shape = 'u32[144,128]{1,0:T(1,128)}', space=vmem, size = 0x12000, scoped, tag = 'internal scratch']
  %s0 = inlined_call_operand.vmem [shape: bf16[128,8,64], index: 0, kind: input, shape index: {}]
  %s1 = inlined_call_operand.vmem [shape: bf16[64,640], index: 1, kind: input, shape index: {}]
  %s2 = inlined_call_operand.vmem [shape: f32[1,640], index: 2, kind: input, shape index: {}]
  %s3 = inlined_call_operand.vmem [shape: f32[128,4], index: 3, kind: input, shape index: {}]
  %s4 = inlined_call_operand.vmem [shape: f32[1,4], index: 4, kind: input, shape index: {}]
  %s5 = inlined_call_operand.hbm [shape: f32[128,8,128], index: 5, kind: output, shape index: {}]
  %s6 = sld [smem:[#allocation0]]
  $region53: #{tpu_custom_call.1} parent=0
    _
  %s8 = ssub.s32 1, %s6
  %s9 = scalar_select 0, %s8, %s6
  $region1: #{tpu_custom_call.1} parent=0
    #allocation2 [shape = 'u8[262144]{0}', space=vmem, size = 0x40000, scoped, tag = 'output window, operand 0']
    #allocation3 [shape = 's32[2]{0}', space=sflag, size = 0x8, scoped, tag = 'scoped memory for tpu_custom_call.1']
    %10 = vsyncpa [#allocation3], 0
    %s11 = scalar_lea.sflag [#allocation3], 1
    %12 = vsyncpa %s11, 0
    loop: start=0, step=1, limit=6
    $region2: #{tpu_custom_call.1} parent=1 // loop_pre_header
      _
    $region3: #{tpu_custom_call.1} parent=1 // loop_header
      %s14 = sphi 0, %s18
      %p15 = scmp.ge.s32.totalorder %s14, 6
      %s24 = sphi 0, %s26
      %s27 = sphi 0, %s24
      %s28 = sphi 0, %s27
      %s44 = sphi 0, %s28
      %s48 = sphi 0, %s48
      %s50 = sphi 0, %s48
      %s51 = sphi 0, %s50
      %s65 = sphi 0, %s51
      %s69 = sphi 0, %s69
      %s71 = sphi 0, %s69
      %s72 = sphi 0, %s71
      %s86 = sphi 0, %s72
      %s90 = sphi 0, %s90
      %s92 = sphi 0, %s90
      %s93 = sphi 0, %s92
      %s107 = sphi 0, %s93
      %s111 = sphi 0, %s111
      %s113 = sphi 0, %s111
      %s114 = sphi 0, %s113
      %s128 = sphi 0, %s114
      %s134 = sphi 0, %s136
      %s137 = sphi 0, %s134
      %s138 = sphi 0, %s137
      %s154 = sphi 0, %s138
    $region4: #{tpu_custom_call.1} parent=1 // loop_header_branch
      %17 = sbr.rel (%p15) target = $region8
    $region5: #{tpu_custom_call.1} parent=1 // loop_body
      %s19 = ssub.s32 %s14, 1
      %s20 = ssub.s32 %s14, 2
      %s21 = sadd.s32 %s14, 1
      %s22 = ssub.s32 %s14, %s21
      %p23 = scmp.eq.s32.totalorder %s22, 0
      %s25 = sadd.s32 %s24, 1
      %s26 = scalar_select %p23, %s24, %s25
      %p29 = pneg %p23
      %p30 = scmp.eq.s32.totalorder %s14, 3
      %p31 = por %p29, %p30
      %p32 = scmp.ne.s32.totalorder %s24, %s27
      %p33 = scmp.eq.s32.totalorder %s14, 0
      %p34 = por %p32, %p33
      %p35 = scmp.ne.s32.totalorder %s24, %s27
      %p36 = scmp.eq.s32.totalorder %s19, 3
      %p37 = por %p35, %p36
      %p38 = scmp.ne.s32.totalorder %s27, %s28
      %p39 = scmp.eq.s32.totalorder %s19, 0
      %p40 = por %p38, %p39
      %p41 = scmp.ne.s32.totalorder %s27, %s28
      %p42 = scmp.eq.s32.totalorder %s20, 3
      %p43 = por %p41, %p42
      %p45 = scmp.ne.s32.totalorder %s28, %s44
      %p46 = scmp.eq.s32.totalorder %s20, 0
      %p47 = por %p45, %p46
      %s49 = sadd.s32 %s48, 1
      %p52 = scmp.eq.s32.totalorder %s14, 3
      %p53 = scmp.ne.s32.totalorder %s48, %s50
      %p54 = scmp.eq.s32.totalorder %s14, 0
      %p55 = por %p53, %p54
      %p56 = scmp.ne.s32.totalorder %s48, %s50
      %p57 = scmp.eq.s32.totalorder %s19, 3
      %p58 = por %p56, %p57
      %p59 = scmp.ne.s32.totalorder %s50, %s51
      %p60 = scmp.eq.s32.totalorder %s19, 0
      %p61 = por %p59, %p60
      %p62 = scmp.ne.s32.totalorder %s50, %s51
      %p63 = scmp.eq.s32.totalorder %s20, 3
      %p64 = por %p62, %p63
      %p66 = scmp.ne.s32.totalorder %s51, %s65
      %p67 = scmp.eq.s32.totalorder %s20, 0
      %p68 = por %p66, %p67
      %s70 = sadd.s32 %s69, 1
      %p73 = scmp.eq.s32.totalorder %s14, 3
      %p74 = scmp.ne.s32.totalorder %s69, %s71
      %p75 = scmp.eq.s32.totalorder %s14, 0
      %p76 = por %p74, %p75
      %p77 = scmp.ne.s32.totalorder %s69, %s71
      %p78 = scmp.eq.s32.totalorder %s19, 3
      %p79 = por %p77, %p78
      %p80 = scmp.ne.s32.totalorder %s71, %s72
      %p81 = scmp.eq.s32.totalorder %s19, 0
      %p82 = por %p80, %p81
      %p83 = scmp.ne.s32.totalorder %s71, %s72
      %p84 = scmp.eq.s32.totalorder %s20, 3
      %p85 = por %p83, %p84
      %p87 = scmp.ne.s32.totalorder %s72, %s86
      %p88 = scmp.eq.s32.totalorder %s20, 0
      %p89 = por %p87, %p88
      %s91 = sadd.s32 %s90, 1
      %p94 = scmp.eq.s32.totalorder %s14, 3
      %p95 = scmp.ne.s32.totalorder %s90, %s92
      %p96 = scmp.eq.s32.totalorder %s14, 0
      %p97 = por %p95, %p96
      %p98 = scmp.ne.s32.totalorder %s90, %s92
      %p99 = scmp.eq.s32.totalorder %s19, 3
      %p100 = por %p98, %p99
      %p101 = scmp.ne.s32.totalorder %s92, %s93
      %p102 = scmp.eq.s32.totalorder %s19, 0
      %p103 = por %p101, %p102
      %p104 = scmp.ne.s32.totalorder %s92, %s93
      %p105 = scmp.eq.s32.totalorder %s20, 3
      %p106 = por %p104, %p105
      %p108 = scmp.ne.s32.totalorder %s93, %s107
      %p109 = scmp.eq.s32.totalorder %s20, 0
      %p110 = por %p108, %p109
      %s112 = sadd.s32 %s111, 1
      %p115 = scmp.eq.s32.totalorder %s14, 3
      %p116 = scmp.ne.s32.totalorder %s111, %s113
      %p117 = scmp.eq.s32.totalorder %s14, 0
      %p118 = por %p116, %p117
      %p119 = scmp.ne.s32.totalorder %s111, %s113
      %p120 = scmp.eq.s32.totalorder %s19, 3
      %p121 = por %p119, %p120
      %p122 = scmp.ne.s32.totalorder %s113, %s114
      %p123 = scmp.eq.s32.totalorder %s19, 0
      %p124 = por %p122, %p123
      %p125 = scmp.ne.s32.totalorder %s113, %s114
      %p126 = scmp.eq.s32.totalorder %s20, 3
      %p127 = por %p125, %p126
      %p129 = scmp.ne.s32.totalorder %s114, %s128
      %p130 = scmp.eq.s32.totalorder %s20, 0
      %p131 = por %p129, %p130
      %s132 = ssub.s32 %s14, %s21
      %p133 = scmp.eq.s32.totalorder %s132, 0
      %s135 = sadd.s32 %s134, 1
      %s136 = scalar_select %p133, %s134, %s135
      %p139 = pneg %p133
      %p140 = scmp.eq.s32.totalorder %s14, 3
      %p141 = por %p139, %p140
      %p142 = scmp.ne.s32.totalorder %s134, %s137
      %p143 = scmp.eq.s32.totalorder %s14, 0
      %p144 = por %p142, %p143
      %p145 = scmp.ne.s32.totalorder %s134, %s137
      %p146 = scmp.eq.s32.totalorder %s19, 3
      %p147 = por %p145, %p146
      %p148 = scmp.ne.s32.totalorder %s137, %s138
      %p149 = scmp.eq.s32.totalorder %s19, 0
      %p150 = por %p148, %p149
      %p151 = scmp.ne.s32.totalorder %s137, %s138
      %p152 = scmp.eq.s32.totalorder %s20, 3
      %p153 = por %p151, %p152
      %p155 = scmp.ne.s32.totalorder %s138, %s154
      %p156 = scmp.eq.s32.totalorder %s20, 0
      %p157 = por %p155, %p156
      %p158 = scmp.le.s32.totalorder 1, %s14
      %p159 = scmp.lt.s32.totalorder %s14, 5
      %p160 = pnand %p158, %p159
      %p161 = pneg %p160
      // Predicated region
      $region9: #{tpu_custom_call.1} parent=5 // pred_check
        _
      $region10: #{tpu_custom_call.1} parent=5 // pred_check_branch
        %163 = sbr.rel (%p160) target = $region12
      $region11: #{tpu_custom_call.1} parent=5 // pred_region
        %s164 = ssub.s32 %s14, 1
        // Predicated region
        $region13: #{tpu_custom_call.1} parent=11 // pred_check
          %p165 = pneg %p61
        $region14: #{tpu_custom_call.1} parent=11 // pred_check_branch
          %167 = sbr.rel (%p165) target = $region16
        $region15: #{tpu_custom_call.1} parent=11 // pred_region
          _
        $region16: #{tpu_custom_call.1} parent=11 // pred_fallthru
          _
        // Predicated region
        $region17: #{tpu_custom_call.1} parent=11 // pred_check
          %p168 = pneg %p82
        $region18: #{tpu_custom_call.1} parent=11 // pred_check_branch
          %170 = sbr.rel (%p168) target = $region20
        $region19: #{tpu_custom_call.1} parent=11 // pred_region
          _
        $region20: #{tpu_custom_call.1} parent=11 // pred_fallthru
          _
        // Predicated region
        $region21: #{tpu_custom_call.1} parent=11 // pred_check
          %p171 = pneg %p103
        $region22: #{tpu_custom_call.1} parent=11 // pred_check_branch
          %173 = sbr.rel (%p171) target = $region24
        $region23: #{tpu_custom_call.1} parent=11 // pred_region
          _
        $region24: #{tpu_custom_call.1} parent=11 // pred_fallthru
          _
        // Predicated region
        $region25: #{tpu_custom_call.1} parent=11 // pred_check
          %p174 = pneg %p124
        $region26: #{tpu_custom_call.1} parent=11 // pred_check_branch
          %176 = sbr.rel (%p174) target = $region28
        $region27: #{tpu_custom_call.1} parent=11 // pred_region
          _
        $region28: #{tpu_custom_call.1} parent=11 // pred_fallthru
          _
      $region12: #{tpu_custom_call.1} parent=5 // pred_fallthru
        _
      %p177 = scmp.lt.s32.totalorder %s14, 4
      // Predicated region
      $region29: #{tpu_custom_call.1} parent=5 // pred_check
        %p178 = pneg %p177
      $region30: #{tpu_custom_call.1} parent=5 // pred_check_branch
        %180 = sbr.rel (%p178) target = $region32
      $region31: #{tpu_custom_call.1} parent=5 // pred_region
        // Predicated region
        $region33: #{tpu_custom_call.1} parent=31 // pred_check
          %p181 = pneg %p34
        $region34: #{tpu_custom_call.1} parent=31 // pred_check_branch
          %183 = sbr.rel (%p181) target = $region36
        $region35: #{tpu_custom_call.1} parent=31 // pred_region
          %s184 = smul.u32 32, %s14
          %p185 = scmp.lt.s32.totalorder %s184, 127
          %s186 = scalar_select %p185, %s184, 127
          %s187 = smul.addr %s186, 4
          %s188 = scalar_lea.vmem %s0, %s187
          %s189 = smul.u32 32, %s14
        $region36: #{tpu_custom_call.1} parent=31 // pred_fallthru
          _
      $region32: #{tpu_custom_call.1} parent=5 // pred_fallthru
        _
      %p190 = scmp.le.s32.totalorder 1, %s14
      %p191 = scmp.lt.s32.totalorder %s14, 5
      %p192 = pnand %p190, %p191
      %p193 = pneg %p192
      // Predicated region
      $region37: #{tpu_custom_call.1} parent=5 // pred_check
        _
      $region38: #{tpu_custom_call.1} parent=5 // pred_check_branch
        %195 = sbr.rel (%p192) target = $region40
      $region39: #{tpu_custom_call.1} parent=5 // pred_region
        %s196 = ssub.s32 %s14, 1
        %s197 = smul.u32 32, %s19
        %p198 = scmp.lt.s32.totalorder %s197, 127
        %s199 = scalar_select %p198, %s197, 127
        %s200 = smul.addr %s199, 4
        %s201 = scalar_lea.vmem %s0, %s200
        %p202 = pneg %p40
        %p203 = pneg %p37
        %p204 = pneg %p61
        %p205 = pneg %p58
        %p206 = pneg %p82
        %p207 = pneg %p79
        %p208 = pneg %p103
        %p209 = pneg %p100
        %p210 = pneg %p124
        %p211 = pneg %p121
        %p212 = pneg %p150
        %p213 = pneg %p147
        %s214 = sand.u32 %s137, 1
        %s215 = scalar_lea.sflag [#allocation3], %s214
        %s216 = sand.u32 %s137, 1
        %s217 = smul.addr %s216, 256
        %s218 = scalar_lea.vmem [#allocation2], %s217
        %s219 = smul.u32 32, %s19
        %p220 = scmp.lt.s32.totalorder %s219, 127
        %s221 = scalar_select %p220, %s219, 127
        %s222 = smul.addr %s221, 4
        %s223 = scalar_lea.vmem %s0, %s222
        %s224 = smul.u32 32, %s19
        %s225 = smul.u32 32, %s19
        %v227 = vld [vmem:[%s223] sm:$0xf]
        %v228 = vld [vmem:[%s223 + $0x4] sm:$0xf]
        %v229 = vld [vmem:[%s223 + $0x8] sm:$0xf]
        %v230 = vld [vmem:[%s223 + $0xc] sm:$0xf]
        %v231 = vld [vmem:[%s223 + $0x10] sm:$0xf]
        %v232 = vld [vmem:[%s223 + $0x14] sm:$0xf]
        %v233 = vld [vmem:[%s223 + $0x18] sm:$0xf]
        %v234 = vld [vmem:[%s223 + $0x1c] sm:$0xf]
        %v235 = vld [vmem:[%s223 + $0x20] sm:$0xf]
        %v236 = vld [vmem:[%s223 + $0x24] sm:$0xf]
        %v237 = vld [vmem:[%s223 + $0x28] sm:$0xf]
        %v238 = vld [vmem:[%s223 + $0x2c] sm:$0xf]
        %v239 = vld [vmem:[%s223 + $0x30] sm:$0xf]
        %v240 = vld [vmem:[%s223 + $0x34] sm:$0xf]
        %v241 = vld [vmem:[%s223 + $0x38] sm:$0xf]
        %v242 = vld [vmem:[%s223 + $0x3c] sm:$0xf]
        %v243 = vld [vmem:[%s223 + $0x40] sm:$0xf]
        %v244 = vld [vmem:[%s223 + $0x44] sm:$0xf]
        %v245 = vld [vmem:[%s223 + $0x48] sm:$0xf]
        %v246 = vld [vmem:[%s223 + $0x4c] sm:$0xf]
        %v247 = vld [vmem:[%s223 + $0x50] sm:$0xf]
        %v248 = vld [vmem:[%s223 + $0x54] sm:$0xf]
        %v249 = vld [vmem:[%s223 + $0x58] sm:$0xf]
        %v250 = vld [vmem:[%s223 + $0x5c] sm:$0xf]
        %v251 = vld [vmem:[%s223 + $0x60] sm:$0xf]
        %v252 = vld [vmem:[%s223 + $0x64] sm:$0xf]
        %v253 = vld [vmem:[%s223 + $0x68] sm:$0xf]
        %v254 = vld [vmem:[%s223 + $0x6c] sm:$0xf]
        %v255 = vld [vmem:[%s223 + $0x70] sm:$0xf]
        %v256 = vld [vmem:[%s223 + $0x74] sm:$0xf]
        %v257 = vld [vmem:[%s223 + $0x78] sm:$0xf]
        %v258 = vld [vmem:[%s223 + $0x7c] sm:$0xf]
        %v259 = vld [vmem:[%s1] sm:$0xff]
        %v260 = vld [vmem:[%s1 + $0x8] sm:$0xff]
        %v261 = vld [vmem:[%s1 + $0x10] sm:$0xf]
        %v262 = vld [vmem:[%s1 + $0x14] sm:$0xff]
        %v263 = vld [vmem:[%s1 + $0x1c] sm:$0xff]
        %v264 = vld [vmem:[%s1 + $0x24] sm:$0xf]
        %v265 = vld [vmem:[%s1 + $0x28] sm:$0xff]
        %v266 = vld [vmem:[%s1 + $0x30] sm:$0xff]
        %v267 = vld [vmem:[%s1 + $0x38] sm:$0xf]
        %v268 = vld [vmem:[%s1 + $0x3c] sm:$0xff]
        %v269 = vld [vmem:[%s1 + $0x44] sm:$0xff]
        %v270 = vld [vmem:[%s1 + $0x4c] sm:$0xf]
        %v271 = vld [vmem:[%s1 + $0x50] sm:$0xff]
        %v272 = vld [vmem:[%s1 + $0x58] sm:$0xff]
        %v273 = vld [vmem:[%s1 + $0x60] sm:$0xf]
        %v274 = vld [vmem:[%s1 + $0x64] sm:$0xff]
        %v275 = vld [vmem:[%s1 + $0x6c] sm:$0xff]
        %v276 = vld [vmem:[%s1 + $0x74] sm:$0xf]
        %v277 = vld [vmem:[%s1 + $0x78] sm:$0xff]
        %v278 = vld [vmem:[%s1 + $0x80] sm:$0xff]
        %v279 = vld [vmem:[%s1 + $0x88] sm:$0xf]
        %v280 = vld [vmem:[%s1 + $0x8c] sm:$0xff]
        %v281 = vld [vmem:[%s1 + $0x94] sm:$0xff]
        %v282 = vld [vmem:[%s1 + $0x9c] sm:$0xf]
        %v283 = vld [vmem:[%s2] sm:$0x1f]
        %v285 = vlaneseq
        %v286 = vshrl.u32 %v285, 7
        %v287 = vsub.s32 0, %v286
        %v288 = vrot.slane %v283, %v287
        %v289 = vlaneseq
        %v290 = vshrl.u32 %v289, 7
        %v291 = vsub.s32 1, %v290
        %v292 = vrot.slane %v283, %v291
        %v293 = vlaneseq
        %v294 = vshrl.u32 %v293, 7
        %v295 = vsub.s32 2, %v294
        %v296 = vrot.slane %v283, %v295
        %v297 = vlaneseq
        %v298 = vshrl.u32 %v297, 7
        %v299 = vsub.s32 3, %v298
        %v300 = vrot.slane %v283, %v299
        %v301 = vlaneseq
        %v302 = vshrl.u32 %v301, 7
        %v303 = vsub.s32 4, %v302
        %v304 = vrot.slane %v283, %v303
        %v342 = vunpack.c.l.b16 %v227
        %v343 = vunpack.c.l.b16 %v228
        %v344 = vunpack.c.l.b16 %v229
        %v345 = vunpack.c.l.b16 %v230
        %v346 = vunpack.c.l.b16 %v231
        %v347 = vunpack.c.l.b16 %v232
        %v348 = vunpack.c.l.b16 %v233
        %v349 = vunpack.c.l.b16 %v234
        %v350 = vunpack.c.l.b16 %v235
        %v351 = vunpack.c.l.b16 %v236
        %v352 = vunpack.c.l.b16 %v237
        %v353 = vunpack.c.l.b16 %v238
        %v354 = vunpack.c.l.b16 %v239
        %v355 = vunpack.c.l.b16 %v240
        %v356 = vunpack.c.l.b16 %v241
        %v357 = vunpack.c.l.b16 %v242
        %v358 = vunpack.c.l.b16 %v243
        %v359 = vunpack.c.l.b16 %v244
        %v360 = vunpack.c.l.b16 %v245
        %v361 = vunpack.c.l.b16 %v246
        %v362 = vunpack.c.l.b16 %v247
        %v363 = vunpack.c.l.b16 %v248
        %v364 = vunpack.c.l.b16 %v249
        %v365 = vunpack.c.l.b16 %v250
        %v366 = vunpack.c.l.b16 %v251
        %v367 = vunpack.c.l.b16 %v252
        %v368 = vunpack.c.l.b16 %v253
        %v369 = vunpack.c.l.b16 %v254
        %v370 = vunpack.c.l.b16 %v255
        %v371 = vunpack.c.l.b16 %v256
        %v372 = vunpack.c.l.b16 %v257
        %v373 = vunpack.c.l.b16 %v258
        %v374 = vpack.c.b16 %v343, %v342
        %v375 = vpack.c.b16 %v345, %v344
        %v376 = vpack.c.b16 %v347, %v346
        %v377 = vpack.c.b16 %v349, %v348
        %v378 = vpack.c.b16 %v351, %v350
        %v379 = vpack.c.b16 %v353, %v352
        %v380 = vpack.c.b16 %v355, %v354
        %v381 = vpack.c.b16 %v357, %v356
        %v382 = vpack.c.b16 %v359, %v358
        %v383 = vpack.c.b16 %v361, %v360
        %v384 = vpack.c.b16 %v363, %v362
        %v385 = vpack.c.b16 %v365, %v364
        %v386 = vpack.c.b16 %v367, %v366
        %v387 = vpack.c.b16 %v369, %v368
        %v388 = vpack.c.b16 %v371, %v370
        %v389 = vpack.c.b16 %v373, %v372
        %v414 = vunpack.c.l.b16 %v259
        %v415 = vunpack.c.h.b16 %v259
        %v416 = vunpack.c.l.b16 %v260
        %v417 = vunpack.c.h.b16 %v260
        %v418 = vunpack.c.l.b16 %v261
        %v419 = vunpack.c.l.b16 %v262
        %v420 = vunpack.c.h.b16 %v262
        %v421 = vunpack.c.l.b16 %v263
        %v422 = vunpack.c.h.b16 %v263
        %v423 = vunpack.c.l.b16 %v264
        %v424 = vunpack.c.l.b16 %v265
        %v425 = vunpack.c.h.b16 %v265
        %v426 = vunpack.c.l.b16 %v266
        %v427 = vunpack.c.h.b16 %v266
        %v428 = vunpack.c.l.b16 %v267
        %v429 = vunpack.c.l.b16 %v268
        %v430 = vunpack.c.h.b16 %v268
        %v431 = vunpack.c.l.b16 %v269
        %v432 = vunpack.c.h.b16 %v269
        %v433 = vunpack.c.l.b16 %v270
        %v434 = vunpack.c.l.b16 %v271
        %v435 = vunpack.c.h.b16 %v271
        %v436 = vunpack.c.l.b16 %v272
        %v437 = vunpack.c.h.b16 %v272
        %v438 = vunpack.c.l.b16 %v273
        %v439 = vunpack.c.l.b16 %v274
        %v440 = vunpack.c.h.b16 %v274
        %v441 = vunpack.c.l.b16 %v275
        %v442 = vunpack.c.h.b16 %v275
        %v443 = vunpack.c.l.b16 %v276
        %v444 = vunpack.c.l.b16 %v277
        %v445 = vunpack.c.h.b16 %v277
        %v446 = vunpack.c.l.b16 %v278
        %v447 = vunpack.c.h.b16 %v278
        %v448 = vunpack.c.l.b16 %v279
        %v449 = vunpack.c.l.b16 %v280
        %v450 = vunpack.c.h.b16 %v280
        %v451 = vunpack.c.l.b16 %v281
        %v452 = vunpack.c.h.b16 %v281
        %v453 = vunpack.c.l.b16 %v282
        %v454 = vpack.c.b16 %v419, %v414
        %v455 = vpack.c.b16 %v420, %v415
        %v456 = vpack.c.b16 %v421, %v416
        %v457 = vpack.c.b16 %v422, %v417
        %v458 = vpack.c.b16 %v423, %v418
        %v459 = vpack.c.b16 %v429, %v424
        %v460 = vpack.c.b16 %v430, %v425
        %v461 = vpack.c.b16 %v431, %v426
        %v462 = vpack.c.b16 %v432, %v427
        %v463 = vpack.c.b16 %v433, %v428
        %v464 = vpack.c.b16 %v439, %v434
        %v465 = vpack.c.b16 %v440, %v435
        %v466 = vpack.c.b16 %v441, %v436
        %v467 = vpack.c.b16 %v442, %v437
        %v468 = vpack.c.b16 %v443, %v438
        %v469 = vpack.c.b16 %v449, %v444
        %v470 = vpack.c.b16 %v450, %v445
        %v471 = vpack.c.b16 %v451, %v446
        %v472 = vpack.c.b16 %v452, %v447
        %v473 = vpack.c.b16 %v453, %v448
        %vm494 = vcmask 523264
        %v496 = vsel %vm494, %v374, 0
        %v499 = vsel %vm494, %v375, 0
        %v502 = vsel %vm494, %v376, 0
        %v505 = vsel %vm494, %v377, 0
        %v508 = vsel %vm494, %v378, 0
        %v511 = vsel %vm494, %v379, 0
        %v514 = vsel %vm494, %v380, 0
        %v517 = vsel %vm494, %v381, 0
        %v520 = vsel %vm494, %v382, 0
        %v523 = vsel %vm494, %v383, 0
        %v526 = vsel %vm494, %v384, 0
        %v529 = vsel %vm494, %v385, 0
        %v532 = vsel %vm494, %v386, 0
        %v535 = vsel %vm494, %v387, 0
        %v538 = vsel %vm494, %v388, 0
        %v541 = vsel %vm494, %v389, 0
        %543 = vmatprep.subr.bf16.mxu0 %v455
        %544 = vmatpush1.bf16.msra.mxu0 %v454
        %545 = vmatprep.subr.bf16.mxu0 %v460
        %546 = vmatpush1.bf16.msra.mxu0 %v459
        %547 = vmatprep.subr.bf16.mxu0 %v465
        %548 = vmatpush1.bf16.msra.mxu0 %v464
        %549 = vmatprep.subr.bf16.mxu0 %v470
        %550 = vmatpush1.bf16.msra.mxu0 %v469
        %551 = vmatprep.subr.bf16.mxu0 0
        %552 = vmatpush1.bf16.msra.mxu0 0
        %553 = vmatprep.subr.bf16.mxu0 0
        %554 = vmatpush1.bf16.msra.mxu0 0
        %555 = vmatprep.subr.bf16.mxu0 0
        %556 = vmatpush1.bf16.msra.mxu0 0
        %557 = vmatprep.subr.bf16.mxu0 0
        %558 = vmatpush1.bf16.msra.mxu0 0
        %559 = vmatprep.subr.bf16.mxu0 0
        %560 = vmatpush1.bf16.msra.mxu0 0
        %561 = vmatprep.subr.bf16.mxu0 0
        %562 = vmatpush1.bf16.msra.mxu0 0
        %563 = vmatprep.subr.bf16.mxu0 0
        %564 = vmatpush1.bf16.msra.mxu0 0
        %565 = vmatprep.subr.bf16.mxu0 0
        %566 = vmatpush1.bf16.msra.mxu0 0
        %567 = vmatprep.subr.bf16.mxu0 0
        %568 = vmatpush1.bf16.msra.mxu0 0
        %569 = vmatprep.subr.bf16.mxu0 0
        %570 = vmatpush1.bf16.msra.mxu0 0
        %571 = vmatprep.subr.bf16.mxu0 0
        %572 = vmatpush1.bf16.msra.mxu0 0
        %573 = vmatprep.subr.bf16.mxu0 0
        %574 = vmatpush1.bf16.msra.mxu0 0
        %575 = vmatprep.mubr.bf16.mxu0 0
        %576 = vmatmul.mubr.bf16.gmra.mrb[0].mxu0 %v496
        %v577 = vpop.f32.mrb[0].mxu0
        %v578 = vadd.f32 %v288, %v577
        %v579 = vpop.f32.mrb[0].mxu0
        %v580 = vadd.f32 %v292, %v579
        %v581 = vpop.f32.mrb[0].mxu0
        %v582 = vadd.f32 %v288, %v581
        %v583 = vpop.f32.mrb[0].mxu0
        %v584 = vadd.f32 %v292, %v583
        %585 = vmatprep.mubr.bf16.mxu0 0
        %586 = vmatmul.mubr.bf16.gmra.mrb[0].mxu0 %v499
        %v587 = vpop.f32.mrb[0].mxu0
        %v588 = vadd.f32 %v288, %v587
        %v589 = vpop.f32.mrb[0].mxu0
        %v590 = vadd.f32 %v292, %v589
        %v591 = vpop.f32.mrb[0].mxu0
        %v592 = vadd.f32 %v288, %v591
        %v593 = vpop.f32.mrb[0].mxu0
        %v594 = vadd.f32 %v292, %v593
        %595 = vmatprep.mubr.bf16.mxu0 0
        %596 = vmatmul.mubr.bf16.gmra.mrb[0].mxu0 %v502
        %v597 = vpop.f32.mrb[0].mxu0
        %v598 = vadd.f32 %v288, %v597
        %v599 = vpop.f32.mrb[0].mxu0
        %v600 = vadd.f32 %v292, %v599
        %v601 = vpop.f32.mrb[0].mxu0
        %v602 = vadd.f32 %v288, %v601
        %v603 = vpop.f32.mrb[0].mxu0
        %v604 = vadd.f32 %v292, %v603
        %605 = vmatprep.mubr.bf16.mxu0 0
        %606 = vmatmul.mubr.bf16.gmra.mrb[0].mxu0 %v505
        %v607 = vpop.f32.mrb[0].mxu0
        %v608 = vadd.f32 %v288, %v607
        %v609 = vpop.f32.mrb[0].mxu0
        %v610 = vadd.f32 %v292, %v609
        %v611 = vpop.f32.mrb[0].mxu0
        %v612 = vadd.f32 %v288, %v611
        %v613 = vpop.f32.mrb[0].mxu0
        %v614 = vadd.f32 %v292, %v613
        %615 = vmatprep.mubr.bf16.mxu0 0
        %616 = vmatmul.mubr.bf16.gmra.mrb[0].mxu0 %v508
        %v617 = vpop.f32.mrb[0].mxu0
        %v618 = vadd.f32 %v288, %v617
        %v619 = vpop.f32.mrb[0].mxu0
        %v620 = vadd.f32 %v292, %v619
        %v621 = vpop.f32.mrb[0].mxu0
        %v622 = vadd.f32 %v288, %v621
        %v623 = vpop.f32.mrb[0].mxu0
        %v624 = vadd.f32 %v292, %v623
        %625 = vmatprep.mubr.bf16.mxu0 0
        %626 = vmatmul.mubr.bf16.gmra.mrb[0].mxu0 %v511
        %v627 = vpop.f32.mrb[0].mxu0
        %v628 = vadd.f32 %v288, %v627
        %v629 = vpop.f32.mrb[0].mxu0
        %v630 = vadd.f32 %v292, %v629
        %v631 = vpop.f32.mrb[0].mxu0
        %v632 = vadd.f32 %v288, %v631
        %v633 = vpop.f32.mrb[0].mxu0
        %v634 = vadd.f32 %v292, %v633
        %635 = vmatprep.mubr.bf16.mxu0 0
        %636 = vmatmul.mubr.bf16.gmra.mrb[0].mxu0 %v514
        %v637 = vpop.f32.mrb[0].mxu0
        %v638 = vadd.f32 %v288, %v637
        %v639 = vpop.f32.mrb[0].mxu0
        %v640 = vadd.f32 %v292, %v639
        %v641 = vpop.f32.mrb[0].mxu0
        %v642 = vadd.f32 %v288, %v641
        %v643 = vpop.f32.mrb[0].mxu0
        %v644 = vadd.f32 %v292, %v643
        %645 = vmatprep.mubr.bf16.mxu0 0
        %646 = vmatmul.mubr.bf16.gmra.mrb[0].mxu0 %v517
        %v647 = vpop.f32.mrb[0].mxu0
        %v648 = vadd.f32 %v288, %v647
        %v649 = vpop.f32.mrb[0].mxu0
        %v650 = vadd.f32 %v292, %v649
        %v651 = vpop.f32.mrb[0].mxu0
        %v652 = vadd.f32 %v288, %v651
        %v653 = vpop.f32.mrb[0].mxu0
        %v654 = vadd.f32 %v292, %v653
        %655 = vmatprep.mubr.bf16.mxu0 0
        %656 = vmatmul.mubr.bf16.gmra.mrb[0].mxu0 %v520
        %v657 = vpop.f32.mrb[0].mxu0
        %v658 = vadd.f32 %v288, %v657
        %v659 = vpop.f32.mrb[0].mxu0
        %v660 = vadd.f32 %v292, %v659
        %v661 = vpop.f32.mrb[0].mxu0
        %v662 = vadd.f32 %v288, %v661
        %v663 = vpop.f32.mrb[0].mxu0
        %v664 = vadd.f32 %v292, %v663
        %665 = vmatprep.mubr.bf16.mxu0 0
        %666 = vmatmul.mubr.bf16.gmra.mrb[0].mxu0 %v523
        %v667 = vpop.f32.mrb[0].mxu0
        %v668 = vadd.f32 %v288, %v667
        %v669 = vpop.f32.mrb[0].mxu0
        %v670 = vadd.f32 %v292, %v669
        %v671 = vpop.f32.mrb[0].mxu0
        %v672 = vadd.f32 %v288, %v671
        %v673 = vpop.f32.mrb[0].mxu0
        %v674 = vadd.f32 %v292, %v673
        %675 = vmatprep.mubr.bf16.mxu0 0
        %676 = vmatmul.mubr.bf16.gmra.mrb[0].mxu0 %v526
        %v677 = vpop.f32.mrb[0].mxu0
        %v678 = vadd.f32 %v288, %v677
        %v679 = vpop.f32.mrb[0].mxu0
        %v680 = vadd.f32 %v292, %v679
        %v681 = vpop.f32.mrb[0].mxu0
        %v682 = vadd.f32 %v288, %v681
        %v683 = vpop.f32.mrb[0].mxu0
        %v684 = vadd.f32 %v292, %v683
        %685 = vmatprep.mubr.bf16.mxu0 0
        %686 = vmatmul.mubr.bf16.gmra.mrb[0].mxu0 %v529
        %v687 = vpop.f32.mrb[0].mxu0
        %v688 = vadd.f32 %v288, %v687
        %v689 = vpop.f32.mrb[0].mxu0
        %v690 = vadd.f32 %v292, %v689
        %v691 = vpop.f32.mrb[0].mxu0
        %v692 = vadd.f32 %v288, %v691
        %v693 = vpop.f32.mrb[0].mxu0
        %v694 = vadd.f32 %v292, %v693
        %695 = vmatprep.mubr.bf16.mxu0 0
        %696 = vmatmul.mubr.bf16.gmra.mrb[0].mxu0 %v532
        %v697 = vpop.f32.mrb[0].mxu0
        %v698 = vadd.f32 %v288, %v697
        %v699 = vpop.f32.mrb[0].mxu0
        %v700 = vadd.f32 %v292, %v699
        %v701 = vpop.f32.mrb[0].mxu0
        %v702 = vadd.f32 %v288, %v701
        %v703 = vpop.f32.mrb[0].mxu0
        %v704 = vadd.f32 %v292, %v703
        %705 = vmatprep.mubr.bf16.mxu0 0
        %706 = vmatmul.mubr.bf16.gmra.mrb[0].mxu0 %v535
        %v707 = vpop.f32.mrb[0].mxu0
        %v708 = vadd.f32 %v288, %v707
        %v709 = vpop.f32.mrb[0].mxu0
        %v710 = vadd.f32 %v292, %v709
        %v711 = vpop.f32.mrb[0].mxu0
        %v712 = vadd.f32 %v288, %v711
        %v713 = vpop.f32.mrb[0].mxu0
        %v714 = vadd.f32 %v292, %v713
        %715 = vmatprep.mubr.bf16.mxu0 0
        %716 = vmatmul.mubr.bf16.gmra.mrb[0].mxu0 %v538
        %v717 = vpop.f32.mrb[0].mxu0
        %v718 = vadd.f32 %v288, %v717
        %v719 = vpop.f32.mrb[0].mxu0
        %v720 = vadd.f32 %v292, %v719
        %v721 = vpop.f32.mrb[0].mxu0
        %v722 = vadd.f32 %v288, %v721
        %v723 = vpop.f32.mrb[0].mxu0
        %v724 = vadd.f32 %v292, %v723
        %725 = vmatprep.mubr.bf16.mxu0 0
        %726 = vmatmul.mubr.bf16.gmra.mrb[0].mxu0 %v541
        %v727 = vpop.f32.mrb[0].mxu0
        %v728 = vadd.f32 %v288, %v727
        %v729 = vpop.f32.mrb[0].mxu0
        %v730 = vadd.f32 %v292, %v729
        %v731 = vpop.f32.mrb[0].mxu0
        %v732 = vadd.f32 %v288, %v731
        %v733 = vpop.f32.mrb[0].mxu0
        %v734 = vadd.f32 %v292, %v733
        %735 = vdwg.mxu0
        %736 = vmatprep.subr.bf16.mxu0 %v457
        %737 = vmatpush1.bf16.msra.mxu0 %v456
        %738 = vmatprep.subr.bf16.mxu0 %v462
        %739 = vmatpush1.bf16.msra.mxu0 %v461
        %740 = vmatprep.subr.bf16.mxu0 %v467
        %741 = vmatpush1.bf16.msra.mxu0 %v466
        %742 = vmatprep.subr.bf16.mxu0 %v472
        %743 = vmatpush1.bf16.msra.mxu0 %v471
        %744 = vmatprep.subr.bf16.mxu0 0
        %745 = vmatpush1.bf16.msra.mxu0 0
        %746 = vmatprep.subr.bf16.mxu0 0
        %747 = vmatpush1.bf16.msra.mxu0 0
        %748 = vmatprep.subr.bf16.mxu0 0
        %749 = vmatpush1.bf16.msra.mxu0 0
        %750 = vmatprep.subr.bf16.mxu0 0
        %751 = vmatpush1.bf16.msra.mxu0 0
        %752 = vmatprep.subr.bf16.mxu0 0
        %753 = vmatpush1.bf16.msra.mxu0 0
        %754 = vmatprep.subr.bf16.mxu0 0
        %755 = vmatpush1.bf16.msra.mxu0 0
        %756 = vmatprep.subr.bf16.mxu0 0
        %757 = vmatpush1.bf16.msra.mxu0 0
        %758 = vmatprep.subr.bf16.mxu0 0
        %759 = vmatpush1.bf16.msra.mxu0 0
        %760 = vmatprep.subr.bf16.mxu0 0
        %761 = vmatpush1.bf16.msra.mxu0 0
        %762 = vmatprep.subr.bf16.mxu0 0
        %763 = vmatpush1.bf16.msra.mxu0 0
        %764 = vmatprep.subr.bf16.mxu0 0
        %765 = vmatpush1.bf16.msra.mxu0 0
        %766 = vmatprep.subr.bf16.mxu0 0
        %767 = vmatpush1.bf16.msra.mxu0 0
        %768 = vmatprep.mubr.bf16.mxu0 0
        %769 = vmatmul.mubr.bf16.gmra.mrb[0].mxu0 %v496
        %v770 = vpop.f32.mrb[0].mxu0
        %v771 = vadd.f32 %v296, %v770
        %v772 = vpop.f32.mrb[0].mxu0
        %v773 = vadd.f32 %v300, %v772
        %v774 = vpop.f32.mrb[0].mxu0
        %v775 = vadd.f32 %v296, %v774
        %v776 = vpop.f32.mrb[0].mxu0
        %v777 = vadd.f32 %v300, %v776
        %778 = vmatprep.mubr.bf16.mxu0 0
        %779 = vmatmul.mubr.bf16.gmra.mrb[0].mxu0 %v499
        %v780 = vpop.f32.mrb[0].mxu0
        %v781 = vadd.f32 %v296, %v780
        %v782 = vpop.f32.mrb[0].mxu0
        %v783 = vadd.f32 %v300, %v782
        %v784 = vpop.f32.mrb[0].mxu0
        %v785 = vadd.f32 %v296, %v784
        %v786 = vpop.f32.mrb[0].mxu0
        %v787 = vadd.f32 %v300, %v786
        %788 = vmatprep.mubr.bf16.mxu0 0
        %789 = vmatmul.mubr.bf16.gmra.mrb[0].mxu0 %v502
        %v790 = vpop.f32.mrb[0].mxu0
        %v791 = vadd.f32 %v296, %v790
        %v792 = vpop.f32.mrb[0].mxu0
        %v793 = vadd.f32 %v300, %v792
        %v794 = vpop.f32.mrb[0].mxu0
        %v795 = vadd.f32 %v296, %v794
        %v796 = vpop.f32.mrb[0].mxu0
        %v797 = vadd.f32 %v300, %v796
        %798 = vmatprep.mubr.bf16.mxu0 0
        %799 = vmatmul.mubr.bf16.gmra.mrb[0].mxu0 %v505
        %v800 = vpop.f32.mrb[0].mxu0
        %v801 = vadd.f32 %v296, %v800
        %v802 = vpop.f32.mrb[0].mxu0
        %v803 = vadd.f32 %v300, %v802
        %v804 = vpop.f32.mrb[0].mxu0
        %v805 = vadd.f32 %v296, %v804
        %v806 = vpop.f32.mrb[0].mxu0
        %v807 = vadd.f32 %v300, %v806
        %808 = vmatprep.mubr.bf16.mxu0 0
        %809 = vmatmul.mubr.bf16.gmra.mrb[0].mxu0 %v508
        %v810 = vpop.f32.mrb[0].mxu0
        %v811 = vadd.f32 %v296, %v810
        %v812 = vpop.f32.mrb[0].mxu0
        %v813 = vadd.f32 %v300, %v812
        %v814 = vpop.f32.mrb[0].mxu0
        %v815 = vadd.f32 %v296, %v814
        %v816 = vpop.f32.mrb[0].mxu0
        %v817 = vadd.f32 %v300, %v816
        %818 = vmatprep.mubr.bf16.mxu0 0
        %819 = vmatmul.mubr.bf16.gmra.mrb[0].mxu0 %v511
        %v820 = vpop.f32.mrb[0].mxu0
        %v821 = vadd.f32 %v296, %v820
        %v822 = vpop.f32.mrb[0].mxu0
        %v823 = vadd.f32 %v300, %v822
        %v824 = vpop.f32.mrb[0].mxu0
        %v825 = vadd.f32 %v296, %v824
        %v826 = vpop.f32.mrb[0].mxu0
        %v827 = vadd.f32 %v300, %v826
        %828 = vmatprep.mubr.bf16.mxu0 0
        %829 = vmatmul.mubr.bf16.gmra.mrb[0].mxu0 %v514
        %v830 = vpop.f32.mrb[0].mxu0
        %v831 = vadd.f32 %v296, %v830
        %v832 = vpop.f32.mrb[0].mxu0
        %v833 = vadd.f32 %v300, %v832
        %v834 = vpop.f32.mrb[0].mxu0
        %v835 = vadd.f32 %v296, %v834
        %v836 = vpop.f32.mrb[0].mxu0
        %v837 = vadd.f32 %v300, %v836
        %838 = vmatprep.mubr.bf16.mxu0 0
        %839 = vmatmul.mubr.bf16.gmra.mrb[0].mxu0 %v517
        %v840 = vpop.f32.mrb[0].mxu0
        %v841 = vadd.f32 %v296, %v840
        %v842 = vpop.f32.mrb[0].mxu0
        %v843 = vadd.f32 %v300, %v842
        %v844 = vpop.f32.mrb[0].mxu0
        %v845 = vadd.f32 %v296, %v844
        %v846 = vpop.f32.mrb[0].mxu0
        %v847 = vadd.f32 %v300, %v846
        %848 = vmatprep.mubr.bf16.mxu0 0
        %849 = vmatmul.mubr.bf16.gmra.mrb[0].mxu0 %v520
        %v850 = vpop.f32.mrb[0].mxu0
        %v851 = vadd.f32 %v296, %v850
        %v852 = vpop.f32.mrb[0].mxu0
        %v853 = vadd.f32 %v300, %v852
        %v854 = vpop.f32.mrb[0].mxu0
        %v855 = vadd.f32 %v296, %v854
        %v856 = vpop.f32.mrb[0].mxu0
        %v857 = vadd.f32 %v300, %v856
        %858 = vmatprep.mubr.bf16.mxu0 0
        %859 = vmatmul.mubr.bf16.gmra.mrb[0].mxu0 %v523
        %v860 = vpop.f32.mrb[0].mxu0
        %v861 = vadd.f32 %v296, %v860
        %v862 = vpop.f32.mrb[0].mxu0
        %v863 = vadd.f32 %v300, %v862
        %v864 = vpop.f32.mrb[0].mxu0
        %v865 = vadd.f32 %v296, %v864
        %v866 = vpop.f32.mrb[0].mxu0
        %v867 = vadd.f32 %v300, %v866
        %868 = vmatprep.mubr.bf16.mxu0 0
        %869 = vmatmul.mubr.bf16.gmra.mrb[0].mxu0 %v526
        %v870 = vpop.f32.mrb[0].mxu0
        %v871 = vadd.f32 %v296, %v870
        %v872 = vpop.f32.mrb[0].mxu0
        %v873 = vadd.f32 %v300, %v872
        %v874 = vpop.f32.mrb[0].mxu0
        %v875 = vadd.f32 %v296, %v874
        %v876 = vpop.f32.mrb[0].mxu0
        %v877 = vadd.f32 %v300, %v876
        %878 = vmatprep.mubr.bf16.mxu0 0
        %879 = vmatmul.mubr.bf16.gmra.mrb[0].mxu0 %v529
        %v880 = vpop.f32.mrb[0].mxu0
        %v881 = vadd.f32 %v296, %v880
        %v882 = vpop.f32.mrb[0].mxu0
        %v883 = vadd.f32 %v300, %v882
        %v884 = vpop.f32.mrb[0].mxu0
        %v885 = vadd.f32 %v296, %v884
        %v886 = vpop.f32.mrb[0].mxu0
        %v887 = vadd.f32 %v300, %v886
        %888 = vmatprep.mubr.bf16.mxu0 0
        %889 = vmatmul.mubr.bf16.gmra.mrb[0].mxu0 %v532
        %v890 = vpop.f32.mrb[0].mxu0
        %v891 = vadd.f32 %v296, %v890
        %v892 = vpop.f32.mrb[0].mxu0
        %v893 = vadd.f32 %v300, %v892
        %v894 = vpop.f32.mrb[0].mxu0
        %v895 = vadd.f32 %v296, %v894
        %v896 = vpop.f32.mrb[0].mxu0
        %v897 = vadd.f32 %v300, %v896
        %898 = vmatprep.mubr.bf16.mxu0 0
        %899 = vmatmul.mubr.bf16.gmra.mrb[0].mxu0 %v535
        %v900 = vpop.f32.mrb[0].mxu0
        %v901 = vadd.f32 %v296, %v900
        %v902 = vpop.f32.mrb[0].mxu0
        %v903 = vadd.f32 %v300, %v902
        %v904 = vpop.f32.mrb[0].mxu0
        %v905 = vadd.f32 %v296, %v904
        %v906 = vpop.f32.mrb[0].mxu0
        %v907 = vadd.f32 %v300, %v906
        %908 = vmatprep.mubr.bf16.mxu0 0
        %909 = vmatmul.mubr.bf16.gmra.mrb[0].mxu0 %v538
        %v910 = vpop.f32.mrb[0].mxu0
        %v911 = vadd.f32 %v296, %v910
        %v912 = vpop.f32.mrb[0].mxu0
        %v913 = vadd.f32 %v300, %v912
        %v914 = vpop.f32.mrb[0].mxu0
        %v915 = vadd.f32 %v296, %v914
        %v916 = vpop.f32.mrb[0].mxu0
        %v917 = vadd.f32 %v300, %v916
        %918 = vmatprep.mubr.bf16.mxu0 0
        %919 = vmatmul.mubr.bf16.gmra.mrb[0].mxu0 %v541
        %v920 = vpop.f32.mrb[0].mxu0
        %v921 = vadd.f32 %v296, %v920
        %v922 = vpop.f32.mrb[0].mxu0
        %v923 = vadd.f32 %v300, %v922
        %v924 = vpop.f32.mrb[0].mxu0
        %v925 = vadd.f32 %v296, %v924
        %v926 = vpop.f32.mrb[0].mxu0
        %v927 = vadd.f32 %v300, %v926
        %928 = vdwg.mxu0
        %929 = vmatprep.subr.bf16.mxu0 0
        %930 = vmatpush1.bf16.msra.mxu0 %v458
        %931 = vmatprep.subr.bf16.mxu0 0
        %932 = vmatpush1.bf16.msra.mxu0 %v463
        %933 = vmatprep.subr.bf16.mxu0 0
        %934 = vmatpush1.bf16.msra.mxu0 %v468
        %935 = vmatprep.subr.bf16.mxu0 0
        %936 = vmatpush1.bf16.msra.mxu0 %v473
        %937 = vmatprep.subr.bf16.mxu0 0
        %938 = vmatpush1.bf16.msra.mxu0 0
        %939 = vmatprep.subr.bf16.mxu0 0
        %940 = vmatpush1.bf16.msra.mxu0 0
        %941 = vmatprep.subr.bf16.mxu0 0
        %942 = vmatpush1.bf16.msra.mxu0 0
        %943 = vmatprep.subr.bf16.mxu0 0
        %944 = vmatpush1.bf16.msra.mxu0 0
        %945 = vmatprep.subr.bf16.mxu0 0
        %946 = vmatpush1.bf16.msra.mxu0 0
        %947 = vmatprep.subr.bf16.mxu0 0
        %948 = vmatpush1.bf16.msra.mxu0 0
        %949 = vmatprep.subr.bf16.mxu0 0
        %950 = vmatpush1.bf16.msra.mxu0 0
        %951 = vmatprep.subr.bf16.mxu0 0
        %952 = vmatpush1.bf16.msra.mxu0 0
        %953 = vmatprep.subr.bf16.mxu0 0
        %954 = vmatpush1.bf16.msra.mxu0 0
        %955 = vmatprep.subr.bf16.mxu0 0
        %956 = vmatpush1.bf16.msra.mxu0 0
        %957 = vmatprep.subr.bf16.mxu0 0
        %958 = vmatpush1.bf16.msra.mxu0 0
        %959 = vmatprep.subr.bf16.mxu0 0
        %960 = vmatpush1.bf16.msra.mxu0 0
        %961 = vmatprep.mubr.bf16.mxu0 0
        %962 = vmatmul.mubr.bf16.gmra.mrb[0].mxu0 %v496
        %v963 = vpop.f32.mrb[0].mxu0
        %v964 = vadd.f32 %v304, %v963
        %v965 = vpop.f32.mrb[0].mxu0
        %v966 = vpop.f32.mrb[0].mxu0
        %v967 = vadd.f32 %v304, %v966
        %v968 = vpop.f32.mrb[0].mxu0
        %969 = vmatprep.mubr.bf16.mxu0 0
        %970 = vmatmul.mubr.bf16.gmra.mrb[0].mxu0 %v499
        %v971 = vpop.f32.mrb[0].mxu0
        %v972 = vadd.f32 %v304, %v971
        %v973 = vpop.f32.mrb[0].mxu0
        %v974 = vpop.f32.mrb[0].mxu0
        %v975 = vadd.f32 %v304, %v974
        %v976 = vpop.f32.mrb[0].mxu0
        %977 = vmatprep.mubr.bf16.mxu0 0
        %978 = vmatmul.mubr.bf16.gmra.mrb[0].mxu0 %v502
        %v979 = vpop.f32.mrb[0].mxu0
        %v980 = vadd.f32 %v304, %v979
        %v981 = vpop.f32.mrb[0].mxu0
        %v982 = vpop.f32.mrb[0].mxu0
        %v983 = vadd.f32 %v304, %v982
        %v984 = vpop.f32.mrb[0].mxu0
        %985 = vmatprep.mubr.bf16.mxu0 0
        %986 = vmatmul.mubr.bf16.gmra.mrb[0].mxu0 %v505
        %v987 = vpop.f32.mrb[0].mxu0
        %v988 = vadd.f32 %v304, %v987
        %v989 = vpop.f32.mrb[0].mxu0
        %v990 = vpop.f32.mrb[0].mxu0
        %v991 = vadd.f32 %v304, %v990
        %v992 = vpop.f32.mrb[0].mxu0
        %993 = vmatprep.mubr.bf16.mxu0 0
        %994 = vmatmul.mubr.bf16.gmra.mrb[0].mxu0 %v508
        %v995 = vpop.f32.mrb[0].mxu0
        %v996 = vadd.f32 %v304, %v995
        %v997 = vpop.f32.mrb[0].mxu0
        %v998 = vpop.f32.mrb[0].mxu0
        %v999 = vadd.f32 %v304, %v998
        %v1000 = vpop.f32.mrb[0].mxu0
        %1001 = vmatprep.mubr.bf16.mxu0 0
        %1002 = vmatmul.mubr.bf16.gmra.mrb[0].mxu0 %v511
        %v1003 = vpop.f32.mrb[0].mxu0
        %v1004 = vadd.f32 %v304, %v1003
        %v1005 = vpop.f32.mrb[0].mxu0
        %v1006 = vpop.f32.mrb[0].mxu0
        %v1007 = vadd.f32 %v304, %v1006
        %v1008 = vpop.f32.mrb[0].mxu0
        %1009 = vmatprep.mubr.bf16.mxu0 0
        %1010 = vmatmul.mubr.bf16.gmra.mrb[0].mxu0 %v514
        %v1011 = vpop.f32.mrb[0].mxu0
        %v1012 = vadd.f32 %v304, %v1011
        %v1013 = vpop.f32.mrb[0].mxu0
        %v1014 = vpop.f32.mrb[0].mxu0
        %v1015 = vadd.f32 %v304, %v1014
        %v1016 = vpop.f32.mrb[0].mxu0
        %1017 = vmatprep.mubr.bf16.mxu0 0
        %1018 = vmatmul.mubr.bf16.gmra.mrb[0].mxu0 %v517
        %v1019 = vpop.f32.mrb[0].mxu0
        %v1020 = vadd.f32 %v304, %v1019
        %v1021 = vpop.f32.mrb[0].mxu0
        %v1022 = vpop.f32.mrb[0].mxu0
        %v1023 = vadd.f32 %v304, %v1022
        %v1024 = vpop.f32.mrb[0].mxu0
        %1025 = vmatprep.mubr.bf16.mxu0 0
        %1026 = vmatmul.mubr.bf16.gmra.mrb[0].mxu0 %v520
        %v1027 = vpop.f32.mrb[0].mxu0
        %v1028 = vadd.f32 %v304, %v1027
        %v1029 = vpop.f32.mrb[0].mxu0
        %v1030 = vpop.f32.mrb[0].mxu0
        %v1031 = vadd.f32 %v304, %v1030
        %v1032 = vpop.f32.mrb[0].mxu0
        %1033 = vmatprep.mubr.bf16.mxu0 0
        %1034 = vmatmul.mubr.bf16.gmra.mrb[0].mxu0 %v523
        %v1035 = vpop.f32.mrb[0].mxu0
        %v1036 = vadd.f32 %v304, %v1035
        %v1037 = vpop.f32.mrb[0].mxu0
        %v1038 = vpop.f32.mrb[0].mxu0
        %v1039 = vadd.f32 %v304, %v1038
        %v1040 = vpop.f32.mrb[0].mxu0
        %1041 = vmatprep.mubr.bf16.mxu0 0
        %1042 = vmatmul.mubr.bf16.gmra.mrb[0].mxu0 %v526
        %v1043 = vpop.f32.mrb[0].mxu0
        %v1044 = vadd.f32 %v304, %v1043
        %v1045 = vpop.f32.mrb[0].mxu0
        %v1046 = vpop.f32.mrb[0].mxu0
        %v1047 = vadd.f32 %v304, %v1046
        %v1048 = vpop.f32.mrb[0].mxu0
        %1049 = vmatprep.mubr.bf16.mxu0 0
        %1050 = vmatmul.mubr.bf16.gmra.mrb[0].mxu0 %v529
        %v1051 = vpop.f32.mrb[0].mxu0
        %v1052 = vadd.f32 %v304, %v1051
        %v1053 = vpop.f32.mrb[0].mxu0
        %v1054 = vpop.f32.mrb[0].mxu0
        %v1055 = vadd.f32 %v304, %v1054
        %v1056 = vpop.f32.mrb[0].mxu0
        %1057 = vmatprep.mubr.bf16.mxu0 0
        %1058 = vmatmul.mubr.bf16.gmra.mrb[0].mxu0 %v532
        %v1059 = vpop.f32.mrb[0].mxu0
        %v1060 = vadd.f32 %v304, %v1059
        %v1061 = vpop.f32.mrb[0].mxu0
        %v1062 = vpop.f32.mrb[0].mxu0
        %v1063 = vadd.f32 %v304, %v1062
        %v1064 = vpop.f32.mrb[0].mxu0
        %1065 = vmatprep.mubr.bf16.mxu0 0
        %1066 = vmatmul.mubr.bf16.gmra.mrb[0].mxu0 %v535
        %v1067 = vpop.f32.mrb[0].mxu0
        %v1068 = vadd.f32 %v304, %v1067
        %v1069 = vpop.f32.mrb[0].mxu0
        %v1070 = vpop.f32.mrb[0].mxu0
        %v1071 = vadd.f32 %v304, %v1070
        %v1072 = vpop.f32.mrb[0].mxu0
        %1073 = vmatprep.mubr.bf16.mxu0 0
        %1074 = vmatmul.mubr.bf16.gmra.mrb[0].mxu0 %v538
        %v1075 = vpop.f32.mrb[0].mxu0
        %v1076 = vadd.f32 %v304, %v1075
        %v1077 = vpop.f32.mrb[0].mxu0
        %v1078 = vpop.f32.mrb[0].mxu0
        %v1079 = vadd.f32 %v304, %v1078
        %v1080 = vpop.f32.mrb[0].mxu0
        %1081 = vmatprep.mubr.bf16.mxu0 0
        %1082 = vmatmul.mubr.bf16.gmra.mrb[0].mxu0 %v541
        %v1083 = vpop.f32.mrb[0].mxu0
        %v1084 = vadd.f32 %v304, %v1083
        %v1085 = vpop.f32.mrb[0].mxu0
        %v1086 = vpop.f32.mrb[0].mxu0
        %v1087 = vadd.f32 %v304, %v1086
        %v1088 = vpop.f32.mrb[0].mxu0
        %1089 = vdwg.mxu0
        %1090 = vmatprep.subr.mxu0 0.0
        %1091 = vmatpush1.xpose.msra.mxu0 %v580
        %1092 = vmatprep.subr.mxu0 0.0
        %1093 = vmatpush1.xpose.msra.mxu0 0.0
        %1094 = vmatprep.subr.mxu0 0.0
        %1095 = vmatpush1.xpose.msra.mxu0 0.0
        %1096 = vmatprep.subr.mxu0 0.0
        %1097 = vmatpush1.xpose.msra.mxu0 0.0
        %1098 = vmatprep.subr.mxu0 0.0
        %1099 = vmatpush1.xpose.msra.mxu0 0.0
        %1100 = vmatprep.subr.mxu0 0.0
        %1101 = vmatpush1.xpose.msra.mxu0 0.0
        %1102 = vmatprep.subr.mxu0 0.0
        %1103 = vmatpush1.xpose.msra.mxu0 0.0
        %1104 = vmatprep.subr.mxu0 0.0
        %1105 = vmatpush1.xpose.msra.mxu0 0.0
        %1106 = vmatprep.subr.mxu0 0.0
        %1107 = vmatpush1.xpose.msra.mxu0 0.0
        %1108 = vmatprep.subr.mxu0 0.0
        %1109 = vmatpush1.xpose.msra.mxu0 0.0
        %1110 = vmatprep.subr.mxu0 0.0
        %1111 = vmatpush1.xpose.msra.mxu0 0.0
        %1112 = vmatprep.subr.mxu0 0.0
        %1113 = vmatpush1.xpose.msra.mxu0 0.0
        %1114 = vmatprep.subr.mxu0 0.0
        %1115 = vmatpush1.xpose.msra.mxu0 0.0
        %1116 = vmatprep.subr.mxu0 0.0
        %1117 = vmatpush1.xpose.msra.mxu0 0.0
        %1118 = vmatprep.subr.mxu0 0.0
        %1119 = vmatpush1.xpose.msra.mxu0 0.0
        %1120 = vmatprep.subr.mxu0 0.0
        %1121 = vmatpush1.xpose.msra.mxu0 0.0
        %1122 = vmatprep.subr.mxu0 0.0
        %1123 = vmatpush1.xpose.msra.mxu0 0.0
        %1124 = vmatprep.subr.mxu0 0.0
        %1125 = vmatpush1.xpose.msra.mxu0 0.0
        %1126 = vmatprep.subr.mxu0 0.0
        %1127 = vmatpush1.xpose.msra.mxu0 0.0
        %1128 = vmatprep.subr.mxu0 0.0
        %1129 = vmatpush1.xpose.msra.mxu0 0.0
        %1130 = vmatprep.subr.mxu0 0.0
        %1131 = vmatpush1.xpose.msra.mxu0 0.0
        %1132 = vmatprep.subr.mxu0 0.0
        %1133 = vmatpush1.xpose.msra.mxu0 0.0
        %1134 = vmatprep.subr.mxu0 0.0
        %1135 = vmatpush1.xpose.msra.mxu0 0.0
        %1136 = vmatprep.subr.mxu0 0.0
        %1137 = vmatpush1.xpose.msra.mxu0 0.0
        %1138 = vmatprep.subr.mxu0 0.0
        %1139 = vmatpush1.xpose.msra.mxu0 0.0
        %1140 = vmatprep.subr.mxu0 0.0
        %1141 = vmatpush1.xpose.msra.mxu0 0.0
        %1142 = vmatprep.subr.mxu0 0.0
        %1143 = vmatpush1.xpose.msra.mxu0 0.0
        %1144 = vmatprep.subr.mxu0 0.0
        %1145 = vmatpush1.xpose.msra.mxu0 0.0
        %1146 = vmatprep.subr.mxu0 0.0
        %1147 = vmatpush1.xpose.msra.mxu0 0.0
        %1148 = vmatprep.subr.mxu0 0.0
        %1149 = vmatpush1.xpose.msra.mxu0 0.0
        %1150 = vmatprep.subr.mxu0 0.0
        %1151 = vmatpush1.xpose.msra.mxu0 0.0
        %1152 = vmatprep.subr.mxu0 0.0
        %1153 = vmatpush1.xpose.msra.mxu0 0.0
        %1154 = vmatprep.mubr.f32.mxu0 0.0
        %1155 = vmatmul.mubr.f32.gmra.mrb[0].mxu0 %v578
        %v1156 = vpop.f32.mrb[0].mxu0
        %v1157 = vadd.f32 0.0, %v1156
        %v1158 = vpop.f32.mrb[0].mxu0
        %1159 = vdwg.mxu0
        %1160 = vmatprep.subr.mxu0 0.0
        %1161 = vmatpush1.xpose.msra.mxu0 %v584
        %1162 = vmatprep.subr.mxu0 0.0
        %1163 = vmatpush1.xpose.msra.mxu0 0.0
        %1164 = vmatprep.subr.mxu0 0.0
        %1165 = vmatpush1.xpose.msra.mxu0 0.0
        %1166 = vmatprep.subr.mxu0 0.0
        %1167 = vmatpush1.xpose.msra.mxu0 0.0
        %1168 = vmatprep.subr.mxu0 0.0
        %1169 = vmatpush1.xpose.msra.mxu0 0.0
        %1170 = vmatprep.subr.mxu0 0.0
        %1171 = vmatpush1.xpose.msra.mxu0 0.0
        %1172 = vmatprep.subr.mxu0 0.0
        %1173 = vmatpush1.xpose.msra.mxu0 0.0
        %1174 = vmatprep.subr.mxu0 0.0
        %1175 = vmatpush1.xpose.msra.mxu0 0.0
        %1176 = vmatprep.subr.mxu0 0.0
        %1177 = vmatpush1.xpose.msra.mxu0 0.0
        %1178 = vmatprep.subr.mxu0 0.0
        %1179 = vmatpush1.xpose.msra.mxu0 0.0
        %1180 = vmatprep.subr.mxu0 0.0
        %1181 = vmatpush1.xpose.msra.mxu0 0.0
        %1182 = vmatprep.subr.mxu0 0.0
        %1183 = vmatpush1.xpose.msra.mxu0 0.0
        %1184 = vmatprep.subr.mxu0 0.0
        %1185 = vmatpush1.xpose.msra.mxu0 0.0
        %1186 = vmatprep.subr.mxu0 0.0
        %1187 = vmatpush1.xpose.msra.mxu0 0.0
        %1188 = vmatprep.subr.mxu0 0.0
        %1189 = vmatpush1.xpose.msra.mxu0 0.0
        %1190 = vmatprep.subr.mxu0 0.0
        %1191 = vmatpush1.xpose.msra.mxu0 0.0
        %1192 = vmatprep.subr.mxu0 0.0
        %1193 = vmatpush1.xpose.msra.mxu0 0.0
        %1194 = vmatprep.subr.mxu0 0.0
        %1195 = vmatpush1.xpose.msra.mxu0 0.0
        %1196 = vmatprep.subr.mxu0 0.0
        %1197 = vmatpush1.xpose.msra.mxu0 0.0
        %1198 = vmatprep.subr.mxu0 0.0
        %1199 = vmatpush1.xpose.msra.mxu0 0.0
        %1200 = vmatprep.subr.mxu0 0.0
        %1201 = vmatpush1.xpose.msra.mxu0 0.0
        %1202 = vmatprep.subr.mxu0 0.0
        %1203 = vmatpush1.xpose.msra.mxu0 0.0
        %1204 = vmatprep.subr.mxu0 0.0
        %1205 = vmatpush1.xpose.msra.mxu0 0.0
        %1206 = vmatprep.subr.mxu0 0.0
        %1207 = vmatpush1.xpose.msra.mxu0 0.0
        %1208 = vmatprep.subr.mxu0 0.0
        %1209 = vmatpush1.xpose.msra.mxu0 0.0
        %1210 = vmatprep.subr.mxu0 0.0
        %1211 = vmatpush1.xpose.msra.mxu0 0.0
        %1212 = vmatprep.subr.mxu0 0.0
        %1213 = vmatpush1.xpose.msra.mxu0 0.0
        %1214 = vmatprep.subr.mxu0 0.0
        %1215 = vmatpush1.xpose.msra.mxu0 0.0
        %1216 = vmatprep.subr.mxu0 0.0
        %1217 = vmatpush1.xpose.msra.mxu0 0.0
        %1218 = vmatprep.subr.mxu0 0.0
        %1219 = vmatpush1.xpose.msra.mxu0 0.0
        %1220 = vmatprep.subr.mxu0 0.0
        %1221 = vmatpush1.xpose.msra.mxu0 0.0
        %1222 = vmatprep.subr.mxu0 0.0
        %1223 = vmatpush1.xpose.msra.mxu0 0.0
        %1224 = vmatprep.mubr.f32.mxu0 0.0
        %1225 = vmatmul.mubr.f32.gmra.mrb[0].mxu0 %v582
        %v1226 = vpop.f32.mrb[0].mxu0
        %v1227 = vadd.f32 0.0, %v1226
        %v1228 = vpop.f32.mrb[0].mxu0
        %1229 = vdwg.mxu0
        %1230 = vmatprep.subr.mxu0 0.0
        %1231 = vmatpush1.xpose.msra.mxu0 %v590
        %1232 = vmatprep.subr.mxu0 0.0
        %1233 = vmatpush1.xpose.msra.mxu0 0.0
        %1234 = vmatprep.subr.mxu0 0.0
        %1235 = vmatpush1.xpose.msra.mxu0 0.0
        %1236 = vmatprep.subr.mxu0 0.0
        %1237 = vmatpush1.xpose.msra.mxu0 0.0
        %1238 = vmatprep.subr.mxu0 0.0
        %1239 = vmatpush1.xpose.msra.mxu0 0.0
        %1240 = vmatprep.subr.mxu0 0.0
        %1241 = vmatpush1.xpose.msra.mxu0 0.0
        %1242 = vmatprep.subr.mxu0 0.0
        %1243 = vmatpush1.xpose.msra.mxu0 0.0
        %1244 = vmatprep.subr.mxu0 0.0
        %1245 = vmatpush1.xpose.msra.mxu0 0.0
        %1246 = vmatprep.subr.mxu0 0.0
        %1247 = vmatpush1.xpose.msra.mxu0 0.0
        %1248 = vmatprep.subr.mxu0 0.0
        %1249 = vmatpush1.xpose.msra.mxu0 0.0
        %1250 = vmatprep.subr.mxu0 0.0
        %1251 = vmatpush1.xpose.msra.mxu0 0.0
        %1252 = vmatprep.subr.mxu0 0.0
        %1253 = vmatpush1.xpose.msra.mxu0 0.0
        %1254 = vmatprep.subr.mxu0 0.0
        %1255 = vmatpush1.xpose.msra.mxu0 0.0
        %1256 = vmatprep.subr.mxu0 0.0
        %1257 = vmatpush1.xpose.msra.mxu0 0.0
        %1258 = vmatprep.subr.mxu0 0.0
        %1259 = vmatpush1.xpose.msra.mxu0 0.0
        %1260 = vmatprep.subr.mxu0 0.0
        %1261 = vmatpush1.xpose.msra.mxu0 0.0
        %1262 = vmatprep.subr.mxu0 0.0
        %1263 = vmatpush1.xpose.msra.mxu0 0.0
        %1264 = vmatprep.subr.mxu0 0.0
        %1265 = vmatpush1.xpose.msra.mxu0 0.0
        %1266 = vmatprep.subr.mxu0 0.0
        %1267 = vmatpush1.xpose.msra.mxu0 0.0
        %1268 = vmatprep.subr.mxu0 0.0
        %1269 = vmatpush1.xpose.msra.mxu0 0.0
        %1270 = vmatprep.subr.mxu0 0.0
        %1271 = vmatpush1.xpose.msra.mxu0 0.0
        %1272 = vmatprep.subr.mxu0 0.0
        %1273 = vmatpush1.xpose.msra.mxu0 0.0
        %1274 = vmatprep.subr.mxu0 0.0
        %1275 = vmatpush1.xpose.msra.mxu0 0.0
        %1276 = vmatprep.subr.mxu0 0.0
        %1277 = vmatpush1.xpose.msra.mxu0 0.0
        %1278 = vmatprep.subr.mxu0 0.0
        %1279 = vmatpush1.xpose.msra.mxu0 0.0
        %1280 = vmatprep.subr.mxu0 0.0
        %1281 = vmatpush1.xpose.msra.mxu0 0.0
        %1282 = vmatprep.subr.mxu0 0.0
        %1283 = vmatpush1.xpose.msra.mxu0 0.0
        %1284 = vmatprep.subr.mxu0 0.0
        %1285 = vmatpush1.xpose.msra.mxu0 0.0
        %1286 = vmatprep.subr.mxu0 0.0
        %1287 = vmatpush1.xpose.msra.mxu0 0.0
        %1288 = vmatprep.subr.mxu0 0.0
        %1289 = vmatpush1.xpose.msra.mxu0 0.0
        %1290 = vmatprep.subr.mxu0 0.0
        %1291 = vmatpush1.xpose.msra.mxu0 0.0
        %1292 = vmatprep.subr.mxu0 0.0
        %1293 = vmatpush1.xpose.msra.mxu0 0.0
        %1294 = vmatprep.mubr.f32.mxu0 0.0
        %1295 = vmatmul.mubr.f32.gmra.mrb[0].mxu0 %v588
        %v1296 = vpop.f32.mrb[0].mxu0
        %v1297 = vadd.f32 0.0, %v1296
        %v1298 = vpop.f32.mrb[0].mxu0
        %1299 = vdwg.mxu0
        %1300 = vmatprep.subr.mxu0 0.0
        %1301 = vmatpush1.xpose.msra.mxu0 %v594
        %1302 = vmatprep.subr.mxu0 0.0
        %1303 = vmatpush1.xpose.msra.mxu0 0.0
        %1304 = vmatprep.subr.mxu0 0.0
        %1305 = vmatpush1.xpose.msra.mxu0 0.0
        %1306 = vmatprep.subr.mxu0 0.0
        %1307 = vmatpush1.xpose.msra.mxu0 0.0
        %1308 = vmatprep.subr.mxu0 0.0
        %1309 = vmatpush1.xpose.msra.mxu0 0.0
        %1310 = vmatprep.subr.mxu0 0.0
        %1311 = vmatpush1.xpose.msra.mxu0 0.0
        %1312 = vmatprep.subr.mxu0 0.0
        %1313 = vmatpush1.xpose.msra.mxu0 0.0
        %1314 = vmatprep.subr.mxu0 0.0
        %1315 = vmatpush1.xpose.msra.mxu0 0.0
        %1316 = vmatprep.subr.mxu0 0.0
        %1317 = vmatpush1.xpose.msra.mxu0 0.0
        %1318 = vmatprep.subr.mxu0 0.0
        %1319 = vmatpush1.xpose.msra.mxu0 0.0
        %1320 = vmatprep.subr.mxu0 0.0
        %1321 = vmatpush1.xpose.msra.mxu0 0.0
        %1322 = vmatprep.subr.mxu0 0.0
        %1323 = vmatpush1.xpose.msra.mxu0 0.0
        %1324 = vmatprep.subr.mxu0 0.0
        %1325 = vmatpush1.xpose.msra.mxu0 0.0
        %1326 = vmatprep.subr.mxu0 0.0
        %1327 = vmatpush1.xpose.msra.mxu0 0.0
        %1328 = vmatprep.subr.mxu0 0.0
        %1329 = vmatpush1.xpose.msra.mxu0 0.0
        %1330 = vmatprep.subr.mxu0 0.0
        %1331 = vmatpush1.xpose.msra.mxu0 0.0
        %1332 = vmatprep.subr.mxu0 0.0
        %1333 = vmatpush1.xpose.msra.mxu0 0.0
        %1334 = vmatprep.subr.mxu0 0.0
        %1335 = vmatpush1.xpose.msra.mxu0 0.0
        %1336 = vmatprep.subr.mxu0 0.0
        %1337 = vmatpush1.xpose.msra.mxu0 0.0
        %1338 = vmatprep.subr.mxu0 0.0
        %1339 = vmatpush1.xpose.msra.mxu0 0.0
        %1340 = vmatprep.subr.mxu0 0.0
        %1341 = vmatpush1.xpose.msra.mxu0 0.0
        %1342 = vmatprep.subr.mxu0 0.0
        %1343 = vmatpush1.xpose.msra.mxu0 0.0
        %1344 = vmatprep.subr.mxu0 0.0
        %1345 = vmatpush1.xpose.msra.mxu0 0.0
        %1346 = vmatprep.subr.mxu0 0.0
        %1347 = vmatpush1.xpose.msra.mxu0 0.0
        %1348 = vmatprep.subr.mxu0 0.0
        %1349 = vmatpush1.xpose.msra.mxu0 0.0
        %1350 = vmatprep.subr.mxu0 0.0
        %1351 = vmatpush1.xpose.msra.mxu0 0.0
        %1352 = vmatprep.subr.mxu0 0.0
        %1353 = vmatpush1.xpose.msra.mxu0 0.0
        %1354 = vmatprep.subr.mxu0 0.0
        %1355 = vmatpush1.xpose.msra.mxu0 0.0
        %1356 = vmatprep.subr.mxu0 0.0
        %1357 = vmatpush1.xpose.msra.mxu0 0.0
        %1358 = vmatprep.subr.mxu0 0.0
        %1359 = vmatpush1.xpose.msra.mxu0 0.0
        %1360 = vmatprep.subr.mxu0 0.0
        %1361 = vmatpush1.xpose.msra.mxu0 0.0
        %1362 = vmatprep.subr.mxu0 0.0
        %1363 = vmatpush1.xpose.msra.mxu0 0.0
        %1364 = vmatprep.mubr.f32.mxu0 0.0
        %1365 = vmatmul.mubr.f32.gmra.mrb[0].mxu0 %v592
        %v1366 = vpop.f32.mrb[0].mxu0
        %v1367 = vadd.f32 0.0, %v1366
        %v1368 = vpop.f32.mrb[0].mxu0
        %1369 = vdwg.mxu0
        %1370 = vmatprep.subr.mxu0 0.0
        %1371 = vmatpush1.xpose.msra.mxu0 %v600
        %1372 = vmatprep.subr.mxu0 0.0
        %1373 = vmatpush1.xpose.msra.mxu0 0.0
        %1374 = vmatprep.subr.mxu0 0.0
        %1375 = vmatpush1.xpose.msra.mxu0 0.0
        %1376 = vmatprep.subr.mxu0 0.0
        %1377 = vmatpush1.xpose.msra.mxu0 0.0
        %1378 = vmatprep.subr.mxu0 0.0
        %1379 = vmatpush1.xpose.msra.mxu0 0.0
        %1380 = vmatprep.subr.mxu0 0.0
        %1381 = vmatpush1.xpose.msra.mxu0 0.0
        %1382 = vmatprep.subr.mxu0 0.0
        %1383 = vmatpush1.xpose.msra.mxu0 0.0
        %1384 = vmatprep.subr.mxu0 0.0
        %1385 = vmatpush1.xpose.msra.mxu0 0.0
        %1386 = vmatprep.subr.mxu0 0.0
        %1387 = vmatpush1.xpose.msra.mxu0 0.0
        %1388 = vmatprep.subr.mxu0 0.0
        %1389 = vmatpush1.xpose.msra.mxu0 0.0
        %1390 = vmatprep.subr.mxu0 0.0
        %1391 = vmatpush1.xpose.msra.mxu0 0.0
        %1392 = vmatprep.subr.mxu0 0.0
        %1393 = vmatpush1.xpose.msra.mxu0 0.0
        %1394 = vmatprep.subr.mxu0 0.0
        %1395 = vmatpush1.xpose.msra.mxu0 0.0
        %1396 = vmatprep.subr.mxu0 0.0
        %1397 = vmatpush1.xpose.msra.mxu0 0.0
        %1398 = vmatprep.subr.mxu0 0.0
        %1399 = vmatpush1.xpose.msra.mxu0 0.0
        %1400 = vmatprep.subr.mxu0 0.0
        %1401 = vmatpush1.xpose.msra.mxu0 0.0
        %1402 = vmatprep.subr.mxu0 0.0
        %1403 = vmatpush1.xpose.msra.mxu0 0.0
        %1404 = vmatprep.subr.mxu0 0.0
        %1405 = vmatpush1.xpose.msra.mxu0 0.0
        %1406 = vmatprep.subr.mxu0 0.0
        %1407 = vmatpush1.xpose.msra.mxu0 0.0
        %1408 = vmatprep.subr.mxu0 0.0
        %1409 = vmatpush1.xpose.msra.mxu0 0.0
        %1410 = vmatprep.subr.mxu0 0.0
        %1411 = vmatpush1.xpose.msra.mxu0 0.0
        %1412 = vmatprep.subr.mxu0 0.0
        %1413 = vmatpush1.xpose.msra.mxu0 0.0
        %1414 = vmatprep.subr.mxu0 0.0
        %1415 = vmatpush1.xpose.msra.mxu0 0.0
        %1416 = vmatprep.subr.mxu0 0.0
        %1417 = vmatpush1.xpose.msra.mxu0 0.0
        %1418 = vmatprep.subr.mxu0 0.0
        %1419 = vmatpush1.xpose.msra.mxu0 0.0
        %1420 = vmatprep.subr.mxu0 0.0
        %1421 = vmatpush1.xpose.msra.mxu0 0.0
        %1422 = vmatprep.subr.mxu0 0.0
        %1423 = vmatpush1.xpose.msra.mxu0 0.0
        %1424 = vmatprep.subr.mxu0 0.0
        %1425 = vmatpush1.xpose.msra.mxu0 0.0
        %1426 = vmatprep.subr.mxu0 0.0
        %1427 = vmatpush1.xpose.msra.mxu0 0.0
        %1428 = vmatprep.subr.mxu0 0.0
        %1429 = vmatpush1.xpose.msra.mxu0 0.0
        %1430 = vmatprep.subr.mxu0 0.0
        %1431 = vmatpush1.xpose.msra.mxu0 0.0
        %1432 = vmatprep.subr.mxu0 0.0
        %1433 = vmatpush1.xpose.msra.mxu0 0.0
        %1434 = vmatprep.mubr.f32.mxu0 0.0
        %1435 = vmatmul.mubr.f32.gmra.mrb[0].mxu0 %v598
        %v1436 = vpop.f32.mrb[0].mxu0
        %v1437 = vadd.f32 0.0, %v1436
        %v1438 = vpop.f32.mrb[0].mxu0
        %1439 = vdwg.mxu0
        %1440 = vmatprep.subr.mxu0 0.0
        %1441 = vmatpush1.xpose.msra.mxu0 %v604
        %1442 = vmatprep.subr.mxu0 0.0
        %1443 = vmatpush1.xpose.msra.mxu0 0.0
        %1444 = vmatprep.subr.mxu0 0.0
        %1445 = vmatpush1.xpose.msra.mxu0 0.0
        %1446 = vmatprep.subr.mxu0 0.0
        %1447 = vmatpush1.xpose.msra.mxu0 0.0
        %1448 = vmatprep.subr.mxu0 0.0
        %1449 = vmatpush1.xpose.msra.mxu0 0.0
        %1450 = vmatprep.subr.mxu0 0.0
        %1451 = vmatpush1.xpose.msra.mxu0 0.0
        %1452 = vmatprep.subr.mxu0 0.0
        %1453 = vmatpush1.xpose.msra.mxu0 0.0
        %1454 = vmatprep.subr.mxu0 0.0
        %1455 = vmatpush1.xpose.msra.mxu0 0.0
        %1456 = vmatprep.subr.mxu0 0.0
        %1457 = vmatpush1.xpose.msra.mxu0 0.0
        %1458 = vmatprep.subr.mxu0 0.0
        %1459 = vmatpush1.xpose.msra.mxu0 0.0
        %1460 = vmatprep.subr.mxu0 0.0
        %1461 = vmatpush1.xpose.msra.mxu0 0.0
        %1462 = vmatprep.subr.mxu0 0.0
        %1463 = vmatpush1.xpose.msra.mxu0 0.0
        %1464 = vmatprep.subr.mxu0 0.0
        %1465 = vmatpush1.xpose.msra.mxu0 0.0
        %1466 = vmatprep.subr.mxu0 0.0
        %1467 = vmatpush1.xpose.msra.mxu0 0.0
        %1468 = vmatprep.subr.mxu0 0.0
        %1469 = vmatpush1.xpose.msra.mxu0 0.0
        %1470 = vmatprep.subr.mxu0 0.0
        %1471 = vmatpush1.xpose.msra.mxu0 0.0
        %1472 = vmatprep.subr.mxu0 0.0
        %1473 = vmatpush1.xpose.msra.mxu0 0.0
        %1474 = vmatprep.subr.mxu0 0.0
        %1475 = vmatpush1.xpose.msra.mxu0 0.0
        %1476 = vmatprep.subr.mxu0 0.0
        %1477 = vmatpush1.xpose.msra.mxu0 0.0
        %1478 = vmatprep.subr.mxu0 0.0
        %1479 = vmatpush1.xpose.msra.mxu0 0.0
        %1480 = vmatprep.subr.mxu0 0.0
        %1481 = vmatpush1.xpose.msra.mxu0 0.0
        %1482 = vmatprep.subr.mxu0 0.0
        %1483 = vmatpush1.xpose.msra.mxu0 0.0
        %1484 = vmatprep.subr.mxu0 0.0
        %1485 = vmatpush1.xpose.msra.mxu0 0.0
        %1486 = vmatprep.subr.mxu0 0.0
        %1487 = vmatpush1.xpose.msra.mxu0 0.0
        %1488 = vmatprep.subr.mxu0 0.0
        %1489 = vmatpush1.xpose.msra.mxu0 0.0
        %1490 = vmatprep.subr.mxu0 0.0
        %1491 = vmatpush1.xpose.msra.mxu0 0.0
        %1492 = vmatprep.subr.mxu0 0.0
        %1493 = vmatpush1.xpose.msra.mxu0 0.0
        %1494 = vmatprep.subr.mxu0 0.0
        %1495 = vmatpush1.xpose.msra.mxu0 0.0
        %1496 = vmatprep.subr.mxu0 0.0
        %1497 = vmatpush1.xpose.msra.mxu0 0.0
        %1498 = vmatprep.subr.mxu0 0.0
        %1499 = vmatpush1.xpose.msra.mxu0 0.0
        %1500 = vmatprep.subr.mxu0 0.0
        %1501 = vmatpush1.xpose.msra.mxu0 0.0
        %1502 = vmatprep.subr.mxu0 0.0
        %1503 = vmatpush1.xpose.msra.mxu0 0.0
        %1504 = vmatprep.mubr.f32.mxu0 0.0
        %1505 = vmatmul.mubr.f32.gmra.mrb[0].mxu0 %v602
        %v1506 = vpop.f32.mrb[0].mxu0
        %v1507 = vadd.f32 0.0, %v1506
        %v1508 = vpop.f32.mrb[0].mxu0
        %1509 = vdwg.mxu0
        %1510 = vmatprep.subr.mxu0 0.0
        %1511 = vmatpush1.xpose.msra.mxu0 %v610
        %1512 = vmatprep.subr.mxu0 0.0
        %1513 = vmatpush1.xpose.msra.mxu0 0.0
        %1514 = vmatprep.subr.mxu0 0.0
        %1515 = vmatpush1.xpose.msra.mxu0 0.0
        %1516 = vmatprep.subr.mxu0 0.0
        %1517 = vmatpush1.xpose.msra.mxu0 0.0
        %1518 = vmatprep.subr.mxu0 0.0
        %1519 = vmatpush1.xpose.msra.mxu0 0.0
        %1520 = vmatprep.subr.mxu0 0.0
        %1521 = vmatpush1.xpose.msra.mxu0 0.0
        %1522 = vmatprep.subr.mxu0 0.0
        %1523 = vmatpush1.xpose.msra.mxu0 0.0
        %1524 = vmatprep.subr.mxu0 0.0
        %1525 = vmatpush1.xpose.msra.mxu0 0.0
        %1526 = vmatprep.subr.mxu0 0.0
        %1527 = vmatpush1.xpose.msra.mxu0 0.0
        %1528 = vmatprep.subr.mxu0 0.0
        %1529 = vmatpush1.xpose.msra.mxu0 0.0
        %1530 = vmatprep.subr.mxu0 0.0
        %1531 = vmatpush1.xpose.msra.mxu0 0.0
        %1532 = vmatprep.subr.mxu0 0.0
        %1533 = vmatpush1.xpose.msra.mxu0 0.0
        %1534 = vmatprep.subr.mxu0 0.0
        %1535 = vmatpush1.xpose.msra.mxu0 0.0
        %1536 = vmatprep.subr.mxu0 0.0
        %1537 = vmatpush1.xpose.msra.mxu0 0.0
        %1538 = vmatprep.subr.mxu0 0.0
        %1539 = vmatpush1.xpose.msra.mxu0 0.0
        %1540 = vmatprep.subr.mxu0 0.0
        %1541 = vmatpush1.xpose.msra.mxu0 0.0
        %1542 = vmatprep.subr.mxu0 0.0
        %1543 = vmatpush1.xpose.msra.mxu0 0.0
        %1544 = vmatprep.subr.mxu0 0.0
        %1545 = vmatpush1.xpose.msra.mxu0 0.0
        %1546 = vmatprep.subr.mxu0 0.0
        %1547 = vmatpush1.xpose.msra.mxu0 0.0
        %1548 = vmatprep.subr.mxu0 0.0
        %1549 = vmatpush1.xpose.msra.mxu0 0.0
        %1550 = vmatprep.subr.mxu0 0.0
        %1551 = vmatpush1.xpose.msra.mxu0 0.0
        %1552 = vmatprep.subr.mxu0 0.0
        %1553 = vmatpush1.xpose.msra.mxu0 0.0
        %1554 = vmatprep.subr.mxu0 0.0
        %1555 = vmatpush1.xpose.msra.mxu0 0.0
        %1556 = vmatprep.subr.mxu0 0.0
        %1557 = vmatpush1.xpose.msra.mxu0 0.0
        %1558 = vmatprep.subr.mxu0 0.0
        %1559 = vmatpush1.xpose.msra.mxu0 0.0
        %1560 = vmatprep.subr.mxu0 0.0
        %1561 = vmatpush1.xpose.msra.mxu0 0.0
        %1562 = vmatprep.subr.mxu0 0.0
        %1563 = vmatpush1.xpose.msra.mxu0 0.0
        %1564 = vmatprep.subr.mxu0 0.0
        %1565 = vmatpush1.xpose.msra.mxu0 0.0
        %1566 = vmatprep.subr.mxu0 0.0
        %1567 = vmatpush1.xpose.msra.mxu0 0.0
        %1568 = vmatprep.subr.mxu0 0.0
        %1569 = vmatpush1.xpose.msra.mxu0 0.0
        %1570 = vmatprep.subr.mxu0 0.0
        %1571 = vmatpush1.xpose.msra.mxu0 0.0
        %1572 = vmatprep.subr.mxu0 0.0
        %1573 = vmatpush1.xpose.msra.mxu0 0.0
        %1574 = vmatprep.mubr.f32.mxu0 0.0
        %1575 = vmatmul.mubr.f32.gmra.mrb[0].mxu0 %v608
        %v1576 = vpop.f32.mrb[0].mxu0
        %v1577 = vadd.f32 0.0, %v1576
        %v1578 = vpop.f32.mrb[0].mxu0
        %1579 = vdwg.mxu0
        %1580 = vmatprep.subr.mxu0 0.0
        %1581 = vmatpush1.xpose.msra.mxu0 %v614
        %1582 = vmatprep.subr.mxu0 0.0
        %1583 = vmatpush1.xpose.msra.mxu0 0.0
        %1584 = vmatprep.subr.mxu0 0.0
        %1585 = vmatpush1.xpose.msra.mxu0 0.0
        %1586 = vmatprep.subr.mxu0 0.0
        %1587 = vmatpush1.xpose.msra.mxu0 0.0
        %1588 = vmatprep.subr.mxu0 0.0
        %1589 = vmatpush1.xpose.msra.mxu0 0.0
        %1590 = vmatprep.subr.mxu0 0.0
        %1591 = vmatpush1.xpose.msra.mxu0 0.0
        %1592 = vmatprep.subr.mxu0 0.0
        %1593 = vmatpush1.xpose.msra.mxu0 0.0
        %1594 = vmatprep.subr.mxu0 0.0
        %1595 = vmatpush1.xpose.msra.mxu0 0.0
        %1596 = vmatprep.subr.mxu0 0.0
        %1597 = vmatpush1.xpose.msra.mxu0 0.0
        %1598 = vmatprep.subr.mxu0 0.0
        %1599 = vmatpush1.xpose.msra.mxu0 0.0
        %1600 = vmatprep.subr.mxu0 0.0
        %1601 = vmatpush1.xpose.msra.mxu0 0.0
        %1602 = vmatprep.subr.mxu0 0.0
        %1603 = vmatpush1.xpose.msra.mxu0 0.0
        %1604 = vmatprep.subr.mxu0 0.0
        %1605 = vmatpush1.xpose.msra.mxu0 0.0
        %1606 = vmatprep.subr.mxu0 0.0
        %1607 = vmatpush1.xpose.msra.mxu0 0.0
        %1608 = vmatprep.subr.mxu0 0.0
        %1609 = vmatpush1.xpose.msra.mxu0 0.0
        %1610 = vmatprep.subr.mxu0 0.0
        %1611 = vmatpush1.xpose.msra.mxu0 0.0
        %1612 = vmatprep.subr.mxu0 0.0
        %1613 = vmatpush1.xpose.msra.mxu0 0.0
        %1614 = vmatprep.subr.mxu0 0.0
        %1615 = vmatpush1.xpose.msra.mxu0 0.0
        %1616 = vmatprep.subr.mxu0 0.0
        %1617 = vmatpush1.xpose.msra.mxu0 0.0
        %1618 = vmatprep.subr.mxu0 0.0
        %1619 = vmatpush1.xpose.msra.mxu0 0.0
        %1620 = vmatprep.subr.mxu0 0.0
        %1621 = vmatpush1.xpose.msra.mxu0 0.0
        %1622 = vmatprep.subr.mxu0 0.0
        %1623 = vmatpush1.xpose.msra.mxu0 0.0
        %1624 = vmatprep.subr.mxu0 0.0
        %1625 = vmatpush1.xpose.msra.mxu0 0.0
        %1626 = vmatprep.subr.mxu0 0.0
        %1627 = vmatpush1.xpose.msra.mxu0 0.0
        %1628 = vmatprep.subr.mxu0 0.0
        %1629 = vmatpush1.xpose.msra.mxu0 0.0
        %1630 = vmatprep.subr.mxu0 0.0
        %1631 = vmatpush1.xpose.msra.mxu0 0.0
        %1632 = vmatprep.subr.mxu0 0.0
        %1633 = vmatpush1.xpose.msra.mxu0 0.0
        %1634 = vmatprep.subr.mxu0 0.0
        %1635 = vmatpush1.xpose.msra.mxu0 0.0
        %1636 = vmatprep.subr.mxu0 0.0
        %1637 = vmatpush1.xpose.msra.mxu0 0.0
        %1638 = vmatprep.subr.mxu0 0.0
        %1639 = vmatpush1.xpose.msra.mxu0 0.0
        %1640 = vmatprep.subr.mxu0 0.0
        %1641 = vmatpush1.xpose.msra.mxu0 0.0
        %1642 = vmatprep.subr.mxu0 0.0
        %1643 = vmatpush1.xpose.msra.mxu0 0.0
        %1644 = vmatprep.mubr.f32.mxu0 0.0
        %1645 = vmatmul.mubr.f32.gmra.mrb[0].mxu0 %v612
        %v1646 = vpop.f32.mrb[0].mxu0
        %v1647 = vadd.f32 0.0, %v1646
        %v1648 = vpop.f32.mrb[0].mxu0
        %1649 = vdwg.mxu0
        %1650 = vmatprep.subr.mxu0 0.0
        %1651 = vmatpush1.xpose.msra.mxu0 %v620
        %1652 = vmatprep.subr.mxu0 0.0
        %1653 = vmatpush1.xpose.msra.mxu0 0.0
        %1654 = vmatprep.subr.mxu0 0.0
        %1655 = vmatpush1.xpose.msra.mxu0 0.0
        %1656 = vmatprep.subr.mxu0 0.0
        %1657 = vmatpush1.xpose.msra.mxu0 0.0
        %1658 = vmatprep.subr.mxu0 0.0
        %1659 = vmatpush1.xpose.msra.mxu0 0.0
        %1660 = vmatprep.subr.mxu0 0.0
        %1661 = vmatpush1.xpose.msra.mxu0 0.0
        %1662 = vmatprep.subr.mxu0 0.0
        %1663 = vmatpush1.xpose.msra.mxu0 0.0
        %1664 = vmatprep.subr.mxu0 0.0
        %1665 = vmatpush1.xpose.msra.mxu0 0.0
        %1666 = vmatprep.subr.mxu0 0.0
        %1667 = vmatpush1.xpose.msra.mxu0 0.0
        %1668 = vmatprep.subr.mxu0 0.0
        %1669 = vmatpush1.xpose.msra.mxu0 0.0
        %1670 = vmatprep.subr.mxu0 0.0
        %1671 = vmatpush1.xpose.msra.mxu0 0.0
        %1672 = vmatprep.subr.mxu0 0.0
        %1673 = vmatpush1.xpose.msra.mxu0 0.0
        %1674 = vmatprep.subr.mxu0 0.0
        %1675 = vmatpush1.xpose.msra.mxu0 0.0
        %1676 = vmatprep.subr.mxu0 0.0
        %1677 = vmatpush1.xpose.msra.mxu0 0.0
        %1678 = vmatprep.subr.mxu0 0.0
        %1679 = vmatpush1.xpose.msra.mxu0 0.0
        %1680 = vmatprep.subr.mxu0 0.0
        %1681 = vmatpush1.xpose.msra.mxu0 0.0
        %1682 = vmatprep.subr.mxu0 0.0
        %1683 = vmatpush1.xpose.msra.mxu0 0.0
        %1684 = vmatprep.subr.mxu0 0.0
        %1685 = vmatpush1.xpose.msra.mxu0 0.0
        %1686 = vmatprep.subr.mxu0 0.0
        %1687 = vmatpush1.xpose.msra.mxu0 0.0
        %1688 = vmatprep.subr.mxu0 0.0
        %1689 = vmatpush1.xpose.msra.mxu0 0.0
        %1690 = vmatprep.subr.mxu0 0.0
        %1691 = vmatpush1.xpose.msra.mxu0 0.0
        %1692 = vmatprep.subr.mxu0 0.0
        %1693 = vmatpush1.xpose.msra.mxu0 0.0
        %1694 = vmatprep.subr.mxu0 0.0
        %1695 = vmatpush1.xpose.msra.mxu0 0.0
        %1696 = vmatprep.subr.mxu0 0.0
        %1697 = vmatpush1.xpose.msra.mxu0 0.0
        %1698 = vmatprep.subr.mxu0 0.0
        %1699 = vmatpush1.xpose.msra.mxu0 0.0
        %1700 = vmatprep.subr.mxu0 0.0
        %1701 = vmatpush1.xpose.msra.mxu0 0.0
        %1702 = vmatprep.subr.mxu0 0.0
        %1703 = vmatpush1.xpose.msra.mxu0 0.0
        %1704 = vmatprep.subr.mxu0 0.0
        %1705 = vmatpush1.xpose.msra.mxu0 0.0
        %1706 = vmatprep.subr.mxu0 0.0
        %1707 = vmatpush1.xpose.msra.mxu0 0.0
        %1708 = vmatprep.subr.mxu0 0.0
        %1709 = vmatpush1.xpose.msra.mxu0 0.0
        %1710 = vmatprep.subr.mxu0 0.0
        %1711 = vmatpush1.xpose.msra.mxu0 0.0
        %1712 = vmatprep.subr.mxu0 0.0
        %1713 = vmatpush1.xpose.msra.mxu0 0.0
        %1714 = vmatprep.mubr.f32.mxu0 0.0
        %1715 = vmatmul.mubr.f32.gmra.mrb[0].mxu0 %v618
        %v1716 = vpop.f32.mrb[0].mxu0
        %v1717 = vadd.f32 0.0, %v1716
        %v1718 = vpop.f32.mrb[0].mxu0
        %1719 = vdwg.mxu0
        %1720 = vmatprep.subr.mxu0 0.0
        %1721 = vmatpush1.xpose.msra.mxu0 %v624
        %1722 = vmatprep.subr.mxu0 0.0
        %1723 = vmatpush1.xpose.msra.mxu0 0.0
        %1724 = vmatprep.subr.mxu0 0.0
        %1725 = vmatpush1.xpose.msra.mxu0 0.0
        %1726 = vmatprep.subr.mxu0 0.0
        %1727 = vmatpush1.xpose.msra.mxu0 0.0
        %1728 = vmatprep.subr.mxu0 0.0
        %1729 = vmatpush1.xpose.msra.mxu0 0.0
        %1730 = vmatprep.subr.mxu0 0.0
        %1731 = vmatpush1.xpose.msra.mxu0 0.0
        %1732 = vmatprep.subr.mxu0 0.0
        %1733 = vmatpush1.xpose.msra.mxu0 0.0
        %1734 = vmatprep.subr.mxu0 0.0
        %1735 = vmatpush1.xpose.msra.mxu0 0.0
        %1736 = vmatprep.subr.mxu0 0.0
        %1737 = vmatpush1.xpose.msra.mxu0 0.0
        %1738 = vmatprep.subr.mxu0 0.0
        %1739 = vmatpush1.xpose.msra.mxu0 0.0
        %1740 = vmatprep.subr.mxu0 0.0
        %1741 = vmatpush1.xpose.msra.mxu0 0.0
        %1742 = vmatprep.subr.mxu0 0.0
        %1743 = vmatpush1.xpose.msra.mxu0 0.0
        %1744 = vmatprep.subr.mxu0 0.0
        %1745 = vmatpush1.xpose.msra.mxu0 0.0
        %1746 = vmatprep.subr.mxu0 0.0
        %1747 = vmatpush1.xpose.msra.mxu0 0.0
        %1748 = vmatprep.subr.mxu0 0.0
        %1749 = vmatpush1.xpose.msra.mxu0 0.0
        %1750 = vmatprep.subr.mxu0 0.0
        %1751 = vmatpush1.xpose.msra.mxu0 0.0
        %1752 = vmatprep.subr.mxu0 0.0
        %1753 = vmatpush1.xpose.msra.mxu0 0.0
        %1754 = vmatprep.subr.mxu0 0.0
        %1755 = vmatpush1.xpose.msra.mxu0 0.0
        %1756 = vmatprep.subr.mxu0 0.0
        %1757 = vmatpush1.xpose.msra.mxu0 0.0
        %1758 = vmatprep.subr.mxu0 0.0
        %1759 = vmatpush1.xpose.msra.mxu0 0.0
        %1760 = vmatprep.subr.mxu0 0.0
        %1761 = vmatpush1.xpose.msra.mxu0 0.0
        %1762 = vmatprep.subr.mxu0 0.0
        %1763 = vmatpush1.xpose.msra.mxu0 0.0
        %1764 = vmatprep.subr.mxu0 0.0
        %1765 = vmatpush1.xpose.msra.mxu0 0.0
        %1766 = vmatprep.subr.mxu0 0.0
        %1767 = vmatpush1.xpose.msra.mxu0 0.0
        %1768 = vmatprep.subr.mxu0 0.0
        %1769 = vmatpush1.xpose.msra.mxu0 0.0
        %1770 = vmatprep.subr.mxu0 0.0
        %1771 = vmatpush1.xpose.msra.mxu0 0.0
        %1772 = vmatprep.subr.mxu0 0.0
        %1773 = vmatpush1.xpose.msra.mxu0 0.0
        %1774 = vmatprep.subr.mxu0 0.0
        %1775 = vmatpush1.xpose.msra.mxu0 0.0
        %1776 = vmatprep.subr.mxu0 0.0
        %1777 = vmatpush1.xpose.msra.mxu0 0.0
        %1778 = vmatprep.subr.mxu0 0.0
        %1779 = vmatpush1.xpose.msra.mxu0 0.0
        %1780 = vmatprep.subr.mxu0 0.0
        %1781 = vmatpush1.xpose.msra.mxu0 0.0
        %1782 = vmatprep.subr.mxu0 0.0
        %1783 = vmatpush1.xpose.msra.mxu0 0.0
        %1784 = vmatprep.mubr.f32.mxu0 0.0
        %1785 = vmatmul.mubr.f32.gmra.mrb[0].mxu0 %v622
        %v1786 = vpop.f32.mrb[0].mxu0
        %v1787 = vadd.f32 0.0, %v1786
        %v1788 = vpop.f32.mrb[0].mxu0
        %1789 = vdwg.mxu0
        %1790 = vmatprep.subr.mxu0 0.0
        %1791 = vmatpush1.xpose.msra.mxu0 %v630
        %1792 = vmatprep.subr.mxu0 0.0
        %1793 = vmatpush1.xpose.msra.mxu0 0.0
        %1794 = vmatprep.subr.mxu0 0.0
        %1795 = vmatpush1.xpose.msra.mxu0 0.0
        %1796 = vmatprep.subr.mxu0 0.0
        %1797 = vmatpush1.xpose.msra.mxu0 0.0
        %1798 = vmatprep.subr.mxu0 0.0
        %1799 = vmatpush1.xpose.msra.mxu0 0.0
        %1800 = vmatprep.subr.mxu0 0.0
        %1801 = vmatpush1.xpose.msra.mxu0 0.0
        %1802 = vmatprep.subr.mxu0 0.0
        %1803 = vmatpush1.xpose.msra.mxu0 0.0
        %1804 = vmatprep.subr.mxu0 0.0
        %1805 = vmatpush1.xpose.msra.mxu0 0.0
        %1806 = vmatprep.subr.mxu0 0.0
        %1807 = vmatpush1.xpose.msra.mxu0 0.0
        %1808 = vmatprep.subr.mxu0 0.0
        %1809 = vmatpush1.xpose.msra.mxu0 0.0
        %1810 = vmatprep.subr.mxu0 0.0
        %1811 = vmatpush1.xpose.msra.mxu0 0.0
        %1812 = vmatprep.subr.mxu0 0.0
        %1813 = vmatpush1.xpose.msra.mxu0 0.0
        %1814 = vmatprep.subr.mxu0 0.0
        %1815 = vmatpush1.xpose.msra.mxu0 0.0
        %1816 = vmatprep.subr.mxu0 0.0
        %1817 = vmatpush1.xpose.msra.mxu0 0.0
        %1818 = vmatprep.subr.mxu0 0.0
        %1819 = vmatpush1.xpose.msra.mxu0 0.0
        %1820 = vmatprep.subr.mxu0 0.0
        %1821 = vmatpush1.xpose.msra.mxu0 0.0
        %1822 = vmatprep.subr.mxu0 0.0
        %1823 = vmatpush1.xpose.msra.mxu0 0.0
        %1824 = vmatprep.subr.mxu0 0.0
        %1825 = vmatpush1.xpose.msra.mxu0 0.0
        %1826 = vmatprep.subr.mxu0 0.0
        %1827 = vmatpush1.xpose.msra.mxu0 0.0
        %1828 = vmatprep.subr.mxu0 0.0
        %1829 = vmatpush1.xpose.msra.mxu0 0.0
        %1830 = vmatprep.subr.mxu0 0.0
        %1831 = vmatpush1.xpose.msra.mxu0 0.0
        %1832 = vmatprep.subr.mxu0 0.0
        %1833 = vmatpush1.xpose.msra.mxu0 0.0
        %1834 = vmatprep.subr.mxu0 0.0
        %1835 = vmatpush1.xpose.msra.mxu0 0.0
        %1836 = vmatprep.subr.mxu0 0.0
        %1837 = vmatpush1.xpose.msra.mxu0 0.0
        %1838 = vmatprep.subr.mxu0 0.0
        %1839 = vmatpush1.xpose.msra.mxu0 0.0
        %1840 = vmatprep.subr.mxu0 0.0
        %1841 = vmatpush1.xpose.msra.mxu0 0.0
        %1842 = vmatprep.subr.mxu0 0.0
        %1843 = vmatpush1.xpose.msra.mxu0 0.0
        %1844 = vmatprep.subr.mxu0 0.0
        %1845 = vmatpush1.xpose.msra.mxu0 0.0
        %1846 = vmatprep.subr.mxu0 0.0
        %1847 = vmatpush1.xpose.msra.mxu0 0.0
        %1848 = vmatprep.subr.mxu0 0.0
        %1849 = vmatpush1.xpose.msra.mxu0 0.0
        %1850 = vmatprep.subr.mxu0 0.0
        %1851 = vmatpush1.xpose.msra.mxu0 0.0
        %1852 = vmatprep.subr.mxu0 0.0
        %1853 = vmatpush1.xpose.msra.mxu0 0.0
        %1854 = vmatprep.mubr.f32.mxu0 0.0
        %1855 = vmatmul.mubr.f32.gmra.mrb[0].mxu0 %v628
        %v1856 = vpop.f32.mrb[0].mxu0
        %v1857 = vadd.f32 0.0, %v1856
        %v1858 = vpop.f32.mrb[0].mxu0
        %1859 = vdwg.mxu0
        %1860 = vmatprep.subr.mxu0 0.0
        %1861 = vmatpush1.xpose.msra.mxu0 %v634
        %1862 = vmatprep.subr.mxu0 0.0
        %1863 = vmatpush1.xpose.msra.mxu0 0.0
        %1864 = vmatprep.subr.mxu0 0.0
        %1865 = vmatpush1.xpose.msra.mxu0 0.0
        %1866 = vmatprep.subr.mxu0 0.0
        %1867 = vmatpush1.xpose.msra.mxu0 0.0
        %1868 = vmatprep.subr.mxu0 0.0
        %1869 = vmatpush1.xpose.msra.mxu0 0.0
        %1870 = vmatprep.subr.mxu0 0.0
        %1871 = vmatpush1.xpose.msra.mxu0 0.0
        %1872 = vmatprep.subr.mxu0 0.0
        %1873 = vmatpush1.xpose.msra.mxu0 0.0
        %1874 = vmatprep.subr.mxu0 0.0
        %1875 = vmatpush1.xpose.msra.mxu0 0.0
        %1876 = vmatprep.subr.mxu0 0.0
        %1877 = vmatpush1.xpose.msra.mxu0 0.0
        %1878 = vmatprep.subr.mxu0 0.0
        %1879 = vmatpush1.xpose.msra.mxu0 0.0
        %1880 = vmatprep.subr.mxu0 0.0
        %1881 = vmatpush1.xpose.msra.mxu0 0.0
        %1882 = vmatprep.subr.mxu0 0.0
        %1883 = vmatpush1.xpose.msra.mxu0 0.0
        %1884 = vmatprep.subr.mxu0 0.0
        %1885 = vmatpush1.xpose.msra.mxu0 0.0
        %1886 = vmatprep.subr.mxu0 0.0
        %1887 = vmatpush1.xpose.msra.mxu0 0.0
        %1888 = vmatprep.subr.mxu0 0.0
        %1889 = vmatpush1.xpose.msra.mxu0 0.0
        %1890 = vmatprep.subr.mxu0 0.0
        %1891 = vmatpush1.xpose.msra.mxu0 0.0
        %1892 = vmatprep.subr.mxu0 0.0
        %1893 = vmatpush1.xpose.msra.mxu0 0.0
        %1894 = vmatprep.subr.mxu0 0.0
        %1895 = vmatpush1.xpose.msra.mxu0 0.0
        %1896 = vmatprep.subr.mxu0 0.0
        %1897 = vmatpush1.xpose.msra.mxu0 0.0
        %1898 = vmatprep.subr.mxu0 0.0
        %1899 = vmatpush1.xpose.msra.mxu0 0.0
        %1900 = vmatprep.subr.mxu0 0.0
        %1901 = vmatpush1.xpose.msra.mxu0 0.0
        %1902 = vmatprep.subr.mxu0 0.0
        %1903 = vmatpush1.xpose.msra.mxu0 0.0
        %1904 = vmatprep.subr.mxu0 0.0
        %1905 = vmatpush1.xpose.msra.mxu0 0.0
        %1906 = vmatprep.subr.mxu0 0.0
        %1907 = vmatpush1.xpose.msra.mxu0 0.0
        %1908 = vmatprep.subr.mxu0 0.0
        %1909 = vmatpush1.xpose.msra.mxu0 0.0
        %1910 = vmatprep.subr.mxu0 0.0
        %1911 = vmatpush1.xpose.msra.mxu0 0.0
        %1912 = vmatprep.subr.mxu0 0.0
        %1913 = vmatpush1.xpose.msra.mxu0 0.0
        %1914 = vmatprep.subr.mxu0 0.0
        %1915 = vmatpush1.xpose.msra.mxu0 0.0
        %1916 = vmatprep.subr.mxu0 0.0
        %1917 = vmatpush1.xpose.msra.mxu0 0.0
        %1918 = vmatprep.subr.mxu0 0.0
        %1919 = vmatpush1.xpose.msra.mxu0 0.0
        %1920 = vmatprep.subr.mxu0 0.0
        %1921 = vmatpush1.xpose.msra.mxu0 0.0
        %1922 = vmatprep.subr.mxu0 0.0
        %1923 = vmatpush1.xpose.msra.mxu0 0.0
        %1924 = vmatprep.mubr.f32.mxu0 0.0
        %1925 = vmatmul.mubr.f32.gmra.mrb[0].mxu0 %v632
        %v1926 = vpop.f32.mrb[0].mxu0
        %v1927 = vadd.f32 0.0, %v1926
        %v1928 = vpop.f32.mrb[0].mxu0
        %1929 = vdwg.mxu0
        %1930 = vmatprep.subr.mxu0 0.0
        %1931 = vmatpush1.xpose.msra.mxu0 %v640
        %1932 = vmatprep.subr.mxu0 0.0
        %1933 = vmatpush1.xpose.msra.mxu0 0.0
        %1934 = vmatprep.subr.mxu0 0.0
        %1935 = vmatpush1.xpose.msra.mxu0 0.0
        %1936 = vmatprep.subr.mxu0 0.0
        %1937 = vmatpush1.xpose.msra.mxu0 0.0
        %1938 = vmatprep.subr.mxu0 0.0
        %1939 = vmatpush1.xpose.msra.mxu0 0.0
        %1940 = vmatprep.subr.mxu0 0.0
        %1941 = vmatpush1.xpose.msra.mxu0 0.0
        %1942 = vmatprep.subr.mxu0 0.0
        %1943 = vmatpush1.xpose.msra.mxu0 0.0
        %1944 = vmatprep.subr.mxu0 0.0
        %1945 = vmatpush1.xpose.msra.mxu0 0.0
        %1946 = vmatprep.subr.mxu0 0.0
        %1947 = vmatpush1.xpose.msra.mxu0 0.0
        %1948 = vmatprep.subr.mxu0 0.0
        %1949 = vmatpush1.xpose.msra.mxu0 0.0
        %1950 = vmatprep.subr.mxu0 0.0
        %1951 = vmatpush1.xpose.msra.mxu0 0.0
        %1952 = vmatprep.subr.mxu0 0.0
        %1953 = vmatpush1.xpose.msra.mxu0 0.0
        %1954 = vmatprep.subr.mxu0 0.0
        %1955 = vmatpush1.xpose.msra.mxu0 0.0
        %1956 = vmatprep.subr.mxu0 0.0
        %1957 = vmatpush1.xpose.msra.mxu0 0.0
        %1958 = vmatprep.subr.mxu0 0.0
        %1959 = vmatpush1.xpose.msra.mxu0 0.0
        %1960 = vmatprep.subr.mxu0 0.0
        %1961 = vmatpush1.xpose.msra.mxu0 0.0
        %1962 = vmatprep.subr.mxu0 0.0
        %1963 = vmatpush1.xpose.msra.mxu0 0.0
        %1964 = vmatprep.subr.mxu0 0.0
        %1965 = vmatpush1.xpose.msra.mxu0 0.0
        %1966 = vmatprep.subr.mxu0 0.0
        %1967 = vmatpush1.xpose.msra.mxu0 0.0
        %1968 = vmatprep.subr.mxu0 0.0
        %1969 = vmatpush1.xpose.msra.mxu0 0.0
        %1970 = vmatprep.subr.mxu0 0.0
        %1971 = vmatpush1.xpose.msra.mxu0 0.0
        %1972 = vmatprep.subr.mxu0 0.0
        %1973 = vmatpush1.xpose.msra.mxu0 0.0
        %1974 = vmatprep.subr.mxu0 0.0
        %1975 = vmatpush1.xpose.msra.mxu0 0.0
        %1976 = vmatprep.subr.mxu0 0.0
        %1977 = vmatpush1.xpose.msra.mxu0 0.0
        %1978 = vmatprep.subr.mxu0 0.0
        %1979 = vmatpush1.xpose.msra.mxu0 0.0
        %1980 = vmatprep.subr.mxu0 0.0
        %1981 = vmatpush1.xpose.msra.mxu0 0.0
        %1982 = vmatprep.subr.mxu0 0.0
        %1983 = vmatpush1.xpose.msra.mxu0 0.0
        %1984 = vmatprep.subr.mxu0 0.0
        %1985 = vmatpush1.xpose.msra.mxu0 0.0
        %1986 = vmatprep.subr.mxu0 0.0
        %1987 = vmatpush1.xpose.msra.mxu0 0.0
        %1988 = vmatprep.subr.mxu0 0.0
        %1989 = vmatpush1.xpose.msra.mxu0 0.0
        %1990 = vmatprep.subr.mxu0 0.0
        %1991 = vmatpush1.xpose.msra.mxu0 0.0
        %1992 = vmatprep.subr.mxu0 0.0
        %1993 = vmatpush1.xpose.msra.mxu0 0.0
        %1994 = vmatprep.mubr.f32.mxu0 0.0
        %1995 = vmatmul.mubr.f32.gmra.mrb[0].mxu0 %v638
        %v1996 = vpop.f32.mrb[0].mxu0
        %v1997 = vadd.f32 0.0, %v1996
        %v1998 = vpop.f32.mrb[0].mxu0
        %1999 = vdwg.mxu0
        %2000 = vmatprep.subr.mxu0 0.0
        %2001 = vmatpush1.xpose.msra.mxu0 %v644
        %2002 = vmatprep.subr.mxu0 0.0
        %2003 = vmatpush1.xpose.msra.mxu0 0.0
        %2004 = vmatprep.subr.mxu0 0.0
        %2005 = vmatpush1.xpose.msra.mxu0 0.0
        %2006 = vmatprep.subr.mxu0 0.0
        %2007 = vmatpush1.xpose.msra.mxu0 0.0
        %2008 = vmatprep.subr.mxu0 0.0
        %2009 = vmatpush1.xpose.msra.mxu0 0.0
        %2010 = vmatprep.subr.mxu0 0.0
        %2011 = vmatpush1.xpose.msra.mxu0 0.0
        %2012 = vmatprep.subr.mxu0 0.0
        %2013 = vmatpush1.xpose.msra.mxu0 0.0
        %2014 = vmatprep.subr.mxu0 0.0
        %2015 = vmatpush1.xpose.msra.mxu0 0.0
        %2016 = vmatprep.subr.mxu0 0.0
        %2017 = vmatpush1.xpose.msra.mxu0 0.0
        %2018 = vmatprep.subr.mxu0 0.0
        %2019 = vmatpush1.xpose.msra.mxu0 0.0
        %2020 = vmatprep.subr.mxu0 0.0
        %2021 = vmatpush1.xpose.msra.mxu0 0.0
        %2022 = vmatprep.subr.mxu0 0.0
        %2023 = vmatpush1.xpose.msra.mxu0 0.0
        %2024 = vmatprep.subr.mxu0 0.0
        %2025 = vmatpush1.xpose.msra.mxu0 0.0
        %2026 = vmatprep.subr.mxu0 0.0
        %2027 = vmatpush1.xpose.msra.mxu0 0.0
        %2028 = vmatprep.subr.mxu0 0.0
        %2029 = vmatpush1.xpose.msra.mxu0 0.0
        %2030 = vmatprep.subr.mxu0 0.0
        %2031 = vmatpush1.xpose.msra.mxu0 0.0
        %2032 = vmatprep.subr.mxu0 0.0
        %2033 = vmatpush1.xpose.msra.mxu0 0.0
        %2034 = vmatprep.subr.mxu0 0.0
        %2035 = vmatpush1.xpose.msra.mxu0 0.0
        %2036 = vmatprep.subr.mxu0 0.0
        %2037 = vmatpush1.xpose.msra.mxu0 0.0
        %2038 = vmatprep.subr.mxu0 0.0
        %2039 = vmatpush1.xpose.msra.mxu0 0.0
        %2040 = vmatprep.subr.mxu0 0.0
        %2041 = vmatpush1.xpose.msra.mxu0 0.0
        %2042 = vmatprep.subr.mxu0 0.0
        %2043 = vmatpush1.xpose.msra.mxu0 0.0
        %2044 = vmatprep.subr.mxu0 0.0
        %2045 = vmatpush1.xpose.msra.mxu0 0.0
        %2046 = vmatprep.subr.mxu0 0.0
        %2047 = vmatpush1.xpose.msra.mxu0 0.0
        %2048 = vmatprep.subr.mxu0 0.0
        %2049 = vmatpush1.xpose.msra.mxu0 0.0
        %2050 = vmatprep.subr.mxu0 0.0
        %2051 = vmatpush1.xpose.msra.mxu0 0.0
        %2052 = vmatprep.subr.mxu0 0.0
        %2053 = vmatpush1.xpose.msra.mxu0 0.0
        %2054 = vmatprep.subr.mxu0 0.0
        %2055 = vmatpush1.xpose.msra.mxu0 0.0
        %2056 = vmatprep.subr.mxu0 0.0
        %2057 = vmatpush1.xpose.msra.mxu0 0.0
        %2058 = vmatprep.subr.mxu0 0.0
        %2059 = vmatpush1.xpose.msra.mxu0 0.0
        %2060 = vmatprep.subr.mxu0 0.0
        %2061 = vmatpush1.xpose.msra.mxu0 0.0
        %2062 = vmatprep.subr.mxu0 0.0
        %2063 = vmatpush1.xpose.msra.mxu0 0.0
        %2064 = vmatprep.mubr.f32.mxu0 0.0
        %2065 = vmatmul.mubr.f32.gmra.mrb[0].mxu0 %v642
        %v2066 = vpop.f32.mrb[0].mxu0
        %v2067 = vadd.f32 0.0, %v2066
        %v2068 = vpop.f32.mrb[0].mxu0
        %2069 = vdwg.mxu0
        %2070 = vmatprep.subr.mxu0 0.0
        %2071 = vmatpush1.xpose.msra.mxu0 %v650
        %2072 = vmatprep.subr.mxu0 0.0
        %2073 = vmatpush1.xpose.msra.mxu0 0.0
        %2074 = vmatprep.subr.mxu0 0.0
        %2075 = vmatpush1.xpose.msra.mxu0 0.0
        %2076 = vmatprep.subr.mxu0 0.0
        %2077 = vmatpush1.xpose.msra.mxu0 0.0
        %2078 = vmatprep.subr.mxu0 0.0
        %2079 = vmatpush1.xpose.msra.mxu0 0.0
        %2080 = vmatprep.subr.mxu0 0.0
        %2081 = vmatpush1.xpose.msra.mxu0 0.0
        %2082 = vmatprep.subr.mxu0 0.0
        %2083 = vmatpush1.xpose.msra.mxu0 0.0
        %2084 = vmatprep.subr.mxu0 0.0
        %2085 = vmatpush1.xpose.msra.mxu0 0.0
        %2086 = vmatprep.subr.mxu0 0.0
        %2087 = vmatpush1.xpose.msra.mxu0 0.0
        %2088 = vmatprep.subr.mxu0 0.0
        %2089 = vmatpush1.xpose.msra.mxu0 0.0
        %2090 = vmatprep.subr.mxu0 0.0
        %2091 = vmatpush1.xpose.msra.mxu0 0.0
        %2092 = vmatprep.subr.mxu0 0.0
        %2093 = vmatpush1.xpose.msra.mxu0 0.0
        %2094 = vmatprep.subr.mxu0 0.0
        %2095 = vmatpush1.xpose.msra.mxu0 0.0
        %2096 = vmatprep.subr.mxu0 0.0
        %2097 = vmatpush1.xpose.msra.mxu0 0.0
        %2098 = vmatprep.subr.mxu0 0.0
        %2099 = vmatpush1.xpose.msra.mxu0 0.0
        %2100 = vmatprep.subr.mxu0 0.0
        %2101 = vmatpush1.xpose.msra.mxu0 0.0
        %2102 = vmatprep.subr.mxu0 0.0
        %2103 = vmatpush1.xpose.msra.mxu0 0.0
        %2104 = vmatprep.subr.mxu0 0.0
        %2105 = vmatpush1.xpose.msra.mxu0 0.0
        %2106 = vmatprep.subr.mxu0 0.0
        %2107 = vmatpush1.xpose.msra.mxu0 0.0
        %2108 = vmatprep.subr.mxu0 0.0
        %2109 = vmatpush1.xpose.msra.mxu0 0.0
        %2110 = vmatprep.subr.mxu0 0.0
        %2111 = vmatpush1.xpose.msra.mxu0 0.0
        %2112 = vmatprep.subr.mxu0 0.0
        %2113 = vmatpush1.xpose.msra.mxu0 0.0
        %2114 = vmatprep.subr.mxu0 0.0
        %2115 = vmatpush1.xpose.msra.mxu0 0.0
        %2116 = vmatprep.subr.mxu0 0.0
        %2117 = vmatpush1.xpose.msra.mxu0 0.0
        %2118 = vmatprep.subr.mxu0 0.0
        %2119 = vmatpush1.xpose.msra.mxu0 0.0
        %2120 = vmatprep.subr.mxu0 0.0
        %2121 = vmatpush1.xpose.msra.mxu0 0.0
        %2122 = vmatprep.subr.mxu0 0.0
        %2123 = vmatpush1.xpose.msra.mxu0 0.0
        %2124 = vmatprep.subr.mxu0 0.0
        %2125 = vmatpush1.xpose.msra.mxu0 0.0
        %2126 = vmatprep.subr.mxu0 0.0
        %2127 = vmatpush1.xpose.msra.mxu0 0.0
        %2128 = vmatprep.subr.mxu0 0.0
        %2129 = vmatpush1.xpose.msra.mxu0 0.0
        %2130 = vmatprep.subr.mxu0 0.0
        %2131 = vmatpush1.xpose.msra.mxu0 0.0
        %2132 = vmatprep.subr.mxu0 0.0
        %2133 = vmatpush1.xpose.msra.mxu0 0.0
        %2134 = vmatprep.mubr.f32.mxu0 0.0
        %2135 = vmatmul.mubr.f32.gmra.mrb[0].mxu0 %v648
        %v2136 = vpop.f32.mrb[0].mxu0
        %v2137 = vadd.f32 0.0, %v2136
        %v2138 = vpop.f32.mrb[0].mxu0
        %2139 = vdwg.mxu0
        %2140 = vmatprep.subr.mxu0 0.0
        %2141 = vmatpush1.xpose.msra.mxu0 %v654
        %2142 = vmatprep.subr.mxu0 0.0
        %2143 = vmatpush1.xpose.msra.mxu0 0.0
        %2144 = vmatprep.subr.mxu0 0.0
        %2145 = vmatpush1.xpose.msra.mxu0 0.0
        %2146 = vmatprep.subr.mxu0 0.0
        %2147 = vmatpush1.xpose.msra.mxu0 0.0
        %2148 = vmatprep.subr.mxu0 0.0
        %2149 = vmatpush1.xpose.msra.mxu0 0.0
        %2150 = vmatprep.subr.mxu0 0.0
        %2151 = vmatpush1.xpose.msra.mxu0 0.0
        %2152 = vmatprep.subr.mxu0 0.0
        %2153 = vmatpush1.xpose.msra.mxu0 0.0
        %2154 = vmatprep.subr.mxu0 0.0
        %2155 = vmatpush1.xpose.msra.mxu0 0.0
        %2156 = vmatprep.subr.mxu0 0.0
        %2157 = vmatpush1.xpose.msra.mxu0 0.0
        %2158 = vmatprep.subr.mxu0 0.0
        %2159 = vmatpush1.xpose.msra.mxu0 0.0
        %2160 = vmatprep.subr.mxu0 0.0
        %2161 = vmatpush1.xpose.msra.mxu0 0.0
        %2162 = vmatprep.subr.mxu0 0.0
        %2163 = vmatpush1.xpose.msra.mxu0 0.0
        %2164 = vmatprep.subr.mxu0 0.0
        %2165 = vmatpush1.xpose.msra.mxu0 0.0
        %2166 = vmatprep.subr.mxu0 0.0
        %2167 = vmatpush1.xpose.msra.mxu0 0.0
        %2168 = vmatprep.subr.mxu0 0.0
        %2169 = vmatpush1.xpose.msra.mxu0 0.0
        %2170 = vmatprep.subr.mxu0 0.0
        %2171 = vmatpush1.xpose.msra.mxu0 0.0
        %2172 = vmatprep.subr.mxu0 0.0
        %2173 = vmatpush1.xpose.msra.mxu0 0.0
        %2174 = vmatprep.subr.mxu0 0.0
        %2175 = vmatpush1.xpose.msra.mxu0 0.0
        %2176 = vmatprep.subr.mxu0 0.0
        %2177 = vmatpush1.xpose.msra.mxu0 0.0
        %2178 = vmatprep.subr.mxu0 0.0
        %2179 = vmatpush1.xpose.msra.mxu0 0.0
        %2180 = vmatprep.subr.mxu0 0.0
        %2181 = vmatpush1.xpose.msra.mxu0 0.0
        %2182 = vmatprep.subr.mxu0 0.0
        %2183 = vmatpush1.xpose.msra.mxu0 0.0
        %2184 = vmatprep.subr.mxu0 0.0
        %2185 = vmatpush1.xpose.msra.mxu0 0.0
        %2186 = vmatprep.subr.mxu0 0.0
        %2187 = vmatpush1.xpose.msra.mxu0 0.0
        %2188 = vmatprep.subr.mxu0 0.0
        %2189 = vmatpush1.xpose.msra.mxu0 0.0
        %2190 = vmatprep.subr.mxu0 0.0
        %2191 = vmatpush1.xpose.msra.mxu0 0.0
        %2192 = vmatprep.subr.mxu0 0.0
        %2193 = vmatpush1.xpose.msra.mxu0 0.0
        %2194 = vmatprep.subr.mxu0 0.0
        %2195 = vmatpush1.xpose.msra.mxu0 0.0
        %2196 = vmatprep.subr.mxu0 0.0
        %2197 = vmatpush1.xpose.msra.mxu0 0.0
        %2198 = vmatprep.subr.mxu0 0.0
        %2199 = vmatpush1.xpose.msra.mxu0 0.0
        %2200 = vmatprep.subr.mxu0 0.0
        %2201 = vmatpush1.xpose.msra.mxu0 0.0
        %2202 = vmatprep.subr.mxu0 0.0
        %2203 = vmatpush1.xpose.msra.mxu0 0.0
        %2204 = vmatprep.mubr.f32.mxu0 0.0
        %2205 = vmatmul.mubr.f32.gmra.mrb[0].mxu0 %v652
        %v2206 = vpop.f32.mrb[0].mxu0
        %v2207 = vadd.f32 0.0, %v2206
        %v2208 = vpop.f32.mrb[0].mxu0
        %2209 = vdwg.mxu0
        %2210 = vmatprep.subr.mxu0 0.0
        %2211 = vmatpush1.xpose.msra.mxu0 %v660
        %2212 = vmatprep.subr.mxu0 0.0
        %2213 = vmatpush1.xpose.msra.mxu0 0.0
        %2214 = vmatprep.subr.mxu0 0.0
        %2215 = vmatpush1.xpose.msra.mxu0 0.0
        %2216 = vmatprep.subr.mxu0 0.0
        %2217 = vmatpush1.xpose.msra.mxu0 0.0
        %2218 = vmatprep.subr.mxu0 0.0
        %2219 = vmatpush1.xpose.msra.mxu0 0.0
        %2220 = vmatprep.subr.mxu0 0.0
        %2221 = vmatpush1.xpose.msra.mxu0 0.0
        %2222 = vmatprep.subr.mxu0 0.0
        %2223 = vmatpush1.xpose.msra.mxu0 0.0
        %2224 = vmatprep.subr.mxu0 0.0
        %2225 = vmatpush1.xpose.msra.mxu0 0.0
        %2226 = vmatprep.subr.mxu0 0.0
        %2227 = vmatpush1.xpose.msra.mxu0 0.0
        %2228 = vmatprep.subr.mxu0 0.0
        %2229 = vmatpush1.xpose.msra.mxu0 0.0
        %2230 = vmatprep.subr.mxu0 0.0
        %2231 = vmatpush1.xpose.msra.mxu0 0.0
        %2232 = vmatprep.subr.mxu0 0.0
        %2233 = vmatpush1.xpose.msra.mxu0 0.0
        %2234 = vmatprep.subr.mxu0 0.0
        %2235 = vmatpush1.xpose.msra.mxu0 0.0
        %2236 = vmatprep.subr.mxu0 0.0
        %2237 = vmatpush1.xpose.msra.mxu0 0.0
        %2238 = vmatprep.subr.mxu0 0.0
        %2239 = vmatpush1.xpose.msra.mxu0 0.0
        %2240 = vmatprep.subr.mxu0 0.0
        %2241 = vmatpush1.xpose.msra.mxu0 0.0
        %2242 = vmatprep.subr.mxu0 0.0
        %2243 = vmatpush1.xpose.msra.mxu0 0.0
        %2244 = vmatprep.subr.mxu0 0.0
        %2245 = vmatpush1.xpose.msra.mxu0 0.0
        %2246 = vmatprep.subr.mxu0 0.0
        %2247 = vmatpush1.xpose.msra.mxu0 0.0
        %2248 = vmatprep.subr.mxu0 0.0
        %2249 = vmatpush1.xpose.msra.mxu0 0.0
        %2250 = vmatprep.subr.mxu0 0.0
        %2251 = vmatpush1.xpose.msra.mxu0 0.0
        %2252 = vmatprep.subr.mxu0 0.0
        %2253 = vmatpush1.xpose.msra.mxu0 0.0
        %2254 = vmatprep.subr.mxu0 0.0
        %2255 = vmatpush1.xpose.msra.mxu0 0.0
        %2256 = vmatprep.subr.mxu0 0.0
        %2257 = vmatpush1.xpose.msra.mxu0 0.0
        %2258 = vmatprep.subr.mxu0 0.0
        %2259 = vmatpush1.xpose.msra.mxu0 0.0
        %2260 = vmatprep.subr.mxu0 0.0
        %2261 = vmatpush1.xpose.msra.mxu0 0.0
        %2262 = vmatprep.subr.mxu0 0.0
        %2263 = vmatpush1.xpose.msra.mxu0 0.0
        %2264 = vmatprep.subr.mxu0 0.0
        %2265 = vmatpush1.xpose.msra.mxu0 0.0
        %2266 = vmatprep.subr.mxu0 0.0
        %2267 = vmatpush1.xpose.msra.mxu0 0.0
        %2268 = vmatprep.subr.mxu0 0.0
        %2269 = vmatpush1.xpose.msra.mxu0 0.0
        %2270 = vmatprep.subr.mxu0 0.0
        %2271 = vmatpush1.xpose.msra.mxu0 0.0
        %2272 = vmatprep.subr.mxu0 0.0
        %2273 = vmatpush1.xpose.msra.mxu0 0.0
        %2274 = vmatprep.mubr.f32.mxu0 0.0
        %2275 = vmatmul.mubr.f32.gmra.mrb[0].mxu0 %v658
        %v2276 = vpop.f32.mrb[0].mxu0
        %v2277 = vadd.f32 0.0, %v2276
        %v2278 = vpop.f32.mrb[0].mxu0
        %2279 = vdwg.mxu0
        %2280 = vmatprep.subr.mxu0 0.0
        %2281 = vmatpush1.xpose.msra.mxu0 %v664
        %2282 = vmatprep.subr.mxu0 0.0
        %2283 = vmatpush1.xpose.msra.mxu0 0.0
        %2284 = vmatprep.subr.mxu0 0.0
        %2285 = vmatpush1.xpose.msra.mxu0 0.0
        %2286 = vmatprep.subr.mxu0 0.0
        %2287 = vmatpush1.xpose.msra.mxu0 0.0
        %2288 = vmatprep.subr.mxu0 0.0
        %2289 = vmatpush1.xpose.msra.mxu0 0.0
        %2290 = vmatprep.subr.mxu0 0.0
        %2291 = vmatpush1.xpose.msra.mxu0 0.0
        %2292 = vmatprep.subr.mxu0 0.0
        %2293 = vmatpush1.xpose.msra.mxu0 0.0
        %2294 = vmatprep.subr.mxu0 0.0
        %2295 = vmatpush1.xpose.msra.mxu0 0.0
        %2296 = vmatprep.subr.mxu0 0.0
        %2297 = vmatpush1.xpose.msra.mxu0 0.0
        %2298 = vmatprep.subr.mxu0 0.0
        %2299 = vmatpush1.xpose.msra.mxu0 0.0
        %2300 = vmatprep.subr.mxu0 0.0
        %2301 = vmatpush1.xpose.msra.mxu0 0.0
        %2302 = vmatprep.subr.mxu0 0.0
        %2303 = vmatpush1.xpose.msra.mxu0 0.0
        %2304 = vmatprep.subr.mxu0 0.0
        %2305 = vmatpush1.xpose.msra.mxu0 0.0
        %2306 = vmatprep.subr.mxu0 0.0
        %2307 = vmatpush1.xpose.msra.mxu0 0.0
        %2308 = vmatprep.subr.mxu0 0.0
        %2309 = vmatpush1.xpose.msra.mxu0 0.0
        %2310 = vmatprep.subr.mxu0 0.0
        %2311 = vmatpush1.xpose.msra.mxu0 0.0
        %2312 = vmatprep.subr.mxu0 0.0
        %2313 = vmatpush1.xpose.msra.mxu0 0.0
        %2314 = vmatprep.subr.mxu0 0.0
        %2315 = vmatpush1.xpose.msra.mxu0 0.0
        %2316 = vmatprep.subr.mxu0 0.0
        %2317 = vmatpush1.xpose.msra.mxu0 0.0
        %2318 = vmatprep.subr.mxu0 0.0
        %2319 = vmatpush1.xpose.msra.mxu0 0.0
        %2320 = vmatprep.subr.mxu0 0.0
        %2321 = vmatpush1.xpose.msra.mxu0 0.0
        %2322 = vmatprep.subr.mxu0 0.0
        %2323 = vmatpush1.xpose.msra.mxu0 0.0
        %2324 = vmatprep.subr.mxu0 0.0
        %2325 = vmatpush1.xpose.msra.mxu0 0.0
        %2326 = vmatprep.subr.mxu0 0.0
        %2327 = vmatpush1.xpose.msra.mxu0 0.0
        %2328 = vmatprep.subr.mxu0 0.0
        %2329 = vmatpush1.xpose.msra.mxu0 0.0
        %2330 = vmatprep.subr.mxu0 0.0
        %2331 = vmatpush1.xpose.msra.mxu0 0.0
        %2332 = vmatprep.subr.mxu0 0.0
        %2333 = vmatpush1.xpose.msra.mxu0 0.0
        %2334 = vmatprep.subr.mxu0 0.0
        %2335 = vmatpush1.xpose.msra.mxu0 0.0
        %2336 = vmatprep.subr.mxu0 0.0
        %2337 = vmatpush1.xpose.msra.mxu0 0.0
        %2338 = vmatprep.subr.mxu0 0.0
        %2339 = vmatpush1.xpose.msra.mxu0 0.0
        %2340 = vmatprep.subr.mxu0 0.0
        %2341 = vmatpush1.xpose.msra.mxu0 0.0
        %2342 = vmatprep.subr.mxu0 0.0
        %2343 = vmatpush1.xpose.msra.mxu0 0.0
        %2344 = vmatprep.mubr.f32.mxu0 0.0
        %2345 = vmatmul.mubr.f32.gmra.mrb[0].mxu0 %v662
        %v2346 = vpop.f32.mrb[0].mxu0
        %v2347 = vadd.f32 0.0, %v2346
        %v2348 = vpop.f32.mrb[0].mxu0
        %2349 = vdwg.mxu0
        %2350 = vmatprep.subr.mxu0 0.0
        %2351 = vmatpush1.xpose.msra.mxu0 %v670
        %2352 = vmatprep.subr.mxu0 0.0
        %2353 = vmatpush1.xpose.msra.mxu0 0.0
        %2354 = vmatprep.subr.mxu0 0.0
        %2355 = vmatpush1.xpose.msra.mxu0 0.0
        %2356 = vmatprep.subr.mxu0 0.0
        %2357 = vmatpush1.xpose.msra.mxu0 0.0
        %2358 = vmatprep.subr.mxu0 0.0
        %2359 = vmatpush1.xpose.msra.mxu0 0.0
        %2360 = vmatprep.subr.mxu0 0.0
        %2361 = vmatpush1.xpose.msra.mxu0 0.0
        %2362 = vmatprep.subr.mxu0 0.0
        %2363 = vmatpush1.xpose.msra.mxu0 0.0
        %2364 = vmatprep.subr.mxu0 0.0
        %2365 = vmatpush1.xpose.msra.mxu0 0.0
        %2366 = vmatprep.subr.mxu0 0.0
        %2367 = vmatpush1.xpose.msra.mxu0 0.0
        %2368 = vmatprep.subr.mxu0 0.0
        %2369 = vmatpush1.xpose.msra.mxu0 0.0
        %2370 = vmatprep.subr.mxu0 0.0
        %2371 = vmatpush1.xpose.msra.mxu0 0.0
        %2372 = vmatprep.subr.mxu0 0.0
        %2373 = vmatpush1.xpose.msra.mxu0 0.0
        %2374 = vmatprep.subr.mxu0 0.0
        %2375 = vmatpush1.xpose.msra.mxu0 0.0
        %2376 = vmatprep.subr.mxu0 0.0
        %2377 = vmatpush1.xpose.msra.mxu0 0.0
        %2378 = vmatprep.subr.mxu0 0.0
        %2379 = vmatpush1.xpose.msra.mxu0 0.0
        %2380 = vmatprep.subr.mxu0 0.0
        %2381 = vmatpush1.xpose.msra.mxu0 0.0
        %2382 = vmatprep.subr.mxu0 0.0
        %2383 = vmatpush1.xpose.msra.mxu0 0.0
        %2384 = vmatprep.subr.mxu0 0.0
        %2385 = vmatpush1.xpose.msra.mxu0 0.0
        %2386 = vmatprep.subr.mxu0 0.0
        %2387 = vmatpush1.xpose.msra.mxu0 0.0
        %2388 = vmatprep.subr.mxu0 0.0
        %2389 = vmatpush1.xpose.msra.mxu0 0.0
        %2390 = vmatprep.subr.mxu0 0.0
        %2391 = vmatpush1.xpose.msra.mxu0 0.0
        %2392 = vmatprep.subr.mxu0 0.0
        %2393 = vmatpush1.xpose.msra.mxu0 0.0
        %2394 = vmatprep.subr.mxu0 0.0
        %2395 = vmatpush1.xpose.msra.mxu0 0.0
        %2396 = vmatprep.subr.mxu0 0.0
        %2397 = vmatpush1.xpose.msra.mxu0 0.0
        %2398 = vmatprep.subr.mxu0 0.0
        %2399 = vmatpush1.xpose.msra.mxu0 0.0
        %2400 = vmatprep.subr.mxu0 0.0
        %2401 = vmatpush1.xpose.msra.mxu0 0.0
        %2402 = vmatprep.subr.mxu0 0.0
        %2403 = vmatpush1.xpose.msra.mxu0 0.0
        %2404 = vmatprep.subr.mxu0 0.0
        %2405 = vmatpush1.xpose.msra.mxu0 0.0
        %2406 = vmatprep.subr.mxu0 0.0
        %2407 = vmatpush1.xpose.msra.mxu0 0.0
        %2408 = vmatprep.subr.mxu0 0.0
        %2409 = vmatpush1.xpose.msra.mxu0 0.0
        %2410 = vmatprep.subr.mxu0 0.0
        %2411 = vmatpush1.xpose.msra.mxu0 0.0
        %2412 = vmatprep.subr.mxu0 0.0
        %2413 = vmatpush1.xpose.msra.mxu0 0.0
        %2414 = vmatprep.mubr.f32.mxu0 0.0
        %2415 = vmatmul.mubr.f32.gmra.mrb[0].mxu0 %v668
        %v2416 = vpop.f32.mrb[0].mxu0
        %v2417 = vadd.f32 0.0, %v2416
        %v2418 = vpop.f32.mrb[0].mxu0
        %2419 = vdwg.mxu0
        %2420 = vmatprep.subr.mxu0 0.0
        %2421 = vmatpush1.xpose.msra.mxu0 %v674
        %2422 = vmatprep.subr.mxu0 0.0
        %2423 = vmatpush1.xpose.msra.mxu0 0.0
        %2424 = vmatprep.subr.mxu0 0.0
        %2425 = vmatpush1.xpose.msra.mxu0 0.0
        %2426 = vmatprep.subr.mxu0 0.0
        %2427 = vmatpush1.xpose.msra.mxu0 0.0
        %2428 = vmatprep.subr.mxu0 0.0
        %2429 = vmatpush1.xpose.msra.mxu0 0.0
        %2430 = vmatprep.subr.mxu0 0.0
        %2431 = vmatpush1.xpose.msra.mxu0 0.0
        %2432 = vmatprep.subr.mxu0 0.0
        %2433 = vmatpush1.xpose.msra.mxu0 0.0
        %2434 = vmatprep.subr.mxu0 0.0
        %2435 = vmatpush1.xpose.msra.mxu0 0.0
        %2436 = vmatprep.subr.mxu0 0.0
        %2437 = vmatpush1.xpose.msra.mxu0 0.0
        %2438 = vmatprep.subr.mxu0 0.0
        %2439 = vmatpush1.xpose.msra.mxu0 0.0
        %2440 = vmatprep.subr.mxu0 0.0
        %2441 = vmatpush1.xpose.msra.mxu0 0.0
        %2442 = vmatprep.subr.mxu0 0.0
        %2443 = vmatpush1.xpose.msra.mxu0 0.0
        %2444 = vmatprep.subr.mxu0 0.0
        %2445 = vmatpush1.xpose.msra.mxu0 0.0
        %2446 = vmatprep.subr.mxu0 0.0
        %2447 = vmatpush1.xpose.msra.mxu0 0.0
        %2448 = vmatprep.subr.mxu0 0.0
        %2449 = vmatpush1.xpose.msra.mxu0 0.0
        %2450 = vmatprep.subr.mxu0 0.0
        %2451 = vmatpush1.xpose.msra.mxu0 0.0
        %2452 = vmatprep.subr.mxu0 0.0
        %2453 = vmatpush1.xpose.msra.mxu0 0.0
        %2454 = vmatprep.subr.mxu0 0.0
        %2455 = vmatpush1.xpose.msra.mxu0 0.0
        %2456 = vmatprep.subr.mxu0 0.0
        %2457 = vmatpush1.xpose.msra.mxu0 0.0
        %2458 = vmatprep.subr.mxu0 0.0
        %2459 = vmatpush1.xpose.msra.mxu0 0.0
        %2460 = vmatprep.subr.mxu0 0.0
        %2461 = vmatpush1.xpose.msra.mxu0 0.0
        %2462 = vmatprep.subr.mxu0 0.0
        %2463 = vmatpush1.xpose.msra.mxu0 0.0
        %2464 = vmatprep.subr.mxu0 0.0
        %2465 = vmatpush1.xpose.msra.mxu0 0.0
        %2466 = vmatprep.subr.mxu0 0.0
        %2467 = vmatpush1.xpose.msra.mxu0 0.0
        %2468 = vmatprep.subr.mxu0 0.0
        %2469 = vmatpush1.xpose.msra.mxu0 0.0
        %2470 = vmatprep.subr.mxu0 0.0
        %2471 = vmatpush1.xpose.msra.mxu0 0.0
        %2472 = vmatprep.subr.mxu0 0.0
        %2473 = vmatpush1.xpose.msra.mxu0 0.0
        %2474 = vmatprep.subr.mxu0 0.0
        %2475 = vmatpush1.xpose.msra.mxu0 0.0
        %2476 = vmatprep.subr.mxu0 0.0
        %2477 = vmatpush1.xpose.msra.mxu0 0.0
        %2478 = vmatprep.subr.mxu0 0.0
        %2479 = vmatpush1.xpose.msra.mxu0 0.0
        %2480 = vmatprep.subr.mxu0 0.0
        %2481 = vmatpush1.xpose.msra.mxu0 0.0
        %2482 = vmatprep.subr.mxu0 0.0
        %2483 = vmatpush1.xpose.msra.mxu0 0.0
        %2484 = vmatprep.mubr.f32.mxu0 0.0
        %2485 = vmatmul.mubr.f32.gmra.mrb[0].mxu0 %v672
        %v2486 = vpop.f32.mrb[0].mxu0
        %v2487 = vadd.f32 0.0, %v2486
        %v2488 = vpop.f32.mrb[0].mxu0
        %2489 = vdwg.mxu0
        %2490 = vmatprep.subr.mxu0 0.0
        %2491 = vmatpush1.xpose.msra.mxu0 %v680
        %2492 = vmatprep.subr.mxu0 0.0
        %2493 = vmatpush1.xpose.msra.mxu0 0.0
        %2494 = vmatprep.subr.mxu0 0.0
        %2495 = vmatpush1.xpose.msra.mxu0 0.0
        %2496 = vmatprep.subr.mxu0 0.0
        %2497 = vmatpush1.xpose.msra.mxu0 0.0
        %2498 = vmatprep.subr.mxu0 0.0
        %2499 = vmatpush1.xpose.msra.mxu0 0.0
        %2500 = vmatprep.subr.mxu0 0.0
        %2501 = vmatpush1.xpose.msra.mxu0 0.0
        %2502 = vmatprep.subr.mxu0 0.0
        %2503 = vmatpush1.xpose.msra.mxu0 0.0
        %2504 = vmatprep.subr.mxu0 0.0
        %2505 = vmatpush1.xpose.msra.mxu0 0.0
        %2506 = vmatprep.subr.mxu0 0.0
        %2507 = vmatpush1.xpose.msra.mxu0 0.0
        %2508 = vmatprep.subr.mxu0 0.0
        %2509 = vmatpush1.xpose.msra.mxu0 0.0
        %2510 = vmatprep.subr.mxu0 0.0
        %2511 = vmatpush1.xpose.msra.mxu0 0.0
        %2512 = vmatprep.subr.mxu0 0.0
        %2513 = vmatpush1.xpose.msra.mxu0 0.0
        %2514 = vmatprep.subr.mxu0 0.0
        %2515 = vmatpush1.xpose.msra.mxu0 0.0
        %2516 = vmatprep.subr.mxu0 0.0
        %2517 = vmatpush1.xpose.msra.mxu0 0.0
        %2518 = vmatprep.subr.mxu0 0.0
        %2519 = vmatpush1.xpose.msra.mxu0 0.0
        %2520 = vmatprep.subr.mxu0 0.0
        %2521 = vmatpush1.xpose.msra.mxu0 0.0
        %2522 = vmatprep.subr.mxu0 0.0
        %2523 = vmatpush1.xpose.msra.mxu0 0.0
        %2524 = vmatprep.subr.mxu0 0.0
        %2525 = vmatpush1.xpose.msra.mxu0 0.0
        %2526 = vmatprep.subr.mxu0 0.0
        %2527 = vmatpush1.xpose.msra.mxu0 0.0
        %2528 = vmatprep.subr.mxu0 0.0
        %2529 = vmatpush1.xpose.msra.mxu0 0.0
        %2530 = vmatprep.subr.mxu0 0.0
        %2531 = vmatpush1.xpose.msra.mxu0 0.0
        %2532 = vmatprep.subr.mxu0 0.0
        %2533 = vmatpush1.xpose.msra.mxu0 0.0
        %2534 = vmatprep.subr.mxu0 0.0
        %2535 = vmatpush1.xpose.msra.mxu0 0.0
        %2536 = vmatprep.subr.mxu0 0.0
        %2537 = vmatpush1.xpose.msra.mxu0 0.0
        %2538 = vmatprep.subr.mxu0 0.0
        %2539 = vmatpush1.xpose.msra.mxu0 0.0
        %2540 = vmatprep.subr.mxu0 0.0
        %2541 = vmatpush1.xpose.msra.mxu0 0.0
        %2542 = vmatprep.subr.mxu0 0.0
        %2543 = vmatpush1.xpose.msra.mxu0 0.0
        %2544 = vmatprep.subr.mxu0 0.0
        %2545 = vmatpush1.xpose.msra.mxu0 0.0
        %2546 = vmatprep.subr.mxu0 0.0
        %2547 = vmatpush1.xpose.msra.mxu0 0.0
        %2548 = vmatprep.subr.mxu0 0.0
        %2549 = vmatpush1.xpose.msra.mxu0 0.0
        %2550 = vmatprep.subr.mxu0 0.0
        %2551 = vmatpush1.xpose.msra.mxu0 0.0
        %2552 = vmatprep.subr.mxu0 0.0
        %2553 = vmatpush1.xpose.msra.mxu0 0.0
        %2554 = vmatprep.mubr.f32.mxu0 0.0
        %2555 = vmatmul.mubr.f32.gmra.mrb[0].mxu0 %v678
        %v2556 = vpop.f32.mrb[0].mxu0
        %v2557 = vadd.f32 0.0, %v2556
        %v2558 = vpop.f32.mrb[0].mxu0
        %2559 = vdwg.mxu0
        %2560 = vmatprep.subr.mxu0 0.0
        %2561 = vmatpush1.xpose.msra.mxu0 %v684
        %2562 = vmatprep.subr.mxu0 0.0
        %2563 = vmatpush1.xpose.msra.mxu0 0.0
        %2564 = vmatprep.subr.mxu0 0.0
        %2565 = vmatpush1.xpose.msra.mxu0 0.0
        %2566 = vmatprep.subr.mxu0 0.0
        %2567 = vmatpush1.xpose.msra.mxu0 0.0
        %2568 = vmatprep.subr.mxu0 0.0
        %2569 = vmatpush1.xpose.msra.mxu0 0.0
        %2570 = vmatprep.subr.mxu0 0.0
        %2571 = vmatpush1.xpose.msra.mxu0 0.0
        %2572 = vmatprep.subr.mxu0 0.0
        %2573 = vmatpush1.xpose.msra.mxu0 0.0
        %2574 = vmatprep.subr.mxu0 0.0
        %2575 = vmatpush1.xpose.msra.mxu0 0.0
        %2576 = vmatprep.subr.mxu0 0.0
        %2577 = vmatpush1.xpose.msra.mxu0 0.0
        %2578 = vmatprep.subr.mxu0 0.0
        %2579 = vmatpush1.xpose.msra.mxu0 0.0
        %2580 = vmatprep.subr.mxu0 0.0
        %2581 = vmatpush1.xpose.msra.mxu0 0.0
        %2582 = vmatprep.subr.mxu0 0.0
        %2583 = vmatpush1.xpose.msra.mxu0 0.0
        %2584 = vmatprep.subr.mxu0 0.0
        %2585 = vmatpush1.xpose.msra.mxu0 0.0
        %2586 = vmatprep.subr.mxu0 0.0
        %2587 = vmatpush1.xpose.msra.mxu0 0.0
        %2588 = vmatprep.subr.mxu0 0.0
        %2589 = vmatpush1.xpose.msra.mxu0 0.0
        %2590 = vmatprep.subr.mxu0 0.0
        %2591 = vmatpush1.xpose.msra.mxu0 0.0
        %2592 = vmatprep.subr.mxu0 0.0
        %2593 = vmatpush1.xpose.msra.mxu0 0.0
        %2594 = vmatprep.subr.mxu0 0.0
        %2595 = vmatpush1.xpose.msra.mxu0 0.0
        %2596 = vmatprep.subr.mxu0 0.0
        %2597 = vmatpush1.xpose.msra.mxu0 0.0
        %2598 = vmatprep.subr.mxu0 0.0
        %2599 = vmatpush1.xpose.msra.mxu0 0.0
        %2600 = vmatprep.subr.mxu0 0.0
        %2601 = vmatpush1.xpose.msra.mxu0 0.0
        %2602 = vmatprep.subr.mxu0 0.0
        %2603 = vmatpush1.xpose.msra.mxu0 0.0
        %2604 = vmatprep.subr.mxu0 0.0
        %2605 = vmatpush1.xpose.msra.mxu0 0.0
        %2606 = vmatprep.subr.mxu0 0.0
        %2607 = vmatpush1.xpose.msra.mxu0 0.0
        %2608 = vmatprep.subr.mxu0 0.0
        %2609 = vmatpush1.xpose.msra.mxu0 0.0
        %2610 = vmatprep.subr.mxu0 0.0
        %2611 = vmatpush1.xpose.msra.mxu0 0.0
        %2612 = vmatprep.subr.mxu0 0.0
        %2613 = vmatpush1.xpose.msra.mxu0 0.0
        %2614 = vmatprep.subr.mxu0 0.0
        %2615 = vmatpush1.xpose.msra.mxu0 0.0
        %2616 = vmatprep.subr.mxu0 0.0
        %2617 = vmatpush1.xpose.msra.mxu0 0.0
        %2618 = vmatprep.subr.mxu0 0.0
        %2619 = vmatpush1.xpose.msra.mxu0 0.0
        %2620 = vmatprep.subr.mxu0 0.0
        %2621 = vmatpush1.xpose.msra.mxu0 0.0
        %2622 = vmatprep.subr.mxu0 0.0
        %2623 = vmatpush1.xpose.msra.mxu0 0.0
        %2624 = vmatprep.mubr.f32.mxu0 0.0
        %2625 = vmatmul.mubr.f32.gmra.mrb[0].mxu0 %v682
        %v2626 = vpop.f32.mrb[0].mxu0
        %v2627 = vadd.f32 0.0, %v2626
        %v2628 = vpop.f32.mrb[0].mxu0
        %2629 = vdwg.mxu0
        %2630 = vmatprep.subr.mxu0 0.0
        %2631 = vmatpush1.xpose.msra.mxu0 %v690
        %2632 = vmatprep.subr.mxu0 0.0
        %2633 = vmatpush1.xpose.msra.mxu0 0.0
        %2634 = vmatprep.subr.mxu0 0.0
        %2635 = vmatpush1.xpose.msra.mxu0 0.0
        %2636 = vmatprep.subr.mxu0 0.0
        %2637 = vmatpush1.xpose.msra.mxu0 0.0
        %2638 = vmatprep.subr.mxu0 0.0
        %2639 = vmatpush1.xpose.msra.mxu0 0.0
        %2640 = vmatprep.subr.mxu0 0.0
        %2641 = vmatpush1.xpose.msra.mxu0 0.0
        %2642 = vmatprep.subr.mxu0 0.0
        %2643 = vmatpush1.xpose.msra.mxu0 0.0
        %2644 = vmatprep.subr.mxu0 0.0
        %2645 = vmatpush1.xpose.msra.mxu0 0.0
        %2646 = vmatprep.subr.mxu0 0.0
        %2647 = vmatpush1.xpose.msra.mxu0 0.0
        %2648 = vmatprep.subr.mxu0 0.0
        %2649 = vmatpush1.xpose.msra.mxu0 0.0
        %2650 = vmatprep.subr.mxu0 0.0
        %2651 = vmatpush1.xpose.msra.mxu0 0.0
        %2652 = vmatprep.subr.mxu0 0.0
        %2653 = vmatpush1.xpose.msra.mxu0 0.0
        %2654 = vmatprep.subr.mxu0 0.0
        %2655 = vmatpush1.xpose.msra.mxu0 0.0
        %2656 = vmatprep.subr.mxu0 0.0
        %2657 = vmatpush1.xpose.msra.mxu0 0.0
        %2658 = vmatprep.subr.mxu0 0.0
        %2659 = vmatpush1.xpose.msra.mxu0 0.0
        %2660 = vmatprep.subr.mxu0 0.0
        %2661 = vmatpush1.xpose.msra.mxu0 0.0
        %2662 = vmatprep.subr.mxu0 0.0
        %2663 = vmatpush1.xpose.msra.mxu0 0.0
        %2664 = vmatprep.subr.mxu0 0.0
        %2665 = vmatpush1.xpose.msra.mxu0 0.0
        %2666 = vmatprep.subr.mxu0 0.0
        %2667 = vmatpush1.xpose.msra.mxu0 0.0
        %2668 = vmatprep.subr.mxu0 0.0
        %2669 = vmatpush1.xpose.msra.mxu0 0.0
        %2670 = vmatprep.subr.mxu0 0.0
        %2671 = vmatpush1.xpose.msra.mxu0 0.0
        %2672 = vmatprep.subr.mxu0 0.0
        %2673 = vmatpush1.xpose.msra.mxu0 0.0
        %2674 = vmatprep.subr.mxu0 0.0
        %2675 = vmatpush1.xpose.msra.mxu0 0.0
        %2676 = vmatprep.subr.mxu0 0.0
        %2677 = vmatpush1.xpose.msra.mxu0 0.0
        %2678 = vmatprep.subr.mxu0 0.0
        %2679 = vmatpush1.xpose.msra.mxu0 0.0
        %2680 = vmatprep.subr.mxu0 0.0
        %2681 = vmatpush1.xpose.msra.mxu0 0.0
        %2682 = vmatprep.subr.mxu0 0.0
        %2683 = vmatpush1.xpose.msra.mxu0 0.0
        %2684 = vmatprep.subr.mxu0 0.0
        %2685 = vmatpush1.xpose.msra.mxu0 0.0
        %2686 = vmatprep.subr.mxu0 0.0
        %2687 = vmatpush1.xpose.msra.mxu0 0.0
        %2688 = vmatprep.subr.mxu0 0.0
        %2689 = vmatpush1.xpose.msra.mxu0 0.0
        %2690 = vmatprep.subr.mxu0 0.0
        %2691 = vmatpush1.xpose.msra.mxu0 0.0
        %2692 = vmatprep.subr.mxu0 0.0
        %2693 = vmatpush1.xpose.msra.mxu0 0.0
        %2694 = vmatprep.mubr.f32.mxu0 0.0
        %2695 = vmatmul.mubr.f32.gmra.mrb[0].mxu0 %v688
        %v2696 = vpop.f32.mrb[0].mxu0
        %v2697 = vadd.f32 0.0, %v2696
        %v2698 = vpop.f32.mrb[0].mxu0
        %2699 = vdwg.mxu0
        %2700 = vmatprep.subr.mxu0 0.0
        %2701 = vmatpush1.xpose.msra.mxu0 %v694
        %2702 = vmatprep.subr.mxu0 0.0
        %2703 = vmatpush1.xpose.msra.mxu0 0.0
        %2704 = vmatprep.subr.mxu0 0.0
        %2705 = vmatpush1.xpose.msra.mxu0 0.0
        %2706 = vmatprep.subr.mxu0 0.0
        %2707 = vmatpush1.xpose.msra.mxu0 0.0
        %2708 = vmatprep.subr.mxu0 0.0
        %2709 = vmatpush1.xpose.msra.mxu0 0.0
        %2710 = vmatprep.subr.mxu0 0.0
        %2711 = vmatpush1.xpose.msra.mxu0 0.0
        %2712 = vmatprep.subr.mxu0 0.0
        %2713 = vmatpush1.xpose.msra.mxu0 0.0
        %2714 = vmatprep.subr.mxu0 0.0
        %2715 = vmatpush1.xpose.msra.mxu0 0.0
        %2716 = vmatprep.subr.mxu0 0.0
        %2717 = vmatpush1.xpose.msra.mxu0 0.0
        %2718 = vmatprep.subr.mxu0 0.0
        %2719 = vmatpush1.xpose.msra.mxu0 0.0
        %2720 = vmatprep.subr.mxu0 0.0
        %2721 = vmatpush1.xpose.msra.mxu0 0.0
        %2722 = vmatprep.subr.mxu0 0.0
        %2723 = vmatpush1.xpose.msra.mxu0 0.0
        %2724 = vmatprep.subr.mxu0 0.0
        %2725 = vmatpush1.xpose.msra.mxu0 0.0
        %2726 = vmatprep.subr.mxu0 0.0
        %2727 = vmatpush1.xpose.msra.mxu0 0.0
        %2728 = vmatprep.subr.mxu0 0.0
        %2729 = vmatpush1.xpose.msra.mxu0 0.0
        %2730 = vmatprep.subr.mxu0 0.0
        %2731 = vmatpush1.xpose.msra.mxu0 0.0
        %2732 = vmatprep.subr.mxu0 0.0
        %2733 = vmatpush1.xpose.msra.mxu0 0.0
        %2734 = vmatprep.subr.mxu0 0.0
        %2735 = vmatpush1.xpose.msra.mxu0 0.0
        %2736 = vmatprep.subr.mxu0 0.0
        %2737 = vmatpush1.xpose.msra.mxu0 0.0
        %2738 = vmatprep.subr.mxu0 0.0
        %2739 = vmatpush1.xpose.msra.mxu0 0.0
        %2740 = vmatprep.subr.mxu0 0.0
        %2741 = vmatpush1.xpose.msra.mxu0 0.0
        %2742 = vmatprep.subr.mxu0 0.0
        %2743 = vmatpush1.xpose.msra.mxu0 0.0
        %2744 = vmatprep.subr.mxu0 0.0
        %2745 = vmatpush1.xpose.msra.mxu0 0.0
        %2746 = vmatprep.subr.mxu0 0.0
        %2747 = vmatpush1.xpose.msra.mxu0 0.0
        %2748 = vmatprep.subr.mxu0 0.0
        %2749 = vmatpush1.xpose.msra.mxu0 0.0
        %2750 = vmatprep.subr.mxu0 0.0
        %2751 = vmatpush1.xpose.msra.mxu0 0.0
        %2752 = vmatprep.subr.mxu0 0.0
        %2753 = vmatpush1.xpose.msra.mxu0 0.0
        %2754 = vmatprep.subr.mxu0 0.0
        %2755 = vmatpush1.xpose.msra.mxu0 0.0
        %2756 = vmatprep.subr.mxu0 0.0
        %2757 = vmatpush1.xpose.msra.mxu0 0.0
        %2758 = vmatprep.subr.mxu0 0.0
        %2759 = vmatpush1.xpose.msra.mxu0 0.0
        %2760 = vmatprep.subr.mxu0 0.0
        %2761 = vmatpush1.xpose.msra.mxu0 0.0
        %2762 = vmatprep.subr.mxu0 0.0
        %2763 = vmatpush1.xpose.msra.mxu0 0.0
        %2764 = vmatprep.mubr.f32.mxu0 0.0
        %2765 = vmatmul.mubr.f32.gmra.mrb[0].mxu0 %v692
        %v2766 = vpop.f32.mrb[0].mxu0
        %v2767 = vadd.f32 0.0, %v2766
        %v2768 = vpop.f32.mrb[0].mxu0
        %2769 = vdwg.mxu0
        %2770 = vmatprep.subr.mxu0 0.0
        %2771 = vmatpush1.xpose.msra.mxu0 %v700
        %2772 = vmatprep.subr.mxu0 0.0
        %2773 = vmatpush1.xpose.msra.mxu0 0.0
        %2774 = vmatprep.subr.mxu0 0.0
        %2775 = vmatpush1.xpose.msra.mxu0 0.0
        %2776 = vmatprep.subr.mxu0 0.0
        %2777 = vmatpush1.xpose.msra.mxu0 0.0
        %2778 = vmatprep.subr.mxu0 0.0
        %2779 = vmatpush1.xpose.msra.mxu0 0.0
        %2780 = vmatprep.subr.mxu0 0.0
        %2781 = vmatpush1.xpose.msra.mxu0 0.0
        %2782 = vmatprep.subr.mxu0 0.0
        %2783 = vmatpush1.xpose.msra.mxu0 0.0
        %2784 = vmatprep.subr.mxu0 0.0
        %2785 = vmatpush1.xpose.msra.mxu0 0.0
        %2786 = vmatprep.subr.mxu0 0.0
        %2787 = vmatpush1.xpose.msra.mxu0 0.0
        %2788 = vmatprep.subr.mxu0 0.0
        %2789 = vmatpush1.xpose.msra.mxu0 0.0
        %2790 = vmatprep.subr.mxu0 0.0
        %2791 = vmatpush1.xpose.msra.mxu0 0.0
        %2792 = vmatprep.subr.mxu0 0.0
        %2793 = vmatpush1.xpose.msra.mxu0 0.0
        %2794 = vmatprep.subr.mxu0 0.0
        %2795 = vmatpush1.xpose.msra.mxu0 0.0
        %2796 = vmatprep.subr.mxu0 0.0
        %2797 = vmatpush1.xpose.msra.mxu0 0.0
        %2798 = vmatprep.subr.mxu0 0.0
        %2799 = vmatpush1.xpose.msra.mxu0 0.0
        %2800 = vmatprep.subr.mxu0 0.0
        %2801 = vmatpush1.xpose.msra.mxu0 0.0
        %2802 = vmatprep.subr.mxu0 0.0
        %2803 = vmatpush1.xpose.msra.mxu0 0.0
        %2804 = vmatprep.subr.mxu0 0.0
        %2805 = vmatpush1.xpose.msra.mxu0 0.0
        %2806 = vmatprep.subr.mxu0 0.0
        %2807 = vmatpush1.xpose.msra.mxu0 0.0
        %2808 = vmatprep.subr.mxu0 0.0
        %2809 = vmatpush1.xpose.msra.mxu0 0.0
        %2810 = vmatprep.subr.mxu0 0.0
        %2811 = vmatpush1.xpose.msra.mxu0 0.0
        %2812 = vmatprep.subr.mxu0 0.0
        %2813 = vmatpush1.xpose.msra.mxu0 0.0
        %2814 = vmatprep.subr.mxu0 0.0
        %2815 = vmatpush1.xpose.msra.mxu0 0.0
        %2816 = vmatprep.subr.mxu0 0.0
        %2817 = vmatpush1.xpose.msra.mxu0 0.0
        %2818 = vmatprep.subr.mxu0 0.0
        %2819 = vmatpush1.xpose.msra.mxu0 0.0
        %2820 = vmatprep.subr.mxu0 0.0
        %2821 = vmatpush1.xpose.msra.mxu0 0.0
        %2822 = vmatprep.subr.mxu0 0.0
        %2823 = vmatpush1.xpose.msra.mxu0 0.0
        %2824 = vmatprep.subr.mxu0 0.0
        %2825 = vmatpush1.xpose.msra.mxu0 0.0
        %2826 = vmatprep.subr.mxu0 0.0
        %2827 = vmatpush1.xpose.msra.mxu0 0.0
        %2828 = vmatprep.subr.mxu0 0.0
        %2829 = vmatpush1.xpose.msra.mxu0 0.0
        %2830 = vmatprep.subr.mxu0 0.0
        %2831 = vmatpush1.xpose.msra.mxu0 0.0
        %2832 = vmatprep.subr.mxu0 0.0
        %2833 = vmatpush1.xpose.msra.mxu0 0.0
        %2834 = vmatprep.mubr.f32.mxu0 0.0
        %2835 = vmatmul.mubr.f32.gmra.mrb[0].mxu0 %v698
        %v2836 = vpop.f32.mrb[0].mxu0
        %v2837 = vadd.f32 0.0, %v2836
        %v2838 = vpop.f32.mrb[0].mxu0
        %2839 = vdwg.mxu0
        %2840 = vmatprep.subr.mxu0 0.0
        %2841 = vmatpush1.xpose.msra.mxu0 %v704
        %2842 = vmatprep.subr.mxu0 0.0
        %2843 = vmatpush1.xpose.msra.mxu0 0.0
        %2844 = vmatprep.subr.mxu0 0.0
        %2845 = vmatpush1.xpose.msra.mxu0 0.0
        %2846 = vmatprep.subr.mxu0 0.0
        %2847 = vmatpush1.xpose.msra.mxu0 0.0
        %2848 = vmatprep.subr.mxu0 0.0
        %2849 = vmatpush1.xpose.msra.mxu0 0.0
        %2850 = vmatprep.subr.mxu0 0.0
        %2851 = vmatpush1.xpose.msra.mxu0 0.0
        %2852 = vmatprep.subr.mxu0 0.0
        %2853 = vmatpush1.xpose.msra.mxu0 0.0
        %2854 = vmatprep.subr.mxu0 0.0
        %2855 = vmatpush1.xpose.msra.mxu0 0.0
        %2856 = vmatprep.subr.mxu0 0.0
        %2857 = vmatpush1.xpose.msra.mxu0 0.0
        %2858 = vmatprep.subr.mxu0 0.0
        %2859 = vmatpush1.xpose.msra.mxu0 0.0
        %2860 = vmatprep.subr.mxu0 0.0
        %2861 = vmatpush1.xpose.msra.mxu0 0.0
        %2862 = vmatprep.subr.mxu0 0.0
        %2863 = vmatpush1.xpose.msra.mxu0 0.0
        %2864 = vmatprep.subr.mxu0 0.0
        %2865 = vmatpush1.xpose.msra.mxu0 0.0
        %2866 = vmatprep.subr.mxu0 0.0
        %2867 = vmatpush1.xpose.msra.mxu0 0.0
        %2868 = vmatprep.subr.mxu0 0.0
        %2869 = vmatpush1.xpose.msra.mxu0 0.0
        %2870 = vmatprep.subr.mxu0 0.0
        %2871 = vmatpush1.xpose.msra.mxu0 0.0
        %2872 = vmatprep.subr.mxu0 0.0
        %2873 = vmatpush1.xpose.msra.mxu0 0.0
        %2874 = vmatprep.subr.mxu0 0.0
        %2875 = vmatpush1.xpose.msra.mxu0 0.0
        %2876 = vmatprep.subr.mxu0 0.0
        %2877 = vmatpush1.xpose.msra.mxu0 0.0
        %2878 = vmatprep.subr.mxu0 0.0
        %2879 = vmatpush1.xpose.msra.mxu0 0.0
        %2880 = vmatprep.subr.mxu0 0.0
        %2881 = vmatpush1.xpose.msra.mxu0 0.0
        %2882 = vmatprep.subr.mxu0 0.0
        %2883 = vmatpush1.xpose.msra.mxu0 0.0
        %2884 = vmatprep.subr.mxu0 0.0
        %2885 = vmatpush1.xpose.msra.mxu0 0.0
        %2886 = vmatprep.subr.mxu0 0.0
        %2887 = vmatpush1.xpose.msra.mxu0 0.0
        %2888 = vmatprep.subr.mxu0 0.0
        %2889 = vmatpush1.xpose.msra.mxu0 0.0
        %2890 = vmatprep.subr.mxu0 0.0
        %2891 = vmatpush1.xpose.msra.mxu0 0.0
        %2892 = vmatprep.subr.mxu0 0.0
        %2893 = vmatpush1.xpose.msra.mxu0 0.0
        %2894 = vmatprep.subr.mxu0 0.0
        %2895 = vmatpush1.xpose.msra.mxu0 0.0
        %2896 = vmatprep.subr.mxu0 0.0
        %2897 = vmatpush1.xpose.msra.mxu0 0.0
        %2898 = vmatprep.subr.mxu0 0.0
        %2899 = vmatpush1.xpose.msra.mxu0 0.0
        %2900 = vmatprep.subr.mxu0 0.0
        %2901 = vmatpush1.xpose.msra.mxu0 0.0
        %2902 = vmatprep.subr.mxu0 0.0
        %2903 = vmatpush1.xpose.msra.mxu0 0.0
        %2904 = vmatprep.mubr.f32.mxu0 0.0
        %2905 = vmatmul.mubr.f32.gmra.mrb[0].mxu0 %v702
        %v2906 = vpop.f32.mrb[0].mxu0
        %v2907 = vadd.f32 0.0, %v2906
        %v2908 = vpop.f32.mrb[0].mxu0
        %2909 = vdwg.mxu0
        %2910 = vmatprep.subr.mxu0 0.0
        %2911 = vmatpush1.xpose.msra.mxu0 %v710
        %2912 = vmatprep.subr.mxu0 0.0
        %2913 = vmatpush1.xpose.msra.mxu0 0.0
        %2914 = vmatprep.subr.mxu0 0.0
        %2915 = vmatpush1.xpose.msra.mxu0 0.0
        %2916 = vmatprep.subr.mxu0 0.0
        %2917 = vmatpush1.xpose.msra.mxu0 0.0
        %2918 = vmatprep.subr.mxu0 0.0
        %2919 = vmatpush1.xpose.msra.mxu0 0.0
        %2920 = vmatprep.subr.mxu0 0.0
        %2921 = vmatpush1.xpose.msra.mxu0 0.0
        %2922 = vmatprep.subr.mxu0 0.0
        %2923 = vmatpush1.xpose.msra.mxu0 0.0
        %2924 = vmatprep.subr.mxu0 0.0
        %2925 = vmatpush1.xpose.msra.mxu0 0.0
        %2926 = vmatprep.subr.mxu0 0.0
        %2927 = vmatpush1.xpose.msra.mxu0 0.0
        %2928 = vmatprep.subr.mxu0 0.0
        %2929 = vmatpush1.xpose.msra.mxu0 0.0
        %2930 = vmatprep.subr.mxu0 0.0
        %2931 = vmatpush1.xpose.msra.mxu0 0.0
        %2932 = vmatprep.subr.mxu0 0.0
        %2933 = vmatpush1.xpose.msra.mxu0 0.0
        %2934 = vmatprep.subr.mxu0 0.0
        %2935 = vmatpush1.xpose.msra.mxu0 0.0
        %2936 = vmatprep.subr.mxu0 0.0
        %2937 = vmatpush1.xpose.msra.mxu0 0.0
        %2938 = vmatprep.subr.mxu0 0.0
        %2939 = vmatpush1.xpose.msra.mxu0 0.0
        %2940 = vmatprep.subr.mxu0 0.0
        %2941 = vmatpush1.xpose.msra.mxu0 0.0
        %2942 = vmatprep.subr.mxu0 0.0
        %2943 = vmatpush1.xpose.msra.mxu0 0.0
        %2944 = vmatprep.subr.mxu0 0.0
        %2945 = vmatpush1.xpose.msra.mxu0 0.0
        %2946 = vmatprep.subr.mxu0 0.0
        %2947 = vmatpush1.xpose.msra.mxu0 0.0
        %2948 = vmatprep.subr.mxu0 0.0
        %2949 = vmatpush1.xpose.msra.mxu0 0.0
        %2950 = vmatprep.subr.mxu0 0.0
        %2951 = vmatpush1.xpose.msra.mxu0 0.0
        %2952 = vmatprep.subr.mxu0 0.0
        %2953 = vmatpush1.xpose.msra.mxu0 0.0
        %2954 = vmatprep.subr.mxu0 0.0
        %2955 = vmatpush1.xpose.msra.mxu0 0.0
        %2956 = vmatprep.subr.mxu0 0.0
        %2957 = vmatpush1.xpose.msra.mxu0 0.0
        %2958 = vmatprep.subr.mxu0 0.0
        %2959 = vmatpush1.xpose.msra.mxu0 0.0
        %2960 = vmatprep.subr.mxu0 0.0
        %2961 = vmatpush1.xpose.msra.mxu0 0.0
        %2962 = vmatprep.subr.mxu0 0.0
        %2963 = vmatpush1.xpose.msra.mxu0 0.0
        %2964 = vmatprep.subr.mxu0 0.0
        %2965 = vmatpush1.xpose.msra.mxu0 0.0
        %2966 = vmatprep.subr.mxu0 0.0
        %2967 = vmatpush1.xpose.msra.mxu0 0.0
        %2968 = vmatprep.subr.mxu0 0.0
        %2969 = vmatpush1.xpose.msra.mxu0 0.0
        %2970 = vmatprep.subr.mxu0 0.0
        %2971 = vmatpush1.xpose.msra.mxu0 0.0
        %2972 = vmatprep.subr.mxu0 0.0
        %2973 = vmatpush1.xpose.msra.mxu0 0.0
        %2974 = vmatprep.mubr.f32.mxu0 0.0
        %2975 = vmatmul.mubr.f32.gmra.mrb[0].mxu0 %v708
        %v2976 = vpop.f32.mrb[0].mxu0
        %v2977 = vadd.f32 0.0, %v2976
        %v2978 = vpop.f32.mrb[0].mxu0
        %2979 = vdwg.mxu0
        %2980 = vmatprep.subr.mxu0 0.0
        %2981 = vmatpush1.xpose.msra.mxu0 %v714
        %2982 = vmatprep.subr.mxu0 0.0
        %2983 = vmatpush1.xpose.msra.mxu0 0.0
        %2984 = vmatprep.subr.mxu0 0.0
        %2985 = vmatpush1.xpose.msra.mxu0 0.0
        %2986 = vmatprep.subr.mxu0 0.0
        %2987 = vmatpush1.xpose.msra.mxu0 0.0
        %2988 = vmatprep.subr.mxu0 0.0
        %2989 = vmatpush1.xpose.msra.mxu0 0.0
        %2990 = vmatprep.subr.mxu0 0.0
        %2991 = vmatpush1.xpose.msra.mxu0 0.0
        %2992 = vmatprep.subr.mxu0 0.0
        %2993 = vmatpush1.xpose.msra.mxu0 0.0
        %2994 = vmatprep.subr.mxu0 0.0
        %2995 = vmatpush1.xpose.msra.mxu0 0.0
        %2996 = vmatprep.subr.mxu0 0.0
        %2997 = vmatpush1.xpose.msra.mxu0 0.0
        %2998 = vmatprep.subr.mxu0 0.0
        %2999 = vmatpush1.xpose.msra.mxu0 0.0
        %3000 = vmatprep.subr.mxu0 0.0
        %3001 = vmatpush1.xpose.msra.mxu0 0.0
        %3002 = vmatprep.subr.mxu0 0.0
        %3003 = vmatpush1.xpose.msra.mxu0 0.0
        %3004 = vmatprep.subr.mxu0 0.0
        %3005 = vmatpush1.xpose.msra.mxu0 0.0
        %3006 = vmatprep.subr.mxu0 0.0
        %3007 = vmatpush1.xpose.msra.mxu0 0.0
        %3008 = vmatprep.subr.mxu0 0.0
        %3009 = vmatpush1.xpose.msra.mxu0 0.0
        %3010 = vmatprep.subr.mxu0 0.0
        %3011 = vmatpush1.xpose.msra.mxu0 0.0
        %3012 = vmatprep.subr.mxu0 0.0
        %3013 = vmatpush1.xpose.msra.mxu0 0.0
        %3014 = vmatprep.subr.mxu0 0.0
        %3015 = vmatpush1.xpose.msra.mxu0 0.0
        %3016 = vmatprep.subr.mxu0 0.0
        %3017 = vmatpush1.xpose.msra.mxu0 0.0
        %3018 = vmatprep.subr.mxu0 0.0
        %3019 = vmatpush1.xpose.msra.mxu0 0.0
        %3020 = vmatprep.subr.mxu0 0.0
        %3021 = vmatpush1.xpose.msra.mxu0 0.0
        %3022 = vmatprep.subr.mxu0 0.0
        %3023 = vmatpush1.xpose.msra.mxu0 0.0
        %3024 = vmatprep.subr.mxu0 0.0
        %3025 = vmatpush1.xpose.msra.mxu0 0.0
        %3026 = vmatprep.subr.mxu0 0.0
        %3027 = vmatpush1.xpose.msra.mxu0 0.0
        %3028 = vmatprep.subr.mxu0 0.0
        %3029 = vmatpush1.xpose.msra.mxu0 0.0
        %3030 = vmatprep.subr.mxu0 0.0
        %3031 = vmatpush1.xpose.msra.mxu0 0.0
        %3032 = vmatprep.subr.mxu0 0.0
        %3033 = vmatpush1.xpose.msra.mxu0 0.0
        %3034 = vmatprep.subr.mxu0 0.0
        %3035 = vmatpush1.xpose.msra.mxu0 0.0
        %3036 = vmatprep.subr.mxu0 0.0
        %3037 = vmatpush1.xpose.msra.mxu0 0.0
        %3038 = vmatprep.subr.mxu0 0.0
        %3039 = vmatpush1.xpose.msra.mxu0 0.0
        %3040 = vmatprep.subr.mxu0 0.0
        %3041 = vmatpush1.xpose.msra.mxu0 0.0
        %3042 = vmatprep.subr.mxu0 0.0
        %3043 = vmatpush1.xpose.msra.mxu0 0.0
        %3044 = vmatprep.mubr.f32.mxu0 0.0
        %3045 = vmatmul.mubr.f32.gmra.mrb[0].mxu0 %v712
        %v3046 = vpop.f32.mrb[0].mxu0
        %v3047 = vadd.f32 0.0, %v3046
        %v3048 = vpop.f32.mrb[0].mxu0
        %3049 = vdwg.mxu0
        %3050 = vmatprep.subr.mxu0 0.0
        %3051 = vmatpush1.xpose.msra.mxu0 %v720
        %3052 = vmatprep.subr.mxu0 0.0
        %3053 = vmatpush1.xpose.msra.mxu0 0.0
        %3054 = vmatprep.subr.mxu0 0.0
        %3055 = vmatpush1.xpose.msra.mxu0 0.0
        %3056 = vmatprep.subr.mxu0 0.0
        %3057 = vmatpush1.xpose.msra.mxu0 0.0
        %3058 = vmatprep.subr.mxu0 0.0
        %3059 = vmatpush1.xpose.msra.mxu0 0.0
        %3060 = vmatprep.subr.mxu0 0.0
        %3061 = vmatpush1.xpose.msra.mxu0 0.0
        %3062 = vmatprep.subr.mxu0 0.0
        %3063 = vmatpush1.xpose.msra.mxu0 0.0
        %3064 = vmatprep.subr.mxu0 0.0
        %3065 = vmatpush1.xpose.msra.mxu0 0.0
        %3066 = vmatprep.subr.mxu0 0.0
        %3067 = vmatpush1.xpose.msra.mxu0 0.0
        %3068 = vmatprep.subr.mxu0 0.0
        %3069 = vmatpush1.xpose.msra.mxu0 0.0
        %3070 = vmatprep.subr.mxu0 0.0
        %3071 = vmatpush1.xpose.msra.mxu0 0.0
        %3072 = vmatprep.subr.mxu0 0.0
        %3073 = vmatpush1.xpose.msra.mxu0 0.0
        %3074 = vmatprep.subr.mxu0 0.0
        %3075 = vmatpush1.xpose.msra.mxu0 0.0
        %3076 = vmatprep.subr.mxu0 0.0
        %3077 = vmatpush1.xpose.msra.mxu0 0.0
        %3078 = vmatprep.subr.mxu0 0.0
        %3079 = vmatpush1.xpose.msra.mxu0 0.0
        %3080 = vmatprep.subr.mxu0 0.0
        %3081 = vmatpush1.xpose.msra.mxu0 0.0
        %3082 = vmatprep.subr.mxu0 0.0
        %3083 = vmatpush1.xpose.msra.mxu0 0.0
        %3084 = vmatprep.subr.mxu0 0.0
        %3085 = vmatpush1.xpose.msra.mxu0 0.0
        %3086 = vmatprep.subr.mxu0 0.0
        %3087 = vmatpush1.xpose.msra.mxu0 0.0
        %3088 = vmatprep.subr.mxu0 0.0
        %3089 = vmatpush1.xpose.msra.mxu0 0.0
        %3090 = vmatprep.subr.mxu0 0.0
        %3091 = vmatpush1.xpose.msra.mxu0 0.0
        %3092 = vmatprep.subr.mxu0 0.0
        %3093 = vmatpush1.xpose.msra.mxu0 0.0
        %3094 = vmatprep.subr.mxu0 0.0
        %3095 = vmatpush1.xpose.msra.mxu0 0.0
        %3096 = vmatprep.subr.mxu0 0.0
        %3097 = vmatpush1.xpose.msra.mxu0 0.0
        %3098 = vmatprep.subr.mxu0 0.0
        %3099 = vmatpush1.xpose.msra.mxu0 0.0
        %3100 = vmatprep.subr.mxu0 0.0
        %3101 = vmatpush1.xpose.msra.mxu0 0.0
        %3102 = vmatprep.subr.mxu0 0.0
        %3103 = vmatpush1.xpose.msra.mxu0 0.0
        %3104 = vmatprep.subr.mxu0 0.0
        %3105 = vmatpush1.xpose.msra.mxu0 0.0
        %3106 = vmatprep.subr.mxu0 0.0
        %3107 = vmatpush1.xpose.msra.mxu0 0.0
        %3108 = vmatprep.subr.mxu0 0.0
        %3109 = vmatpush1.xpose.msra.mxu0 0.0
        %3110 = vmatprep.subr.mxu0 0.0
        %3111 = vmatpush1.xpose.msra.mxu0 0.0
        %3112 = vmatprep.subr.mxu0 0.0
        %3113 = vmatpush1.xpose.msra.mxu0 0.0
        %3114 = vmatprep.mubr.f32.mxu0 0.0
        %3115 = vmatmul.mubr.f32.gmra.mrb[0].mxu0 %v718
        %v3116 = vpop.f32.mrb[0].mxu0
        %v3117 = vadd.f32 0.0, %v3116
        %v3118 = vpop.f32.mrb[0].mxu0
        %3119 = vdwg.mxu0
        %3120 = vmatprep.subr.mxu0 0.0
        %3121 = vmatpush1.xpose.msra.mxu0 %v724
        %3122 = vmatprep.subr.mxu0 0.0
        %3123 = vmatpush1.xpose.msra.mxu0 0.0
        %3124 = vmatprep.subr.mxu0 0.0
        %3125 = vmatpush1.xpose.msra.mxu0 0.0
        %3126 = vmatprep.subr.mxu0 0.0
        %3127 = vmatpush1.xpose.msra.mxu0 0.0
        %3128 = vmatprep.subr.mxu0 0.0
        %3129 = vmatpush1.xpose.msra.mxu0 0.0
        %3130 = vmatprep.subr.mxu0 0.0
        %3131 = vmatpush1.xpose.msra.mxu0 0.0
        %3132 = vmatprep.subr.mxu0 0.0
        %3133 = vmatpush1.xpose.msra.mxu0 0.0
        %3134 = vmatprep.subr.mxu0 0.0
        %3135 = vmatpush1.xpose.msra.mxu0 0.0
        %3136 = vmatprep.subr.mxu0 0.0
        %3137 = vmatpush1.xpose.msra.mxu0 0.0
        %3138 = vmatprep.subr.mxu0 0.0
        %3139 = vmatpush1.xpose.msra.mxu0 0.0
        %3140 = vmatprep.subr.mxu0 0.0
        %3141 = vmatpush1.xpose.msra.mxu0 0.0
        %3142 = vmatprep.subr.mxu0 0.0
        %3143 = vmatpush1.xpose.msra.mxu0 0.0
        %3144 = vmatprep.subr.mxu0 0.0
        %3145 = vmatpush1.xpose.msra.mxu0 0.0
        %3146 = vmatprep.subr.mxu0 0.0
        %3147 = vmatpush1.xpose.msra.mxu0 0.0
        %3148 = vmatprep.subr.mxu0 0.0
        %3149 = vmatpush1.xpose.msra.mxu0 0.0
        %3150 = vmatprep.subr.mxu0 0.0
        %3151 = vmatpush1.xpose.msra.mxu0 0.0
        %3152 = vmatprep.subr.mxu0 0.0
        %3153 = vmatpush1.xpose.msra.mxu0 0.0
        %3154 = vmatprep.subr.mxu0 0.0
        %3155 = vmatpush1.xpose.msra.mxu0 0.0
        %3156 = vmatprep.subr.mxu0 0.0
        %3157 = vmatpush1.xpose.msra.mxu0 0.0
        %3158 = vmatprep.subr.mxu0 0.0
        %3159 = vmatpush1.xpose.msra.mxu0 0.0
        %3160 = vmatprep.subr.mxu0 0.0
        %3161 = vmatpush1.xpose.msra.mxu0 0.0
        %3162 = vmatprep.subr.mxu0 0.0
        %3163 = vmatpush1.xpose.msra.mxu0 0.0
        %3164 = vmatprep.subr.mxu0 0.0
        %3165 = vmatpush1.xpose.msra.mxu0 0.0
        %3166 = vmatprep.subr.mxu0 0.0
        %3167 = vmatpush1.xpose.msra.mxu0 0.0
        %3168 = vmatprep.subr.mxu0 0.0
        %3169 = vmatpush1.xpose.msra.mxu0 0.0
        %3170 = vmatprep.subr.mxu0 0.0
        %3171 = vmatpush1.xpose.msra.mxu0 0.0
        %3172 = vmatprep.subr.mxu0 0.0
        %3173 = vmatpush1.xpose.msra.mxu0 0.0
        %3174 = vmatprep.subr.mxu0 0.0
        %3175 = vmatpush1.xpose.msra.mxu0 0.0
        %3176 = vmatprep.subr.mxu0 0.0
        %3177 = vmatpush1.xpose.msra.mxu0 0.0
        %3178 = vmatprep.subr.mxu0 0.0
        %3179 = vmatpush1.xpose.msra.mxu0 0.0
        %3180 = vmatprep.subr.mxu0 0.0
        %3181 = vmatpush1.xpose.msra.mxu0 0.0
        %3182 = vmatprep.subr.mxu0 0.0
        %3183 = vmatpush1.xpose.msra.mxu0 0.0
        %3184 = vmatprep.mubr.f32.mxu0 0.0
        %3185 = vmatmul.mubr.f32.gmra.mrb[0].mxu0 %v722
        %v3186 = vpop.f32.mrb[0].mxu0
        %v3187 = vadd.f32 0.0, %v3186
        %v3188 = vpop.f32.mrb[0].mxu0
        %3189 = vdwg.mxu0
        %3190 = vmatprep.subr.mxu0 0.0
        %3191 = vmatpush1.xpose.msra.mxu0 %v730
        %3192 = vmatprep.subr.mxu0 0.0
        %3193 = vmatpush1.xpose.msra.mxu0 0.0
        %3194 = vmatprep.subr.mxu0 0.0
        %3195 = vmatpush1.xpose.msra.mxu0 0.0
        %3196 = vmatprep.subr.mxu0 0.0
        %3197 = vmatpush1.xpose.msra.mxu0 0.0
        %3198 = vmatprep.subr.mxu0 0.0
        %3199 = vmatpush1.xpose.msra.mxu0 0.0
        %3200 = vmatprep.subr.mxu0 0.0
        %3201 = vmatpush1.xpose.msra.mxu0 0.0
        %3202 = vmatprep.subr.mxu0 0.0
        %3203 = vmatpush1.xpose.msra.mxu0 0.0
        %3204 = vmatprep.subr.mxu0 0.0
        %3205 = vmatpush1.xpose.msra.mxu0 0.0
        %3206 = vmatprep.subr.mxu0 0.0
        %3207 = vmatpush1.xpose.msra.mxu0 0.0
        %3208 = vmatprep.subr.mxu0 0.0
        %3209 = vmatpush1.xpose.msra.mxu0 0.0
        %3210 = vmatprep.subr.mxu0 0.0
        %3211 = vmatpush1.xpose.msra.mxu0 0.0
        %3212 = vmatprep.subr.mxu0 0.0
        %3213 = vmatpush1.xpose.msra.mxu0 0.0
        %3214 = vmatprep.subr.mxu0 0.0
        %3215 = vmatpush1.xpose.msra.mxu0 0.0
        %3216 = vmatprep.subr.mxu0 0.0
        %3217 = vmatpush1.xpose.msra.mxu0 0.0
        %3218 = vmatprep.subr.mxu0 0.0
        %3219 = vmatpush1.xpose.msra.mxu0 0.0
        %3220 = vmatprep.subr.mxu0 0.0
        %3221 = vmatpush1.xpose.msra.mxu0 0.0
        %3222 = vmatprep.subr.mxu0 0.0
        %3223 = vmatpush1.xpose.msra.mxu0 0.0
        %3224 = vmatprep.subr.mxu0 0.0
        %3225 = vmatpush1.xpose.msra.mxu0 0.0
        %3226 = vmatprep.subr.mxu0 0.0
        %3227 = vmatpush1.xpose.msra.mxu0 0.0
        %3228 = vmatprep.subr.mxu0 0.0
        %3229 = vmatpush1.xpose.msra.mxu0 0.0
        %3230 = vmatprep.subr.mxu0 0.0
        %3231 = vmatpush1.xpose.msra.mxu0 0.0
        %3232 = vmatprep.subr.mxu0 0.0
        %3233 = vmatpush1.xpose.msra.mxu0 0.0
        %3234 = vmatprep.subr.mxu0 0.0
        %3235 = vmatpush1.xpose.msra.mxu0 0.0
        %3236 = vmatprep.subr.mxu0 0.0
        %3237 = vmatpush1.xpose.msra.mxu0 0.0
        %3238 = vmatprep.subr.mxu0 0.0
        %3239 = vmatpush1.xpose.msra.mxu0 0.0
        %3240 = vmatprep.subr.mxu0 0.0
        %3241 = vmatpush1.xpose.msra.mxu0 0.0
        %3242 = vmatprep.subr.mxu0 0.0
        %3243 = vmatpush1.xpose.msra.mxu0 0.0
        %3244 = vmatprep.subr.mxu0 0.0
        %3245 = vmatpush1.xpose.msra.mxu0 0.0
        %3246 = vmatprep.subr.mxu0 0.0
        %3247 = vmatpush1.xpose.msra.mxu0 0.0
        %3248 = vmatprep.subr.mxu0 0.0
        %3249 = vmatpush1.xpose.msra.mxu0 0.0
        %3250 = vmatprep.subr.mxu0 0.0
        %3251 = vmatpush1.xpose.msra.mxu0 0.0
        %3252 = vmatprep.subr.mxu0 0.0
        %3253 = vmatpush1.xpose.msra.mxu0 0.0
        %3254 = vmatprep.mubr.f32.mxu0 0.0
        %3255 = vmatmul.mubr.f32.gmra.mrb[0].mxu0 %v728
        %v3256 = vpop.f32.mrb[0].mxu0
        %v3257 = vadd.f32 0.0, %v3256
        %v3258 = vpop.f32.mrb[0].mxu0
        %3259 = vdwg.mxu0
        %3260 = vmatprep.subr.mxu0 0.0
        %3261 = vmatpush1.xpose.msra.mxu0 %v734
        %3262 = vmatprep.subr.mxu0 0.0
        %3263 = vmatpush1.xpose.msra.mxu0 0.0
        %3264 = vmatprep.subr.mxu0 0.0
        %3265 = vmatpush1.xpose.msra.mxu0 0.0
        %3266 = vmatprep.subr.mxu0 0.0
        %3267 = vmatpush1.xpose.msra.mxu0 0.0
        %3268 = vmatprep.subr.mxu0 0.0
        %3269 = vmatpush1.xpose.msra.mxu0 0.0
        %3270 = vmatprep.subr.mxu0 0.0
        %3271 = vmatpush1.xpose.msra.mxu0 0.0
        %3272 = vmatprep.subr.mxu0 0.0
        %3273 = vmatpush1.xpose.msra.mxu0 0.0
        %3274 = vmatprep.subr.mxu0 0.0
        %3275 = vmatpush1.xpose.msra.mxu0 0.0
        %3276 = vmatprep.subr.mxu0 0.0
        %3277 = vmatpush1.xpose.msra.mxu0 0.0
        %3278 = vmatprep.subr.mxu0 0.0
        %3279 = vmatpush1.xpose.msra.mxu0 0.0
        %3280 = vmatprep.subr.mxu0 0.0
        %3281 = vmatpush1.xpose.msra.mxu0 0.0
        %3282 = vmatprep.subr.mxu0 0.0
        %3283 = vmatpush1.xpose.msra.mxu0 0.0
        %3284 = vmatprep.subr.mxu0 0.0
        %3285 = vmatpush1.xpose.msra.mxu0 0.0
        %3286 = vmatprep.subr.mxu0 0.0
        %3287 = vmatpush1.xpose.msra.mxu0 0.0
        %3288 = vmatprep.subr.mxu0 0.0
        %3289 = vmatpush1.xpose.msra.mxu0 0.0
        %3290 = vmatprep.subr.mxu0 0.0
        %3291 = vmatpush1.xpose.msra.mxu0 0.0
        %3292 = vmatprep.subr.mxu0 0.0
        %3293 = vmatpush1.xpose.msra.mxu0 0.0
        %3294 = vmatprep.subr.mxu0 0.0
        %3295 = vmatpush1.xpose.msra.mxu0 0.0
        %3296 = vmatprep.subr.mxu0 0.0
        %3297 = vmatpush1.xpose.msra.mxu0 0.0
        %3298 = vmatprep.subr.mxu0 0.0
        %3299 = vmatpush1.xpose.msra.mxu0 0.0
        %3300 = vmatprep.subr.mxu0 0.0
        %3301 = vmatpush1.xpose.msra.mxu0 0.0
        %3302 = vmatprep.subr.mxu0 0.0
        %3303 = vmatpush1.xpose.msra.mxu0 0.0
        %3304 = vmatprep.subr.mxu0 0.0
        %3305 = vmatpush1.xpose.msra.mxu0 0.0
        %3306 = vmatprep.subr.mxu0 0.0
        %3307 = vmatpush1.xpose.msra.mxu0 0.0
        %3308 = vmatprep.subr.mxu0 0.0
        %3309 = vmatpush1.xpose.msra.mxu0 0.0
        %3310 = vmatprep.subr.mxu0 0.0
        %3311 = vmatpush1.xpose.msra.mxu0 0.0
        %3312 = vmatprep.subr.mxu0 0.0
        %3313 = vmatpush1.xpose.msra.mxu0 0.0
        %3314 = vmatprep.subr.mxu0 0.0
        %3315 = vmatpush1.xpose.msra.mxu0 0.0
        %3316 = vmatprep.subr.mxu0 0.0
        %3317 = vmatpush1.xpose.msra.mxu0 0.0
        %3318 = vmatprep.subr.mxu0 0.0
        %3319 = vmatpush1.xpose.msra.mxu0 0.0
        %3320 = vmatprep.subr.mxu0 0.0
        %3321 = vmatpush1.xpose.msra.mxu0 0.0
        %3322 = vmatprep.subr.mxu0 0.0
        %3323 = vmatpush1.xpose.msra.mxu0 0.0
        %3324 = vmatprep.mubr.f32.mxu0 0.0
        %3325 = vmatmul.mubr.f32.gmra.mrb[0].mxu0 %v732
        %v3326 = vpop.f32.mrb[0].mxu0
        %v3327 = vadd.f32 0.0, %v3326
        %v3328 = vpop.f32.mrb[0].mxu0
        %3329 = vdwg.mxu0
        %vm3330 = vcmask 64512
        %v3331 = vsel %vm3330, %v1157, -inf
        %3332 = vmax.xlane.f32.xlu0 %v3331
        %v3333 = vpop.xlane.xlu0 %3332
        %v3334 = vsel %vm3330, %v1227, -inf
        %3335 = vmax.xlane.f32.xlu0 %v3334
        %v3336 = vpop.xlane.xlu0 %3335
        %v3337 = vsel %vm3330, %v1297, -inf
        %3338 = vmax.xlane.f32.xlu0 %v3337
        %v3339 = vpop.xlane.xlu0 %3338
        %v3340 = vsel %vm3330, %v1367, -inf
        %3341 = vmax.xlane.f32.xlu0 %v3340
        %v3342 = vpop.xlane.xlu0 %3341
        %v3343 = vsel %vm3330, %v1437, -inf
        %3344 = vmax.xlane.f32.xlu0 %v3343
        %v3345 = vpop.xlane.xlu0 %3344
        %v3346 = vsel %vm3330, %v1507, -inf
        %3347 = vmax.xlane.f32.xlu0 %v3346
        %v3348 = vpop.xlane.xlu0 %3347
        %v3349 = vsel %vm3330, %v1577, -inf
        %3350 = vmax.xlane.f32.xlu0 %v3349
        %v3351 = vpop.xlane.xlu0 %3350
        %v3352 = vsel %vm3330, %v1647, -inf
        %3353 = vmax.xlane.f32.xlu0 %v3352
        %v3354 = vpop.xlane.xlu0 %3353
        %v3355 = vsel %vm3330, %v1717, -inf
        %3356 = vmax.xlane.f32.xlu0 %v3355
        %v3357 = vpop.xlane.xlu0 %3356
        %v3358 = vsel %vm3330, %v1787, -inf
        %3359 = vmax.xlane.f32.xlu0 %v3358
        %v3360 = vpop.xlane.xlu0 %3359
        %v3361 = vsel %vm3330, %v1857, -inf
        %3362 = vmax.xlane.f32.xlu0 %v3361
        %v3363 = vpop.xlane.xlu0 %3362
        %v3364 = vsel %vm3330, %v1927, -inf
        %3365 = vmax.xlane.f32.xlu0 %v3364
        %v3366 = vpop.xlane.xlu0 %3365
        %v3367 = vsel %vm3330, %v1997, -inf
        %3368 = vmax.xlane.f32.xlu0 %v3367
        %v3369 = vpop.xlane.xlu0 %3368
        %v3370 = vsel %vm3330, %v2067, -inf
        %3371 = vmax.xlane.f32.xlu0 %v3370
        %v3372 = vpop.xlane.xlu0 %3371
        %v3373 = vsel %vm3330, %v2137, -inf
        %3374 = vmax.xlane.f32.xlu0 %v3373
        %v3375 = vpop.xlane.xlu0 %3374
        %v3376 = vsel %vm3330, %v2207, -inf
        %3377 = vmax.xlane.f32.xlu0 %v3376
        %v3378 = vpop.xlane.xlu0 %3377
        %v3379 = vsel %vm3330, %v2277, -inf
        %3380 = vmax.xlane.f32.xlu0 %v3379
        %v3381 = vpop.xlane.xlu0 %3380
        %v3382 = vsel %vm3330, %v2347, -inf
        %3383 = vmax.xlane.f32.xlu0 %v3382
        %v3384 = vpop.xlane.xlu0 %3383
        %v3385 = vsel %vm3330, %v2417, -inf
        %3386 = vmax.xlane.f32.xlu0 %v3385
        %v3387 = vpop.xlane.xlu0 %3386
        %v3388 = vsel %vm3330, %v2487, -inf
        %3389 = vmax.xlane.f32.xlu0 %v3388
        %v3390 = vpop.xlane.xlu0 %3389
        %v3391 = vsel %vm3330, %v2557, -inf
        %3392 = vmax.xlane.f32.xlu0 %v3391
        %v3393 = vpop.xlane.xlu0 %3392
        %v3394 = vsel %vm3330, %v2627, -inf
        %3395 = vmax.xlane.f32.xlu0 %v3394
        %v3396 = vpop.xlane.xlu0 %3395
        %v3397 = vsel %vm3330, %v2697, -inf
        %3398 = vmax.xlane.f32.xlu0 %v3397
        %v3399 = vpop.xlane.xlu0 %3398
        %v3400 = vsel %vm3330, %v2767, -inf
        %3401 = vmax.xlane.f32.xlu0 %v3400
        %v3402 = vpop.xlane.xlu0 %3401
        %v3403 = vsel %vm3330, %v2837, -inf
        %3404 = vmax.xlane.f32.xlu0 %v3403
        %v3405 = vpop.xlane.xlu0 %3404
        %v3406 = vsel %vm3330, %v2907, -inf
        %3407 = vmax.xlane.f32.xlu0 %v3406
        %v3408 = vpop.xlane.xlu0 %3407
        %v3409 = vsel %vm3330, %v2977, -inf
        %3410 = vmax.xlane.f32.xlu0 %v3409
        %v3411 = vpop.xlane.xlu0 %3410
        %v3412 = vsel %vm3330, %v3047, -inf
        %3413 = vmax.xlane.f32.xlu0 %v3412
        %v3414 = vpop.xlane.xlu0 %3413
        %v3415 = vsel %vm3330, %v3117, -inf
        %3416 = vmax.xlane.f32.xlu0 %v3415
        %v3417 = vpop.xlane.xlu0 %3416
        %v3418 = vsel %vm3330, %v3187, -inf
        %3419 = vmax.xlane.f32.xlu0 %v3418
        %v3420 = vpop.xlane.xlu0 %3419
        %v3421 = vsel %vm3330, %v3257, -inf
        %3422 = vmax.xlane.f32.xlu0 %v3421
        %v3423 = vpop.xlane.xlu0 %3422
        %v3424 = vsel %vm3330, %v3327, -inf
        %3425 = vmax.xlane.f32.xlu0 %v3424
        %v3426 = vpop.xlane.xlu0 %3425
        %v3427 = vsub.f32 %v1157, %v3333
        %v3428 = vsub.f32 %v1227, %v3336
        %v3429 = vsub.f32 %v1297, %v3339
        %v3430 = vsub.f32 %v1367, %v3342
        %v3431 = vsub.f32 %v1437, %v3345
        %v3432 = vsub.f32 %v1507, %v3348
        %v3433 = vsub.f32 %v1577, %v3351
        %v3434 = vsub.f32 %v1647, %v3354
        %v3435 = vsub.f32 %v1717, %v3357
        %v3436 = vsub.f32 %v1787, %v3360
        %v3437 = vsub.f32 %v1857, %v3363
        %v3438 = vsub.f32 %v1927, %v3366
        %v3439 = vsub.f32 %v1997, %v3369
        %v3440 = vsub.f32 %v2067, %v3372
        %v3441 = vsub.f32 %v2137, %v3375
        %v3442 = vsub.f32 %v2207, %v3378
        %v3443 = vsub.f32 %v2277, %v3381
        %v3444 = vsub.f32 %v2347, %v3384
        %v3445 = vsub.f32 %v2417, %v3387
        %v3446 = vsub.f32 %v2487, %v3390
        %v3447 = vsub.f32 %v2557, %v3393
        %v3448 = vsub.f32 %v2627, %v3396
        %v3449 = vsub.f32 %v2697, %v3399
        %v3450 = vsub.f32 %v2767, %v3402
        %v3451 = vsub.f32 %v2837, %v3405
        %v3452 = vsub.f32 %v2907, %v3408
        %v3453 = vsub.f32 %v2977, %v3411
        %v3454 = vsub.f32 %v3047, %v3414
        %v3455 = vsub.f32 %v3117, %v3417
        %v3456 = vsub.f32 %v3187, %v3420
        %v3457 = vsub.f32 %v3257, %v3423
        %v3458 = vsub.f32 %v3327, %v3426
        %v3459 = vmul.f32 %v3427, 1.442695
        %v3460 = vpow.pop %v3459
        %v3461 = vmul.f32 %v3428, 1.442695
        %v3462 = vpow.pop %v3461
        %v3463 = vmul.f32 %v3429, 1.442695
        %v3464 = vpow.pop %v3463
        %v3465 = vmul.f32 %v3430, 1.442695
        %v3466 = vpow.pop %v3465
        %v3467 = vmul.f32 %v3431, 1.442695
        %v3468 = vpow.pop %v3467
        %v3469 = vmul.f32 %v3432, 1.442695
        %v3470 = vpow.pop %v3469
        %v3471 = vmul.f32 %v3433, 1.442695
        %v3472 = vpow.pop %v3471
        %v3473 = vmul.f32 %v3434, 1.442695
        %v3474 = vpow.pop %v3473
        %v3475 = vmul.f32 %v3435, 1.442695
        %v3476 = vpow.pop %v3475
        %v3477 = vmul.f32 %v3436, 1.442695
        %v3478 = vpow.pop %v3477
        %v3479 = vmul.f32 %v3437, 1.442695
        %v3480 = vpow.pop %v3479
        %v3481 = vmul.f32 %v3438, 1.442695
        %v3482 = vpow.pop %v3481
        %v3483 = vmul.f32 %v3439, 1.442695
        %v3484 = vpow.pop %v3483
        %v3485 = vmul.f32 %v3440, 1.442695
        %v3486 = vpow.pop %v3485
        %v3487 = vmul.f32 %v3441, 1.442695
        %v3488 = vpow.pop %v3487
        %v3489 = vmul.f32 %v3442, 1.442695
        %v3490 = vpow.pop %v3489
        %v3491 = vmul.f32 %v3443, 1.442695
        %v3492 = vpow.pop %v3491
        %v3493 = vmul.f32 %v3444, 1.442695
        %v3494 = vpow.pop %v3493
        %v3495 = vmul.f32 %v3445, 1.442695
        %v3496 = vpow.pop %v3495
        %v3497 = vmul.f32 %v3446, 1.442695
        %v3498 = vpow.pop %v3497
        %v3499 = vmul.f32 %v3447, 1.442695
        %v3500 = vpow.pop %v3499
        %v3501 = vmul.f32 %v3448, 1.442695
        %v3502 = vpow.pop %v3501
        %v3503 = vmul.f32 %v3449, 1.442695
        %v3504 = vpow.pop %v3503
        %v3505 = vmul.f32 %v3450, 1.442695
        %v3506 = vpow.pop %v3505
        %v3507 = vmul.f32 %v3451, 1.442695
        %v3508 = vpow.pop %v3507
        %v3509 = vmul.f32 %v3452, 1.442695
        %v3510 = vpow.pop %v3509
        %v3511 = vmul.f32 %v3453, 1.442695
        %v3512 = vpow.pop %v3511
        %v3513 = vmul.f32 %v3454, 1.442695
        %v3514 = vpow.pop %v3513
        %v3515 = vmul.f32 %v3455, 1.442695
        %v3516 = vpow.pop %v3515
        %v3517 = vmul.f32 %v3456, 1.442695
        %v3518 = vpow.pop %v3517
        %v3519 = vmul.f32 %v3457, 1.442695
        %v3520 = vpow.pop %v3519
        %v3521 = vmul.f32 %v3458, 1.442695
        %v3522 = vpow.pop %v3521
        %v3523 = vsel %vm3330, %v3460, 0.0
        %3524 = vadd.xlane.f32.xlu0 %v3523
        %v3525 = vpop.xlane.xlu0 %3524
        %v3526 = vsel %vm3330, %v3462, 0.0
        %3527 = vadd.xlane.f32.xlu0 %v3526
        %v3528 = vpop.xlane.xlu0 %3527
        %v3529 = vsel %vm3330, %v3464, 0.0
        %3530 = vadd.xlane.f32.xlu0 %v3529
        %v3531 = vpop.xlane.xlu0 %3530
        %v3532 = vsel %vm3330, %v3466, 0.0
        %3533 = vadd.xlane.f32.xlu0 %v3532
        %v3534 = vpop.xlane.xlu0 %3533
        %v3535 = vsel %vm3330, %v3468, 0.0
        %3536 = vadd.xlane.f32.xlu0 %v3535
        %v3537 = vpop.xlane.xlu0 %3536
        %v3538 = vsel %vm3330, %v3470, 0.0
        %3539 = vadd.xlane.f32.xlu0 %v3538
        %v3540 = vpop.xlane.xlu0 %3539
        %v3541 = vsel %vm3330, %v3472, 0.0
        %3542 = vadd.xlane.f32.xlu0 %v3541
        %v3543 = vpop.xlane.xlu0 %3542
        %v3544 = vsel %vm3330, %v3474, 0.0
        %3545 = vadd.xlane.f32.xlu0 %v3544
        %v3546 = vpop.xlane.xlu0 %3545
        %v3547 = vsel %vm3330, %v3476, 0.0
        %3548 = vadd.xlane.f32.xlu0 %v3547
        %v3549 = vpop.xlane.xlu0 %3548
        %v3550 = vsel %vm3330, %v3478, 0.0
        %3551 = vadd.xlane.f32.xlu0 %v3550
        %v3552 = vpop.xlane.xlu0 %3551
        %v3553 = vsel %vm3330, %v3480, 0.0
        %3554 = vadd.xlane.f32.xlu0 %v3553
        %v3555 = vpop.xlane.xlu0 %3554
        %v3556 = vsel %vm3330, %v3482, 0.0
        %3557 = vadd.xlane.f32.xlu0 %v3556
        %v3558 = vpop.xlane.xlu0 %3557
        %v3559 = vsel %vm3330, %v3484, 0.0
        %3560 = vadd.xlane.f32.xlu0 %v3559
        %v3561 = vpop.xlane.xlu0 %3560
        %v3562 = vsel %vm3330, %v3486, 0.0
        %3563 = vadd.xlane.f32.xlu0 %v3562
        %v3564 = vpop.xlane.xlu0 %3563
        %v3565 = vsel %vm3330, %v3488, 0.0
        %3566 = vadd.xlane.f32.xlu0 %v3565
        %v3567 = vpop.xlane.xlu0 %3566
        %v3568 = vsel %vm3330, %v3490, 0.0
        %3569 = vadd.xlane.f32.xlu0 %v3568
        %v3570 = vpop.xlane.xlu0 %3569
        %v3571 = vsel %vm3330, %v3492, 0.0
        %3572 = vadd.xlane.f32.xlu0 %v3571
        %v3573 = vpop.xlane.xlu0 %3572
        %v3574 = vsel %vm3330, %v3494, 0.0
        %3575 = vadd.xlane.f32.xlu0 %v3574
        %v3576 = vpop.xlane.xlu0 %3575
        %v3577 = vsel %vm3330, %v3496, 0.0
        %3578 = vadd.xlane.f32.xlu0 %v3577
        %v3579 = vpop.xlane.xlu0 %3578
        %v3580 = vsel %vm3330, %v3498, 0.0
        %3581 = vadd.xlane.f32.xlu0 %v3580
        %v3582 = vpop.xlane.xlu0 %3581
        %v3583 = vsel %vm3330, %v3500, 0.0
        %3584 = vadd.xlane.f32.xlu0 %v3583
        %v3585 = vpop.xlane.xlu0 %3584
        %v3586 = vsel %vm3330, %v3502, 0.0
        %3587 = vadd.xlane.f32.xlu0 %v3586
        %v3588 = vpop.xlane.xlu0 %3587
        %v3589 = vsel %vm3330, %v3504, 0.0
        %3590 = vadd.xlane.f32.xlu0 %v3589
        %v3591 = vpop.xlane.xlu0 %3590
        %v3592 = vsel %vm3330, %v3506, 0.0
        %3593 = vadd.xlane.f32.xlu0 %v3592
        %v3594 = vpop.xlane.xlu0 %3593
        %v3595 = vsel %vm3330, %v3508, 0.0
        %3596 = vadd.xlane.f32.xlu0 %v3595
        %v3597 = vpop.xlane.xlu0 %3596
        %v3598 = vsel %vm3330, %v3510, 0.0
        %3599 = vadd.xlane.f32.xlu0 %v3598
        %v3600 = vpop.xlane.xlu0 %3599
        %v3601 = vsel %vm3330, %v3512, 0.0
        %3602 = vadd.xlane.f32.xlu0 %v3601
        %v3603 = vpop.xlane.xlu0 %3602
        %v3604 = vsel %vm3330, %v3514, 0.0
        %3605 = vadd.xlane.f32.xlu0 %v3604
        %v3606 = vpop.xlane.xlu0 %3605
        %v3607 = vsel %vm3330, %v3516, 0.0
        %3608 = vadd.xlane.f32.xlu0 %v3607
        %v3609 = vpop.xlane.xlu0 %3608
        %v3610 = vsel %vm3330, %v3518, 0.0
        %3611 = vadd.xlane.f32.xlu0 %v3610
        %v3612 = vpop.xlane.xlu0 %3611
        %v3613 = vsel %vm3330, %v3520, 0.0
        %3614 = vadd.xlane.f32.xlu0 %v3613
        %v3615 = vpop.xlane.xlu0 %3614
        %v3616 = vsel %vm3330, %v3522, 0.0
        %3617 = vadd.xlane.f32.xlu0 %v3616
        %v3618 = vpop.xlane.xlu0 %3617
        %v3619 = vrcp.pop %v3525
        %v3620 = vrcp.pop %v3528
        %v3621 = vrcp.pop %v3531
        %v3622 = vrcp.pop %v3534
        %v3623 = vrcp.pop %v3537
        %v3624 = vrcp.pop %v3540
        %v3625 = vrcp.pop %v3543
        %v3626 = vrcp.pop %v3546
        %v3627 = vrcp.pop %v3549
        %v3628 = vrcp.pop %v3552
        %v3629 = vrcp.pop %v3555
        %v3630 = vrcp.pop %v3558
        %v3631 = vrcp.pop %v3561
        %v3632 = vrcp.pop %v3564
        %v3633 = vrcp.pop %v3567
        %v3634 = vrcp.pop %v3570
        %v3635 = vrcp.pop %v3573
        %v3636 = vrcp.pop %v3576
        %v3637 = vrcp.pop %v3579
        %v3638 = vrcp.pop %v3582
        %v3639 = vrcp.pop %v3585
        %v3640 = vrcp.pop %v3588
        %v3641 = vrcp.pop %v3591
        %v3642 = vrcp.pop %v3594
        %v3643 = vrcp.pop %v3597
        %v3644 = vrcp.pop %v3600
        %v3645 = vrcp.pop %v3603
        %v3646 = vrcp.pop %v3606
        %v3647 = vrcp.pop %v3609
        %v3648 = vrcp.pop %v3612
        %v3649 = vrcp.pop %v3615
        %v3650 = vrcp.pop %v3618
        %v3651 = vmul.f32 %v3460, %v3619
        %v3652 = vmul.f32 %v3462, %v3620
        %v3653 = vmul.f32 %v3464, %v3621
        %v3654 = vmul.f32 %v3466, %v3622
        %v3655 = vmul.f32 %v3468, %v3623
        %v3656 = vmul.f32 %v3470, %v3624
        %v3657 = vmul.f32 %v3472, %v3625
        %v3658 = vmul.f32 %v3474, %v3626
        %v3659 = vmul.f32 %v3476, %v3627
        %v3660 = vmul.f32 %v3478, %v3628
        %v3661 = vmul.f32 %v3480, %v3629
        %v3662 = vmul.f32 %v3482, %v3630
        %v3663 = vmul.f32 %v3484, %v3631
        %v3664 = vmul.f32 %v3486, %v3632
        %v3665 = vmul.f32 %v3488, %v3633
        %v3666 = vmul.f32 %v3490, %v3634
        %v3667 = vmul.f32 %v3492, %v3635
        %v3668 = vmul.f32 %v3494, %v3636
        %v3669 = vmul.f32 %v3496, %v3637
        %v3670 = vmul.f32 %v3498, %v3638
        %v3671 = vmul.f32 %v3500, %v3639
        %v3672 = vmul.f32 %v3502, %v3640
        %v3673 = vmul.f32 %v3504, %v3641
        %v3674 = vmul.f32 %v3506, %v3642
        %v3675 = vmul.f32 %v3508, %v3643
        %v3676 = vmul.f32 %v3510, %v3644
        %v3677 = vmul.f32 %v3512, %v3645
        %v3678 = vmul.f32 %v3514, %v3646
        %v3679 = vmul.f32 %v3516, %v3647
        %v3680 = vmul.f32 %v3518, %v3648
        %v3681 = vmul.f32 %v3520, %v3649
        %v3682 = vmul.f32 %v3522, %v3650
        %3683 = vmatprep.subr.mxu0 0.0
        %3684 = vmatpush1.xpose.msra.mxu0 %v964
        %3685 = vmatprep.subr.mxu0 0.0
        %3686 = vmatpush1.xpose.msra.mxu0 0.0
        %3687 = vmatprep.subr.mxu0 0.0
        %3688 = vmatpush1.xpose.msra.mxu0 0.0
        %3689 = vmatprep.subr.mxu0 0.0
        %3690 = vmatpush1.xpose.msra.mxu0 0.0
        %3691 = vmatprep.subr.mxu0 0.0
        %3692 = vmatpush1.xpose.msra.mxu0 0.0
        %3693 = vmatprep.subr.mxu0 0.0
        %3694 = vmatpush1.xpose.msra.mxu0 0.0
        %3695 = vmatprep.subr.mxu0 0.0
        %3696 = vmatpush1.xpose.msra.mxu0 0.0
        %3697 = vmatprep.subr.mxu0 0.0
        %3698 = vmatpush1.xpose.msra.mxu0 0.0
        %3699 = vmatprep.subr.mxu0 0.0
        %3700 = vmatpush1.xpose.msra.mxu0 0.0
        %3701 = vmatprep.subr.mxu0 0.0
        %3702 = vmatpush1.xpose.msra.mxu0 0.0
        %3703 = vmatprep.subr.mxu0 0.0
        %3704 = vmatpush1.xpose.msra.mxu0 0.0
        %3705 = vmatprep.subr.mxu0 0.0
        %3706 = vmatpush1.xpose.msra.mxu0 0.0
        %3707 = vmatprep.subr.mxu0 0.0
        %3708 = vmatpush1.xpose.msra.mxu0 0.0
        %3709 = vmatprep.subr.mxu0 0.0
        %3710 = vmatpush1.xpose.msra.mxu0 0.0
        %3711 = vmatprep.subr.mxu0 0.0
        %3712 = vmatpush1.xpose.msra.mxu0 0.0
        %3713 = vmatprep.subr.mxu0 0.0
        %3714 = vmatpush1.xpose.msra.mxu0 0.0
        %3715 = vmatprep.subr.mxu0 0.0
        %3716 = vmatpush1.xpose.msra.mxu0 0.0
        %3717 = vmatprep.subr.mxu0 0.0
        %3718 = vmatpush1.xpose.msra.mxu0 0.0
        %3719 = vmatprep.subr.mxu0 0.0
        %3720 = vmatpush1.xpose.msra.mxu0 0.0
        %3721 = vmatprep.subr.mxu0 0.0
        %3722 = vmatpush1.xpose.msra.mxu0 0.0
        %3723 = vmatprep.subr.mxu0 0.0
        %3724 = vmatpush1.xpose.msra.mxu0 0.0
        %3725 = vmatprep.subr.mxu0 0.0
        %3726 = vmatpush1.xpose.msra.mxu0 0.0
        %3727 = vmatprep.subr.mxu0 0.0
        %3728 = vmatpush1.xpose.msra.mxu0 0.0
        %3729 = vmatprep.subr.mxu0 0.0
        %3730 = vmatpush1.xpose.msra.mxu0 0.0
        %3731 = vmatprep.subr.mxu0 0.0
        %3732 = vmatpush1.xpose.msra.mxu0 0.0
        %3733 = vmatprep.subr.mxu0 0.0
        %3734 = vmatpush1.xpose.msra.mxu0 0.0
        %3735 = vmatprep.subr.mxu0 0.0
        %3736 = vmatpush1.xpose.msra.mxu0 0.0
        %3737 = vmatprep.subr.mxu0 0.0
        %3738 = vmatpush1.xpose.msra.mxu0 0.0
        %3739 = vmatprep.subr.mxu0 0.0
        %3740 = vmatpush1.xpose.msra.mxu0 0.0
        %3741 = vmatprep.subr.mxu0 0.0
        %3742 = vmatpush1.xpose.msra.mxu0 0.0
        %3743 = vmatprep.subr.mxu0 0.0
        %3744 = vmatpush1.xpose.msra.mxu0 0.0
        %3745 = vmatprep.subr.mxu0 0.0
        %3746 = vmatpush1.xpose.msra.mxu0 0.0
        %3747 = vmatprep.mubr.f32.mxu0 0.0
        %3748 = vmatmul.mubr.f32.gmra.mrb[0].mxu0 %v773
        %v3749 = vpop.f32.mrb[0].mxu0
        %v3750 = vadd.f32 0.0, %v3749
        %v3751 = vpop.f32.mrb[0].mxu0
        %3752 = vdwg.mxu0
        %3753 = vmatprep.subr.mxu0 0.0
        %3754 = vmatpush1.xpose.msra.mxu0 %v967
        %3755 = vmatprep.subr.mxu0 0.0
        %3756 = vmatpush1.xpose.msra.mxu0 0.0
        %3757 = vmatprep.subr.mxu0 0.0
        %3758 = vmatpush1.xpose.msra.mxu0 0.0
        %3759 = vmatprep.subr.mxu0 0.0
        %3760 = vmatpush1.xpose.msra.mxu0 0.0
        %3761 = vmatprep.subr.mxu0 0.0
        %3762 = vmatpush1.xpose.msra.mxu0 0.0
        %3763 = vmatprep.subr.mxu0 0.0
        %3764 = vmatpush1.xpose.msra.mxu0 0.0
        %3765 = vmatprep.subr.mxu0 0.0
        %3766 = vmatpush1.xpose.msra.mxu0 0.0
        %3767 = vmatprep.subr.mxu0 0.0
        %3768 = vmatpush1.xpose.msra.mxu0 0.0
        %3769 = vmatprep.subr.mxu0 0.0
        %3770 = vmatpush1.xpose.msra.mxu0 0.0
        %3771 = vmatprep.subr.mxu0 0.0
        %3772 = vmatpush1.xpose.msra.mxu0 0.0
        %3773 = vmatprep.subr.mxu0 0.0
        %3774 = vmatpush1.xpose.msra.mxu0 0.0
        %3775 = vmatprep.subr.mxu0 0.0
        %3776 = vmatpush1.xpose.msra.mxu0 0.0
        %3777 = vmatprep.subr.mxu0 0.0
        %3778 = vmatpush1.xpose.msra.mxu0 0.0
        %3779 = vmatprep.subr.mxu0 0.0
        %3780 = vmatpush1.xpose.msra.mxu0 0.0
        %3781 = vmatprep.subr.mxu0 0.0
        %3782 = vmatpush1.xpose.msra.mxu0 0.0
        %3783 = vmatprep.subr.mxu0 0.0
        %3784 = vmatpush1.xpose.msra.mxu0 0.0
        %3785 = vmatprep.subr.mxu0 0.0
        %3786 = vmatpush1.xpose.msra.mxu0 0.0
        %3787 = vmatprep.subr.mxu0 0.0
        %3788 = vmatpush1.xpose.msra.mxu0 0.0
        %3789 = vmatprep.subr.mxu0 0.0
        %3790 = vmatpush1.xpose.msra.mxu0 0.0
        %3791 = vmatprep.subr.mxu0 0.0
        %3792 = vmatpush1.xpose.msra.mxu0 0.0
        %3793 = vmatprep.subr.mxu0 0.0
        %3794 = vmatpush1.xpose.msra.mxu0 0.0
        %3795 = vmatprep.subr.mxu0 0.0
        %3796 = vmatpush1.xpose.msra.mxu0 0.0
        %3797 = vmatprep.subr.mxu0 0.0
        %3798 = vmatpush1.xpose.msra.mxu0 0.0
        %3799 = vmatprep.subr.mxu0 0.0
        %3800 = vmatpush1.xpose.msra.mxu0 0.0
        %3801 = vmatprep.subr.mxu0 0.0
        %3802 = vmatpush1.xpose.msra.mxu0 0.0
        %3803 = vmatprep.subr.mxu0 0.0
        %3804 = vmatpush1.xpose.msra.mxu0 0.0
        %3805 = vmatprep.subr.mxu0 0.0
        %3806 = vmatpush1.xpose.msra.mxu0 0.0
        %3807 = vmatprep.subr.mxu0 0.0
        %3808 = vmatpush1.xpose.msra.mxu0 0.0
        %3809 = vmatprep.subr.mxu0 0.0
        %3810 = vmatpush1.xpose.msra.mxu0 0.0
        %3811 = vmatprep.subr.mxu0 0.0
        %3812 = vmatpush1.xpose.msra.mxu0 0.0
        %3813 = vmatprep.subr.mxu0 0.0
        %3814 = vmatpush1.xpose.msra.mxu0 0.0
        %3815 = vmatprep.subr.mxu0 0.0
        %3816 = vmatpush1.xpose.msra.mxu0 0.0
        %3817 = vmatprep.mubr.f32.mxu0 0.0
        %3818 = vmatmul.mubr.f32.gmra.mrb[0].mxu0 %v777
        %v3819 = vpop.f32.mrb[0].mxu0
        %v3820 = vadd.f32 0.0, %v3819
        %v3821 = vpop.f32.mrb[0].mxu0
        %3822 = vdwg.mxu0
        %3823 = vmatprep.subr.mxu0 0.0
        %3824 = vmatpush1.xpose.msra.mxu0 %v972
        %3825 = vmatprep.subr.mxu0 0.0
        %3826 = vmatpush1.xpose.msra.mxu0 0.0
        %3827 = vmatprep.subr.mxu0 0.0
        %3828 = vmatpush1.xpose.msra.mxu0 0.0
        %3829 = vmatprep.subr.mxu0 0.0
        %3830 = vmatpush1.xpose.msra.mxu0 0.0
        %3831 = vmatprep.subr.mxu0 0.0
        %3832 = vmatpush1.xpose.msra.mxu0 0.0
        %3833 = vmatprep.subr.mxu0 0.0
        %3834 = vmatpush1.xpose.msra.mxu0 0.0
        %3835 = vmatprep.subr.mxu0 0.0
        %3836 = vmatpush1.xpose.msra.mxu0 0.0
        %3837 = vmatprep.subr.mxu0 0.0
        %3838 = vmatpush1.xpose.msra.mxu0 0.0
        %3839 = vmatprep.subr.mxu0 0.0
        %3840 = vmatpush1.xpose.msra.mxu0 0.0
        %3841 = vmatprep.subr.mxu0 0.0
        %3842 = vmatpush1.xpose.msra.mxu0 0.0
        %3843 = vmatprep.subr.mxu0 0.0
        %3844 = vmatpush1.xpose.msra.mxu0 0.0
        %3845 = vmatprep.subr.mxu0 0.0
        %3846 = vmatpush1.xpose.msra.mxu0 0.0
        %3847 = vmatprep.subr.mxu0 0.0
        %3848 = vmatpush1.xpose.msra.mxu0 0.0
        %3849 = vmatprep.subr.mxu0 0.0
        %3850 = vmatpush1.xpose.msra.mxu0 0.0
        %3851 = vmatprep.subr.mxu0 0.0
        %3852 = vmatpush1.xpose.msra.mxu0 0.0
        %3853 = vmatprep.subr.mxu0 0.0
        %3854 = vmatpush1.xpose.msra.mxu0 0.0
        %3855 = vmatprep.subr.mxu0 0.0
        %3856 = vmatpush1.xpose.msra.mxu0 0.0
        %3857 = vmatprep.subr.mxu0 0.0
        %3858 = vmatpush1.xpose.msra.mxu0 0.0
        %3859 = vmatprep.subr.mxu0 0.0
        %3860 = vmatpush1.xpose.msra.mxu0 0.0
        %3861 = vmatprep.subr.mxu0 0.0
        %3862 = vmatpush1.xpose.msra.mxu0 0.0
        %3863 = vmatprep.subr.mxu0 0.0
        %3864 = vmatpush1.xpose.msra.mxu0 0.0
        %3865 = vmatprep.subr.mxu0 0.0
        %3866 = vmatpush1.xpose.msra.mxu0 0.0
        %3867 = vmatprep.subr.mxu0 0.0
        %3868 = vmatpush1.xpose.msra.mxu0 0.0
        %3869 = vmatprep.subr.mxu0 0.0
        %3870 = vmatpush1.xpose.msra.mxu0 0.0
        %3871 = vmatprep.subr.mxu0 0.0
        %3872 = vmatpush1.xpose.msra.mxu0 0.0
        %3873 = vmatprep.subr.mxu0 0.0
        %3874 = vmatpush1.xpose.msra.mxu0 0.0
        %3875 = vmatprep.subr.mxu0 0.0
        %3876 = vmatpush1.xpose.msra.mxu0 0.0
        %3877 = vmatprep.subr.mxu0 0.0
        %3878 = vmatpush1.xpose.msra.mxu0 0.0
        %3879 = vmatprep.subr.mxu0 0.0
        %3880 = vmatpush1.xpose.msra.mxu0 0.0
        %3881 = vmatprep.subr.mxu0 0.0
        %3882 = vmatpush1.xpose.msra.mxu0 0.0
        %3883 = vmatprep.subr.mxu0 0.0
        %3884 = vmatpush1.xpose.msra.mxu0 0.0
        %3885 = vmatprep.subr.mxu0 0.0
        %3886 = vmatpush1.xpose.msra.mxu0 0.0
        %3887 = vmatprep.mubr.f32.mxu0 0.0
        %3888 = vmatmul.mubr.f32.gmra.mrb[0].mxu0 %v783
        %v3889 = vpop.f32.mrb[0].mxu0
        %v3890 = vadd.f32 0.0, %v3889
        %v3891 = vpop.f32.mrb[0].mxu0
        %3892 = vdwg.mxu0
        %3893 = vmatprep.subr.mxu0 0.0
        %3894 = vmatpush1.xpose.msra.mxu0 %v975
        %3895 = vmatprep.subr.mxu0 0.0
        %3896 = vmatpush1.xpose.msra.mxu0 0.0
        %3897 = vmatprep.subr.mxu0 0.0
        %3898 = vmatpush1.xpose.msra.mxu0 0.0
        %3899 = vmatprep.subr.mxu0 0.0
        %3900 = vmatpush1.xpose.msra.mxu0 0.0
        %3901 = vmatprep.subr.mxu0 0.0
        %3902 = vmatpush1.xpose.msra.mxu0 0.0
        %3903 = vmatprep.subr.mxu0 0.0
        %3904 = vmatpush1.xpose.msra.mxu0 0.0
        %3905 = vmatprep.subr.mxu0 0.0
        %3906 = vmatpush1.xpose.msra.mxu0 0.0
        %3907 = vmatprep.subr.mxu0 0.0
        %3908 = vmatpush1.xpose.msra.mxu0 0.0
        %3909 = vmatprep.subr.mxu0 0.0
        %3910 = vmatpush1.xpose.msra.mxu0 0.0
        %3911 = vmatprep.subr.mxu0 0.0
        %3912 = vmatpush1.xpose.msra.mxu0 0.0
        %3913 = vmatprep.subr.mxu0 0.0
        %3914 = vmatpush1.xpose.msra.mxu0 0.0
        %3915 = vmatprep.subr.mxu0 0.0
        %3916 = vmatpush1.xpose.msra.mxu0 0.0
        %3917 = vmatprep.subr.mxu0 0.0
        %3918 = vmatpush1.xpose.msra.mxu0 0.0
        %3919 = vmatprep.subr.mxu0 0.0
        %3920 = vmatpush1.xpose.msra.mxu0 0.0
        %3921 = vmatprep.subr.mxu0 0.0
        %3922 = vmatpush1.xpose.msra.mxu0 0.0
        %3923 = vmatprep.subr.mxu0 0.0
        %3924 = vmatpush1.xpose.msra.mxu0 0.0
        %3925 = vmatprep.subr.mxu0 0.0
        %3926 = vmatpush1.xpose.msra.mxu0 0.0
        %3927 = vmatprep.subr.mxu0 0.0
        %3928 = vmatpush1.xpose.msra.mxu0 0.0
        %3929 = vmatprep.subr.mxu0 0.0
        %3930 = vmatpush1.xpose.msra.mxu0 0.0
        %3931 = vmatprep.subr.mxu0 0.0
        %3932 = vmatpush1.xpose.msra.mxu0 0.0
        %3933 = vmatprep.subr.mxu0 0.0
        %3934 = vmatpush1.xpose.msra.mxu0 0.0
        %3935 = vmatprep.subr.mxu0 0.0
        %3936 = vmatpush1.xpose.msra.mxu0 0.0
        %3937 = vmatprep.subr.mxu0 0.0
        %3938 = vmatpush1.xpose.msra.mxu0 0.0
        %3939 = vmatprep.subr.mxu0 0.0
        %3940 = vmatpush1.xpose.msra.mxu0 0.0
        %3941 = vmatprep.subr.mxu0 0.0
        %3942 = vmatpush1.xpose.msra.mxu0 0.0
        %3943 = vmatprep.subr.mxu0 0.0
        %3944 = vmatpush1.xpose.msra.mxu0 0.0
        %3945 = vmatprep.subr.mxu0 0.0
        %3946 = vmatpush1.xpose.msra.mxu0 0.0
        %3947 = vmatprep.subr.mxu0 0.0
        %3948 = vmatpush1.xpose.msra.mxu0 0.0
        %3949 = vmatprep.subr.mxu0 0.0
        %3950 = vmatpush1.xpose.msra.mxu0 0.0
        %3951 = vmatprep.subr.mxu0 0.0
        %3952 = vmatpush1.xpose.msra.mxu0 0.0
        %3953 = vmatprep.subr.mxu0 0.0
        %3954 = vmatpush1.xpose.msra.mxu0 0.0
        %3955 = vmatprep.subr.mxu0 0.0
        %3956 = vmatpush1.xpose.msra.mxu0 0.0
        %3957 = vmatprep.mubr.f32.mxu0 0.0
        %3958 = vmatmul.mubr.f32.gmra.mrb[0].mxu0 %v787
        %v3959 = vpop.f32.mrb[0].mxu0
        %v3960 = vadd.f32 0.0, %v3959
        %v3961 = vpop.f32.mrb[0].mxu0
        %3962 = vdwg.mxu0
        %3963 = vmatprep.subr.mxu0 0.0
        %3964 = vmatpush1.xpose.msra.mxu0 %v980
        %3965 = vmatprep.subr.mxu0 0.0
        %3966 = vmatpush1.xpose.msra.mxu0 0.0
        %3967 = vmatprep.subr.mxu0 0.0
        %3968 = vmatpush1.xpose.msra.mxu0 0.0
        %3969 = vmatprep.subr.mxu0 0.0
        %3970 = vmatpush1.xpose.msra.mxu0 0.0
        %3971 = vmatprep.subr.mxu0 0.0
        %3972 = vmatpush1.xpose.msra.mxu0 0.0
        %3973 = vmatprep.subr.mxu0 0.0
        %3974 = vmatpush1.xpose.msra.mxu0 0.0
        %3975 = vmatprep.subr.mxu0 0.0
        %3976 = vmatpush1.xpose.msra.mxu0 0.0
        %3977 = vmatprep.subr.mxu0 0.0
        %3978 = vmatpush1.xpose.msra.mxu0 0.0
        %3979 = vmatprep.subr.mxu0 0.0
        %3980 = vmatpush1.xpose.msra.mxu0 0.0
        %3981 = vmatprep.subr.mxu0 0.0
        %3982 = vmatpush1.xpose.msra.mxu0 0.0
        %3983 = vmatprep.subr.mxu0 0.0
        %3984 = vmatpush1.xpose.msra.mxu0 0.0
        %3985 = vmatprep.subr.mxu0 0.0
        %3986 = vmatpush1.xpose.msra.mxu0 0.0
        %3987 = vmatprep.subr.mxu0 0.0
        %3988 = vmatpush1.xpose.msra.mxu0 0.0
        %3989 = vmatprep.subr.mxu0 0.0
        %3990 = vmatpush1.xpose.msra.mxu0 0.0
        %3991 = vmatprep.subr.mxu0 0.0
        %3992 = vmatpush1.xpose.msra.mxu0 0.0
        %3993 = vmatprep.subr.mxu0 0.0
        %3994 = vmatpush1.xpose.msra.mxu0 0.0
        %3995 = vmatprep.subr.mxu0 0.0
        %3996 = vmatpush1.xpose.msra.mxu0 0.0
        %3997 = vmatprep.subr.mxu0 0.0
        %3998 = vmatpush1.xpose.msra.mxu0 0.0
        %3999 = vmatprep.subr.mxu0 0.0
        %4000 = vmatpush1.xpose.msra.mxu0 0.0
        %4001 = vmatprep.subr.mxu0 0.0
        %4002 = vmatpush1.xpose.msra.mxu0 0.0
        %4003 = vmatprep.subr.mxu0 0.0
        %4004 = vmatpush1.xpose.msra.mxu0 0.0
        %4005 = vmatprep.subr.mxu0 0.0
        %4006 = vmatpush1.xpose.msra.mxu0 0.0
        %4007 = vmatprep.subr.mxu0 0.0
        %4008 = vmatpush1.xpose.msra.mxu0 0.0
        %4009 = vmatprep.subr.mxu0 0.0
        %4010 = vmatpush1.xpose.msra.mxu0 0.0
        %4011 = vmatprep.subr.mxu0 0.0
        %4012 = vmatpush1.xpose.msra.mxu0 0.0
        %4013 = vmatprep.subr.mxu0 0.0
        %4014 = vmatpush1.xpose.msra.mxu0 0.0
        %4015 = vmatprep.subr.mxu0 0.0
        %4016 = vmatpush1.xpose.msra.mxu0 0.0
        %4017 = vmatprep.subr.mxu0 0.0
        %4018 = vmatpush1.xpose.msra.mxu0 0.0
        %4019 = vmatprep.subr.mxu0 0.0
        %4020 = vmatpush1.xpose.msra.mxu0 0.0
        %4021 = vmatprep.subr.mxu0 0.0
        %4022 = vmatpush1.xpose.msra.mxu0 0.0
        %4023 = vmatprep.subr.mxu0 0.0
        %4024 = vmatpush1.xpose.msra.mxu0 0.0
        %4025 = vmatprep.subr.mxu0 0.0
        %4026 = vmatpush1.xpose.msra.mxu0 0.0
        %4027 = vmatprep.mubr.f32.mxu0 0.0
        %4028 = vmatmul.mubr.f32.gmra.mrb[0].mxu0 %v793
        %v4029 = vpop.f32.mrb[0].mxu0
        %v4030 = vadd.f32 0.0, %v4029
        %v4031 = vpop.f32.mrb[0].mxu0
        %4032 = vdwg.mxu0
        %4033 = vmatprep.subr.mxu0 0.0
        %4034 = vmatpush1.xpose.msra.mxu0 %v983
        %4035 = vmatprep.subr.mxu0 0.0
        %4036 = vmatpush1.xpose.msra.mxu0 0.0
        %4037 = vmatprep.subr.mxu0 0.0
        %4038 = vmatpush1.xpose.msra.mxu0 0.0
        %4039 = vmatprep.subr.mxu0 0.0
        %4040 = vmatpush1.xpose.msra.mxu0 0.0
        %4041 = vmatprep.subr.mxu0 0.0
        %4042 = vmatpush1.xpose.msra.mxu0 0.0
        %4043 = vmatprep.subr.mxu0 0.0
        %4044 = vmatpush1.xpose.msra.mxu0 0.0
        %4045 = vmatprep.subr.mxu0 0.0
        %4046 = vmatpush1.xpose.msra.mxu0 0.0
        %4047 = vmatprep.subr.mxu0 0.0
        %4048 = vmatpush1.xpose.msra.mxu0 0.0
        %4049 = vmatprep.subr.mxu0 0.0
        %4050 = vmatpush1.xpose.msra.mxu0 0.0
        %4051 = vmatprep.subr.mxu0 0.0
        %4052 = vmatpush1.xpose.msra.mxu0 0.0
        %4053 = vmatprep.subr.mxu0 0.0
        %4054 = vmatpush1.xpose.msra.mxu0 0.0
        %4055 = vmatprep.subr.mxu0 0.0
        %4056 = vmatpush1.xpose.msra.mxu0 0.0
        %4057 = vmatprep.subr.mxu0 0.0
        %4058 = vmatpush1.xpose.msra.mxu0 0.0
        %4059 = vmatprep.subr.mxu0 0.0
        %4060 = vmatpush1.xpose.msra.mxu0 0.0
        %4061 = vmatprep.subr.mxu0 0.0
        %4062 = vmatpush1.xpose.msra.mxu0 0.0
        %4063 = vmatprep.subr.mxu0 0.0
        %4064 = vmatpush1.xpose.msra.mxu0 0.0
        %4065 = vmatprep.subr.mxu0 0.0
        %4066 = vmatpush1.xpose.msra.mxu0 0.0
        %4067 = vmatprep.subr.mxu0 0.0
        %4068 = vmatpush1.xpose.msra.mxu0 0.0
        %4069 = vmatprep.subr.mxu0 0.0
        %4070 = vmatpush1.xpose.msra.mxu0 0.0
        %4071 = vmatprep.subr.mxu0 0.0
        %4072 = vmatpush1.xpose.msra.mxu0 0.0
        %4073 = vmatprep.subr.mxu0 0.0
        %4074 = vmatpush1.xpose.msra.mxu0 0.0
        %4075 = vmatprep.subr.mxu0 0.0
        %4076 = vmatpush1.xpose.msra.mxu0 0.0
        %4077 = vmatprep.subr.mxu0 0.0
        %4078 = vmatpush1.xpose.msra.mxu0 0.0
        %4079 = vmatprep.subr.mxu0 0.0
        %4080 = vmatpush1.xpose.msra.mxu0 0.0
        %4081 = vmatprep.subr.mxu0 0.0
        %4082 = vmatpush1.xpose.msra.mxu0 0.0
        %4083 = vmatprep.subr.mxu0 0.0
        %4084 = vmatpush1.xpose.msra.mxu0 0.0
        %4085 = vmatprep.subr.mxu0 0.0
        %4086 = vmatpush1.xpose.msra.mxu0 0.0
        %4087 = vmatprep.subr.mxu0 0.0
        %4088 = vmatpush1.xpose.msra.mxu0 0.0
        %4089 = vmatprep.subr.mxu0 0.0
        %4090 = vmatpush1.xpose.msra.mxu0 0.0
        %4091 = vmatprep.subr.mxu0 0.0
        %4092 = vmatpush1.xpose.msra.mxu0 0.0
        %4093 = vmatprep.subr.mxu0 0.0
        %4094 = vmatpush1.xpose.msra.mxu0 0.0
        %4095 = vmatprep.subr.mxu0 0.0
        %4096 = vmatpush1.xpose.msra.mxu0 0.0
        %4097 = vmatprep.mubr.f32.mxu0 0.0
        %4098 = vmatmul.mubr.f32.gmra.mrb[0].mxu0 %v797
        %v4099 = vpop.f32.mrb[0].mxu0
        %v4100 = vadd.f32 0.0, %v4099
        %v4101 = vpop.f32.mrb[0].mxu0
        %4102 = vdwg.mxu0
        %4103 = vmatprep.subr.mxu0 0.0
        %4104 = vmatpush1.xpose.msra.mxu0 %v988
        %4105 = vmatprep.subr.mxu0 0.0
        %4106 = vmatpush1.xpose.msra.mxu0 0.0
        %4107 = vmatprep.subr.mxu0 0.0
        %4108 = vmatpush1.xpose.msra.mxu0 0.0
        %4109 = vmatprep.subr.mxu0 0.0
        %4110 = vmatpush1.xpose.msra.mxu0 0.0
        %4111 = vmatprep.subr.mxu0 0.0
        %4112 = vmatpush1.xpose.msra.mxu0 0.0
        %4113 = vmatprep.subr.mxu0 0.0
        %4114 = vmatpush1.xpose.msra.mxu0 0.0
        %4115 = vmatprep.subr.mxu0 0.0
        %4116 = vmatpush1.xpose.msra.mxu0 0.0
        %4117 = vmatprep.subr.mxu0 0.0
        %4118 = vmatpush1.xpose.msra.mxu0 0.0
        %4119 = vmatprep.subr.mxu0 0.0
        %4120 = vmatpush1.xpose.msra.mxu0 0.0
        %4121 = vmatprep.subr.mxu0 0.0
        %4122 = vmatpush1.xpose.msra.mxu0 0.0
        %4123 = vmatprep.subr.mxu0 0.0
        %4124 = vmatpush1.xpose.msra.mxu0 0.0
        %4125 = vmatprep.subr.mxu0 0.0
        %4126 = vmatpush1.xpose.msra.mxu0 0.0
        %4127 = vmatprep.subr.mxu0 0.0
        %4128 = vmatpush1.xpose.msra.mxu0 0.0
        %4129 = vmatprep.subr.mxu0 0.0
        %4130 = vmatpush1.xpose.msra.mxu0 0.0
        %4131 = vmatprep.subr.mxu0 0.0
        %4132 = vmatpush1.xpose.msra.mxu0 0.0
        %4133 = vmatprep.subr.mxu0 0.0
        %4134 = vmatpush1.xpose.msra.mxu0 0.0
        %4135 = vmatprep.subr.mxu0 0.0
        %4136 = vmatpush1.xpose.msra.mxu0 0.0
        %4137 = vmatprep.subr.mxu0 0.0
        %4138 = vmatpush1.xpose.msra.mxu0 0.0
        %4139 = vmatprep.subr.mxu0 0.0
        %4140 = vmatpush1.xpose.msra.mxu0 0.0
        %4141 = vmatprep.subr.mxu0 0.0
        %4142 = vmatpush1.xpose.msra.mxu0 0.0
        %4143 = vmatprep.subr.mxu0 0.0
        %4144 = vmatpush1.xpose.msra.mxu0 0.0
        %4145 = vmatprep.subr.mxu0 0.0
        %4146 = vmatpush1.xpose.msra.mxu0 0.0
        %4147 = vmatprep.subr.mxu0 0.0
        %4148 = vmatpush1.xpose.msra.mxu0 0.0
        %4149 = vmatprep.subr.mxu0 0.0
        %4150 = vmatpush1.xpose.msra.mxu0 0.0
        %4151 = vmatprep.subr.mxu0 0.0
        %4152 = vmatpush1.xpose.msra.mxu0 0.0
        %4153 = vmatprep.subr.mxu0 0.0
        %4154 = vmatpush1.xpose.msra.mxu0 0.0
        %4155 = vmatprep.subr.mxu0 0.0
        %4156 = vmatpush1.xpose.msra.mxu0 0.0
        %4157 = vmatprep.subr.mxu0 0.0
        %4158 = vmatpush1.xpose.msra.mxu0 0.0
        %4159 = vmatprep.subr.mxu0 0.0
        %4160 = vmatpush1.xpose.msra.mxu0 0.0
        %4161 = vmatprep.subr.mxu0 0.0
        %4162 = vmatpush1.xpose.msra.mxu0 0.0
        %4163 = vmatprep.subr.mxu0 0.0
        %4164 = vmatpush1.xpose.msra.mxu0 0.0
        %4165 = vmatprep.subr.mxu0 0.0
        %4166 = vmatpush1.xpose.msra.mxu0 0.0
        %4167 = vmatprep.mubr.f32.mxu0 0.0
        %4168 = vmatmul.mubr.f32.gmra.mrb[0].mxu0 %v803
        %v4169 = vpop.f32.mrb[0].mxu0
        %v4170 = vadd.f32 0.0, %v4169
        %v4171 = vpop.f32.mrb[0].mxu0
        %4172 = vdwg.mxu0
        %4173 = vmatprep.subr.mxu0 0.0
        %4174 = vmatpush1.xpose.msra.mxu0 %v991
        %4175 = vmatprep.subr.mxu0 0.0
        %4176 = vmatpush1.xpose.msra.mxu0 0.0
        %4177 = vmatprep.subr.mxu0 0.0
        %4178 = vmatpush1.xpose.msra.mxu0 0.0
        %4179 = vmatprep.subr.mxu0 0.0
        %4180 = vmatpush1.xpose.msra.mxu0 0.0
        %4181 = vmatprep.subr.mxu0 0.0
        %4182 = vmatpush1.xpose.msra.mxu0 0.0
        %4183 = vmatprep.subr.mxu0 0.0
        %4184 = vmatpush1.xpose.msra.mxu0 0.0
        %4185 = vmatprep.subr.mxu0 0.0
        %4186 = vmatpush1.xpose.msra.mxu0 0.0
        %4187 = vmatprep.subr.mxu0 0.0
        %4188 = vmatpush1.xpose.msra.mxu0 0.0
        %4189 = vmatprep.subr.mxu0 0.0
        %4190 = vmatpush1.xpose.msra.mxu0 0.0
        %4191 = vmatprep.subr.mxu0 0.0
        %4192 = vmatpush1.xpose.msra.mxu0 0.0
        %4193 = vmatprep.subr.mxu0 0.0
        %4194 = vmatpush1.xpose.msra.mxu0 0.0
        %4195 = vmatprep.subr.mxu0 0.0
        %4196 = vmatpush1.xpose.msra.mxu0 0.0
        %4197 = vmatprep.subr.mxu0 0.0
        %4198 = vmatpush1.xpose.msra.mxu0 0.0
        %4199 = vmatprep.subr.mxu0 0.0
        %4200 = vmatpush1.xpose.msra.mxu0 0.0
        %4201 = vmatprep.subr.mxu0 0.0
        %4202 = vmatpush1.xpose.msra.mxu0 0.0
        %4203 = vmatprep.subr.mxu0 0.0
        %4204 = vmatpush1.xpose.msra.mxu0 0.0
        %4205 = vmatprep.subr.mxu0 0.0
        %4206 = vmatpush1.xpose.msra.mxu0 0.0
        %4207 = vmatprep.subr.mxu0 0.0
        %4208 = vmatpush1.xpose.msra.mxu0 0.0
        %4209 = vmatprep.subr.mxu0 0.0
        %4210 = vmatpush1.xpose.msra.mxu0 0.0
        %4211 = vmatprep.subr.mxu0 0.0
        %4212 = vmatpush1.xpose.msra.mxu0 0.0
        %4213 = vmatprep.subr.mxu0 0.0
        %4214 = vmatpush1.xpose.msra.mxu0 0.0
        %4215 = vmatprep.subr.mxu0 0.0
        %4216 = vmatpush1.xpose.msra.mxu0 0.0
        %4217 = vmatprep.subr.mxu0 0.0
        %4218 = vmatpush1.xpose.msra.mxu0 0.0
        %4219 = vmatprep.subr.mxu0 0.0
        %4220 = vmatpush1.xpose.msra.mxu0 0.0
        %4221 = vmatprep.subr.mxu0 0.0
        %4222 = vmatpush1.xpose.msra.mxu0 0.0
        %4223 = vmatprep.subr.mxu0 0.0
        %4224 = vmatpush1.xpose.msra.mxu0 0.0
        %4225 = vmatprep.subr.mxu0 0.0
        %4226 = vmatpush1.xpose.msra.mxu0 0.0
        %4227 = vmatprep.subr.mxu0 0.0
        %4228 = vmatpush1.xpose.msra.mxu0 0.0
        %4229 = vmatprep.subr.mxu0 0.0
        %4230 = vmatpush1.xpose.msra.mxu0 0.0
        %4231 = vmatprep.subr.mxu0 0.0
        %4232 = vmatpush1.xpose.msra.mxu0 0.0
        %4233 = vmatprep.subr.mxu0 0.0
        %4234 = vmatpush1.xpose.msra.mxu0 0.0
        %4235 = vmatprep.subr.mxu0 0.0
        %4236 = vmatpush1.xpose.msra.mxu0 0.0
        %4237 = vmatprep.mubr.f32.mxu0 0.0
        %4238 = vmatmul.mubr.f32.gmra.mrb[0].mxu0 %v807
        %v4239 = vpop.f32.mrb[0].mxu0
        %v4240 = vadd.f32 0.0, %v4239
        %v4241 = vpop.f32.mrb[0].mxu0
        %4242 = vdwg.mxu0
        %4243 = vmatprep.subr.mxu0 0.0
        %4244 = vmatpush1.xpose.msra.mxu0 %v996
        %4245 = vmatprep.subr.mxu0 0.0
        %4246 = vmatpush1.xpose.msra.mxu0 0.0
        %4247 = vmatprep.subr.mxu0 0.0
        %4248 = vmatpush1.xpose.msra.mxu0 0.0
        %4249 = vmatprep.subr.mxu0 0.0
        %4250 = vmatpush1.xpose.msra.mxu0 0.0
        %4251 = vmatprep.subr.mxu0 0.0
        %4252 = vmatpush1.xpose.msra.mxu0 0.0
        %4253 = vmatprep.subr.mxu0 0.0
        %4254 = vmatpush1.xpose.msra.mxu0 0.0
        %4255 = vmatprep.subr.mxu0 0.0
        %4256 = vmatpush1.xpose.msra.mxu0 0.0
        %4257 = vmatprep.subr.mxu0 0.0
        %4258 = vmatpush1.xpose.msra.mxu0 0.0
        %4259 = vmatprep.subr.mxu0 0.0
        %4260 = vmatpush1.xpose.msra.mxu0 0.0
        %4261 = vmatprep.subr.mxu0 0.0
        %4262 = vmatpush1.xpose.msra.mxu0 0.0
        %4263 = vmatprep.subr.mxu0 0.0
        %4264 = vmatpush1.xpose.msra.mxu0 0.0
        %4265 = vmatprep.subr.mxu0 0.0
        %4266 = vmatpush1.xpose.msra.mxu0 0.0
        %4267 = vmatprep.subr.mxu0 0.0
        %4268 = vmatpush1.xpose.msra.mxu0 0.0
        %4269 = vmatprep.subr.mxu0 0.0
        %4270 = vmatpush1.xpose.msra.mxu0 0.0
        %4271 = vmatprep.subr.mxu0 0.0
        %4272 = vmatpush1.xpose.msra.mxu0 0.0
        %4273 = vmatprep.subr.mxu0 0.0
        %4274 = vmatpush1.xpose.msra.mxu0 0.0
        %4275 = vmatprep.subr.mxu0 0.0
        %4276 = vmatpush1.xpose.msra.mxu0 0.0
        %4277 = vmatprep.subr.mxu0 0.0
        %4278 = vmatpush1.xpose.msra.mxu0 0.0
        %4279 = vmatprep.subr.mxu0 0.0
        %4280 = vmatpush1.xpose.msra.mxu0 0.0
        %4281 = vmatprep.subr.mxu0 0.0
        %4282 = vmatpush1.xpose.msra.mxu0 0.0
        %4283 = vmatprep.subr.mxu0 0.0
        %4284 = vmatpush1.xpose.msra.mxu0 0.0
        %4285 = vmatprep.subr.mxu0 0.0
        %4286 = vmatpush1.xpose.msra.mxu0 0.0
        %4287 = vmatprep.subr.mxu0 0.0
        %4288 = vmatpush1.xpose.msra.mxu0 0.0
        %4289 = vmatprep.subr.mxu0 0.0
        %4290 = vmatpush1.xpose.msra.mxu0 0.0
        %4291 = vmatprep.subr.mxu0 0.0
        %4292 = vmatpush1.xpose.msra.mxu0 0.0
        %4293 = vmatprep.subr.mxu0 0.0
        %4294 = vmatpush1.xpose.msra.mxu0 0.0
        %4295 = vmatprep.subr.mxu0 0.0
        %4296 = vmatpush1.xpose.msra.mxu0 0.0
        %4297 = vmatprep.subr.mxu0 0.0
        %4298 = vmatpush1.xpose.msra.mxu0 0.0
        %4299 = vmatprep.subr.mxu0 0.0
        %4300 = vmatpush1.xpose.msra.mxu0 0.0
        %4301 = vmatprep.subr.mxu0 0.0
        %4302 = vmatpush1.xpose.msra.mxu0 0.0
        %4303 = vmatprep.subr.mxu0 0.0
        %4304 = vmatpush1.xpose.msra.mxu0 0.0
        %4305 = vmatprep.subr.mxu0 0.0
        %4306 = vmatpush1.xpose.msra.mxu0 0.0
        %4307 = vmatprep.mubr.f32.mxu0 0.0
        %4308 = vmatmul.mubr.f32.gmra.mrb[0].mxu0 %v813
        %v4309 = vpop.f32.mrb[0].mxu0
        %v4310 = vadd.f32 0.0, %v4309
        %v4311 = vpop.f32.mrb[0].mxu0
        %4312 = vdwg.mxu0
        %4313 = vmatprep.subr.mxu0 0.0
        %4314 = vmatpush1.xpose.msra.mxu0 %v999
        %4315 = vmatprep.subr.mxu0 0.0
        %4316 = vmatpush1.xpose.msra.mxu0 0.0
        %4317 = vmatprep.subr.mxu0 0.0
        %4318 = vmatpush1.xpose.msra.mxu0 0.0
        %4319 = vmatprep.subr.mxu0 0.0
        %4320 = vmatpush1.xpose.msra.mxu0 0.0
        %4321 = vmatprep.subr.mxu0 0.0
        %4322 = vmatpush1.xpose.msra.mxu0 0.0
        %4323 = vmatprep.subr.mxu0 0.0
        %4324 = vmatpush1.xpose.msra.mxu0 0.0
        %4325 = vmatprep.subr.mxu0 0.0
        %4326 = vmatpush1.xpose.msra.mxu0 0.0
        %4327 = vmatprep.subr.mxu0 0.0
        %4328 = vmatpush1.xpose.msra.mxu0 0.0
        %4329 = vmatprep.subr.mxu0 0.0
        %4330 = vmatpush1.xpose.msra.mxu0 0.0
        %4331 = vmatprep.subr.mxu0 0.0
        %4332 = vmatpush1.xpose.msra.mxu0 0.0
        %4333 = vmatprep.subr.mxu0 0.0
        %4334 = vmatpush1.xpose.msra.mxu0 0.0
        %4335 = vmatprep.subr.mxu0 0.0
        %4336 = vmatpush1.xpose.msra.mxu0 0.0
        %4337 = vmatprep.subr.mxu0 0.0
        %4338 = vmatpush1.xpose.msra.mxu0 0.0
        %4339 = vmatprep.subr.mxu0 0.0
        %4340 = vmatpush1.xpose.msra.mxu0 0.0
        %4341 = vmatprep.subr.mxu0 0.0
        %4342 = vmatpush1.xpose.msra.mxu0 0.0
        %4343 = vmatprep.subr.mxu0 0.0
        %4344 = vmatpush1.xpose.msra.mxu0 0.0
        %4345 = vmatprep.subr.mxu0 0.0
        %4346 = vmatpush1.xpose.msra.mxu0 0.0
        %4347 = vmatprep.subr.mxu0 0.0
        %4348 = vmatpush1.xpose.msra.mxu0 0.0
        %4349 = vmatprep.subr.mxu0 0.0
        %4350 = vmatpush1.xpose.msra.mxu0 0.0
        %4351 = vmatprep.subr.mxu0 0.0
        %4352 = vmatpush1.xpose.msra.mxu0 0.0
        %4353 = vmatprep.subr.mxu0 0.0
        %4354 = vmatpush1.xpose.msra.mxu0 0.0
        %4355 = vmatprep.subr.mxu0 0.0
        %4356 = vmatpush1.xpose.msra.mxu0 0.0
        %4357 = vmatprep.subr.mxu0 0.0
        %4358 = vmatpush1.xpose.msra.mxu0 0.0
        %4359 = vmatprep.subr.mxu0 0.0
        %4360 = vmatpush1.xpose.msra.mxu0 0.0
        %4361 = vmatprep.subr.mxu0 0.0
        %4362 = vmatpush1.xpose.msra.mxu0 0.0
        %4363 = vmatprep.subr.mxu0 0.0
        %4364 = vmatpush1.xpose.msra.mxu0 0.0
        %4365 = vmatprep.subr.mxu0 0.0
        %4366 = vmatpush1.xpose.msra.mxu0 0.0
        %4367 = vmatprep.subr.mxu0 0.0
        %4368 = vmatpush1.xpose.msra.mxu0 0.0
        %4369 = vmatprep.subr.mxu0 0.0
        %4370 = vmatpush1.xpose.msra.mxu0 0.0
        %4371 = vmatprep.subr.mxu0 0.0
        %4372 = vmatpush1.xpose.msra.mxu0 0.0
        %4373 = vmatprep.subr.mxu0 0.0
        %4374 = vmatpush1.xpose.msra.mxu0 0.0
        %4375 = vmatprep.subr.mxu0 0.0
        %4376 = vmatpush1.xpose.msra.mxu0 0.0
        %4377 = vmatprep.mubr.f32.mxu0 0.0
        %4378 = vmatmul.mubr.f32.gmra.mrb[0].mxu0 %v817
        %v4379 = vpop.f32.mrb[0].mxu0
        %v4380 = vadd.f32 0.0, %v4379
        %v4381 = vpop.f32.mrb[0].mxu0
        %4382 = vdwg.mxu0
        %4383 = vmatprep.subr.mxu0 0.0
        %4384 = vmatpush1.xpose.msra.mxu0 %v1004
        %4385 = vmatprep.subr.mxu0 0.0
        %4386 = vmatpush1.xpose.msra.mxu0 0.0
        %4387 = vmatprep.subr.mxu0 0.0
        %4388 = vmatpush1.xpose.msra.mxu0 0.0
        %4389 = vmatprep.subr.mxu0 0.0
        %4390 = vmatpush1.xpose.msra.mxu0 0.0
        %4391 = vmatprep.subr.mxu0 0.0
        %4392 = vmatpush1.xpose.msra.mxu0 0.0
        %4393 = vmatprep.subr.mxu0 0.0
        %4394 = vmatpush1.xpose.msra.mxu0 0.0
        %4395 = vmatprep.subr.mxu0 0.0
        %4396 = vmatpush1.xpose.msra.mxu0 0.0
        %4397 = vmatprep.subr.mxu0 0.0
        %4398 = vmatpush1.xpose.msra.mxu0 0.0
        %4399 = vmatprep.subr.mxu0 0.0
        %4400 = vmatpush1.xpose.msra.mxu0 0.0
        %4401 = vmatprep.subr.mxu0 0.0
        %4402 = vmatpush1.xpose.msra.mxu0 0.0
        %4403 = vmatprep.subr.mxu0 0.0
        %4404 = vmatpush1.xpose.msra.mxu0 0.0
        %4405 = vmatprep.subr.mxu0 0.0
        %4406 = vmatpush1.xpose.msra.mxu0 0.0
        %4407 = vmatprep.subr.mxu0 0.0
        %4408 = vmatpush1.xpose.msra.mxu0 0.0
        %4409 = vmatprep.subr.mxu0 0.0
        %4410 = vmatpush1.xpose.msra.mxu0 0.0
        %4411 = vmatprep.subr.mxu0 0.0
        %4412 = vmatpush1.xpose.msra.mxu0 0.0
        %4413 = vmatprep.subr.mxu0 0.0
        %4414 = vmatpush1.xpose.msra.mxu0 0.0
        %4415 = vmatprep.subr.mxu0 0.0
        %4416 = vmatpush1.xpose.msra.mxu0 0.0
        %4417 = vmatprep.subr.mxu0 0.0
        %4418 = vmatpush1.xpose.msra.mxu0 0.0
        %4419 = vmatprep.subr.mxu0 0.0
        %4420 = vmatpush1.xpose.msra.mxu0 0.0
        %4421 = vmatprep.subr.mxu0 0.0
        %4422 = vmatpush1.xpose.msra.mxu0 0.0
        %4423 = vmatprep.subr.mxu0 0.0
        %4424 = vmatpush1.xpose.msra.mxu0 0.0
        %4425 = vmatprep.subr.mxu0 0.0
        %4426 = vmatpush1.xpose.msra.mxu0 0.0
        %4427 = vmatprep.subr.mxu0 0.0
        %4428 = vmatpush1.xpose.msra.mxu0 0.0
        %4429 = vmatprep.subr.mxu0 0.0
        %4430 = vmatpush1.xpose.msra.mxu0 0.0
        %4431 = vmatprep.subr.mxu0 0.0
        %4432 = vmatpush1.xpose.msra.mxu0 0.0
        %4433 = vmatprep.subr.mxu0 0.0
        %4434 = vmatpush1.xpose.msra.mxu0 0.0
        %4435 = vmatprep.subr.mxu0 0.0
        %4436 = vmatpush1.xpose.msra.mxu0 0.0
        %4437 = vmatprep.subr.mxu0 0.0
        %4438 = vmatpush1.xpose.msra.mxu0 0.0
        %4439 = vmatprep.subr.mxu0 0.0
        %4440 = vmatpush1.xpose.msra.mxu0 0.0
        %4441 = vmatprep.subr.mxu0 0.0
        %4442 = vmatpush1.xpose.msra.mxu0 0.0
        %4443 = vmatprep.subr.mxu0 0.0
        %4444 = vmatpush1.xpose.msra.mxu0 0.0
        %4445 = vmatprep.subr.mxu0 0.0
        %4446 = vmatpush1.xpose.msra.mxu0 0.0
        %4447 = vmatprep.mubr.f32.mxu0 0.0
        %4448 = vmatmul.mubr.f32.gmra.mrb[0].mxu0 %v823
        %v4449 = vpop.f32.mrb[0].mxu0
        %v4450 = vadd.f32 0.0, %v4449
        %v4451 = vpop.f32.mrb[0].mxu0
        %4452 = vdwg.mxu0
        %4453 = vmatprep.subr.mxu0 0.0
        %4454 = vmatpush1.xpose.msra.mxu0 %v1007
        %4455 = vmatprep.subr.mxu0 0.0
        %4456 = vmatpush1.xpose.msra.mxu0 0.0
        %4457 = vmatprep.subr.mxu0 0.0
        %4458 = vmatpush1.xpose.msra.mxu0 0.0
        %4459 = vmatprep.subr.mxu0 0.0
        %4460 = vmatpush1.xpose.msra.mxu0 0.0
        %4461 = vmatprep.subr.mxu0 0.0
        %4462 = vmatpush1.xpose.msra.mxu0 0.0
        %4463 = vmatprep.subr.mxu0 0.0
        %4464 = vmatpush1.xpose.msra.mxu0 0.0
        %4465 = vmatprep.subr.mxu0 0.0
        %4466 = vmatpush1.xpose.msra.mxu0 0.0
        %4467 = vmatprep.subr.mxu0 0.0
        %4468 = vmatpush1.xpose.msra.mxu0 0.0
        %4469 = vmatprep.subr.mxu0 0.0
        %4470 = vmatpush1.xpose.msra.mxu0 0.0
        %4471 = vmatprep.subr.mxu0 0.0
        %4472 = vmatpush1.xpose.msra.mxu0 0.0
        %4473 = vmatprep.subr.mxu0 0.0
        %4474 = vmatpush1.xpose.msra.mxu0 0.0
        %4475 = vmatprep.subr.mxu0 0.0
        %4476 = vmatpush1.xpose.msra.mxu0 0.0
        %4477 = vmatprep.subr.mxu0 0.0
        %4478 = vmatpush1.xpose.msra.mxu0 0.0
        %4479 = vmatprep.subr.mxu0 0.0
        %4480 = vmatpush1.xpose.msra.mxu0 0.0
        %4481 = vmatprep.subr.mxu0 0.0
        %4482 = vmatpush1.xpose.msra.mxu0 0.0
        %4483 = vmatprep.subr.mxu0 0.0
        %4484 = vmatpush1.xpose.msra.mxu0 0.0
        %4485 = vmatprep.subr.mxu0 0.0
        %4486 = vmatpush1.xpose.msra.mxu0 0.0
        %4487 = vmatprep.subr.mxu0 0.0
        %4488 = vmatpush1.xpose.msra.mxu0 0.0
        %4489 = vmatprep.subr.mxu0 0.0
        %4490 = vmatpush1.xpose.msra.mxu0 0.0
        %4491 = vmatprep.subr.mxu0 0.0
        %4492 = vmatpush1.xpose.msra.mxu0 0.0
        %4493 = vmatprep.subr.mxu0 0.0
        %4494 = vmatpush1.xpose.msra.mxu0 0.0
        %4495 = vmatprep.subr.mxu0 0.0
        %4496 = vmatpush1.xpose.msra.mxu0 0.0
        %4497 = vmatprep.subr.mxu0 0.0
        %4498 = vmatpush1.xpose.msra.mxu0 0.0
        %4499 = vmatprep.subr.mxu0 0.0
        %4500 = vmatpush1.xpose.msra.mxu0 0.0
        %4501 = vmatprep.subr.mxu0 0.0
        %4502 = vmatpush1.xpose.msra.mxu0 0.0
        %4503 = vmatprep.subr.mxu0 0.0
        %4504 = vmatpush1.xpose.msra.mxu0 0.0
        %4505 = vmatprep.subr.mxu0 0.0
        %4506 = vmatpush1.xpose.msra.mxu0 0.0
        %4507 = vmatprep.subr.mxu0 0.0
        %4508 = vmatpush1.xpose.msra.mxu0 0.0
        %4509 = vmatprep.subr.mxu0 0.0
        %4510 = vmatpush1.xpose.msra.mxu0 0.0
        %4511 = vmatprep.subr.mxu0 0.0
        %4512 = vmatpush1.xpose.msra.mxu0 0.0
        %4513 = vmatprep.subr.mxu0 0.0
        %4514 = vmatpush1.xpose.msra.mxu0 0.0
        %4515 = vmatprep.subr.mxu0 0.0
        %4516 = vmatpush1.xpose.msra.mxu0 0.0
        %4517 = vmatprep.mubr.f32.mxu0 0.0
        %4518 = vmatmul.mubr.f32.gmra.mrb[0].mxu0 %v827
        %v4519 = vpop.f32.mrb[0].mxu0
        %v4520 = vadd.f32 0.0, %v4519
        %v4521 = vpop.f32.mrb[0].mxu0
        %4522 = vdwg.mxu0
        %4523 = vmatprep.subr.mxu0 0.0
        %4524 = vmatpush1.xpose.msra.mxu0 %v1012
        %4525 = vmatprep.subr.mxu0 0.0
        %4526 = vmatpush1.xpose.msra.mxu0 0.0
        %4527 = vmatprep.subr.mxu0 0.0
        %4528 = vmatpush1.xpose.msra.mxu0 0.0
        %4529 = vmatprep.subr.mxu0 0.0
        %4530 = vmatpush1.xpose.msra.mxu0 0.0
        %4531 = vmatprep.subr.mxu0 0.0
        %4532 = vmatpush1.xpose.msra.mxu0 0.0
        %4533 = vmatprep.subr.mxu0 0.0
        %4534 = vmatpush1.xpose.msra.mxu0 0.0
        %4535 = vmatprep.subr.mxu0 0.0
        %4536 = vmatpush1.xpose.msra.mxu0 0.0
        %4537 = vmatprep.subr.mxu0 0.0
        %4538 = vmatpush1.xpose.msra.mxu0 0.0
        %4539 = vmatprep.subr.mxu0 0.0
        %4540 = vmatpush1.xpose.msra.mxu0 0.0
        %4541 = vmatprep.subr.mxu0 0.0
        %4542 = vmatpush1.xpose.msra.mxu0 0.0
        %4543 = vmatprep.subr.mxu0 0.0
        %4544 = vmatpush1.xpose.msra.mxu0 0.0
        %4545 = vmatprep.subr.mxu0 0.0
        %4546 = vmatpush1.xpose.msra.mxu0 0.0
        %4547 = vmatprep.subr.mxu0 0.0
        %4548 = vmatpush1.xpose.msra.mxu0 0.0
        %4549 = vmatprep.subr.mxu0 0.0
        %4550 = vmatpush1.xpose.msra.mxu0 0.0
        %4551 = vmatprep.subr.mxu0 0.0
        %4552 = vmatpush1.xpose.msra.mxu0 0.0
        %4553 = vmatprep.subr.mxu0 0.0
        %4554 = vmatpush1.xpose.msra.mxu0 0.0
        %4555 = vmatprep.subr.mxu0 0.0
        %4556 = vmatpush1.xpose.msra.mxu0 0.0
        %4557 = vmatprep.subr.mxu0 0.0
        %4558 = vmatpush1.xpose.msra.mxu0 0.0
        %4559 = vmatprep.subr.mxu0 0.0
        %4560 = vmatpush1.xpose.msra.mxu0 0.0
        %4561 = vmatprep.subr.mxu0 0.0
        %4562 = vmatpush1.xpose.msra.mxu0 0.0
        %4563 = vmatprep.subr.mxu0 0.0
        %4564 = vmatpush1.xpose.msra.mxu0 0.0
        %4565 = vmatprep.subr.mxu0 0.0
        %4566 = vmatpush1.xpose.msra.mxu0 0.0
        %4567 = vmatprep.subr.mxu0 0.0
        %4568 = vmatpush1.xpose.msra.mxu0 0.0
        %4569 = vmatprep.subr.mxu0 0.0
        %4570 = vmatpush1.xpose.msra.mxu0 0.0
        %4571 = vmatprep.subr.mxu0 0.0
        %4572 = vmatpush1.xpose.msra.mxu0 0.0
        %4573 = vmatprep.subr.mxu0 0.0
        %4574 = vmatpush1.xpose.msra.mxu0 0.0
        %4575 = vmatprep.subr.mxu0 0.0
        %4576 = vmatpush1.xpose.msra.mxu0 0.0
        %4577 = vmatprep.subr.mxu0 0.0
        %4578 = vmatpush1.xpose.msra.mxu0 0.0
        %4579 = vmatprep.subr.mxu0 0.0
        %4580 = vmatpush1.xpose.msra.mxu0 0.0
        %4581 = vmatprep.subr.mxu0 0.0
        %4582 = vmatpush1.xpose.msra.mxu0 0.0
        %4583 = vmatprep.subr.mxu0 0.0
        %4584 = vmatpush1.xpose.msra.mxu0 0.0
        %4585 = vmatprep.subr.mxu0 0.0
        %4586 = vmatpush1.xpose.msra.mxu0 0.0
        %4587 = vmatprep.mubr.f32.mxu0 0.0
        %4588 = vmatmul.mubr.f32.gmra.mrb[0].mxu0 %v833
        %v4589 = vpop.f32.mrb[0].mxu0
        %v4590 = vadd.f32 0.0, %v4589
        %v4591 = vpop.f32.mrb[0].mxu0
        %4592 = vdwg.mxu0
        %4593 = vmatprep.subr.mxu0 0.0
        %4594 = vmatpush1.xpose.msra.mxu0 %v1015
        %4595 = vmatprep.subr.mxu0 0.0
        %4596 = vmatpush1.xpose.msra.mxu0 0.0
        %4597 = vmatprep.subr.mxu0 0.0
        %4598 = vmatpush1.xpose.msra.mxu0 0.0
        %4599 = vmatprep.subr.mxu0 0.0
        %4600 = vmatpush1.xpose.msra.mxu0 0.0
        %4601 = vmatprep.subr.mxu0 0.0
        %4602 = vmatpush1.xpose.msra.mxu0 0.0
        %4603 = vmatprep.subr.mxu0 0.0
        %4604 = vmatpush1.xpose.msra.mxu0 0.0
        %4605 = vmatprep.subr.mxu0 0.0
        %4606 = vmatpush1.xpose.msra.mxu0 0.0
        %4607 = vmatprep.subr.mxu0 0.0
        %4608 = vmatpush1.xpose.msra.mxu0 0.0
        %4609 = vmatprep.subr.mxu0 0.0
        %4610 = vmatpush1.xpose.msra.mxu0 0.0
        %4611 = vmatprep.subr.mxu0 0.0
        %4612 = vmatpush1.xpose.msra.mxu0 0.0
        %4613 = vmatprep.subr.mxu0 0.0
        %4614 = vmatpush1.xpose.msra.mxu0 0.0
        %4615 = vmatprep.subr.mxu0 0.0
        %4616 = vmatpush1.xpose.msra.mxu0 0.0
        %4617 = vmatprep.subr.mxu0 0.0
        %4618 = vmatpush1.xpose.msra.mxu0 0.0
        %4619 = vmatprep.subr.mxu0 0.0
        %4620 = vmatpush1.xpose.msra.mxu0 0.0
        %4621 = vmatprep.subr.mxu0 0.0
        %4622 = vmatpush1.xpose.msra.mxu0 0.0
        %4623 = vmatprep.subr.mxu0 0.0
        %4624 = vmatpush1.xpose.msra.mxu0 0.0
        %4625 = vmatprep.subr.mxu0 0.0
        %4626 = vmatpush1.xpose.msra.mxu0 0.0
        %4627 = vmatprep.subr.mxu0 0.0
        %4628 = vmatpush1.xpose.msra.mxu0 0.0
        %4629 = vmatprep.subr.mxu0 0.0
        %4630 = vmatpush1.xpose.msra.mxu0 0.0
        %4631 = vmatprep.subr.mxu0 0.0
        %4632 = vmatpush1.xpose.msra.mxu0 0.0
        %4633 = vmatprep.subr.mxu0 0.0
        %4634 = vmatpush1.xpose.msra.mxu0 0.0
        %4635 = vmatprep.subr.mxu0 0.0
        %4636 = vmatpush1.xpose.msra.mxu0 0.0
        %4637 = vmatprep.subr.mxu0 0.0
        %4638 = vmatpush1.xpose.msra.mxu0 0.0
        %4639 = vmatprep.subr.mxu0 0.0
        %4640 = vmatpush1.xpose.msra.mxu0 0.0
        %4641 = vmatprep.subr.mxu0 0.0
        %4642 = vmatpush1.xpose.msra.mxu0 0.0
        %4643 = vmatprep.subr.mxu0 0.0
        %4644 = vmatpush1.xpose.msra.mxu0 0.0
        %4645 = vmatprep.subr.mxu0 0.0
        %4646 = vmatpush1.xpose.msra.mxu0 0.0
        %4647 = vmatprep.subr.mxu0 0.0
        %4648 = vmatpush1.xpose.msra.mxu0 0.0
        %4649 = vmatprep.subr.mxu0 0.0
        %4650 = vmatpush1.xpose.msra.mxu0 0.0
        %4651 = vmatprep.subr.mxu0 0.0
        %4652 = vmatpush1.xpose.msra.mxu0 0.0
        %4653 = vmatprep.subr.mxu0 0.0
        %4654 = vmatpush1.xpose.msra.mxu0 0.0
        %4655 = vmatprep.subr.mxu0 0.0
        %4656 = vmatpush1.xpose.msra.mxu0 0.0
        %4657 = vmatprep.mubr.f32.mxu0 0.0
        %4658 = vmatmul.mubr.f32.gmra.mrb[0].mxu0 %v837
        %v4659 = vpop.f32.mrb[0].mxu0
        %v4660 = vadd.f32 0.0, %v4659
        %v4661 = vpop.f32.mrb[0].mxu0
        %4662 = vdwg.mxu0
        %4663 = vmatprep.subr.mxu0 0.0
        %4664 = vmatpush1.xpose.msra.mxu0 %v1020
        %4665 = vmatprep.subr.mxu0 0.0
        %4666 = vmatpush1.xpose.msra.mxu0 0.0
        %4667 = vmatprep.subr.mxu0 0.0
        %4668 = vmatpush1.xpose.msra.mxu0 0.0
        %4669 = vmatprep.subr.mxu0 0.0
        %4670 = vmatpush1.xpose.msra.mxu0 0.0
        %4671 = vmatprep.subr.mxu0 0.0
        %4672 = vmatpush1.xpose.msra.mxu0 0.0
        %4673 = vmatprep.subr.mxu0 0.0
        %4674 = vmatpush1.xpose.msra.mxu0 0.0
        %4675 = vmatprep.subr.mxu0 0.0
        %4676 = vmatpush1.xpose.msra.mxu0 0.0
        %4677 = vmatprep.subr.mxu0 0.0
        %4678 = vmatpush1.xpose.msra.mxu0 0.0
        %4679 = vmatprep.subr.mxu0 0.0
        %4680 = vmatpush1.xpose.msra.mxu0 0.0
        %4681 = vmatprep.subr.mxu0 0.0
        %4682 = vmatpush1.xpose.msra.mxu0 0.0
        %4683 = vmatprep.subr.mxu0 0.0
        %4684 = vmatpush1.xpose.msra.mxu0 0.0
        %4685 = vmatprep.subr.mxu0 0.0
        %4686 = vmatpush1.xpose.msra.mxu0 0.0
        %4687 = vmatprep.subr.mxu0 0.0
        %4688 = vmatpush1.xpose.msra.mxu0 0.0
        %4689 = vmatprep.subr.mxu0 0.0
        %4690 = vmatpush1.xpose.msra.mxu0 0.0
        %4691 = vmatprep.subr.mxu0 0.0
        %4692 = vmatpush1.xpose.msra.mxu0 0.0
        %4693 = vmatprep.subr.mxu0 0.0
        %4694 = vmatpush1.xpose.msra.mxu0 0.0
        %4695 = vmatprep.subr.mxu0 0.0
        %4696 = vmatpush1.xpose.msra.mxu0 0.0
        %4697 = vmatprep.subr.mxu0 0.0
        %4698 = vmatpush1.xpose.msra.mxu0 0.0
        %4699 = vmatprep.subr.mxu0 0.0
        %4700 = vmatpush1.xpose.msra.mxu0 0.0
        %4701 = vmatprep.subr.mxu0 0.0
        %4702 = vmatpush1.xpose.msra.mxu0 0.0
        %4703 = vmatprep.subr.mxu0 0.0
        %4704 = vmatpush1.xpose.msra.mxu0 0.0
        %4705 = vmatprep.subr.mxu0 0.0
        %4706 = vmatpush1.xpose.msra.mxu0 0.0
        %4707 = vmatprep.subr.mxu0 0.0
        %4708 = vmatpush1.xpose.msra.mxu0 0.0
        %4709 = vmatprep.subr.mxu0 0.0
        %4710 = vmatpush1.xpose.msra.mxu0 0.0
        %4711 = vmatprep.subr.mxu0 0.0
        %4712 = vmatpush1.xpose.msra.mxu0 0.0
        %4713 = vmatprep.subr.mxu0 0.0
        %4714 = vmatpush1.xpose.msra.mxu0 0.0
        %4715 = vmatprep.subr.mxu0 0.0
        %4716 = vmatpush1.xpose.msra.mxu0 0.0
        %4717 = vmatprep.subr.mxu0 0.0
        %4718 = vmatpush1.xpose.msra.mxu0 0.0
        %4719 = vmatprep.subr.mxu0 0.0
        %4720 = vmatpush1.xpose.msra.mxu0 0.0
        %4721 = vmatprep.subr.mxu0 0.0
        %4722 = vmatpush1.xpose.msra.mxu0 0.0
        %4723 = vmatprep.subr.mxu0 0.0
        %4724 = vmatpush1.xpose.msra.mxu0 0.0
        %4725 = vmatprep.subr.mxu0 0.0
        %4726 = vmatpush1.xpose.msra.mxu0 0.0
        %4727 = vmatprep.mubr.f32.mxu0 0.0
        %4728 = vmatmul.mubr.f32.gmra.mrb[0].mxu0 %v843
        %v4729 = vpop.f32.mrb[0].mxu0
        %v4730 = vadd.f32 0.0, %v4729
        %v4731 = vpop.f32.mrb[0].mxu0
        %4732 = vdwg.mxu0
        %4733 = vmatprep.subr.mxu0 0.0
        %4734 = vmatpush1.xpose.msra.mxu0 %v1023
        %4735 = vmatprep.subr.mxu0 0.0
        %4736 = vmatpush1.xpose.msra.mxu0 0.0
        %4737 = vmatprep.subr.mxu0 0.0
        %4738 = vmatpush1.xpose.msra.mxu0 0.0
        %4739 = vmatprep.subr.mxu0 0.0
        %4740 = vmatpush1.xpose.msra.mxu0 0.0
        %4741 = vmatprep.subr.mxu0 0.0
        %4742 = vmatpush1.xpose.msra.mxu0 0.0
        %4743 = vmatprep.subr.mxu0 0.0
        %4744 = vmatpush1.xpose.msra.mxu0 0.0
        %4745 = vmatprep.subr.mxu0 0.0
        %4746 = vmatpush1.xpose.msra.mxu0 0.0
        %4747 = vmatprep.subr.mxu0 0.0
        %4748 = vmatpush1.xpose.msra.mxu0 0.0
        %4749 = vmatprep.subr.mxu0 0.0
        %4750 = vmatpush1.xpose.msra.mxu0 0.0
        %4751 = vmatprep.subr.mxu0 0.0
        %4752 = vmatpush1.xpose.msra.mxu0 0.0
        %4753 = vmatprep.subr.mxu0 0.0
        %4754 = vmatpush1.xpose.msra.mxu0 0.0
        %4755 = vmatprep.subr.mxu0 0.0
        %4756 = vmatpush1.xpose.msra.mxu0 0.0
        %4757 = vmatprep.subr.mxu0 0.0
        %4758 = vmatpush1.xpose.msra.mxu0 0.0
        %4759 = vmatprep.subr.mxu0 0.0
        %4760 = vmatpush1.xpose.msra.mxu0 0.0
        %4761 = vmatprep.subr.mxu0 0.0
        %4762 = vmatpush1.xpose.msra.mxu0 0.0
        %4763 = vmatprep.subr.mxu0 0.0
        %4764 = vmatpush1.xpose.msra.mxu0 0.0
        %4765 = vmatprep.subr.mxu0 0.0
        %4766 = vmatpush1.xpose.msra.mxu0 0.0
        %4767 = vmatprep.subr.mxu0 0.0
        %4768 = vmatpush1.xpose.msra.mxu0 0.0
        %4769 = vmatprep.subr.mxu0 0.0
        %4770 = vmatpush1.xpose.msra.mxu0 0.0
        %4771 = vmatprep.subr.mxu0 0.0
        %4772 = vmatpush1.xpose.msra.mxu0 0.0
        %4773 = vmatprep.subr.mxu0 0.0
        %4774 = vmatpush1.xpose.msra.mxu0 0.0
        %4775 = vmatprep.subr.mxu0 0.0
        %4776 = vmatpush1.xpose.msra.mxu0 0.0
        %4777 = vmatprep.subr.mxu0 0.0
        %4778 = vmatpush1.xpose.msra.mxu0 0.0
        %4779 = vmatprep.subr.mxu0 0.0
        %4780 = vmatpush1.xpose.msra.mxu0 0.0
        %4781 = vmatprep.subr.mxu0 0.0
        %4782 = vmatpush1.xpose.msra.mxu0 0.0
        %4783 = vmatprep.subr.mxu0 0.0
        %4784 = vmatpush1.xpose.msra.mxu0 0.0
        %4785 = vmatprep.subr.mxu0 0.0
        %4786 = vmatpush1.xpose.msra.mxu0 0.0
        %4787 = vmatprep.subr.mxu0 0.0
        %4788 = vmatpush1.xpose.msra.mxu0 0.0
        %4789 = vmatprep.subr.mxu0 0.0
        %4790 = vmatpush1.xpose.msra.mxu0 0.0
        %4791 = vmatprep.subr.mxu0 0.0
        %4792 = vmatpush1.xpose.msra.mxu0 0.0
        %4793 = vmatprep.subr.mxu0 0.0
        %4794 = vmatpush1.xpose.msra.mxu0 0.0
        %4795 = vmatprep.subr.mxu0 0.0
        %4796 = vmatpush1.xpose.msra.mxu0 0.0
        %4797 = vmatprep.mubr.f32.mxu0 0.0
        %4798 = vmatmul.mubr.f32.gmra.mrb[0].mxu0 %v847
        %v4799 = vpop.f32.mrb[0].mxu0
        %v4800 = vadd.f32 0.0, %v4799
        %v4801 = vpop.f32.mrb[0].mxu0
        %4802 = vdwg.mxu0
        %4803 = vmatprep.subr.mxu0 0.0
        %4804 = vmatpush1.xpose.msra.mxu0 %v1028
        %4805 = vmatprep.subr.mxu0 0.0
        %4806 = vmatpush1.xpose.msra.mxu0 0.0
        %4807 = vmatprep.subr.mxu0 0.0
        %4808 = vmatpush1.xpose.msra.mxu0 0.0
        %4809 = vmatprep.subr.mxu0 0.0
        %4810 = vmatpush1.xpose.msra.mxu0 0.0
        %4811 = vmatprep.subr.mxu0 0.0
        %4812 = vmatpush1.xpose.msra.mxu0 0.0
        %4813 = vmatprep.subr.mxu0 0.0
        %4814 = vmatpush1.xpose.msra.mxu0 0.0
        %4815 = vmatprep.subr.mxu0 0.0
        %4816 = vmatpush1.xpose.msra.mxu0 0.0
        %4817 = vmatprep.subr.mxu0 0.0
        %4818 = vmatpush1.xpose.msra.mxu0 0.0
        %4819 = vmatprep.subr.mxu0 0.0
        %4820 = vmatpush1.xpose.msra.mxu0 0.0
        %4821 = vmatprep.subr.mxu0 0.0
        %4822 = vmatpush1.xpose.msra.mxu0 0.0
        %4823 = vmatprep.subr.mxu0 0.0
        %4824 = vmatpush1.xpose.msra.mxu0 0.0
        %4825 = vmatprep.subr.mxu0 0.0
        %4826 = vmatpush1.xpose.msra.mxu0 0.0
        %4827 = vmatprep.subr.mxu0 0.0
        %4828 = vmatpush1.xpose.msra.mxu0 0.0
        %4829 = vmatprep.subr.mxu0 0.0
        %4830 = vmatpush1.xpose.msra.mxu0 0.0
        %4831 = vmatprep.subr.mxu0 0.0
        %4832 = vmatpush1.xpose.msra.mxu0 0.0
        %4833 = vmatprep.subr.mxu0 0.0
        %4834 = vmatpush1.xpose.msra.mxu0 0.0
        %4835 = vmatprep.subr.mxu0 0.0
        %4836 = vmatpush1.xpose.msra.mxu0 0.0
        %4837 = vmatprep.subr.mxu0 0.0
        %4838 = vmatpush1.xpose.msra.mxu0 0.0
        %4839 = vmatprep.subr.mxu0 0.0
        %4840 = vmatpush1.xpose.msra.mxu0 0.0
        %4841 = vmatprep.subr.mxu0 0.0
        %4842 = vmatpush1.xpose.msra.mxu0 0.0
        %4843 = vmatprep.subr.mxu0 0.0
        %4844 = vmatpush1.xpose.msra.mxu0 0.0
        %4845 = vmatprep.subr.mxu0 0.0
        %4846 = vmatpush1.xpose.msra.mxu0 0.0
        %4847 = vmatprep.subr.mxu0 0.0
        %4848 = vmatpush1.xpose.msra.mxu0 0.0
        %4849 = vmatprep.subr.mxu0 0.0
        %4850 = vmatpush1.xpose.msra.mxu0 0.0
        %4851 = vmatprep.subr.mxu0 0.0
        %4852 = vmatpush1.xpose.msra.mxu0 0.0
        %4853 = vmatprep.subr.mxu0 0.0
        %4854 = vmatpush1.xpose.msra.mxu0 0.0
        %4855 = vmatprep.subr.mxu0 0.0
        %4856 = vmatpush1.xpose.msra.mxu0 0.0
        %4857 = vmatprep.subr.mxu0 0.0
        %4858 = vmatpush1.xpose.msra.mxu0 0.0
        %4859 = vmatprep.subr.mxu0 0.0
        %4860 = vmatpush1.xpose.msra.mxu0 0.0
        %4861 = vmatprep.subr.mxu0 0.0
        %4862 = vmatpush1.xpose.msra.mxu0 0.0
        %4863 = vmatprep.subr.mxu0 0.0
        %4864 = vmatpush1.xpose.msra.mxu0 0.0
        %4865 = vmatprep.subr.mxu0 0.0
        %4866 = vmatpush1.xpose.msra.mxu0 0.0
        %4867 = vmatprep.mubr.f32.mxu0 0.0
        %4868 = vmatmul.mubr.f32.gmra.mrb[0].mxu0 %v853
        %v4869 = vpop.f32.mrb[0].mxu0
        %v4870 = vadd.f32 0.0, %v4869
        %v4871 = vpop.f32.mrb[0].mxu0
        %4872 = vdwg.mxu0
        %4873 = vmatprep.subr.mxu0 0.0
        %4874 = vmatpush1.xpose.msra.mxu0 %v1031
        %4875 = vmatprep.subr.mxu0 0.0
        %4876 = vmatpush1.xpose.msra.mxu0 0.0
        %4877 = vmatprep.subr.mxu0 0.0
        %4878 = vmatpush1.xpose.msra.mxu0 0.0
        %4879 = vmatprep.subr.mxu0 0.0
        %4880 = vmatpush1.xpose.msra.mxu0 0.0
        %4881 = vmatprep.subr.mxu0 0.0
        %4882 = vmatpush1.xpose.msra.mxu0 0.0
        %4883 = vmatprep.subr.mxu0 0.0
        %4884 = vmatpush1.xpose.msra.mxu0 0.0
        %4885 = vmatprep.subr.mxu0 0.0
        %4886 = vmatpush1.xpose.msra.mxu0 0.0
        %4887 = vmatprep.subr.mxu0 0.0
        %4888 = vmatpush1.xpose.msra.mxu0 0.0
        %4889 = vmatprep.subr.mxu0 0.0
        %4890 = vmatpush1.xpose.msra.mxu0 0.0
        %4891 = vmatprep.subr.mxu0 0.0
        %4892 = vmatpush1.xpose.msra.mxu0 0.0
        %4893 = vmatprep.subr.mxu0 0.0
        %4894 = vmatpush1.xpose.msra.mxu0 0.0
        %4895 = vmatprep.subr.mxu0 0.0
        %4896 = vmatpush1.xpose.msra.mxu0 0.0
        %4897 = vmatprep.subr.mxu0 0.0
        %4898 = vmatpush1.xpose.msra.mxu0 0.0
        %4899 = vmatprep.subr.mxu0 0.0
        %4900 = vmatpush1.xpose.msra.mxu0 0.0
        %4901 = vmatprep.subr.mxu0 0.0
        %4902 = vmatpush1.xpose.msra.mxu0 0.0
        %4903 = vmatprep.subr.mxu0 0.0
        %4904 = vmatpush1.xpose.msra.mxu0 0.0
        %4905 = vmatprep.subr.mxu0 0.0
        %4906 = vmatpush1.xpose.msra.mxu0 0.0
        %4907 = vmatprep.subr.mxu0 0.0
        %4908 = vmatpush1.xpose.msra.mxu0 0.0
        %4909 = vmatprep.subr.mxu0 0.0
        %4910 = vmatpush1.xpose.msra.mxu0 0.0
        %4911 = vmatprep.subr.mxu0 0.0
        %4912 = vmatpush1.xpose.msra.mxu0 0.0
        %4913 = vmatprep.subr.mxu0 0.0
        %4914 = vmatpush1.xpose.msra.mxu0 0.0
        %4915 = vmatprep.subr.mxu0 0.0
        %4916 = vmatpush1.xpose.msra.mxu0 0.0
        %4917 = vmatprep.subr.mxu0 0.0
        %4918 = vmatpush1.xpose.msra.mxu0 0.0
        %4919 = vmatprep.subr.mxu0 0.0
        %4920 = vmatpush1.xpose.msra.mxu0 0.0
        %4921 = vmatprep.subr.mxu0 0.0
        %4922 = vmatpush1.xpose.msra.mxu0 0.0
        %4923 = vmatprep.subr.mxu0 0.0
        %4924 = vmatpush1.xpose.msra.mxu0 0.0
        %4925 = vmatprep.subr.mxu0 0.0
        %4926 = vmatpush1.xpose.msra.mxu0 0.0
        %4927 = vmatprep.subr.mxu0 0.0
        %4928 = vmatpush1.xpose.msra.mxu0 0.0
        %4929 = vmatprep.subr.mxu0 0.0
        %4930 = vmatpush1.xpose.msra.mxu0 0.0
        %4931 = vmatprep.subr.mxu0 0.0
        %4932 = vmatpush1.xpose.msra.mxu0 0.0
        %4933 = vmatprep.subr.mxu0 0.0
        %4934 = vmatpush1.xpose.msra.mxu0 0.0
        %4935 = vmatprep.subr.mxu0 0.0
        %4936 = vmatpush1.xpose.msra.mxu0 0.0
        %4937 = vmatprep.mubr.f32.mxu0 0.0
        %4938 = vmatmul.mubr.f32.gmra.mrb[0].mxu0 %v857
        %v4939 = vpop.f32.mrb[0].mxu0
        %v4940 = vadd.f32 0.0, %v4939
        %v4941 = vpop.f32.mrb[0].mxu0
        %4942 = vdwg.mxu0
        %4943 = vmatprep.subr.mxu0 0.0
        %4944 = vmatpush1.xpose.msra.mxu0 %v1036
        %4945 = vmatprep.subr.mxu0 0.0
        %4946 = vmatpush1.xpose.msra.mxu0 0.0
        %4947 = vmatprep.subr.mxu0 0.0
        %4948 = vmatpush1.xpose.msra.mxu0 0.0
        %4949 = vmatprep.subr.mxu0 0.0
        %4950 = vmatpush1.xpose.msra.mxu0 0.0
        %4951 = vmatprep.subr.mxu0 0.0
        %4952 = vmatpush1.xpose.msra.mxu0 0.0
        %4953 = vmatprep.subr.mxu0 0.0
        %4954 = vmatpush1.xpose.msra.mxu0 0.0
        %4955 = vmatprep.subr.mxu0 0.0
        %4956 = vmatpush1.xpose.msra.mxu0 0.0
        %4957 = vmatprep.subr.mxu0 0.0
        %4958 = vmatpush1.xpose.msra.mxu0 0.0
        %4959 = vmatprep.subr.mxu0 0.0
        %4960 = vmatpush1.xpose.msra.mxu0 0.0
        %4961 = vmatprep.subr.mxu0 0.0
        %4962 = vmatpush1.xpose.msra.mxu0 0.0
        %4963 = vmatprep.subr.mxu0 0.0
        %4964 = vmatpush1.xpose.msra.mxu0 0.0
        %4965 = vmatprep.subr.mxu0 0.0
        %4966 = vmatpush1.xpose.msra.mxu0 0.0
        %4967 = vmatprep.subr.mxu0 0.0
        %4968 = vmatpush1.xpose.msra.mxu0 0.0
        %4969 = vmatprep.subr.mxu0 0.0
        %4970 = vmatpush1.xpose.msra.mxu0 0.0
        %4971 = vmatprep.subr.mxu0 0.0
        %4972 = vmatpush1.xpose.msra.mxu0 0.0
        %4973 = vmatprep.subr.mxu0 0.0
        %4974 = vmatpush1.xpose.msra.mxu0 0.0
        %4975 = vmatprep.subr.mxu0 0.0
        %4976 = vmatpush1.xpose.msra.mxu0 0.0
        %4977 = vmatprep.subr.mxu0 0.0
        %4978 = vmatpush1.xpose.msra.mxu0 0.0
        %4979 = vmatprep.subr.mxu0 0.0
        %4980 = vmatpush1.xpose.msra.mxu0 0.0
        %4981 = vmatprep.subr.mxu0 0.0
        %4982 = vmatpush1.xpose.msra.mxu0 0.0
        %4983 = vmatprep.subr.mxu0 0.0
        %4984 = vmatpush1.xpose.msra.mxu0 0.0
        %4985 = vmatprep.subr.mxu0 0.0
        %4986 = vmatpush1.xpose.msra.mxu0 0.0
        %4987 = vmatprep.subr.mxu0 0.0
        %4988 = vmatpush1.xpose.msra.mxu0 0.0
        %4989 = vmatprep.subr.mxu0 0.0
        %4990 = vmatpush1.xpose.msra.mxu0 0.0
        %4991 = vmatprep.subr.mxu0 0.0
        %4992 = vmatpush1.xpose.msra.mxu0 0.0
        %4993 = vmatprep.subr.mxu0 0.0
        %4994 = vmatpush1.xpose.msra.mxu0 0.0
        %4995 = vmatprep.subr.mxu0 0.0
        %4996 = vmatpush1.xpose.msra.mxu0 0.0
        %4997 = vmatprep.subr.mxu0 0.0
        %4998 = vmatpush1.xpose.msra.mxu0 0.0
        %4999 = vmatprep.subr.mxu0 0.0
        %5000 = vmatpush1.xpose.msra.mxu0 0.0
        %5001 = vmatprep.subr.mxu0 0.0
        %5002 = vmatpush1.xpose.msra.mxu0 0.0
        %5003 = vmatprep.subr.mxu0 0.0
        %5004 = vmatpush1.xpose.msra.mxu0 0.0
        %5005 = vmatprep.subr.mxu0 0.0
        %5006 = vmatpush1.xpose.msra.mxu0 0.0
        %5007 = vmatprep.mubr.f32.mxu0 0.0
        %5008 = vmatmul.mubr.f32.gmra.mrb[0].mxu0 %v863
        %v5009 = vpop.f32.mrb[0].mxu0
        %v5010 = vadd.f32 0.0, %v5009
        %v5011 = vpop.f32.mrb[0].mxu0
        %5012 = vdwg.mxu0
        %5013 = vmatprep.subr.mxu0 0.0
        %5014 = vmatpush1.xpose.msra.mxu0 %v1039
        %5015 = vmatprep.subr.mxu0 0.0
        %5016 = vmatpush1.xpose.msra.mxu0 0.0
        %5017 = vmatprep.subr.mxu0 0.0
        %5018 = vmatpush1.xpose.msra.mxu0 0.0
        %5019 = vmatprep.subr.mxu0 0.0
        %5020 = vmatpush1.xpose.msra.mxu0 0.0
        %5021 = vmatprep.subr.mxu0 0.0
        %5022 = vmatpush1.xpose.msra.mxu0 0.0
        %5023 = vmatprep.subr.mxu0 0.0
        %5024 = vmatpush1.xpose.msra.mxu0 0.0
        %5025 = vmatprep.subr.mxu0 0.0
        %5026 = vmatpush1.xpose.msra.mxu0 0.0
        %5027 = vmatprep.subr.mxu0 0.0
        %5028 = vmatpush1.xpose.msra.mxu0 0.0
        %5029 = vmatprep.subr.mxu0 0.0
        %5030 = vmatpush1.xpose.msra.mxu0 0.0
        %5031 = vmatprep.subr.mxu0 0.0
        %5032 = vmatpush1.xpose.msra.mxu0 0.0
        %5033 = vmatprep.subr.mxu0 0.0
        %5034 = vmatpush1.xpose.msra.mxu0 0.0
        %5035 = vmatprep.subr.mxu0 0.0
        %5036 = vmatpush1.xpose.msra.mxu0 0.0
        %5037 = vmatprep.subr.mxu0 0.0
        %5038 = vmatpush1.xpose.msra.mxu0 0.0
        %5039 = vmatprep.subr.mxu0 0.0
        %5040 = vmatpush1.xpose.msra.mxu0 0.0
        %5041 = vmatprep.subr.mxu0 0.0
        %5042 = vmatpush1.xpose.msra.mxu0 0.0
        %5043 = vmatprep.subr.mxu0 0.0
        %5044 = vmatpush1.xpose.msra.mxu0 0.0
        %5045 = vmatprep.subr.mxu0 0.0
        %5046 = vmatpush1.xpose.msra.mxu0 0.0
        %5047 = vmatprep.subr.mxu0 0.0
        %5048 = vmatpush1.xpose.msra.mxu0 0.0
        %5049 = vmatprep.subr.mxu0 0.0
        %5050 = vmatpush1.xpose.msra.mxu0 0.0
        %5051 = vmatprep.subr.mxu0 0.0
        %5052 = vmatpush1.xpose.msra.mxu0 0.0
        %5053 = vmatprep.subr.mxu0 0.0
        %5054 = vmatpush1.xpose.msra.mxu0 0.0
        %5055 = vmatprep.subr.mxu0 0.0
        %5056 = vmatpush1.xpose.msra.mxu0 0.0
        %5057 = vmatprep.subr.mxu0 0.0
        %5058 = vmatpush1.xpose.msra.mxu0 0.0
        %5059 = vmatprep.subr.mxu0 0.0
        %5060 = vmatpush1.xpose.msra.mxu0 0.0
        %5061 = vmatprep.subr.mxu0 0.0
        %5062 = vmatpush1.xpose.msra.mxu0 0.0
        %5063 = vmatprep.subr.mxu0 0.0
        %5064 = vmatpush1.xpose.msra.mxu0 0.0
        %5065 = vmatprep.subr.mxu0 0.0
        %5066 = vmatpush1.xpose.msra.mxu0 0.0
        %5067 = vmatprep.subr.mxu0 0.0
        %5068 = vmatpush1.xpose.msra.mxu0 0.0
        %5069 = vmatprep.subr.mxu0 0.0
        %5070 = vmatpush1.xpose.msra.mxu0 0.0
        %5071 = vmatprep.subr.mxu0 0.0
        %5072 = vmatpush1.xpose.msra.mxu0 0.0
        %5073 = vmatprep.subr.mxu0 0.0
        %5074 = vmatpush1.xpose.msra.mxu0 0.0
        %5075 = vmatprep.subr.mxu0 0.0
        %5076 = vmatpush1.xpose.msra.mxu0 0.0
        %5077 = vmatprep.mubr.f32.mxu0 0.0
        %5078 = vmatmul.mubr.f32.gmra.mrb[0].mxu0 %v867
        %v5079 = vpop.f32.mrb[0].mxu0
        %v5080 = vadd.f32 0.0, %v5079
        %v5081 = vpop.f32.mrb[0].mxu0
        %5082 = vdwg.mxu0
        %5083 = vmatprep.subr.mxu0 0.0
        %5084 = vmatpush1.xpose.msra.mxu0 %v1044
        %5085 = vmatprep.subr.mxu0 0.0
        %5086 = vmatpush1.xpose.msra.mxu0 0.0
        %5087 = vmatprep.subr.mxu0 0.0
        %5088 = vmatpush1.xpose.msra.mxu0 0.0
        %5089 = vmatprep.subr.mxu0 0.0
        %5090 = vmatpush1.xpose.msra.mxu0 0.0
        %5091 = vmatprep.subr.mxu0 0.0
        %5092 = vmatpush1.xpose.msra.mxu0 0.0
        %5093 = vmatprep.subr.mxu0 0.0
        %5094 = vmatpush1.xpose.msra.mxu0 0.0
        %5095 = vmatprep.subr.mxu0 0.0
        %5096 = vmatpush1.xpose.msra.mxu0 0.0
        %5097 = vmatprep.subr.mxu0 0.0
        %5098 = vmatpush1.xpose.msra.mxu0 0.0
        %5099 = vmatprep.subr.mxu0 0.0
        %5100 = vmatpush1.xpose.msra.mxu0 0.0
        %5101 = vmatprep.subr.mxu0 0.0
        %5102 = vmatpush1.xpose.msra.mxu0 0.0
        %5103 = vmatprep.subr.mxu0 0.0
        %5104 = vmatpush1.xpose.msra.mxu0 0.0
        %5105 = vmatprep.subr.mxu0 0.0
        %5106 = vmatpush1.xpose.msra.mxu0 0.0
        %5107 = vmatprep.subr.mxu0 0.0
        %5108 = vmatpush1.xpose.msra.mxu0 0.0
        %5109 = vmatprep.subr.mxu0 0.0
        %5110 = vmatpush1.xpose.msra.mxu0 0.0
        %5111 = vmatprep.subr.mxu0 0.0
        %5112 = vmatpush1.xpose.msra.mxu0 0.0
        %5113 = vmatprep.subr.mxu0 0.0
        %5114 = vmatpush1.xpose.msra.mxu0 0.0
        %5115 = vmatprep.subr.mxu0 0.0
        %5116 = vmatpush1.xpose.msra.mxu0 0.0
        %5117 = vmatprep.subr.mxu0 0.0
        %5118 = vmatpush1.xpose.msra.mxu0 0.0
        %5119 = vmatprep.subr.mxu0 0.0
        %5120 = vmatpush1.xpose.msra.mxu0 0.0
        %5121 = vmatprep.subr.mxu0 0.0
        %5122 = vmatpush1.xpose.msra.mxu0 0.0
        %5123 = vmatprep.subr.mxu0 0.0
        %5124 = vmatpush1.xpose.msra.mxu0 0.0
        %5125 = vmatprep.subr.mxu0 0.0
        %5126 = vmatpush1.xpose.msra.mxu0 0.0
        %5127 = vmatprep.subr.mxu0 0.0
        %5128 = vmatpush1.xpose.msra.mxu0 0.0
        %5129 = vmatprep.subr.mxu0 0.0
        %5130 = vmatpush1.xpose.msra.mxu0 0.0
        %5131 = vmatprep.subr.mxu0 0.0
        %5132 = vmatpush1.xpose.msra.mxu0 0.0
        %5133 = vmatprep.subr.mxu0 0.0
        %5134 = vmatpush1.xpose.msra.mxu0 0.0
        %5135 = vmatprep.subr.mxu0 0.0
        %5136 = vmatpush1.xpose.msra.mxu0 0.0
        %5137 = vmatprep.subr.mxu0 0.0
        %5138 = vmatpush1.xpose.msra.mxu0 0.0
        %5139 = vmatprep.subr.mxu0 0.0
        %5140 = vmatpush1.xpose.msra.mxu0 0.0
        %5141 = vmatprep.subr.mxu0 0.0
        %5142 = vmatpush1.xpose.msra.mxu0 0.0
        %5143 = vmatprep.subr.mxu0 0.0
        %5144 = vmatpush1.xpose.msra.mxu0 0.0
        %5145 = vmatprep.subr.mxu0 0.0
        %5146 = vmatpush1.xpose.msra.mxu0 0.0
        %5147 = vmatprep.mubr.f32.mxu0 0.0
        %5148 = vmatmul.mubr.f32.gmra.mrb[0].mxu0 %v873
        %v5149 = vpop.f32.mrb[0].mxu0
        %v5150 = vadd.f32 0.0, %v5149
        %v5151 = vpop.f32.mrb[0].mxu0
        %5152 = vdwg.mxu0
        %5153 = vmatprep.subr.mxu0 0.0
        %5154 = vmatpush1.xpose.msra.mxu0 %v1047
        %5155 = vmatprep.subr.mxu0 0.0
        %5156 = vmatpush1.xpose.msra.mxu0 0.0
        %5157 = vmatprep.subr.mxu0 0.0
        %5158 = vmatpush1.xpose.msra.mxu0 0.0
        %5159 = vmatprep.subr.mxu0 0.0
        %5160 = vmatpush1.xpose.msra.mxu0 0.0
        %5161 = vmatprep.subr.mxu0 0.0
        %5162 = vmatpush1.xpose.msra.mxu0 0.0
        %5163 = vmatprep.subr.mxu0 0.0
        %5164 = vmatpush1.xpose.msra.mxu0 0.0
        %5165 = vmatprep.subr.mxu0 0.0
        %5166 = vmatpush1.xpose.msra.mxu0 0.0
        %5167 = vmatprep.subr.mxu0 0.0
        %5168 = vmatpush1.xpose.msra.mxu0 0.0
        %5169 = vmatprep.subr.mxu0 0.0
        %5170 = vmatpush1.xpose.msra.mxu0 0.0
        %5171 = vmatprep.subr.mxu0 0.0
        %5172 = vmatpush1.xpose.msra.mxu0 0.0
        %5173 = vmatprep.subr.mxu0 0.0
        %5174 = vmatpush1.xpose.msra.mxu0 0.0
        %5175 = vmatprep.subr.mxu0 0.0
        %5176 = vmatpush1.xpose.msra.mxu0 0.0
        %5177 = vmatprep.subr.mxu0 0.0
        %5178 = vmatpush1.xpose.msra.mxu0 0.0
        %5179 = vmatprep.subr.mxu0 0.0
        %5180 = vmatpush1.xpose.msra.mxu0 0.0
        %5181 = vmatprep.subr.mxu0 0.0
        %5182 = vmatpush1.xpose.msra.mxu0 0.0
        %5183 = vmatprep.subr.mxu0 0.0
        %5184 = vmatpush1.xpose.msra.mxu0 0.0
        %5185 = vmatprep.subr.mxu0 0.0
        %5186 = vmatpush1.xpose.msra.mxu0 0.0
        %5187 = vmatprep.subr.mxu0 0.0
        %5188 = vmatpush1.xpose.msra.mxu0 0.0
        %5189 = vmatprep.subr.mxu0 0.0
        %5190 = vmatpush1.xpose.msra.mxu0 0.0
        %5191 = vmatprep.subr.mxu0 0.0
        %5192 = vmatpush1.xpose.msra.mxu0 0.0
        %5193 = vmatprep.subr.mxu0 0.0
        %5194 = vmatpush1.xpose.msra.mxu0 0.0
        %5195 = vmatprep.subr.mxu0 0.0
        %5196 = vmatpush1.xpose.msra.mxu0 0.0
        %5197 = vmatprep.subr.mxu0 0.0
        %5198 = vmatpush1.xpose.msra.mxu0 0.0
        %5199 = vmatprep.subr.mxu0 0.0
        %5200 = vmatpush1.xpose.msra.mxu0 0.0
        %5201 = vmatprep.subr.mxu0 0.0
        %5202 = vmatpush1.xpose.msra.mxu0 0.0
        %5203 = vmatprep.subr.mxu0 0.0
        %5204 = vmatpush1.xpose.msra.mxu0 0.0
        %5205 = vmatprep.subr.mxu0 0.0
        %5206 = vmatpush1.xpose.msra.mxu0 0.0
        %5207 = vmatprep.subr.mxu0 0.0
        %5208 = vmatpush1.xpose.msra.mxu0 0.0
        %5209 = vmatprep.subr.mxu0 0.0
        %5210 = vmatpush1.xpose.msra.mxu0 0.0
        %5211 = vmatprep.subr.mxu0 0.0
        %5212 = vmatpush1.xpose.msra.mxu0 0.0
        %5213 = vmatprep.subr.mxu0 0.0
        %5214 = vmatpush1.xpose.msra.mxu0 0.0
        %5215 = vmatprep.subr.mxu0 0.0
        %5216 = vmatpush1.xpose.msra.mxu0 0.0
        %5217 = vmatprep.mubr.f32.mxu0 0.0
        %5218 = vmatmul.mubr.f32.gmra.mrb[0].mxu0 %v877
        %v5219 = vpop.f32.mrb[0].mxu0
        %v5220 = vadd.f32 0.0, %v5219
        %v5221 = vpop.f32.mrb[0].mxu0
        %5222 = vdwg.mxu0
        %5223 = vmatprep.subr.mxu0 0.0
        %5224 = vmatpush1.xpose.msra.mxu0 %v1052
        %5225 = vmatprep.subr.mxu0 0.0
        %5226 = vmatpush1.xpose.msra.mxu0 0.0
        %5227 = vmatprep.subr.mxu0 0.0
        %5228 = vmatpush1.xpose.msra.mxu0 0.0
        %5229 = vmatprep.subr.mxu0 0.0
        %5230 = vmatpush1.xpose.msra.mxu0 0.0
        %5231 = vmatprep.subr.mxu0 0.0
        %5232 = vmatpush1.xpose.msra.mxu0 0.0
        %5233 = vmatprep.subr.mxu0 0.0
        %5234 = vmatpush1.xpose.msra.mxu0 0.0
        %5235 = vmatprep.subr.mxu0 0.0
        %5236 = vmatpush1.xpose.msra.mxu0 0.0
        %5237 = vmatprep.subr.mxu0 0.0
        %5238 = vmatpush1.xpose.msra.mxu0 0.0
        %5239 = vmatprep.subr.mxu0 0.0
        %5240 = vmatpush1.xpose.msra.mxu0 0.0
        %5241 = vmatprep.subr.mxu0 0.0
        %5242 = vmatpush1.xpose.msra.mxu0 0.0
        %5243 = vmatprep.subr.mxu0 0.0
        %5244 = vmatpush1.xpose.msra.mxu0 0.0
        %5245 = vmatprep.subr.mxu0 0.0
        %5246 = vmatpush1.xpose.msra.mxu0 0.0
        %5247 = vmatprep.subr.mxu0 0.0
        %5248 = vmatpush1.xpose.msra.mxu0 0.0
        %5249 = vmatprep.subr.mxu0 0.0
        %5250 = vmatpush1.xpose.msra.mxu0 0.0
        %5251 = vmatprep.subr.mxu0 0.0
        %5252 = vmatpush1.xpose.msra.mxu0 0.0
        %5253 = vmatprep.subr.mxu0 0.0
        %5254 = vmatpush1.xpose.msra.mxu0 0.0
        %5255 = vmatprep.subr.mxu0 0.0
        %5256 = vmatpush1.xpose.msra.mxu0 0.0
        %5257 = vmatprep.subr.mxu0 0.0
        %5258 = vmatpush1.xpose.msra.mxu0 0.0
        %5259 = vmatprep.subr.mxu0 0.0
        %5260 = vmatpush1.xpose.msra.mxu0 0.0
        %5261 = vmatprep.subr.mxu0 0.0
        %5262 = vmatpush1.xpose.msra.mxu0 0.0
        %5263 = vmatprep.subr.mxu0 0.0
        %5264 = vmatpush1.xpose.msra.mxu0 0.0
        %5265 = vmatprep.subr.mxu0 0.0
        %5266 = vmatpush1.xpose.msra.mxu0 0.0
        %5267 = vmatprep.subr.mxu0 0.0
        %5268 = vmatpush1.xpose.msra.mxu0 0.0
        %5269 = vmatprep.subr.mxu0 0.0
        %5270 = vmatpush1.xpose.msra.mxu0 0.0
        %5271 = vmatprep.subr.mxu0 0.0
        %5272 = vmatpush1.xpose.msra.mxu0 0.0
        %5273 = vmatprep.subr.mxu0 0.0
        %5274 = vmatpush1.xpose.msra.mxu0 0.0
        %5275 = vmatprep.subr.mxu0 0.0
        %5276 = vmatpush1.xpose.msra.mxu0 0.0
        %5277 = vmatprep.subr.mxu0 0.0
        %5278 = vmatpush1.xpose.msra.mxu0 0.0
        %5279 = vmatprep.subr.mxu0 0.0
        %5280 = vmatpush1.xpose.msra.mxu0 0.0
        %5281 = vmatprep.subr.mxu0 0.0
        %5282 = vmatpush1.xpose.msra.mxu0 0.0
        %5283 = vmatprep.subr.mxu0 0.0
        %5284 = vmatpush1.xpose.msra.mxu0 0.0
        %5285 = vmatprep.subr.mxu0 0.0
        %5286 = vmatpush1.xpose.msra.mxu0 0.0
        %5287 = vmatprep.mubr.f32.mxu0 0.0
        %5288 = vmatmul.mubr.f32.gmra.mrb[0].mxu0 %v883
        %v5289 = vpop.f32.mrb[0].mxu0
        %v5290 = vadd.f32 0.0, %v5289
        %v5291 = vpop.f32.mrb[0].mxu0
        %5292 = vdwg.mxu0
        %5293 = vmatprep.subr.mxu0 0.0
        %5294 = vmatpush1.xpose.msra.mxu0 %v1055
        %5295 = vmatprep.subr.mxu0 0.0
        %5296 = vmatpush1.xpose.msra.mxu0 0.0
        %5297 = vmatprep.subr.mxu0 0.0
        %5298 = vmatpush1.xpose.msra.mxu0 0.0
        %5299 = vmatprep.subr.mxu0 0.0
        %5300 = vmatpush1.xpose.msra.mxu0 0.0
        %5301 = vmatprep.subr.mxu0 0.0
        %5302 = vmatpush1.xpose.msra.mxu0 0.0
        %5303 = vmatprep.subr.mxu0 0.0
        %5304 = vmatpush1.xpose.msra.mxu0 0.0
        %5305 = vmatprep.subr.mxu0 0.0
        %5306 = vmatpush1.xpose.msra.mxu0 0.0
        %5307 = vmatprep.subr.mxu0 0.0
        %5308 = vmatpush1.xpose.msra.mxu0 0.0
        %5309 = vmatprep.subr.mxu0 0.0
        %5310 = vmatpush1.xpose.msra.mxu0 0.0
        %5311 = vmatprep.subr.mxu0 0.0
        %5312 = vmatpush1.xpose.msra.mxu0 0.0
        %5313 = vmatprep.subr.mxu0 0.0
        %5314 = vmatpush1.xpose.msra.mxu0 0.0
        %5315 = vmatprep.subr.mxu0 0.0
        %5316 = vmatpush1.xpose.msra.mxu0 0.0
        %5317 = vmatprep.subr.mxu0 0.0
        %5318 = vmatpush1.xpose.msra.mxu0 0.0
        %5319 = vmatprep.subr.mxu0 0.0
        %5320 = vmatpush1.xpose.msra.mxu0 0.0
        %5321 = vmatprep.subr.mxu0 0.0
        %5322 = vmatpush1.xpose.msra.mxu0 0.0
        %5323 = vmatprep.subr.mxu0 0.0
        %5324 = vmatpush1.xpose.msra.mxu0 0.0
        %5325 = vmatprep.subr.mxu0 0.0
        %5326 = vmatpush1.xpose.msra.mxu0 0.0
        %5327 = vmatprep.subr.mxu0 0.0
        %5328 = vmatpush1.xpose.msra.mxu0 0.0
        %5329 = vmatprep.subr.mxu0 0.0
        %5330 = vmatpush1.xpose.msra.mxu0 0.0
        %5331 = vmatprep.subr.mxu0 0.0
        %5332 = vmatpush1.xpose.msra.mxu0 0.0
        %5333 = vmatprep.subr.mxu0 0.0
        %5334 = vmatpush1.xpose.msra.mxu0 0.0
        %5335 = vmatprep.subr.mxu0 0.0
        %5336 = vmatpush1.xpose.msra.mxu0 0.0
        %5337 = vmatprep.subr.mxu0 0.0
        %5338 = vmatpush1.xpose.msra.mxu0 0.0
        %5339 = vmatprep.subr.mxu0 0.0
        %5340 = vmatpush1.xpose.msra.mxu0 0.0
        %5341 = vmatprep.subr.mxu0 0.0
        %5342 = vmatpush1.xpose.msra.mxu0 0.0
        %5343 = vmatprep.subr.mxu0 0.0
        %5344 = vmatpush1.xpose.msra.mxu0 0.0
        %5345 = vmatprep.subr.mxu0 0.0
        %5346 = vmatpush1.xpose.msra.mxu0 0.0
        %5347 = vmatprep.subr.mxu0 0.0
        %5348 = vmatpush1.xpose.msra.mxu0 0.0
        %5349 = vmatprep.subr.mxu0 0.0
        %5350 = vmatpush1.xpose.msra.mxu0 0.0
        %5351 = vmatprep.subr.mxu0 0.0
        %5352 = vmatpush1.xpose.msra.mxu0 0.0
        %5353 = vmatprep.subr.mxu0 0.0
        %5354 = vmatpush1.xpose.msra.mxu0 0.0
        %5355 = vmatprep.subr.mxu0 0.0
        %5356 = vmatpush1.xpose.msra.mxu0 0.0
        %5357 = vmatprep.mubr.f32.mxu0 0.0
        %5358 = vmatmul.mubr.f32.gmra.mrb[0].mxu0 %v887
        %v5359 = vpop.f32.mrb[0].mxu0
        %v5360 = vadd.f32 0.0, %v5359
        %v5361 = vpop.f32.mrb[0].mxu0
        %5362 = vdwg.mxu0
        %5363 = vmatprep.subr.mxu0 0.0
        %5364 = vmatpush1.xpose.msra.mxu0 %v1060
        %5365 = vmatprep.subr.mxu0 0.0
        %5366 = vmatpush1.xpose.msra.mxu0 0.0
        %5367 = vmatprep.subr.mxu0 0.0
        %5368 = vmatpush1.xpose.msra.mxu0 0.0
        %5369 = vmatprep.subr.mxu0 0.0
        %5370 = vmatpush1.xpose.msra.mxu0 0.0
        %5371 = vmatprep.subr.mxu0 0.0
        %5372 = vmatpush1.xpose.msra.mxu0 0.0
        %5373 = vmatprep.subr.mxu0 0.0
        %5374 = vmatpush1.xpose.msra.mxu0 0.0
        %5375 = vmatprep.subr.mxu0 0.0
        %5376 = vmatpush1.xpose.msra.mxu0 0.0
        %5377 = vmatprep.subr.mxu0 0.0
        %5378 = vmatpush1.xpose.msra.mxu0 0.0
        %5379 = vmatprep.subr.mxu0 0.0
        %5380 = vmatpush1.xpose.msra.mxu0 0.0
        %5381 = vmatprep.subr.mxu0 0.0
        %5382 = vmatpush1.xpose.msra.mxu0 0.0
        %5383 = vmatprep.subr.mxu0 0.0
        %5384 = vmatpush1.xpose.msra.mxu0 0.0
        %5385 = vmatprep.subr.mxu0 0.0
        %5386 = vmatpush1.xpose.msra.mxu0 0.0
        %5387 = vmatprep.subr.mxu0 0.0
        %5388 = vmatpush1.xpose.msra.mxu0 0.0
        %5389 = vmatprep.subr.mxu0 0.0
        %5390 = vmatpush1.xpose.msra.mxu0 0.0
        %5391 = vmatprep.subr.mxu0 0.0
        %5392 = vmatpush1.xpose.msra.mxu0 0.0
        %5393 = vmatprep.subr.mxu0 0.0
        %5394 = vmatpush1.xpose.msra.mxu0 0.0
        %5395 = vmatprep.subr.mxu0 0.0
        %5396 = vmatpush1.xpose.msra.mxu0 0.0
        %5397 = vmatprep.subr.mxu0 0.0
        %5398 = vmatpush1.xpose.msra.mxu0 0.0
        %5399 = vmatprep.subr.mxu0 0.0
        %5400 = vmatpush1.xpose.msra.mxu0 0.0
        %5401 = vmatprep.subr.mxu0 0.0
        %5402 = vmatpush1.xpose.msra.mxu0 0.0
        %5403 = vmatprep.subr.mxu0 0.0
        %5404 = vmatpush1.xpose.msra.mxu0 0.0
        %5405 = vmatprep.subr.mxu0 0.0
        %5406 = vmatpush1.xpose.msra.mxu0 0.0
        %5407 = vmatprep.subr.mxu0 0.0
        %5408 = vmatpush1.xpose.msra.mxu0 0.0
        %5409 = vmatprep.subr.mxu0 0.0
        %5410 = vmatpush1.xpose.msra.mxu0 0.0
        %5411 = vmatprep.subr.mxu0 0.0
        %5412 = vmatpush1.xpose.msra.mxu0 0.0
        %5413 = vmatprep.subr.mxu0 0.0
        %5414 = vmatpush1.xpose.msra.mxu0 0.0
        %5415 = vmatprep.subr.mxu0 0.0
        %5416 = vmatpush1.xpose.msra.mxu0 0.0
        %5417 = vmatprep.subr.mxu0 0.0
        %5418 = vmatpush1.xpose.msra.mxu0 0.0
        %5419 = vmatprep.subr.mxu0 0.0
        %5420 = vmatpush1.xpose.msra.mxu0 0.0
        %5421 = vmatprep.subr.mxu0 0.0
        %5422 = vmatpush1.xpose.msra.mxu0 0.0
        %5423 = vmatprep.subr.mxu0 0.0
        %5424 = vmatpush1.xpose.msra.mxu0 0.0
        %5425 = vmatprep.subr.mxu0 0.0
        %5426 = vmatpush1.xpose.msra.mxu0 0.0
        %5427 = vmatprep.mubr.f32.mxu0 0.0
        %5428 = vmatmul.mubr.f32.gmra.mrb[0].mxu0 %v893
        %v5429 = vpop.f32.mrb[0].mxu0
        %v5430 = vadd.f32 0.0, %v5429
        %v5431 = vpop.f32.mrb[0].mxu0
        %5432 = vdwg.mxu0
        %5433 = vmatprep.subr.mxu0 0.0
        %5434 = vmatpush1.xpose.msra.mxu0 %v1063
        %5435 = vmatprep.subr.mxu0 0.0
        %5436 = vmatpush1.xpose.msra.mxu0 0.0
        %5437 = vmatprep.subr.mxu0 0.0
        %5438 = vmatpush1.xpose.msra.mxu0 0.0
        %5439 = vmatprep.subr.mxu0 0.0
        %5440 = vmatpush1.xpose.msra.mxu0 0.0
        %5441 = vmatprep.subr.mxu0 0.0
        %5442 = vmatpush1.xpose.msra.mxu0 0.0
        %5443 = vmatprep.subr.mxu0 0.0
        %5444 = vmatpush1.xpose.msra.mxu0 0.0
        %5445 = vmatprep.subr.mxu0 0.0
        %5446 = vmatpush1.xpose.msra.mxu0 0.0
        %5447 = vmatprep.subr.mxu0 0.0
        %5448 = vmatpush1.xpose.msra.mxu0 0.0
        %5449 = vmatprep.subr.mxu0 0.0
        %5450 = vmatpush1.xpose.msra.mxu0 0.0
        %5451 = vmatprep.subr.mxu0 0.0
        %5452 = vmatpush1.xpose.msra.mxu0 0.0
        %5453 = vmatprep.subr.mxu0 0.0
        %5454 = vmatpush1.xpose.msra.mxu0 0.0
        %5455 = vmatprep.subr.mxu0 0.0
        %5456 = vmatpush1.xpose.msra.mxu0 0.0
        %5457 = vmatprep.subr.mxu0 0.0
        %5458 = vmatpush1.xpose.msra.mxu0 0.0
        %5459 = vmatprep.subr.mxu0 0.0
        %5460 = vmatpush1.xpose.msra.mxu0 0.0
        %5461 = vmatprep.subr.mxu0 0.0
        %5462 = vmatpush1.xpose.msra.mxu0 0.0
        %5463 = vmatprep.subr.mxu0 0.0
        %5464 = vmatpush1.xpose.msra.mxu0 0.0
        %5465 = vmatprep.subr.mxu0 0.0
        %5466 = vmatpush1.xpose.msra.mxu0 0.0
        %5467 = vmatprep.subr.mxu0 0.0
        %5468 = vmatpush1.xpose.msra.mxu0 0.0
        %5469 = vmatprep.subr.mxu0 0.0
        %5470 = vmatpush1.xpose.msra.mxu0 0.0
        %5471 = vmatprep.subr.mxu0 0.0
        %5472 = vmatpush1.xpose.msra.mxu0 0.0
        %5473 = vmatprep.subr.mxu0 0.0
        %5474 = vmatpush1.xpose.msra.mxu0 0.0
        %5475 = vmatprep.subr.mxu0 0.0
        %5476 = vmatpush1.xpose.msra.mxu0 0.0
        %5477 = vmatprep.subr.mxu0 0.0
        %5478 = vmatpush1.xpose.msra.mxu0 0.0
        %5479 = vmatprep.subr.mxu0 0.0
        %5480 = vmatpush1.xpose.msra.mxu0 0.0
        %5481 = vmatprep.subr.mxu0 0.0
        %5482 = vmatpush1.xpose.msra.mxu0 0.0
        %5483 = vmatprep.subr.mxu0 0.0
        %5484 = vmatpush1.xpose.msra.mxu0 0.0
        %5485 = vmatprep.subr.mxu0 0.0
        %5486 = vmatpush1.xpose.msra.mxu0 0.0
        %5487 = vmatprep.subr.mxu0 0.0
        %5488 = vmatpush1.xpose.msra.mxu0 0.0
        %5489 = vmatprep.subr.mxu0 0.0
        %5490 = vmatpush1.xpose.msra.mxu0 0.0
        %5491 = vmatprep.subr.mxu0 0.0
        %5492 = vmatpush1.xpose.msra.mxu0 0.0
        %5493 = vmatprep.subr.mxu0 0.0
        %5494 = vmatpush1.xpose.msra.mxu0 0.0
        %5495 = vmatprep.subr.mxu0 0.0
        %5496 = vmatpush1.xpose.msra.mxu0 0.0
        %5497 = vmatprep.mubr.f32.mxu0 0.0
        %5498 = vmatmul.mubr.f32.gmra.mrb[0].mxu0 %v897
        %v5499 = vpop.f32.mrb[0].mxu0
        %v5500 = vadd.f32 0.0, %v5499
        %v5501 = vpop.f32.mrb[0].mxu0
        %5502 = vdwg.mxu0
        %5503 = vmatprep.subr.mxu0 0.0
        %5504 = vmatpush1.xpose.msra.mxu0 %v1068
        %5505 = vmatprep.subr.mxu0 0.0
        %5506 = vmatpush1.xpose.msra.mxu0 0.0
        %5507 = vmatprep.subr.mxu0 0.0
        %5508 = vmatpush1.xpose.msra.mxu0 0.0
        %5509 = vmatprep.subr.mxu0 0.0
        %5510 = vmatpush1.xpose.msra.mxu0 0.0
        %5511 = vmatprep.subr.mxu0 0.0
        %5512 = vmatpush1.xpose.msra.mxu0 0.0
        %5513 = vmatprep.subr.mxu0 0.0
        %5514 = vmatpush1.xpose.msra.mxu0 0.0
        %5515 = vmatprep.subr.mxu0 0.0
        %5516 = vmatpush1.xpose.msra.mxu0 0.0
        %5517 = vmatprep.subr.mxu0 0.0
        %5518 = vmatpush1.xpose.msra.mxu0 0.0
        %5519 = vmatprep.subr.mxu0 0.0
        %5520 = vmatpush1.xpose.msra.mxu0 0.0
        %5521 = vmatprep.subr.mxu0 0.0
        %5522 = vmatpush1.xpose.msra.mxu0 0.0
        %5523 = vmatprep.subr.mxu0 0.0
        %5524 = vmatpush1.xpose.msra.mxu0 0.0
        %5525 = vmatprep.subr.mxu0 0.0
        %5526 = vmatpush1.xpose.msra.mxu0 0.0
        %5527 = vmatprep.subr.mxu0 0.0
        %5528 = vmatpush1.xpose.msra.mxu0 0.0
        %5529 = vmatprep.subr.mxu0 0.0
        %5530 = vmatpush1.xpose.msra.mxu0 0.0
        %5531 = vmatprep.subr.mxu0 0.0
        %5532 = vmatpush1.xpose.msra.mxu0 0.0
        %5533 = vmatprep.subr.mxu0 0.0
        %5534 = vmatpush1.xpose.msra.mxu0 0.0
        %5535 = vmatprep.subr.mxu0 0.0
        %5536 = vmatpush1.xpose.msra.mxu0 0.0
        %5537 = vmatprep.subr.mxu0 0.0
        %5538 = vmatpush1.xpose.msra.mxu0 0.0
        %5539 = vmatprep.subr.mxu0 0.0
        %5540 = vmatpush1.xpose.msra.mxu0 0.0
        %5541 = vmatprep.subr.mxu0 0.0
        %5542 = vmatpush1.xpose.msra.mxu0 0.0
        %5543 = vmatprep.subr.mxu0 0.0
        %5544 = vmatpush1.xpose.msra.mxu0 0.0
        %5545 = vmatprep.subr.mxu0 0.0
        %5546 = vmatpush1.xpose.msra.mxu0 0.0
        %5547 = vmatprep.subr.mxu0 0.0
        %5548 = vmatpush1.xpose.msra.mxu0 0.0
        %5549 = vmatprep.subr.mxu0 0.0
        %5550 = vmatpush1.xpose.msra.mxu0 0.0
        %5551 = vmatprep.subr.mxu0 0.0
        %5552 = vmatpush1.xpose.msra.mxu0 0.0
        %5553 = vmatprep.subr.mxu0 0.0
        %5554 = vmatpush1.xpose.msra.mxu0 0.0
        %5555 = vmatprep.subr.mxu0 0.0
        %5556 = vmatpush1.xpose.msra.mxu0 0.0
        %5557 = vmatprep.subr.mxu0 0.0
        %5558 = vmatpush1.xpose.msra.mxu0 0.0
        %5559 = vmatprep.subr.mxu0 0.0
        %5560 = vmatpush1.xpose.msra.mxu0 0.0
        %5561 = vmatprep.subr.mxu0 0.0
        %5562 = vmatpush1.xpose.msra.mxu0 0.0
        %5563 = vmatprep.subr.mxu0 0.0
        %5564 = vmatpush1.xpose.msra.mxu0 0.0
        %5565 = vmatprep.subr.mxu0 0.0
        %5566 = vmatpush1.xpose.msra.mxu0 0.0
        %5567 = vmatprep.mubr.f32.mxu0 0.0
        %5568 = vmatmul.mubr.f32.gmra.mrb[0].mxu0 %v903
        %v5569 = vpop.f32.mrb[0].mxu0
        %v5570 = vadd.f32 0.0, %v5569
        %v5571 = vpop.f32.mrb[0].mxu0
        %5572 = vdwg.mxu0
        %5573 = vmatprep.subr.mxu0 0.0
        %5574 = vmatpush1.xpose.msra.mxu0 %v1071
        %5575 = vmatprep.subr.mxu0 0.0
        %5576 = vmatpush1.xpose.msra.mxu0 0.0
        %5577 = vmatprep.subr.mxu0 0.0
        %5578 = vmatpush1.xpose.msra.mxu0 0.0
        %5579 = vmatprep.subr.mxu0 0.0
        %5580 = vmatpush1.xpose.msra.mxu0 0.0
        %5581 = vmatprep.subr.mxu0 0.0
        %5582 = vmatpush1.xpose.msra.mxu0 0.0
        %5583 = vmatprep.subr.mxu0 0.0
        %5584 = vmatpush1.xpose.msra.mxu0 0.0
        %5585 = vmatprep.subr.mxu0 0.0
        %5586 = vmatpush1.xpose.msra.mxu0 0.0
        %5587 = vmatprep.subr.mxu0 0.0
        %5588 = vmatpush1.xpose.msra.mxu0 0.0
        %5589 = vmatprep.subr.mxu0 0.0
        %5590 = vmatpush1.xpose.msra.mxu0 0.0
        %5591 = vmatprep.subr.mxu0 0.0
        %5592 = vmatpush1.xpose.msra.mxu0 0.0
        %5593 = vmatprep.subr.mxu0 0.0
        %5594 = vmatpush1.xpose.msra.mxu0 0.0
        %5595 = vmatprep.subr.mxu0 0.0
        %5596 = vmatpush1.xpose.msra.mxu0 0.0
        %5597 = vmatprep.subr.mxu0 0.0
        %5598 = vmatpush1.xpose.msra.mxu0 0.0
        %5599 = vmatprep.subr.mxu0 0.0
        %5600 = vmatpush1.xpose.msra.mxu0 0.0
        %5601 = vmatprep.subr.mxu0 0.0
        %5602 = vmatpush1.xpose.msra.mxu0 0.0
        %5603 = vmatprep.subr.mxu0 0.0
        %5604 = vmatpush1.xpose.msra.mxu0 0.0
        %5605 = vmatprep.subr.mxu0 0.0
        %5606 = vmatpush1.xpose.msra.mxu0 0.0
        %5607 = vmatprep.subr.mxu0 0.0
        %5608 = vmatpush1.xpose.msra.mxu0 0.0
        %5609 = vmatprep.subr.mxu0 0.0
        %5610 = vmatpush1.xpose.msra.mxu0 0.0
        %5611 = vmatprep.subr.mxu0 0.0
        %5612 = vmatpush1.xpose.msra.mxu0 0.0
        %5613 = vmatprep.subr.mxu0 0.0
        %5614 = vmatpush1.xpose.msra.mxu0 0.0
        %5615 = vmatprep.subr.mxu0 0.0
        %5616 = vmatpush1.xpose.msra.mxu0 0.0
        %5617 = vmatprep.subr.mxu0 0.0
        %5618 = vmatpush1.xpose.msra.mxu0 0.0
        %5619 = vmatprep.subr.mxu0 0.0
        %5620 = vmatpush1.xpose.msra.mxu0 0.0
        %5621 = vmatprep.subr.mxu0 0.0
        %5622 = vmatpush1.xpose.msra.mxu0 0.0
        %5623 = vmatprep.subr.mxu0 0.0
        %5624 = vmatpush1.xpose.msra.mxu0 0.0
        %5625 = vmatprep.subr.mxu0 0.0
        %5626 = vmatpush1.xpose.msra.mxu0 0.0
        %5627 = vmatprep.subr.mxu0 0.0
        %5628 = vmatpush1.xpose.msra.mxu0 0.0
        %5629 = vmatprep.subr.mxu0 0.0
        %5630 = vmatpush1.xpose.msra.mxu0 0.0
        %5631 = vmatprep.subr.mxu0 0.0
        %5632 = vmatpush1.xpose.msra.mxu0 0.0
        %5633 = vmatprep.subr.mxu0 0.0
        %5634 = vmatpush1.xpose.msra.mxu0 0.0
        %5635 = vmatprep.subr.mxu0 0.0
        %5636 = vmatpush1.xpose.msra.mxu0 0.0
        %5637 = vmatprep.mubr.f32.mxu0 0.0
        %5638 = vmatmul.mubr.f32.gmra.mrb[0].mxu0 %v907
        %v5639 = vpop.f32.mrb[0].mxu0
        %v5640 = vadd.f32 0.0, %v5639
        %v5641 = vpop.f32.mrb[0].mxu0
        %5642 = vdwg.mxu0
        %5643 = vmatprep.subr.mxu0 0.0
        %5644 = vmatpush1.xpose.msra.mxu0 %v1076
        %5645 = vmatprep.subr.mxu0 0.0
        %5646 = vmatpush1.xpose.msra.mxu0 0.0
        %5647 = vmatprep.subr.mxu0 0.0
        %5648 = vmatpush1.xpose.msra.mxu0 0.0
        %5649 = vmatprep.subr.mxu0 0.0
        %5650 = vmatpush1.xpose.msra.mxu0 0.0
        %5651 = vmatprep.subr.mxu0 0.0
        %5652 = vmatpush1.xpose.msra.mxu0 0.0
        %5653 = vmatprep.subr.mxu0 0.0
        %5654 = vmatpush1.xpose.msra.mxu0 0.0
        %5655 = vmatprep.subr.mxu0 0.0
        %5656 = vmatpush1.xpose.msra.mxu0 0.0
        %5657 = vmatprep.subr.mxu0 0.0
        %5658 = vmatpush1.xpose.msra.mxu0 0.0
        %5659 = vmatprep.subr.mxu0 0.0
        %5660 = vmatpush1.xpose.msra.mxu0 0.0
        %5661 = vmatprep.subr.mxu0 0.0
        %5662 = vmatpush1.xpose.msra.mxu0 0.0
        %5663 = vmatprep.subr.mxu0 0.0
        %5664 = vmatpush1.xpose.msra.mxu0 0.0
        %5665 = vmatprep.subr.mxu0 0.0
        %5666 = vmatpush1.xpose.msra.mxu0 0.0
        %5667 = vmatprep.subr.mxu0 0.0
        %5668 = vmatpush1.xpose.msra.mxu0 0.0
        %5669 = vmatprep.subr.mxu0 0.0
        %5670 = vmatpush1.xpose.msra.mxu0 0.0
        %5671 = vmatprep.subr.mxu0 0.0
        %5672 = vmatpush1.xpose.msra.mxu0 0.0
        %5673 = vmatprep.subr.mxu0 0.0
        %5674 = vmatpush1.xpose.msra.mxu0 0.0
        %5675 = vmatprep.subr.mxu0 0.0
        %5676 = vmatpush1.xpose.msra.mxu0 0.0
        %5677 = vmatprep.subr.mxu0 0.0
        %5678 = vmatpush1.xpose.msra.mxu0 0.0
        %5679 = vmatprep.subr.mxu0 0.0
        %5680 = vmatpush1.xpose.msra.mxu0 0.0
        %5681 = vmatprep.subr.mxu0 0.0
        %5682 = vmatpush1.xpose.msra.mxu0 0.0
        %5683 = vmatprep.subr.mxu0 0.0
        %5684 = vmatpush1.xpose.msra.mxu0 0.0
        %5685 = vmatprep.subr.mxu0 0.0
        %5686 = vmatpush1.xpose.msra.mxu0 0.0
        %5687 = vmatprep.subr.mxu0 0.0
        %5688 = vmatpush1.xpose.msra.mxu0 0.0
        %5689 = vmatprep.subr.mxu0 0.0
        %5690 = vmatpush1.xpose.msra.mxu0 0.0
        %5691 = vmatprep.subr.mxu0 0.0
        %5692 = vmatpush1.xpose.msra.mxu0 0.0
        %5693 = vmatprep.subr.mxu0 0.0
        %5694 = vmatpush1.xpose.msra.mxu0 0.0
        %5695 = vmatprep.subr.mxu0 0.0
        %5696 = vmatpush1.xpose.msra.mxu0 0.0
        %5697 = vmatprep.subr.mxu0 0.0
        %5698 = vmatpush1.xpose.msra.mxu0 0.0
        %5699 = vmatprep.subr.mxu0 0.0
        %5700 = vmatpush1.xpose.msra.mxu0 0.0
        %5701 = vmatprep.subr.mxu0 0.0
        %5702 = vmatpush1.xpose.msra.mxu0 0.0
        %5703 = vmatprep.subr.mxu0 0.0
        %5704 = vmatpush1.xpose.msra.mxu0 0.0
        %5705 = vmatprep.subr.mxu0 0.0
        %5706 = vmatpush1.xpose.msra.mxu0 0.0
        %5707 = vmatprep.mubr.f32.mxu0 0.0
        %5708 = vmatmul.mubr.f32.gmra.mrb[0].mxu0 %v913
        %v5709 = vpop.f32.mrb[0].mxu0
        %v5710 = vadd.f32 0.0, %v5709
        %v5711 = vpop.f32.mrb[0].mxu0
        %5712 = vdwg.mxu0
        %5713 = vmatprep.subr.mxu0 0.0
        %5714 = vmatpush1.xpose.msra.mxu0 %v1079
        %5715 = vmatprep.subr.mxu0 0.0
        %5716 = vmatpush1.xpose.msra.mxu0 0.0
        %5717 = vmatprep.subr.mxu0 0.0
        %5718 = vmatpush1.xpose.msra.mxu0 0.0
        %5719 = vmatprep.subr.mxu0 0.0
        %5720 = vmatpush1.xpose.msra.mxu0 0.0
        %5721 = vmatprep.subr.mxu0 0.0
        %5722 = vmatpush1.xpose.msra.mxu0 0.0
        %5723 = vmatprep.subr.mxu0 0.0
        %5724 = vmatpush1.xpose.msra.mxu0 0.0
        %5725 = vmatprep.subr.mxu0 0.0
        %5726 = vmatpush1.xpose.msra.mxu0 0.0
        %5727 = vmatprep.subr.mxu0 0.0
        %5728 = vmatpush1.xpose.msra.mxu0 0.0
        %5729 = vmatprep.subr.mxu0 0.0
        %5730 = vmatpush1.xpose.msra.mxu0 0.0
        %5731 = vmatprep.subr.mxu0 0.0
        %5732 = vmatpush1.xpose.msra.mxu0 0.0
        %5733 = vmatprep.subr.mxu0 0.0
        %5734 = vmatpush1.xpose.msra.mxu0 0.0
        %5735 = vmatprep.subr.mxu0 0.0
        %5736 = vmatpush1.xpose.msra.mxu0 0.0
        %5737 = vmatprep.subr.mxu0 0.0
        %5738 = vmatpush1.xpose.msra.mxu0 0.0
        %5739 = vmatprep.subr.mxu0 0.0
        %5740 = vmatpush1.xpose.msra.mxu0 0.0
        %5741 = vmatprep.subr.mxu0 0.0
        %5742 = vmatpush1.xpose.msra.mxu0 0.0
        %5743 = vmatprep.subr.mxu0 0.0
        %5744 = vmatpush1.xpose.msra.mxu0 0.0
        %5745 = vmatprep.subr.mxu0 0.0
        %5746 = vmatpush1.xpose.msra.mxu0 0.0
        %5747 = vmatprep.subr.mxu0 0.0
        %5748 = vmatpush1.xpose.msra.mxu0 0.0
        %5749 = vmatprep.subr.mxu0 0.0
        %5750 = vmatpush1.xpose.msra.mxu0 0.0
        %5751 = vmatprep.subr.mxu0 0.0
        %5752 = vmatpush1.xpose.msra.mxu0 0.0
        %5753 = vmatprep.subr.mxu0 0.0
        %5754 = vmatpush1.xpose.msra.mxu0 0.0
        %5755 = vmatprep.subr.mxu0 0.0
        %5756 = vmatpush1.xpose.msra.mxu0 0.0
        %5757 = vmatprep.subr.mxu0 0.0
        %5758 = vmatpush1.xpose.msra.mxu0 0.0
        %5759 = vmatprep.subr.mxu0 0.0
        %5760 = vmatpush1.xpose.msra.mxu0 0.0
        %5761 = vmatprep.subr.mxu0 0.0
        %5762 = vmatpush1.xpose.msra.mxu0 0.0
        %5763 = vmatprep.subr.mxu0 0.0
        %5764 = vmatpush1.xpose.msra.mxu0 0.0
        %5765 = vmatprep.subr.mxu0 0.0
        %5766 = vmatpush1.xpose.msra.mxu0 0.0
        %5767 = vmatprep.subr.mxu0 0.0
        %5768 = vmatpush1.xpose.msra.mxu0 0.0
        %5769 = vmatprep.subr.mxu0 0.0
        %5770 = vmatpush1.xpose.msra.mxu0 0.0
        %5771 = vmatprep.subr.mxu0 0.0
        %5772 = vmatpush1.xpose.msra.mxu0 0.0
        %5773 = vmatprep.subr.mxu0 0.0
        %5774 = vmatpush1.xpose.msra.mxu0 0.0
        %5775 = vmatprep.subr.mxu0 0.0
        %5776 = vmatpush1.xpose.msra.mxu0 0.0
        %5777 = vmatprep.mubr.f32.mxu0 0.0
        %5778 = vmatmul.mubr.f32.gmra.mrb[0].mxu0 %v917
        %v5779 = vpop.f32.mrb[0].mxu0
        %v5780 = vadd.f32 0.0, %v5779
        %v5781 = vpop.f32.mrb[0].mxu0
        %5782 = vdwg.mxu0
        %5783 = vmatprep.subr.mxu0 0.0
        %5784 = vmatpush1.xpose.msra.mxu0 %v1084
        %5785 = vmatprep.subr.mxu0 0.0
        %5786 = vmatpush1.xpose.msra.mxu0 0.0
        %5787 = vmatprep.subr.mxu0 0.0
        %5788 = vmatpush1.xpose.msra.mxu0 0.0
        %5789 = vmatprep.subr.mxu0 0.0
        %5790 = vmatpush1.xpose.msra.mxu0 0.0
        %5791 = vmatprep.subr.mxu0 0.0
        %5792 = vmatpush1.xpose.msra.mxu0 0.0
        %5793 = vmatprep.subr.mxu0 0.0
        %5794 = vmatpush1.xpose.msra.mxu0 0.0
        %5795 = vmatprep.subr.mxu0 0.0
        %5796 = vmatpush1.xpose.msra.mxu0 0.0
        %5797 = vmatprep.subr.mxu0 0.0
        %5798 = vmatpush1.xpose.msra.mxu0 0.0
        %5799 = vmatprep.subr.mxu0 0.0
        %5800 = vmatpush1.xpose.msra.mxu0 0.0
        %5801 = vmatprep.subr.mxu0 0.0
        %5802 = vmatpush1.xpose.msra.mxu0 0.0
        %5803 = vmatprep.subr.mxu0 0.0
        %5804 = vmatpush1.xpose.msra.mxu0 0.0
        %5805 = vmatprep.subr.mxu0 0.0
        %5806 = vmatpush1.xpose.msra.mxu0 0.0
        %5807 = vmatprep.subr.mxu0 0.0
        %5808 = vmatpush1.xpose.msra.mxu0 0.0
        %5809 = vmatprep.subr.mxu0 0.0
        %5810 = vmatpush1.xpose.msra.mxu0 0.0
        %5811 = vmatprep.subr.mxu0 0.0
        %5812 = vmatpush1.xpose.msra.mxu0 0.0
        %5813 = vmatprep.subr.mxu0 0.0
        %5814 = vmatpush1.xpose.msra.mxu0 0.0
        %5815 = vmatprep.subr.mxu0 0.0
        %5816 = vmatpush1.xpose.msra.mxu0 0.0
        %5817 = vmatprep.subr.mxu0 0.0
        %5818 = vmatpush1.xpose.msra.mxu0 0.0
        %5819 = vmatprep.subr.mxu0 0.0
        %5820 = vmatpush1.xpose.msra.mxu0 0.0
        %5821 = vmatprep.subr.mxu0 0.0
        %5822 = vmatpush1.xpose.msra.mxu0 0.0
        %5823 = vmatprep.subr.mxu0 0.0
        %5824 = vmatpush1.xpose.msra.mxu0 0.0
        %5825 = vmatprep.subr.mxu0 0.0
        %5826 = vmatpush1.xpose.msra.mxu0 0.0
        %5827 = vmatprep.subr.mxu0 0.0
        %5828 = vmatpush1.xpose.msra.mxu0 0.0
        %5829 = vmatprep.subr.mxu0 0.0
        %5830 = vmatpush1.xpose.msra.mxu0 0.0
        %5831 = vmatprep.subr.mxu0 0.0
        %5832 = vmatpush1.xpose.msra.mxu0 0.0
        %5833 = vmatprep.subr.mxu0 0.0
        %5834 = vmatpush1.xpose.msra.mxu0 0.0
        %5835 = vmatprep.subr.mxu0 0.0
        %5836 = vmatpush1.xpose.msra.mxu0 0.0
        %5837 = vmatprep.subr.mxu0 0.0
        %5838 = vmatpush1.xpose.msra.mxu0 0.0
        %5839 = vmatprep.subr.mxu0 0.0
        %5840 = vmatpush1.xpose.msra.mxu0 0.0
        %5841 = vmatprep.subr.mxu0 0.0
        %5842 = vmatpush1.xpose.msra.mxu0 0.0
        %5843 = vmatprep.subr.mxu0 0.0
        %5844 = vmatpush1.xpose.msra.mxu0 0.0
        %5845 = vmatprep.subr.mxu0 0.0
        %5846 = vmatpush1.xpose.msra.mxu0 0.0
        %5847 = vmatprep.mubr.f32.mxu0 0.0
        %5848 = vmatmul.mubr.f32.gmra.mrb[0].mxu0 %v923
        %v5849 = vpop.f32.mrb[0].mxu0
        %v5850 = vadd.f32 0.0, %v5849
        %v5851 = vpop.f32.mrb[0].mxu0
        %5852 = vdwg.mxu0
        %5853 = vmatprep.subr.mxu0 0.0
        %5854 = vmatpush1.xpose.msra.mxu0 %v1087
        %5855 = vmatprep.subr.mxu0 0.0
        %5856 = vmatpush1.xpose.msra.mxu0 0.0
        %5857 = vmatprep.subr.mxu0 0.0
        %5858 = vmatpush1.xpose.msra.mxu0 0.0
        %5859 = vmatprep.subr.mxu0 0.0
        %5860 = vmatpush1.xpose.msra.mxu0 0.0
        %5861 = vmatprep.subr.mxu0 0.0
        %5862 = vmatpush1.xpose.msra.mxu0 0.0
        %5863 = vmatprep.subr.mxu0 0.0
        %5864 = vmatpush1.xpose.msra.mxu0 0.0
        %5865 = vmatprep.subr.mxu0 0.0
        %5866 = vmatpush1.xpose.msra.mxu0 0.0
        %5867 = vmatprep.subr.mxu0 0.0
        %5868 = vmatpush1.xpose.msra.mxu0 0.0
        %5869 = vmatprep.subr.mxu0 0.0
        %5870 = vmatpush1.xpose.msra.mxu0 0.0
        %5871 = vmatprep.subr.mxu0 0.0
        %5872 = vmatpush1.xpose.msra.mxu0 0.0
        %5873 = vmatprep.subr.mxu0 0.0
        %5874 = vmatpush1.xpose.msra.mxu0 0.0
        %5875 = vmatprep.subr.mxu0 0.0
        %5876 = vmatpush1.xpose.msra.mxu0 0.0
        %5877 = vmatprep.subr.mxu0 0.0
        %5878 = vmatpush1.xpose.msra.mxu0 0.0
        %5879 = vmatprep.subr.mxu0 0.0
        %5880 = vmatpush1.xpose.msra.mxu0 0.0
        %5881 = vmatprep.subr.mxu0 0.0
        %5882 = vmatpush1.xpose.msra.mxu0 0.0
        %5883 = vmatprep.subr.mxu0 0.0
        %5884 = vmatpush1.xpose.msra.mxu0 0.0
        %5885 = vmatprep.subr.mxu0 0.0
        %5886 = vmatpush1.xpose.msra.mxu0 0.0
        %5887 = vmatprep.subr.mxu0 0.0
        %5888 = vmatpush1.xpose.msra.mxu0 0.0
        %5889 = vmatprep.subr.mxu0 0.0
        %5890 = vmatpush1.xpose.msra.mxu0 0.0
        %5891 = vmatprep.subr.mxu0 0.0
        %5892 = vmatpush1.xpose.msra.mxu0 0.0
        %5893 = vmatprep.subr.mxu0 0.0
        %5894 = vmatpush1.xpose.msra.mxu0 0.0
        %5895 = vmatprep.subr.mxu0 0.0
        %5896 = vmatpush1.xpose.msra.mxu0 0.0
        %5897 = vmatprep.subr.mxu0 0.0
        %5898 = vmatpush1.xpose.msra.mxu0 0.0
        %5899 = vmatprep.subr.mxu0 0.0
        %5900 = vmatpush1.xpose.msra.mxu0 0.0
        %5901 = vmatprep.subr.mxu0 0.0
        %5902 = vmatpush1.xpose.msra.mxu0 0.0
        %5903 = vmatprep.subr.mxu0 0.0
        %5904 = vmatpush1.xpose.msra.mxu0 0.0
        %5905 = vmatprep.subr.mxu0 0.0
        %5906 = vmatpush1.xpose.msra.mxu0 0.0
        %5907 = vmatprep.subr.mxu0 0.0
        %5908 = vmatpush1.xpose.msra.mxu0 0.0
        %5909 = vmatprep.subr.mxu0 0.0
        %5910 = vmatpush1.xpose.msra.mxu0 0.0
        %5911 = vmatprep.subr.mxu0 0.0
        %5912 = vmatpush1.xpose.msra.mxu0 0.0
        %5913 = vmatprep.subr.mxu0 0.0
        %5914 = vmatpush1.xpose.msra.mxu0 0.0
        %5915 = vmatprep.subr.mxu0 0.0
        %5916 = vmatpush1.xpose.msra.mxu0 0.0
        %5917 = vmatprep.mubr.f32.mxu0 0.0
        %5918 = vmatmul.mubr.f32.gmra.mrb[0].mxu0 %v927
        %v5919 = vpop.f32.mrb[0].mxu0
        %v5920 = vadd.f32 0.0, %v5919
        %v5921 = vpop.f32.mrb[0].mxu0
        %5922 = vdwg.mxu0
        %v5923 = vsel %vm3330, %v3750, -inf
        %5924 = vmax.xlane.f32.xlu0 %v5923
        %v5925 = vpop.xlane.xlu0 %5924
        %v5926 = vsel %vm3330, %v3820, -inf
        %5927 = vmax.xlane.f32.xlu0 %v5926
        %v5928 = vpop.xlane.xlu0 %5927
        %v5929 = vsel %vm3330, %v3890, -inf
        %5930 = vmax.xlane.f32.xlu0 %v5929
        %v5931 = vpop.xlane.xlu0 %5930
        %v5932 = vsel %vm3330, %v3960, -inf
        %5933 = vmax.xlane.f32.xlu0 %v5932
        %v5934 = vpop.xlane.xlu0 %5933
        %v5935 = vsel %vm3330, %v4030, -inf
        %5936 = vmax.xlane.f32.xlu0 %v5935
        %v5937 = vpop.xlane.xlu0 %5936
        %v5938 = vsel %vm3330, %v4100, -inf
        %5939 = vmax.xlane.f32.xlu0 %v5938
        %v5940 = vpop.xlane.xlu0 %5939
        %v5941 = vsel %vm3330, %v4170, -inf
        %5942 = vmax.xlane.f32.xlu0 %v5941
        %v5943 = vpop.xlane.xlu0 %5942
        %v5944 = vsel %vm3330, %v4240, -inf
        %5945 = vmax.xlane.f32.xlu0 %v5944
        %v5946 = vpop.xlane.xlu0 %5945
        %v5947 = vsel %vm3330, %v4310, -inf
        %5948 = vmax.xlane.f32.xlu0 %v5947
        %v5949 = vpop.xlane.xlu0 %5948
        %v5950 = vsel %vm3330, %v4380, -inf
        %5951 = vmax.xlane.f32.xlu0 %v5950
        %v5952 = vpop.xlane.xlu0 %5951
        %v5953 = vsel %vm3330, %v4450, -inf
        %5954 = vmax.xlane.f32.xlu0 %v5953
        %v5955 = vpop.xlane.xlu0 %5954
        %v5956 = vsel %vm3330, %v4520, -inf
        %5957 = vmax.xlane.f32.xlu0 %v5956
        %v5958 = vpop.xlane.xlu0 %5957
        %v5959 = vsel %vm3330, %v4590, -inf
        %5960 = vmax.xlane.f32.xlu0 %v5959
        %v5961 = vpop.xlane.xlu0 %5960
        %v5962 = vsel %vm3330, %v4660, -inf
        %5963 = vmax.xlane.f32.xlu0 %v5962
        %v5964 = vpop.xlane.xlu0 %5963
        %v5965 = vsel %vm3330, %v4730, -inf
        %5966 = vmax.xlane.f32.xlu0 %v5965
        %v5967 = vpop.xlane.xlu0 %5966
        %v5968 = vsel %vm3330, %v4800, -inf
        %5969 = vmax.xlane.f32.xlu0 %v5968
        %v5970 = vpop.xlane.xlu0 %5969
        %v5971 = vsel %vm3330, %v4870, -inf
        %5972 = vmax.xlane.f32.xlu0 %v5971
        %v5973 = vpop.xlane.xlu0 %5972
        %v5974 = vsel %vm3330, %v4940, -inf
        %5975 = vmax.xlane.f32.xlu0 %v5974
        %v5976 = vpop.xlane.xlu0 %5975
        %v5977 = vsel %vm3330, %v5010, -inf
        %5978 = vmax.xlane.f32.xlu0 %v5977
        %v5979 = vpop.xlane.xlu0 %5978
        %v5980 = vsel %vm3330, %v5080, -inf
        %5981 = vmax.xlane.f32.xlu0 %v5980
        %v5982 = vpop.xlane.xlu0 %5981
        %v5983 = vsel %vm3330, %v5150, -inf
        %5984 = vmax.xlane.f32.xlu0 %v5983
        %v5985 = vpop.xlane.xlu0 %5984
        %v5986 = vsel %vm3330, %v5220, -inf
        %5987 = vmax.xlane.f32.xlu0 %v5986
        %v5988 = vpop.xlane.xlu0 %5987
        %v5989 = vsel %vm3330, %v5290, -inf
        %5990 = vmax.xlane.f32.xlu0 %v5989
        %v5991 = vpop.xlane.xlu0 %5990
        %v5992 = vsel %vm3330, %v5360, -inf
        %5993 = vmax.xlane.f32.xlu0 %v5992
        %v5994 = vpop.xlane.xlu0 %5993
        %v5995 = vsel %vm3330, %v5430, -inf
        %5996 = vmax.xlane.f32.xlu0 %v5995
        %v5997 = vpop.xlane.xlu0 %5996
        %v5998 = vsel %vm3330, %v5500, -inf
        %5999 = vmax.xlane.f32.xlu0 %v5998
        %v6000 = vpop.xlane.xlu0 %5999
        %v6001 = vsel %vm3330, %v5570, -inf
        %6002 = vmax.xlane.f32.xlu0 %v6001
        %v6003 = vpop.xlane.xlu0 %6002
        %v6004 = vsel %vm3330, %v5640, -inf
        %6005 = vmax.xlane.f32.xlu0 %v6004
        %v6006 = vpop.xlane.xlu0 %6005
        %v6007 = vsel %vm3330, %v5710, -inf
        %6008 = vmax.xlane.f32.xlu0 %v6007
        %v6009 = vpop.xlane.xlu0 %6008
        %v6010 = vsel %vm3330, %v5780, -inf
        %6011 = vmax.xlane.f32.xlu0 %v6010
        %v6012 = vpop.xlane.xlu0 %6011
        %v6013 = vsel %vm3330, %v5850, -inf
        %6014 = vmax.xlane.f32.xlu0 %v6013
        %v6015 = vpop.xlane.xlu0 %6014
        %v6016 = vsel %vm3330, %v5920, -inf
        %6017 = vmax.xlane.f32.xlu0 %v6016
        %v6018 = vpop.xlane.xlu0 %6017
        %v6019 = vsub.f32 %v3750, %v5925
        %v6020 = vsub.f32 %v3820, %v5928
        %v6021 = vsub.f32 %v3890, %v5931
        %v6022 = vsub.f32 %v3960, %v5934
        %v6023 = vsub.f32 %v4030, %v5937
        %v6024 = vsub.f32 %v4100, %v5940
        %v6025 = vsub.f32 %v4170, %v5943
        %v6026 = vsub.f32 %v4240, %v5946
        %v6027 = vsub.f32 %v4310, %v5949
        %v6028 = vsub.f32 %v4380, %v5952
        %v6029 = vsub.f32 %v4450, %v5955
        %v6030 = vsub.f32 %v4520, %v5958
        %v6031 = vsub.f32 %v4590, %v5961
        %v6032 = vsub.f32 %v4660, %v5964
        %v6033 = vsub.f32 %v4730, %v5967
        %v6034 = vsub.f32 %v4800, %v5970
        %v6035 = vsub.f32 %v4870, %v5973
        %v6036 = vsub.f32 %v4940, %v5976
        %v6037 = vsub.f32 %v5010, %v5979
        %v6038 = vsub.f32 %v5080, %v5982
        %v6039 = vsub.f32 %v5150, %v5985
        %v6040 = vsub.f32 %v5220, %v5988
        %v6041 = vsub.f32 %v5290, %v5991
        %v6042 = vsub.f32 %v5360, %v5994
        %v6043 = vsub.f32 %v5430, %v5997
        %v6044 = vsub.f32 %v5500, %v6000
        %v6045 = vsub.f32 %v5570, %v6003
        %v6046 = vsub.f32 %v5640, %v6006
        %v6047 = vsub.f32 %v5710, %v6009
        %v6048 = vsub.f32 %v5780, %v6012
        %v6049 = vsub.f32 %v5850, %v6015
        %v6050 = vsub.f32 %v5920, %v6018
        %v6051 = vmul.f32 %v6019, 1.442695
        %v6052 = vpow.pop %v6051
        %v6053 = vmul.f32 %v6020, 1.442695
        %v6054 = vpow.pop %v6053
        %v6055 = vmul.f32 %v6021, 1.442695
        %v6056 = vpow.pop %v6055
        %v6057 = vmul.f32 %v6022, 1.442695
        %v6058 = vpow.pop %v6057
        %v6059 = vmul.f32 %v6023, 1.442695
        %v6060 = vpow.pop %v6059
        %v6061 = vmul.f32 %v6024, 1.442695
        %v6062 = vpow.pop %v6061
        %v6063 = vmul.f32 %v6025, 1.442695
        %v6064 = vpow.pop %v6063
        %v6065 = vmul.f32 %v6026, 1.442695
        %v6066 = vpow.pop %v6065
        %v6067 = vmul.f32 %v6027, 1.442695
        %v6068 = vpow.pop %v6067
        %v6069 = vmul.f32 %v6028, 1.442695
        %v6070 = vpow.pop %v6069
        %v6071 = vmul.f32 %v6029, 1.442695
        %v6072 = vpow.pop %v6071
        %v6073 = vmul.f32 %v6030, 1.442695
        %v6074 = vpow.pop %v6073
        %v6075 = vmul.f32 %v6031, 1.442695
        %v6076 = vpow.pop %v6075
        %v6077 = vmul.f32 %v6032, 1.442695
        %v6078 = vpow.pop %v6077
        %v6079 = vmul.f32 %v6033, 1.442695
        %v6080 = vpow.pop %v6079
        %v6081 = vmul.f32 %v6034, 1.442695
        %v6082 = vpow.pop %v6081
        %v6083 = vmul.f32 %v6035, 1.442695
        %v6084 = vpow.pop %v6083
        %v6085 = vmul.f32 %v6036, 1.442695
        %v6086 = vpow.pop %v6085
        %v6087 = vmul.f32 %v6037, 1.442695
        %v6088 = vpow.pop %v6087
        %v6089 = vmul.f32 %v6038, 1.442695
        %v6090 = vpow.pop %v6089
        %v6091 = vmul.f32 %v6039, 1.442695
        %v6092 = vpow.pop %v6091
        %v6093 = vmul.f32 %v6040, 1.442695
        %v6094 = vpow.pop %v6093
        %v6095 = vmul.f32 %v6041, 1.442695
        %v6096 = vpow.pop %v6095
        %v6097 = vmul.f32 %v6042, 1.442695
        %v6098 = vpow.pop %v6097
        %v6099 = vmul.f32 %v6043, 1.442695
        %v6100 = vpow.pop %v6099
        %v6101 = vmul.f32 %v6044, 1.442695
        %v6102 = vpow.pop %v6101
        %v6103 = vmul.f32 %v6045, 1.442695
        %v6104 = vpow.pop %v6103
        %v6105 = vmul.f32 %v6046, 1.442695
        %v6106 = vpow.pop %v6105
        %v6107 = vmul.f32 %v6047, 1.442695
        %v6108 = vpow.pop %v6107
        %v6109 = vmul.f32 %v6048, 1.442695
        %v6110 = vpow.pop %v6109
        %v6111 = vmul.f32 %v6049, 1.442695
        %v6112 = vpow.pop %v6111
        %v6113 = vmul.f32 %v6050, 1.442695
        %v6114 = vpow.pop %v6113
        %v6115 = vsel %vm3330, %v6052, 0.0
        %6116 = vadd.xlane.f32.xlu0 %v6115
        %v6117 = vpop.xlane.xlu0 %6116
        %v6118 = vsel %vm3330, %v6054, 0.0
        %6119 = vadd.xlane.f32.xlu0 %v6118
        %v6120 = vpop.xlane.xlu0 %6119
        %v6121 = vsel %vm3330, %v6056, 0.0
        %6122 = vadd.xlane.f32.xlu0 %v6121
        %v6123 = vpop.xlane.xlu0 %6122
        %v6124 = vsel %vm3330, %v6058, 0.0
        %6125 = vadd.xlane.f32.xlu0 %v6124
        %v6126 = vpop.xlane.xlu0 %6125
        %v6127 = vsel %vm3330, %v6060, 0.0
        %6128 = vadd.xlane.f32.xlu0 %v6127
        %v6129 = vpop.xlane.xlu0 %6128
        %v6130 = vsel %vm3330, %v6062, 0.0
        %6131 = vadd.xlane.f32.xlu0 %v6130
        %v6132 = vpop.xlane.xlu0 %6131
        %v6133 = vsel %vm3330, %v6064, 0.0
        %6134 = vadd.xlane.f32.xlu0 %v6133
        %v6135 = vpop.xlane.xlu0 %6134
        %v6136 = vsel %vm3330, %v6066, 0.0
        %6137 = vadd.xlane.f32.xlu0 %v6136
        %v6138 = vpop.xlane.xlu0 %6137
        %v6139 = vsel %vm3330, %v6068, 0.0
        %6140 = vadd.xlane.f32.xlu0 %v6139
        %v6141 = vpop.xlane.xlu0 %6140
        %v6142 = vsel %vm3330, %v6070, 0.0
        %6143 = vadd.xlane.f32.xlu0 %v6142
        %v6144 = vpop.xlane.xlu0 %6143
        %v6145 = vsel %vm3330, %v6072, 0.0
        %6146 = vadd.xlane.f32.xlu0 %v6145
        %v6147 = vpop.xlane.xlu0 %6146
        %v6148 = vsel %vm3330, %v6074, 0.0
        %6149 = vadd.xlane.f32.xlu0 %v6148
        %v6150 = vpop.xlane.xlu0 %6149
        %v6151 = vsel %vm3330, %v6076, 0.0
        %6152 = vadd.xlane.f32.xlu0 %v6151
        %v6153 = vpop.xlane.xlu0 %6152
        %v6154 = vsel %vm3330, %v6078, 0.0
        %6155 = vadd.xlane.f32.xlu0 %v6154
        %v6156 = vpop.xlane.xlu0 %6155
        %v6157 = vsel %vm3330, %v6080, 0.0
        %6158 = vadd.xlane.f32.xlu0 %v6157
        %v6159 = vpop.xlane.xlu0 %6158
        %v6160 = vsel %vm3330, %v6082, 0.0
        %6161 = vadd.xlane.f32.xlu0 %v6160
        %v6162 = vpop.xlane.xlu0 %6161
        %v6163 = vsel %vm3330, %v6084, 0.0
        %6164 = vadd.xlane.f32.xlu0 %v6163
        %v6165 = vpop.xlane.xlu0 %6164
        %v6166 = vsel %vm3330, %v6086, 0.0
        %6167 = vadd.xlane.f32.xlu0 %v6166
        %v6168 = vpop.xlane.xlu0 %6167
        %v6169 = vsel %vm3330, %v6088, 0.0
        %6170 = vadd.xlane.f32.xlu0 %v6169
        %v6171 = vpop.xlane.xlu0 %6170
        %v6172 = vsel %vm3330, %v6090, 0.0
        %6173 = vadd.xlane.f32.xlu0 %v6172
        %v6174 = vpop.xlane.xlu0 %6173
        %v6175 = vsel %vm3330, %v6092, 0.0
        %6176 = vadd.xlane.f32.xlu0 %v6175
        %v6177 = vpop.xlane.xlu0 %6176
        %v6178 = vsel %vm3330, %v6094, 0.0
        %6179 = vadd.xlane.f32.xlu0 %v6178
        %v6180 = vpop.xlane.xlu0 %6179
        %v6181 = vsel %vm3330, %v6096, 0.0
        %6182 = vadd.xlane.f32.xlu0 %v6181
        %v6183 = vpop.xlane.xlu0 %6182
        %v6184 = vsel %vm3330, %v6098, 0.0
        %6185 = vadd.xlane.f32.xlu0 %v6184
        %v6186 = vpop.xlane.xlu0 %6185
        %v6187 = vsel %vm3330, %v6100, 0.0
        %6188 = vadd.xlane.f32.xlu0 %v6187
        %v6189 = vpop.xlane.xlu0 %6188
        %v6190 = vsel %vm3330, %v6102, 0.0
        %6191 = vadd.xlane.f32.xlu0 %v6190
        %v6192 = vpop.xlane.xlu0 %6191
        %v6193 = vsel %vm3330, %v6104, 0.0
        %6194 = vadd.xlane.f32.xlu0 %v6193
        %v6195 = vpop.xlane.xlu0 %6194
        %v6196 = vsel %vm3330, %v6106, 0.0
        %6197 = vadd.xlane.f32.xlu0 %v6196
        %v6198 = vpop.xlane.xlu0 %6197
        %v6199 = vsel %vm3330, %v6108, 0.0
        %6200 = vadd.xlane.f32.xlu0 %v6199
        %v6201 = vpop.xlane.xlu0 %6200
        %v6202 = vsel %vm3330, %v6110, 0.0
        %6203 = vadd.xlane.f32.xlu0 %v6202
        %v6204 = vpop.xlane.xlu0 %6203
        %v6205 = vsel %vm3330, %v6112, 0.0
        %6206 = vadd.xlane.f32.xlu0 %v6205
        %v6207 = vpop.xlane.xlu0 %6206
        %v6208 = vsel %vm3330, %v6114, 0.0
        %6209 = vadd.xlane.f32.xlu0 %v6208
        %v6210 = vpop.xlane.xlu0 %6209
        %v6211 = vrcp.pop %v6117
        %v6212 = vrcp.pop %v6120
        %v6213 = vrcp.pop %v6123
        %v6214 = vrcp.pop %v6126
        %v6215 = vrcp.pop %v6129
        %v6216 = vrcp.pop %v6132
        %v6217 = vrcp.pop %v6135
        %v6218 = vrcp.pop %v6138
        %v6219 = vrcp.pop %v6141
        %v6220 = vrcp.pop %v6144
        %v6221 = vrcp.pop %v6147
        %v6222 = vrcp.pop %v6150
        %v6223 = vrcp.pop %v6153
        %v6224 = vrcp.pop %v6156
        %v6225 = vrcp.pop %v6159
        %v6226 = vrcp.pop %v6162
        %v6227 = vrcp.pop %v6165
        %v6228 = vrcp.pop %v6168
        %v6229 = vrcp.pop %v6171
        %v6230 = vrcp.pop %v6174
        %v6231 = vrcp.pop %v6177
        %v6232 = vrcp.pop %v6180
        %v6233 = vrcp.pop %v6183
        %v6234 = vrcp.pop %v6186
        %v6235 = vrcp.pop %v6189
        %v6236 = vrcp.pop %v6192
        %v6237 = vrcp.pop %v6195
        %v6238 = vrcp.pop %v6198
        %v6239 = vrcp.pop %v6201
        %v6240 = vrcp.pop %v6204
        %v6241 = vrcp.pop %v6207
        %v6242 = vrcp.pop %v6210
        %v6243 = vmul.f32 %v6052, %v6211
        %v6244 = vmul.f32 %v6054, %v6212
        %v6245 = vmul.f32 %v6056, %v6213
        %v6246 = vmul.f32 %v6058, %v6214
        %v6247 = vmul.f32 %v6060, %v6215
        %v6248 = vmul.f32 %v6062, %v6216
        %v6249 = vmul.f32 %v6064, %v6217
        %v6250 = vmul.f32 %v6066, %v6218
        %v6251 = vmul.f32 %v6068, %v6219
        %v6252 = vmul.f32 %v6070, %v6220
        %v6253 = vmul.f32 %v6072, %v6221
        %v6254 = vmul.f32 %v6074, %v6222
        %v6255 = vmul.f32 %v6076, %v6223
        %v6256 = vmul.f32 %v6078, %v6224
        %v6257 = vmul.f32 %v6080, %v6225
        %v6258 = vmul.f32 %v6082, %v6226
        %v6259 = vmul.f32 %v6084, %v6227
        %v6260 = vmul.f32 %v6086, %v6228
        %v6261 = vmul.f32 %v6088, %v6229
        %v6262 = vmul.f32 %v6090, %v6230
        %v6263 = vmul.f32 %v6092, %v6231
        %v6264 = vmul.f32 %v6094, %v6232
        %v6265 = vmul.f32 %v6096, %v6233
        %v6266 = vmul.f32 %v6098, %v6234
        %v6267 = vmul.f32 %v6100, %v6235
        %v6268 = vmul.f32 %v6102, %v6236
        %v6269 = vmul.f32 %v6104, %v6237
        %v6270 = vmul.f32 %v6106, %v6238
        %v6271 = vmul.f32 %v6108, %v6239
        %v6272 = vmul.f32 %v6110, %v6240
        %v6273 = vmul.f32 %v6112, %v6241
        %v6274 = vmul.f32 %v6114, %v6242
        %v6276 = vsel %vm3330, %v3651, 0
        %6278 = vmatprep.subr.mxu0 0.0
        %6279 = vmatpush1.msra.mxu0 %v771
        %6280 = vmatprep.subr.mxu0 0.0
        %6281 = vmatpush1.msra.mxu0 0.0
        %6282 = vmatprep.subr.mxu0 0.0
        %6283 = vmatpush1.msra.mxu0 0.0
        %6284 = vmatprep.subr.mxu0 0.0
        %6285 = vmatpush1.msra.mxu0 0.0
        %6286 = vmatprep.subr.mxu0 0.0
        %6287 = vmatpush1.msra.mxu0 0.0
        %6288 = vmatprep.subr.mxu0 0.0
        %6289 = vmatpush1.msra.mxu0 0.0
        %6290 = vmatprep.subr.mxu0 0.0
        %6291 = vmatpush1.msra.mxu0 0.0
        %6292 = vmatprep.subr.mxu0 0.0
        %6293 = vmatpush1.msra.mxu0 0.0
        %6294 = vmatprep.subr.mxu0 0.0
        %6295 = vmatpush1.msra.mxu0 0.0
        %6296 = vmatprep.subr.mxu0 0.0
        %6297 = vmatpush1.msra.mxu0 0.0
        %6298 = vmatprep.subr.mxu0 0.0
        %6299 = vmatpush1.msra.mxu0 0.0
        %6300 = vmatprep.subr.mxu0 0.0
        %6301 = vmatpush1.msra.mxu0 0.0
        %6302 = vmatprep.subr.mxu0 0.0
        %6303 = vmatpush1.msra.mxu0 0.0
        %6304 = vmatprep.subr.mxu0 0.0
        %6305 = vmatpush1.msra.mxu0 0.0
        %6306 = vmatprep.subr.mxu0 0.0
        %6307 = vmatpush1.msra.mxu0 0.0
        %6308 = vmatprep.subr.mxu0 0.0
        %6309 = vmatpush1.msra.mxu0 0.0
        %6310 = vmatprep.subr.mxu0 0.0
        %6311 = vmatpush1.msra.mxu0 0.0
        %6312 = vmatprep.subr.mxu0 0.0
        %6313 = vmatpush1.msra.mxu0 0.0
        %6314 = vmatprep.subr.mxu0 0.0
        %6315 = vmatpush1.msra.mxu0 0.0
        %6316 = vmatprep.subr.mxu0 0.0
        %6317 = vmatpush1.msra.mxu0 0.0
        %6318 = vmatprep.subr.mxu0 0.0
        %6319 = vmatpush1.msra.mxu0 0.0
        %6320 = vmatprep.subr.mxu0 0.0
        %6321 = vmatpush1.msra.mxu0 0.0
        %6322 = vmatprep.subr.mxu0 0.0
        %6323 = vmatpush1.msra.mxu0 0.0
        %6324 = vmatprep.subr.mxu0 0.0
        %6325 = vmatpush1.msra.mxu0 0.0
        %6326 = vmatprep.subr.mxu0 0.0
        %6327 = vmatpush1.msra.mxu0 0.0
        %6328 = vmatprep.subr.mxu0 0.0
        %6329 = vmatpush1.msra.mxu0 0.0
        %6330 = vmatprep.subr.mxu0 0.0
        %6331 = vmatpush1.msra.mxu0 0.0
        %6332 = vmatprep.subr.mxu0 0.0
        %6333 = vmatpush1.msra.mxu0 0.0
        %6334 = vmatprep.subr.mxu0 0.0
        %6335 = vmatpush1.msra.mxu0 0.0
        %6336 = vmatprep.subr.mxu0 0.0
        %6337 = vmatpush1.msra.mxu0 0.0
        %6338 = vmatprep.subr.mxu0 0.0
        %6339 = vmatpush1.msra.mxu0 0.0
        %6340 = vmatprep.subr.mxu0 0.0
        %6341 = vmatpush1.msra.mxu0 0.0
        %6342 = vmatprep.mubr.f32.mxu0 0.0
        %6343 = vmatmul.mubr.f32.gmra.mrb[0].mxu0 %v6276
        %v6344 = vpop.f32.mrb[0].mxu0
        %v6345 = vadd.f32 0.0, %v6344
        %v6346 = vpop.f32.mrb[0].mxu0
        %6347 = vdwg.mxu0
        %v6349 = vsel %vm3330, %v3652, 0
        %6351 = vmatprep.subr.mxu0 0.0
        %6352 = vmatpush1.msra.mxu0 %v775
        %6353 = vmatprep.subr.mxu0 0.0
        %6354 = vmatpush1.msra.mxu0 0.0
        %6355 = vmatprep.subr.mxu0 0.0
        %6356 = vmatpush1.msra.mxu0 0.0
        %6357 = vmatprep.subr.mxu0 0.0
        %6358 = vmatpush1.msra.mxu0 0.0
        %6359 = vmatprep.subr.mxu0 0.0
        %6360 = vmatpush1.msra.mxu0 0.0
        %6361 = vmatprep.subr.mxu0 0.0
        %6362 = vmatpush1.msra.mxu0 0.0
        %6363 = vmatprep.subr.mxu0 0.0
        %6364 = vmatpush1.msra.mxu0 0.0
        %6365 = vmatprep.subr.mxu0 0.0
        %6366 = vmatpush1.msra.mxu0 0.0
        %6367 = vmatprep.subr.mxu0 0.0
        %6368 = vmatpush1.msra.mxu0 0.0
        %6369 = vmatprep.subr.mxu0 0.0
        %6370 = vmatpush1.msra.mxu0 0.0
        %6371 = vmatprep.subr.mxu0 0.0
        %6372 = vmatpush1.msra.mxu0 0.0
        %6373 = vmatprep.subr.mxu0 0.0
        %6374 = vmatpush1.msra.mxu0 0.0
        %6375 = vmatprep.subr.mxu0 0.0
        %6376 = vmatpush1.msra.mxu0 0.0
        %6377 = vmatprep.subr.mxu0 0.0
        %6378 = vmatpush1.msra.mxu0 0.0
        %6379 = vmatprep.subr.mxu0 0.0
        %6380 = vmatpush1.msra.mxu0 0.0
        %6381 = vmatprep.subr.mxu0 0.0
        %6382 = vmatpush1.msra.mxu0 0.0
        %6383 = vmatprep.subr.mxu0 0.0
        %6384 = vmatpush1.msra.mxu0 0.0
        %6385 = vmatprep.subr.mxu0 0.0
        %6386 = vmatpush1.msra.mxu0 0.0
        %6387 = vmatprep.subr.mxu0 0.0
        %6388 = vmatpush1.msra.mxu0 0.0
        %6389 = vmatprep.subr.mxu0 0.0
        %6390 = vmatpush1.msra.mxu0 0.0
        %6391 = vmatprep.subr.mxu0 0.0
        %6392 = vmatpush1.msra.mxu0 0.0
        %6393 = vmatprep.subr.mxu0 0.0
        %6394 = vmatpush1.msra.mxu0 0.0
        %6395 = vmatprep.subr.mxu0 0.0
        %6396 = vmatpush1.msra.mxu0 0.0
        %6397 = vmatprep.subr.mxu0 0.0
        %6398 = vmatpush1.msra.mxu0 0.0
        %6399 = vmatprep.subr.mxu0 0.0
        %6400 = vmatpush1.msra.mxu0 0.0
        %6401 = vmatprep.subr.mxu0 0.0
        %6402 = vmatpush1.msra.mxu0 0.0
        %6403 = vmatprep.subr.mxu0 0.0
        %6404 = vmatpush1.msra.mxu0 0.0
        %6405 = vmatprep.subr.mxu0 0.0
        %6406 = vmatpush1.msra.mxu0 0.0
        %6407 = vmatprep.subr.mxu0 0.0
        %6408 = vmatpush1.msra.mxu0 0.0
        %6409 = vmatprep.subr.mxu0 0.0
        %6410 = vmatpush1.msra.mxu0 0.0
        %6411 = vmatprep.subr.mxu0 0.0
        %6412 = vmatpush1.msra.mxu0 0.0
        %6413 = vmatprep.subr.mxu0 0.0
        %6414 = vmatpush1.msra.mxu0 0.0
        %6415 = vmatprep.mubr.f32.mxu0 0.0
        %6416 = vmatmul.mubr.f32.gmra.mrb[0].mxu0 %v6349
        %v6417 = vpop.f32.mrb[0].mxu0
        %v6418 = vadd.f32 0.0, %v6417
        %v6419 = vpop.f32.mrb[0].mxu0
        %6420 = vdwg.mxu0
        %v6422 = vsel %vm3330, %v3653, 0
        %6424 = vmatprep.subr.mxu0 0.0
        %6425 = vmatpush1.msra.mxu0 %v781
        %6426 = vmatprep.subr.mxu0 0.0
        %6427 = vmatpush1.msra.mxu0 0.0
        %6428 = vmatprep.subr.mxu0 0.0
        %6429 = vmatpush1.msra.mxu0 0.0
        %6430 = vmatprep.subr.mxu0 0.0
        %6431 = vmatpush1.msra.mxu0 0.0
        %6432 = vmatprep.subr.mxu0 0.0
        %6433 = vmatpush1.msra.mxu0 0.0
        %6434 = vmatprep.subr.mxu0 0.0
        %6435 = vmatpush1.msra.mxu0 0.0
        %6436 = vmatprep.subr.mxu0 0.0
        %6437 = vmatpush1.msra.mxu0 0.0
        %6438 = vmatprep.subr.mxu0 0.0
        %6439 = vmatpush1.msra.mxu0 0.0
        %6440 = vmatprep.subr.mxu0 0.0
        %6441 = vmatpush1.msra.mxu0 0.0
        %6442 = vmatprep.subr.mxu0 0.0
        %6443 = vmatpush1.msra.mxu0 0.0
        %6444 = vmatprep.subr.mxu0 0.0
        %6445 = vmatpush1.msra.mxu0 0.0
        %6446 = vmatprep.subr.mxu0 0.0
        %6447 = vmatpush1.msra.mxu0 0.0
        %6448 = vmatprep.subr.mxu0 0.0
        %6449 = vmatpush1.msra.mxu0 0.0
        %6450 = vmatprep.subr.mxu0 0.0
        %6451 = vmatpush1.msra.mxu0 0.0
        %6452 = vmatprep.subr.mxu0 0.0
        %6453 = vmatpush1.msra.mxu0 0.0
        %6454 = vmatprep.subr.mxu0 0.0
        %6455 = vmatpush1.msra.mxu0 0.0
        %6456 = vmatprep.subr.mxu0 0.0
        %6457 = vmatpush1.msra.mxu0 0.0
        %6458 = vmatprep.subr.mxu0 0.0
        %6459 = vmatpush1.msra.mxu0 0.0
        %6460 = vmatprep.subr.mxu0 0.0
        %6461 = vmatpush1.msra.mxu0 0.0
        %6462 = vmatprep.subr.mxu0 0.0
        %6463 = vmatpush1.msra.mxu0 0.0
        %6464 = vmatprep.subr.mxu0 0.0
        %6465 = vmatpush1.msra.mxu0 0.0
        %6466 = vmatprep.subr.mxu0 0.0
        %6467 = vmatpush1.msra.mxu0 0.0
        %6468 = vmatprep.subr.mxu0 0.0
        %6469 = vmatpush1.msra.mxu0 0.0
        %6470 = vmatprep.subr.mxu0 0.0
        %6471 = vmatpush1.msra.mxu0 0.0
        %6472 = vmatprep.subr.mxu0 0.0
        %6473 = vmatpush1.msra.mxu0 0.0
        %6474 = vmatprep.subr.mxu0 0.0
        %6475 = vmatpush1.msra.mxu0 0.0
        %6476 = vmatprep.subr.mxu0 0.0
        %6477 = vmatpush1.msra.mxu0 0.0
        %6478 = vmatprep.subr.mxu0 0.0
        %6479 = vmatpush1.msra.mxu0 0.0
        %6480 = vmatprep.subr.mxu0 0.0
        %6481 = vmatpush1.msra.mxu0 0.0
        %6482 = vmatprep.subr.mxu0 0.0
        %6483 = vmatpush1.msra.mxu0 0.0
        %6484 = vmatprep.subr.mxu0 0.0
        %6485 = vmatpush1.msra.mxu0 0.0
        %6486 = vmatprep.subr.mxu0 0.0
        %6487 = vmatpush1.msra.mxu0 0.0
        %6488 = vmatprep.mubr.f32.mxu0 0.0
        %6489 = vmatmul.mubr.f32.gmra.mrb[0].mxu0 %v6422
        %v6490 = vpop.f32.mrb[0].mxu0
        %v6491 = vadd.f32 0.0, %v6490
        %v6492 = vpop.f32.mrb[0].mxu0
        %6493 = vdwg.mxu0
        %v6495 = vsel %vm3330, %v3654, 0
        %6497 = vmatprep.subr.mxu0 0.0
        %6498 = vmatpush1.msra.mxu0 %v785
        %6499 = vmatprep.subr.mxu0 0.0
        %6500 = vmatpush1.msra.mxu0 0.0
        %6501 = vmatprep.subr.mxu0 0.0
        %6502 = vmatpush1.msra.mxu0 0.0
        %6503 = vmatprep.subr.mxu0 0.0
        %6504 = vmatpush1.msra.mxu0 0.0
        %6505 = vmatprep.subr.mxu0 0.0
        %6506 = vmatpush1.msra.mxu0 0.0
        %6507 = vmatprep.subr.mxu0 0.0
        %6508 = vmatpush1.msra.mxu0 0.0
        %6509 = vmatprep.subr.mxu0 0.0
        %6510 = vmatpush1.msra.mxu0 0.0
        %6511 = vmatprep.subr.mxu0 0.0
        %6512 = vmatpush1.msra.mxu0 0.0
        %6513 = vmatprep.subr.mxu0 0.0
        %6514 = vmatpush1.msra.mxu0 0.0
        %6515 = vmatprep.subr.mxu0 0.0
        %6516 = vmatpush1.msra.mxu0 0.0
        %6517 = vmatprep.subr.mxu0 0.0
        %6518 = vmatpush1.msra.mxu0 0.0
        %6519 = vmatprep.subr.mxu0 0.0
        %6520 = vmatpush1.msra.mxu0 0.0
        %6521 = vmatprep.subr.mxu0 0.0
        %6522 = vmatpush1.msra.mxu0 0.0
        %6523 = vmatprep.subr.mxu0 0.0
        %6524 = vmatpush1.msra.mxu0 0.0
        %6525 = vmatprep.subr.mxu0 0.0
        %6526 = vmatpush1.msra.mxu0 0.0
        %6527 = vmatprep.subr.mxu0 0.0
        %6528 = vmatpush1.msra.mxu0 0.0
        %6529 = vmatprep.subr.mxu0 0.0
        %6530 = vmatpush1.msra.mxu0 0.0
        %6531 = vmatprep.subr.mxu0 0.0
        %6532 = vmatpush1.msra.mxu0 0.0
        %6533 = vmatprep.subr.mxu0 0.0
        %6534 = vmatpush1.msra.mxu0 0.0
        %6535 = vmatprep.subr.mxu0 0.0
        %6536 = vmatpush1.msra.mxu0 0.0
        %6537 = vmatprep.subr.mxu0 0.0
        %6538 = vmatpush1.msra.mxu0 0.0
        %6539 = vmatprep.subr.mxu0 0.0
        %6540 = vmatpush1.msra.mxu0 0.0
        %6541 = vmatprep.subr.mxu0 0.0
        %6542 = vmatpush1.msra.mxu0 0.0
        %6543 = vmatprep.subr.mxu0 0.0
        %6544 = vmatpush1.msra.mxu0 0.0
        %6545 = vmatprep.subr.mxu0 0.0
        %6546 = vmatpush1.msra.mxu0 0.0
        %6547 = vmatprep.subr.mxu0 0.0
        %6548 = vmatpush1.msra.mxu0 0.0
        %6549 = vmatprep.subr.mxu0 0.0
        %6550 = vmatpush1.msra.mxu0 0.0
        %6551 = vmatprep.subr.mxu0 0.0
        %6552 = vmatpush1.msra.mxu0 0.0
        %6553 = vmatprep.subr.mxu0 0.0
        %6554 = vmatpush1.msra.mxu0 0.0
        %6555 = vmatprep.subr.mxu0 0.0
        %6556 = vmatpush1.msra.mxu0 0.0
        %6557 = vmatprep.subr.mxu0 0.0
        %6558 = vmatpush1.msra.mxu0 0.0
        %6559 = vmatprep.subr.mxu0 0.0
        %6560 = vmatpush1.msra.mxu0 0.0
        %6561 = vmatprep.mubr.f32.mxu0 0.0
        %6562 = vmatmul.mubr.f32.gmra.mrb[0].mxu0 %v6495
        %v6563 = vpop.f32.mrb[0].mxu0
        %v6564 = vadd.f32 0.0, %v6563
        %v6565 = vpop.f32.mrb[0].mxu0
        %6566 = vdwg.mxu0
        %v6568 = vsel %vm3330, %v3655, 0
        %6570 = vmatprep.subr.mxu0 0.0
        %6571 = vmatpush1.msra.mxu0 %v791
        %6572 = vmatprep.subr.mxu0 0.0
        %6573 = vmatpush1.msra.mxu0 0.0
        %6574 = vmatprep.subr.mxu0 0.0
        %6575 = vmatpush1.msra.mxu0 0.0
        %6576 = vmatprep.subr.mxu0 0.0
        %6577 = vmatpush1.msra.mxu0 0.0
        %6578 = vmatprep.subr.mxu0 0.0
        %6579 = vmatpush1.msra.mxu0 0.0
        %6580 = vmatprep.subr.mxu0 0.0
        %6581 = vmatpush1.msra.mxu0 0.0
        %6582 = vmatprep.subr.mxu0 0.0
        %6583 = vmatpush1.msra.mxu0 0.0
        %6584 = vmatprep.subr.mxu0 0.0
        %6585 = vmatpush1.msra.mxu0 0.0
        %6586 = vmatprep.subr.mxu0 0.0
        %6587 = vmatpush1.msra.mxu0 0.0
        %6588 = vmatprep.subr.mxu0 0.0
        %6589 = vmatpush1.msra.mxu0 0.0
        %6590 = vmatprep.subr.mxu0 0.0
        %6591 = vmatpush1.msra.mxu0 0.0
        %6592 = vmatprep.subr.mxu0 0.0
        %6593 = vmatpush1.msra.mxu0 0.0
        %6594 = vmatprep.subr.mxu0 0.0
        %6595 = vmatpush1.msra.mxu0 0.0
        %6596 = vmatprep.subr.mxu0 0.0
        %6597 = vmatpush1.msra.mxu0 0.0
        %6598 = vmatprep.subr.mxu0 0.0
        %6599 = vmatpush1.msra.mxu0 0.0
        %6600 = vmatprep.subr.mxu0 0.0
        %6601 = vmatpush1.msra.mxu0 0.0
        %6602 = vmatprep.subr.mxu0 0.0
        %6603 = vmatpush1.msra.mxu0 0.0
        %6604 = vmatprep.subr.mxu0 0.0
        %6605 = vmatpush1.msra.mxu0 0.0
        %6606 = vmatprep.subr.mxu0 0.0
        %6607 = vmatpush1.msra.mxu0 0.0
        %6608 = vmatprep.subr.mxu0 0.0
        %6609 = vmatpush1.msra.mxu0 0.0
        %6610 = vmatprep.subr.mxu0 0.0
        %6611 = vmatpush1.msra.mxu0 0.0
        %6612 = vmatprep.subr.mxu0 0.0
        %6613 = vmatpush1.msra.mxu0 0.0
        %6614 = vmatprep.subr.mxu0 0.0
        %6615 = vmatpush1.msra.mxu0 0.0
        %6616 = vmatprep.subr.mxu0 0.0
        %6617 = vmatpush1.msra.mxu0 0.0
        %6618 = vmatprep.subr.mxu0 0.0
        %6619 = vmatpush1.msra.mxu0 0.0
        %6620 = vmatprep.subr.mxu0 0.0
        %6621 = vmatpush1.msra.mxu0 0.0
        %6622 = vmatprep.subr.mxu0 0.0
        %6623 = vmatpush1.msra.mxu0 0.0
        %6624 = vmatprep.subr.mxu0 0.0
        %6625 = vmatpush1.msra.mxu0 0.0
        %6626 = vmatprep.subr.mxu0 0.0
        %6627 = vmatpush1.msra.mxu0 0.0
        %6628 = vmatprep.subr.mxu0 0.0
        %6629 = vmatpush1.msra.mxu0 0.0
        %6630 = vmatprep.subr.mxu0 0.0
        %6631 = vmatpush1.msra.mxu0 0.0
        %6632 = vmatprep.subr.mxu0 0.0
        %6633 = vmatpush1.msra.mxu0 0.0
        %6634 = vmatprep.mubr.f32.mxu0 0.0
        %6635 = vmatmul.mubr.f32.gmra.mrb[0].mxu0 %v6568
        %v6636 = vpop.f32.mrb[0].mxu0
        %v6637 = vadd.f32 0.0, %v6636
        %v6638 = vpop.f32.mrb[0].mxu0
        %6639 = vdwg.mxu0
        %v6641 = vsel %vm3330, %v3656, 0
        %6643 = vmatprep.subr.mxu0 0.0
        %6644 = vmatpush1.msra.mxu0 %v795
        %6645 = vmatprep.subr.mxu0 0.0
        %6646 = vmatpush1.msra.mxu0 0.0
        %6647 = vmatprep.subr.mxu0 0.0
        %6648 = vmatpush1.msra.mxu0 0.0
        %6649 = vmatprep.subr.mxu0 0.0
        %6650 = vmatpush1.msra.mxu0 0.0
        %6651 = vmatprep.subr.mxu0 0.0
        %6652 = vmatpush1.msra.mxu0 0.0
        %6653 = vmatprep.subr.mxu0 0.0
        %6654 = vmatpush1.msra.mxu0 0.0
        %6655 = vmatprep.subr.mxu0 0.0
        %6656 = vmatpush1.msra.mxu0 0.0
        %6657 = vmatprep.subr.mxu0 0.0
        %6658 = vmatpush1.msra.mxu0 0.0
        %6659 = vmatprep.subr.mxu0 0.0
        %6660 = vmatpush1.msra.mxu0 0.0
        %6661 = vmatprep.subr.mxu0 0.0
        %6662 = vmatpush1.msra.mxu0 0.0
        %6663 = vmatprep.subr.mxu0 0.0
        %6664 = vmatpush1.msra.mxu0 0.0
        %6665 = vmatprep.subr.mxu0 0.0
        %6666 = vmatpush1.msra.mxu0 0.0
        %6667 = vmatprep.subr.mxu0 0.0
        %6668 = vmatpush1.msra.mxu0 0.0
        %6669 = vmatprep.subr.mxu0 0.0
        %6670 = vmatpush1.msra.mxu0 0.0
        %6671 = vmatprep.subr.mxu0 0.0
        %6672 = vmatpush1.msra.mxu0 0.0
        %6673 = vmatprep.subr.mxu0 0.0
        %6674 = vmatpush1.msra.mxu0 0.0
        %6675 = vmatprep.subr.mxu0 0.0
        %6676 = vmatpush1.msra.mxu0 0.0
        %6677 = vmatprep.subr.mxu0 0.0
        %6678 = vmatpush1.msra.mxu0 0.0
        %6679 = vmatprep.subr.mxu0 0.0
        %6680 = vmatpush1.msra.mxu0 0.0
        %6681 = vmatprep.subr.mxu0 0.0
        %6682 = vmatpush1.msra.mxu0 0.0
        %6683 = vmatprep.subr.mxu0 0.0
        %6684 = vmatpush1.msra.mxu0 0.0
        %6685 = vmatprep.subr.mxu0 0.0
        %6686 = vmatpush1.msra.mxu0 0.0
        %6687 = vmatprep.subr.mxu0 0.0
        %6688 = vmatpush1.msra.mxu0 0.0
        %6689 = vmatprep.subr.mxu0 0.0
        %6690 = vmatpush1.msra.mxu0 0.0
        %6691 = vmatprep.subr.mxu0 0.0
        %6692 = vmatpush1.msra.mxu0 0.0
        %6693 = vmatprep.subr.mxu0 0.0
        %6694 = vmatpush1.msra.mxu0 0.0
        %6695 = vmatprep.subr.mxu0 0.0
        %6696 = vmatpush1.msra.mxu0 0.0
        %6697 = vmatprep.subr.mxu0 0.0
        %6698 = vmatpush1.msra.mxu0 0.0
        %6699 = vmatprep.subr.mxu0 0.0
        %6700 = vmatpush1.msra.mxu0 0.0
        %6701 = vmatprep.subr.mxu0 0.0
        %6702 = vmatpush1.msra.mxu0 0.0
        %6703 = vmatprep.subr.mxu0 0.0
        %6704 = vmatpush1.msra.mxu0 0.0
        %6705 = vmatprep.subr.mxu0 0.0
        %6706 = vmatpush1.msra.mxu0 0.0
        %6707 = vmatprep.mubr.f32.mxu0 0.0
        %6708 = vmatmul.mubr.f32.gmra.mrb[0].mxu0 %v6641
        %v6709 = vpop.f32.mrb[0].mxu0
        %v6710 = vadd.f32 0.0, %v6709
        %v6711 = vpop.f32.mrb[0].mxu0
        %6712 = vdwg.mxu0
        %v6714 = vsel %vm3330, %v3657, 0
        %6716 = vmatprep.subr.mxu0 0.0
        %6717 = vmatpush1.msra.mxu0 %v801
        %6718 = vmatprep.subr.mxu0 0.0
        %6719 = vmatpush1.msra.mxu0 0.0
        %6720 = vmatprep.subr.mxu0 0.0
        %6721 = vmatpush1.msra.mxu0 0.0
        %6722 = vmatprep.subr.mxu0 0.0
        %6723 = vmatpush1.msra.mxu0 0.0
        %6724 = vmatprep.subr.mxu0 0.0
        %6725 = vmatpush1.msra.mxu0 0.0
        %6726 = vmatprep.subr.mxu0 0.0
        %6727 = vmatpush1.msra.mxu0 0.0
        %6728 = vmatprep.subr.mxu0 0.0
        %6729 = vmatpush1.msra.mxu0 0.0
        %6730 = vmatprep.subr.mxu0 0.0
        %6731 = vmatpush1.msra.mxu0 0.0
        %6732 = vmatprep.subr.mxu0 0.0
        %6733 = vmatpush1.msra.mxu0 0.0
        %6734 = vmatprep.subr.mxu0 0.0
        %6735 = vmatpush1.msra.mxu0 0.0
        %6736 = vmatprep.subr.mxu0 0.0
        %6737 = vmatpush1.msra.mxu0 0.0
        %6738 = vmatprep.subr.mxu0 0.0
        %6739 = vmatpush1.msra.mxu0 0.0
        %6740 = vmatprep.subr.mxu0 0.0
        %6741 = vmatpush1.msra.mxu0 0.0
        %6742 = vmatprep.subr.mxu0 0.0
        %6743 = vmatpush1.msra.mxu0 0.0
        %6744 = vmatprep.subr.mxu0 0.0
        %6745 = vmatpush1.msra.mxu0 0.0
        %6746 = vmatprep.subr.mxu0 0.0
        %6747 = vmatpush1.msra.mxu0 0.0
        %6748 = vmatprep.subr.mxu0 0.0
        %6749 = vmatpush1.msra.mxu0 0.0
        %6750 = vmatprep.subr.mxu0 0.0
        %6751 = vmatpush1.msra.mxu0 0.0
        %6752 = vmatprep.subr.mxu0 0.0
        %6753 = vmatpush1.msra.mxu0 0.0
        %6754 = vmatprep.subr.mxu0 0.0
        %6755 = vmatpush1.msra.mxu0 0.0
        %6756 = vmatprep.subr.mxu0 0.0
        %6757 = vmatpush1.msra.mxu0 0.0
        %6758 = vmatprep.subr.mxu0 0.0
        %6759 = vmatpush1.msra.mxu0 0.0
        %6760 = vmatprep.subr.mxu0 0.0
        %6761 = vmatpush1.msra.mxu0 0.0
        %6762 = vmatprep.subr.mxu0 0.0
        %6763 = vmatpush1.msra.mxu0 0.0
        %6764 = vmatprep.subr.mxu0 0.0
        %6765 = vmatpush1.msra.mxu0 0.0
        %6766 = vmatprep.subr.mxu0 0.0
        %6767 = vmatpush1.msra.mxu0 0.0
        %6768 = vmatprep.subr.mxu0 0.0
        %6769 = vmatpush1.msra.mxu0 0.0
        %6770 = vmatprep.subr.mxu0 0.0
        %6771 = vmatpush1.msra.mxu0 0.0
        %6772 = vmatprep.subr.mxu0 0.0
        %6773 = vmatpush1.msra.mxu0 0.0
        %6774 = vmatprep.subr.mxu0 0.0
        %6775 = vmatpush1.msra.mxu0 0.0
        %6776 = vmatprep.subr.mxu0 0.0
        %6777 = vmatpush1.msra.mxu0 0.0
        %6778 = vmatprep.subr.mxu0 0.0
        %6779 = vmatpush1.msra.mxu0 0.0
        %6780 = vmatprep.mubr.f32.mxu0 0.0
        %6781 = vmatmul.mubr.f32.gmra.mrb[0].mxu0 %v6714
        %v6782 = vpop.f32.mrb[0].mxu0
        %v6783 = vadd.f32 0.0, %v6782
        %v6784 = vpop.f32.mrb[0].mxu0
        %6785 = vdwg.mxu0
        %v6787 = vsel %vm3330, %v3658, 0
        %6789 = vmatprep.subr.mxu0 0.0
        %6790 = vmatpush1.msra.mxu0 %v805
        %6791 = vmatprep.subr.mxu0 0.0
        %6792 = vmatpush1.msra.mxu0 0.0
        %6793 = vmatprep.subr.mxu0 0.0
        %6794 = vmatpush1.msra.mxu0 0.0
        %6795 = vmatprep.subr.mxu0 0.0
        %6796 = vmatpush1.msra.mxu0 0.0
        %6797 = vmatprep.subr.mxu0 0.0
        %6798 = vmatpush1.msra.mxu0 0.0
        %6799 = vmatprep.subr.mxu0 0.0
        %6800 = vmatpush1.msra.mxu0 0.0
        %6801 = vmatprep.subr.mxu0 0.0
        %6802 = vmatpush1.msra.mxu0 0.0
        %6803 = vmatprep.subr.mxu0 0.0
        %6804 = vmatpush1.msra.mxu0 0.0
        %6805 = vmatprep.subr.mxu0 0.0
        %6806 = vmatpush1.msra.mxu0 0.0
        %6807 = vmatprep.subr.mxu0 0.0
        %6808 = vmatpush1.msra.mxu0 0.0
        %6809 = vmatprep.subr.mxu0 0.0
        %6810 = vmatpush1.msra.mxu0 0.0
        %6811 = vmatprep.subr.mxu0 0.0
        %6812 = vmatpush1.msra.mxu0 0.0
        %6813 = vmatprep.subr.mxu0 0.0
        %6814 = vmatpush1.msra.mxu0 0.0
        %6815 = vmatprep.subr.mxu0 0.0
        %6816 = vmatpush1.msra.mxu0 0.0
        %6817 = vmatprep.subr.mxu0 0.0
        %6818 = vmatpush1.msra.mxu0 0.0
        %6819 = vmatprep.subr.mxu0 0.0
        %6820 = vmatpush1.msra.mxu0 0.0
        %6821 = vmatprep.subr.mxu0 0.0
        %6822 = vmatpush1.msra.mxu0 0.0
        %6823 = vmatprep.subr.mxu0 0.0
        %6824 = vmatpush1.msra.mxu0 0.0
        %6825 = vmatprep.subr.mxu0 0.0
        %6826 = vmatpush1.msra.mxu0 0.0
        %6827 = vmatprep.subr.mxu0 0.0
        %6828 = vmatpush1.msra.mxu0 0.0
        %6829 = vmatprep.subr.mxu0 0.0
        %6830 = vmatpush1.msra.mxu0 0.0
        %6831 = vmatprep.subr.mxu0 0.0
        %6832 = vmatpush1.msra.mxu0 0.0
        %6833 = vmatprep.subr.mxu0 0.0
        %6834 = vmatpush1.msra.mxu0 0.0
        %6835 = vmatprep.subr.mxu0 0.0
        %6836 = vmatpush1.msra.mxu0 0.0
        %6837 = vmatprep.subr.mxu0 0.0
        %6838 = vmatpush1.msra.mxu0 0.0
        %6839 = vmatprep.subr.mxu0 0.0
        %6840 = vmatpush1.msra.mxu0 0.0
        %6841 = vmatprep.subr.mxu0 0.0
        %6842 = vmatpush1.msra.mxu0 0.0
        %6843 = vmatprep.subr.mxu0 0.0
        %6844 = vmatpush1.msra.mxu0 0.0
        %6845 = vmatprep.subr.mxu0 0.0
        %6846 = vmatpush1.msra.mxu0 0.0
        %6847 = vmatprep.subr.mxu0 0.0
        %6848 = vmatpush1.msra.mxu0 0.0
        %6849 = vmatprep.subr.mxu0 0.0
        %6850 = vmatpush1.msra.mxu0 0.0
        %6851 = vmatprep.subr.mxu0 0.0
        %6852 = vmatpush1.msra.mxu0 0.0
        %6853 = vmatprep.mubr.f32.mxu0 0.0
        %6854 = vmatmul.mubr.f32.gmra.mrb[0].mxu0 %v6787
        %v6855 = vpop.f32.mrb[0].mxu0
        %v6856 = vadd.f32 0.0, %v6855
        %v6857 = vpop.f32.mrb[0].mxu0
        %6858 = vdwg.mxu0
        %v6860 = vsel %vm3330, %v3659, 0
        %6862 = vmatprep.subr.mxu0 0.0
        %6863 = vmatpush1.msra.mxu0 %v811
        %6864 = vmatprep.subr.mxu0 0.0
        %6865 = vmatpush1.msra.mxu0 0.0
        %6866 = vmatprep.subr.mxu0 0.0
        %6867 = vmatpush1.msra.mxu0 0.0
        %6868 = vmatprep.subr.mxu0 0.0
        %6869 = vmatpush1.msra.mxu0 0.0
        %6870 = vmatprep.subr.mxu0 0.0
        %6871 = vmatpush1.msra.mxu0 0.0
        %6872 = vmatprep.subr.mxu0 0.0
        %6873 = vmatpush1.msra.mxu0 0.0
        %6874 = vmatprep.subr.mxu0 0.0
        %6875 = vmatpush1.msra.mxu0 0.0
        %6876 = vmatprep.subr.mxu0 0.0
        %6877 = vmatpush1.msra.mxu0 0.0
        %6878 = vmatprep.subr.mxu0 0.0
        %6879 = vmatpush1.msra.mxu0 0.0
        %6880 = vmatprep.subr.mxu0 0.0
        %6881 = vmatpush1.msra.mxu0 0.0
        %6882 = vmatprep.subr.mxu0 0.0
        %6883 = vmatpush1.msra.mxu0 0.0
        %6884 = vmatprep.subr.mxu0 0.0
        %6885 = vmatpush1.msra.mxu0 0.0
        %6886 = vmatprep.subr.mxu0 0.0
        %6887 = vmatpush1.msra.mxu0 0.0
        %6888 = vmatprep.subr.mxu0 0.0
        %6889 = vmatpush1.msra.mxu0 0.0
        %6890 = vmatprep.subr.mxu0 0.0
        %6891 = vmatpush1.msra.mxu0 0.0
        %6892 = vmatprep.subr.mxu0 0.0
        %6893 = vmatpush1.msra.mxu0 0.0
        %6894 = vmatprep.subr.mxu0 0.0
        %6895 = vmatpush1.msra.mxu0 0.0
        %6896 = vmatprep.subr.mxu0 0.0
        %6897 = vmatpush1.msra.mxu0 0.0
        %6898 = vmatprep.subr.mxu0 0.0
        %6899 = vmatpush1.msra.mxu0 0.0
        %6900 = vmatprep.subr.mxu0 0.0
        %6901 = vmatpush1.msra.mxu0 0.0
        %6902 = vmatprep.subr.mxu0 0.0
        %6903 = vmatpush1.msra.mxu0 0.0
        %6904 = vmatprep.subr.mxu0 0.0
        %6905 = vmatpush1.msra.mxu0 0.0
        %6906 = vmatprep.subr.mxu0 0.0
        %6907 = vmatpush1.msra.mxu0 0.0
        %6908 = vmatprep.subr.mxu0 0.0
        %6909 = vmatpush1.msra.mxu0 0.0
        %6910 = vmatprep.subr.mxu0 0.0
        %6911 = vmatpush1.msra.mxu0 0.0
        %6912 = vmatprep.subr.mxu0 0.0
        %6913 = vmatpush1.msra.mxu0 0.0
        %6914 = vmatprep.subr.mxu0 0.0
        %6915 = vmatpush1.msra.mxu0 0.0
        %6916 = vmatprep.subr.mxu0 0.0
        %6917 = vmatpush1.msra.mxu0 0.0
        %6918 = vmatprep.subr.mxu0 0.0
        %6919 = vmatpush1.msra.mxu0 0.0
        %6920 = vmatprep.subr.mxu0 0.0
        %6921 = vmatpush1.msra.mxu0 0.0
        %6922 = vmatprep.subr.mxu0 0.0
        %6923 = vmatpush1.msra.mxu0 0.0
        %6924 = vmatprep.subr.mxu0 0.0
        %6925 = vmatpush1.msra.mxu0 0.0
        %6926 = vmatprep.mubr.f32.mxu0 0.0
        %6927 = vmatmul.mubr.f32.gmra.mrb[0].mxu0 %v6860
        %v6928 = vpop.f32.mrb[0].mxu0
        %v6929 = vadd.f32 0.0, %v6928
        %v6930 = vpop.f32.mrb[0].mxu0
        %6931 = vdwg.mxu0
        %v6933 = vsel %vm3330, %v3660, 0
        %6935 = vmatprep.subr.mxu0 0.0
        %6936 = vmatpush1.msra.mxu0 %v815
        %6937 = vmatprep.subr.mxu0 0.0
        %6938 = vmatpush1.msra.mxu0 0.0
        %6939 = vmatprep.subr.mxu0 0.0
        %6940 = vmatpush1.msra.mxu0 0.0
        %6941 = vmatprep.subr.mxu0 0.0
        %6942 = vmatpush1.msra.mxu0 0.0
        %6943 = vmatprep.subr.mxu0 0.0
        %6944 = vmatpush1.msra.mxu0 0.0
        %6945 = vmatprep.subr.mxu0 0.0
        %6946 = vmatpush1.msra.mxu0 0.0
        %6947 = vmatprep.subr.mxu0 0.0
        %6948 = vmatpush1.msra.mxu0 0.0
        %6949 = vmatprep.subr.mxu0 0.0
        %6950 = vmatpush1.msra.mxu0 0.0
        %6951 = vmatprep.subr.mxu0 0.0
        %6952 = vmatpush1.msra.mxu0 0.0
        %6953 = vmatprep.subr.mxu0 0.0
        %6954 = vmatpush1.msra.mxu0 0.0
        %6955 = vmatprep.subr.mxu0 0.0
        %6956 = vmatpush1.msra.mxu0 0.0
        %6957 = vmatprep.subr.mxu0 0.0
        %6958 = vmatpush1.msra.mxu0 0.0
        %6959 = vmatprep.subr.mxu0 0.0
        %6960 = vmatpush1.msra.mxu0 0.0
        %6961 = vmatprep.subr.mxu0 0.0
        %6962 = vmatpush1.msra.mxu0 0.0
        %6963 = vmatprep.subr.mxu0 0.0
        %6964 = vmatpush1.msra.mxu0 0.0
        %6965 = vmatprep.subr.mxu0 0.0
        %6966 = vmatpush1.msra.mxu0 0.0
        %6967 = vmatprep.subr.mxu0 0.0
        %6968 = vmatpush1.msra.mxu0 0.0
        %6969 = vmatprep.subr.mxu0 0.0
        %6970 = vmatpush1.msra.mxu0 0.0
        %6971 = vmatprep.subr.mxu0 0.0
        %6972 = vmatpush1.msra.mxu0 0.0
        %6973 = vmatprep.subr.mxu0 0.0
        %6974 = vmatpush1.msra.mxu0 0.0
        %6975 = vmatprep.subr.mxu0 0.0
        %6976 = vmatpush1.msra.mxu0 0.0
        %6977 = vmatprep.subr.mxu0 0.0
        %6978 = vmatpush1.msra.mxu0 0.0
        %6979 = vmatprep.subr.mxu0 0.0
        %6980 = vmatpush1.msra.mxu0 0.0
        %6981 = vmatprep.subr.mxu0 0.0
        %6982 = vmatpush1.msra.mxu0 0.0
        %6983 = vmatprep.subr.mxu0 0.0
        %6984 = vmatpush1.msra.mxu0 0.0
        %6985 = vmatprep.subr.mxu0 0.0
        %6986 = vmatpush1.msra.mxu0 0.0
        %6987 = vmatprep.subr.mxu0 0.0
        %6988 = vmatpush1.msra.mxu0 0.0
        %6989 = vmatprep.subr.mxu0 0.0
        %6990 = vmatpush1.msra.mxu0 0.0
        %6991 = vmatprep.subr.mxu0 0.0
        %6992 = vmatpush1.msra.mxu0 0.0
        %6993 = vmatprep.subr.mxu0 0.0
        %6994 = vmatpush1.msra.mxu0 0.0
        %6995 = vmatprep.subr.mxu0 0.0
        %6996 = vmatpush1.msra.mxu0 0.0
        %6997 = vmatprep.subr.mxu0 0.0
        %6998 = vmatpush1.msra.mxu0 0.0
        %6999 = vmatprep.mubr.f32.mxu0 0.0
        %7000 = vmatmul.mubr.f32.gmra.mrb[0].mxu0 %v6933
        %v7001 = vpop.f32.mrb[0].mxu0
        %v7002 = vadd.f32 0.0, %v7001
        %v7003 = vpop.f32.mrb[0].mxu0
        %7004 = vdwg.mxu0
        %v7006 = vsel %vm3330, %v3661, 0
        %7008 = vmatprep.subr.mxu0 0.0
        %7009 = vmatpush1.msra.mxu0 %v821
        %7010 = vmatprep.subr.mxu0 0.0
        %7011 = vmatpush1.msra.mxu0 0.0
        %7012 = vmatprep.subr.mxu0 0.0
        %7013 = vmatpush1.msra.mxu0 0.0
        %7014 = vmatprep.subr.mxu0 0.0
        %7015 = vmatpush1.msra.mxu0 0.0
        %7016 = vmatprep.subr.mxu0 0.0
        %7017 = vmatpush1.msra.mxu0 0.0
        %7018 = vmatprep.subr.mxu0 0.0
        %7019 = vmatpush1.msra.mxu0 0.0
        %7020 = vmatprep.subr.mxu0 0.0
        %7021 = vmatpush1.msra.mxu0 0.0
        %7022 = vmatprep.subr.mxu0 0.0
        %7023 = vmatpush1.msra.mxu0 0.0
        %7024 = vmatprep.subr.mxu0 0.0
        %7025 = vmatpush1.msra.mxu0 0.0
        %7026 = vmatprep.subr.mxu0 0.0
        %7027 = vmatpush1.msra.mxu0 0.0
        %7028 = vmatprep.subr.mxu0 0.0
        %7029 = vmatpush1.msra.mxu0 0.0
        %7030 = vmatprep.subr.mxu0 0.0
        %7031 = vmatpush1.msra.mxu0 0.0
        %7032 = vmatprep.subr.mxu0 0.0
        %7033 = vmatpush1.msra.mxu0 0.0
        %7034 = vmatprep.subr.mxu0 0.0
        %7035 = vmatpush1.msra.mxu0 0.0
        %7036 = vmatprep.subr.mxu0 0.0
        %7037 = vmatpush1.msra.mxu0 0.0
        %7038 = vmatprep.subr.mxu0 0.0
        %7039 = vmatpush1.msra.mxu0 0.0
        %7040 = vmatprep.subr.mxu0 0.0
        %7041 = vmatpush1.msra.mxu0 0.0
        %7042 = vmatprep.subr.mxu0 0.0
        %7043 = vmatpush1.msra.mxu0 0.0
        %7044 = vmatprep.subr.mxu0 0.0
        %7045 = vmatpush1.msra.mxu0 0.0
        %7046 = vmatprep.subr.mxu0 0.0
        %7047 = vmatpush1.msra.mxu0 0.0
        %7048 = vmatprep.subr.mxu0 0.0
        %7049 = vmatpush1.msra.mxu0 0.0
        %7050 = vmatprep.subr.mxu0 0.0
        %7051 = vmatpush1.msra.mxu0 0.0
        %7052 = vmatprep.subr.mxu0 0.0
        %7053 = vmatpush1.msra.mxu0 0.0
        %7054 = vmatprep.subr.mxu0 0.0
        %7055 = vmatpush1.msra.mxu0 0.0
        %7056 = vmatprep.subr.mxu0 0.0
        %7057 = vmatpush1.msra.mxu0 0.0
        %7058 = vmatprep.subr.mxu0 0.0
        %7059 = vmatpush1.msra.mxu0 0.0
        %7060 = vmatprep.subr.mxu0 0.0
        %7061 = vmatpush1.msra.mxu0 0.0
        %7062 = vmatprep.subr.mxu0 0.0
        %7063 = vmatpush1.msra.mxu0 0.0
        %7064 = vmatprep.subr.mxu0 0.0
        %7065 = vmatpush1.msra.mxu0 0.0
        %7066 = vmatprep.subr.mxu0 0.0
        %7067 = vmatpush1.msra.mxu0 0.0
        %7068 = vmatprep.subr.mxu0 0.0
        %7069 = vmatpush1.msra.mxu0 0.0
        %7070 = vmatprep.subr.mxu0 0.0
        %7071 = vmatpush1.msra.mxu0 0.0
        %7072 = vmatprep.mubr.f32.mxu0 0.0
        %7073 = vmatmul.mubr.f32.gmra.mrb[0].mxu0 %v7006
        %v7074 = vpop.f32.mrb[0].mxu0
        %v7075 = vadd.f32 0.0, %v7074
        %v7076 = vpop.f32.mrb[0].mxu0
        %7077 = vdwg.mxu0
        %v7079 = vsel %vm3330, %v3662, 0
        %7081 = vmatprep.subr.mxu0 0.0
        %7082 = vmatpush1.msra.mxu0 %v825
        %7083 = vmatprep.subr.mxu0 0.0
        %7084 = vmatpush1.msra.mxu0 0.0
        %7085 = vmatprep.subr.mxu0 0.0
        %7086 = vmatpush1.msra.mxu0 0.0
        %7087 = vmatprep.subr.mxu0 0.0
        %7088 = vmatpush1.msra.mxu0 0.0
        %7089 = vmatprep.subr.mxu0 0.0
        %7090 = vmatpush1.msra.mxu0 0.0
        %7091 = vmatprep.subr.mxu0 0.0
        %7092 = vmatpush1.msra.mxu0 0.0
        %7093 = vmatprep.subr.mxu0 0.0
        %7094 = vmatpush1.msra.mxu0 0.0
        %7095 = vmatprep.subr.mxu0 0.0
        %7096 = vmatpush1.msra.mxu0 0.0
        %7097 = vmatprep.subr.mxu0 0.0
        %7098 = vmatpush1.msra.mxu0 0.0
        %7099 = vmatprep.subr.mxu0 0.0
        %7100 = vmatpush1.msra.mxu0 0.0
        %7101 = vmatprep.subr.mxu0 0.0
        %7102 = vmatpush1.msra.mxu0 0.0
        %7103 = vmatprep.subr.mxu0 0.0
        %7104 = vmatpush1.msra.mxu0 0.0
        %7105 = vmatprep.subr.mxu0 0.0
        %7106 = vmatpush1.msra.mxu0 0.0
        %7107 = vmatprep.subr.mxu0 0.0
        %7108 = vmatpush1.msra.mxu0 0.0
        %7109 = vmatprep.subr.mxu0 0.0
        %7110 = vmatpush1.msra.mxu0 0.0
        %7111 = vmatprep.subr.mxu0 0.0
        %7112 = vmatpush1.msra.mxu0 0.0
        %7113 = vmatprep.subr.mxu0 0.0
        %7114 = vmatpush1.msra.mxu0 0.0
        %7115 = vmatprep.subr.mxu0 0.0
        %7116 = vmatpush1.msra.mxu0 0.0
        %7117 = vmatprep.subr.mxu0 0.0
        %7118 = vmatpush1.msra.mxu0 0.0
        %7119 = vmatprep.subr.mxu0 0.0
        %7120 = vmatpush1.msra.mxu0 0.0
        %7121 = vmatprep.subr.mxu0 0.0
        %7122 = vmatpush1.msra.mxu0 0.0
        %7123 = vmatprep.subr.mxu0 0.0
        %7124 = vmatpush1.msra.mxu0 0.0
        %7125 = vmatprep.subr.mxu0 0.0
        %7126 = vmatpush1.msra.mxu0 0.0
        %7127 = vmatprep.subr.mxu0 0.0
        %7128 = vmatpush1.msra.mxu0 0.0
        %7129 = vmatprep.subr.mxu0 0.0
        %7130 = vmatpush1.msra.mxu0 0.0
        %7131 = vmatprep.subr.mxu0 0.0
        %7132 = vmatpush1.msra.mxu0 0.0
        %7133 = vmatprep.subr.mxu0 0.0
        %7134 = vmatpush1.msra.mxu0 0.0
        %7135 = vmatprep.subr.mxu0 0.0
        %7136 = vmatpush1.msra.mxu0 0.0
        %7137 = vmatprep.subr.mxu0 0.0
        %7138 = vmatpush1.msra.mxu0 0.0
        %7139 = vmatprep.subr.mxu0 0.0
        %7140 = vmatpush1.msra.mxu0 0.0
        %7141 = vmatprep.subr.mxu0 0.0
        %7142 = vmatpush1.msra.mxu0 0.0
        %7143 = vmatprep.subr.mxu0 0.0
        %7144 = vmatpush1.msra.mxu0 0.0
        %7145 = vmatprep.mubr.f32.mxu0 0.0
        %7146 = vmatmul.mubr.f32.gmra.mrb[0].mxu0 %v7079
        %v7147 = vpop.f32.mrb[0].mxu0
        %v7148 = vadd.f32 0.0, %v7147
        %v7149 = vpop.f32.mrb[0].mxu0
        %7150 = vdwg.mxu0
        %v7152 = vsel %vm3330, %v3663, 0
        %7154 = vmatprep.subr.mxu0 0.0
        %7155 = vmatpush1.msra.mxu0 %v831
        %7156 = vmatprep.subr.mxu0 0.0
        %7157 = vmatpush1.msra.mxu0 0.0
        %7158 = vmatprep.subr.mxu0 0.0
        %7159 = vmatpush1.msra.mxu0 0.0
        %7160 = vmatprep.subr.mxu0 0.0
        %7161 = vmatpush1.msra.mxu0 0.0
        %7162 = vmatprep.subr.mxu0 0.0
        %7163 = vmatpush1.msra.mxu0 0.0
        %7164 = vmatprep.subr.mxu0 0.0
        %7165 = vmatpush1.msra.mxu0 0.0
        %7166 = vmatprep.subr.mxu0 0.0
        %7167 = vmatpush1.msra.mxu0 0.0
        %7168 = vmatprep.subr.mxu0 0.0
        %7169 = vmatpush1.msra.mxu0 0.0
        %7170 = vmatprep.subr.mxu0 0.0
        %7171 = vmatpush1.msra.mxu0 0.0
        %7172 = vmatprep.subr.mxu0 0.0
        %7173 = vmatpush1.msra.mxu0 0.0
        %7174 = vmatprep.subr.mxu0 0.0
        %7175 = vmatpush1.msra.mxu0 0.0
        %7176 = vmatprep.subr.mxu0 0.0
        %7177 = vmatpush1.msra.mxu0 0.0
        %7178 = vmatprep.subr.mxu0 0.0
        %7179 = vmatpush1.msra.mxu0 0.0
        %7180 = vmatprep.subr.mxu0 0.0
        %7181 = vmatpush1.msra.mxu0 0.0
        %7182 = vmatprep.subr.mxu0 0.0
        %7183 = vmatpush1.msra.mxu0 0.0
        %7184 = vmatprep.subr.mxu0 0.0
        %7185 = vmatpush1.msra.mxu0 0.0
        %7186 = vmatprep.subr.mxu0 0.0
        %7187 = vmatpush1.msra.mxu0 0.0
        %7188 = vmatprep.subr.mxu0 0.0
        %7189 = vmatpush1.msra.mxu0 0.0
        %7190 = vmatprep.subr.mxu0 0.0
        %7191 = vmatpush1.msra.mxu0 0.0
        %7192 = vmatprep.subr.mxu0 0.0
        %7193 = vmatpush1.msra.mxu0 0.0
        %7194 = vmatprep.subr.mxu0 0.0
        %7195 = vmatpush1.msra.mxu0 0.0
        %7196 = vmatprep.subr.mxu0 0.0
        %7197 = vmatpush1.msra.mxu0 0.0
        %7198 = vmatprep.subr.mxu0 0.0
        %7199 = vmatpush1.msra.mxu0 0.0
        %7200 = vmatprep.subr.mxu0 0.0
        %7201 = vmatpush1.msra.mxu0 0.0
        %7202 = vmatprep.subr.mxu0 0.0
        %7203 = vmatpush1.msra.mxu0 0.0
        %7204 = vmatprep.subr.mxu0 0.0
        %7205 = vmatpush1.msra.mxu0 0.0
        %7206 = vmatprep.subr.mxu0 0.0
        %7207 = vmatpush1.msra.mxu0 0.0
        %7208 = vmatprep.subr.mxu0 0.0
        %7209 = vmatpush1.msra.mxu0 0.0
        %7210 = vmatprep.subr.mxu0 0.0
        %7211 = vmatpush1.msra.mxu0 0.0
        %7212 = vmatprep.subr.mxu0 0.0
        %7213 = vmatpush1.msra.mxu0 0.0
        %7214 = vmatprep.subr.mxu0 0.0
        %7215 = vmatpush1.msra.mxu0 0.0
        %7216 = vmatprep.subr.mxu0 0.0
        %7217 = vmatpush1.msra.mxu0 0.0
        %7218 = vmatprep.mubr.f32.mxu0 0.0
        %7219 = vmatmul.mubr.f32.gmra.mrb[0].mxu0 %v7152
        %v7220 = vpop.f32.mrb[0].mxu0
        %v7221 = vadd.f32 0.0, %v7220
        %v7222 = vpop.f32.mrb[0].mxu0
        %7223 = vdwg.mxu0
        %v7225 = vsel %vm3330, %v3664, 0
        %7227 = vmatprep.subr.mxu0 0.0
        %7228 = vmatpush1.msra.mxu0 %v835
        %7229 = vmatprep.subr.mxu0 0.0
        %7230 = vmatpush1.msra.mxu0 0.0
        %7231 = vmatprep.subr.mxu0 0.0
        %7232 = vmatpush1.msra.mxu0 0.0
        %7233 = vmatprep.subr.mxu0 0.0
        %7234 = vmatpush1.msra.mxu0 0.0
        %7235 = vmatprep.subr.mxu0 0.0
        %7236 = vmatpush1.msra.mxu0 0.0
        %7237 = vmatprep.subr.mxu0 0.0
        %7238 = vmatpush1.msra.mxu0 0.0
        %7239 = vmatprep.subr.mxu0 0.0
        %7240 = vmatpush1.msra.mxu0 0.0
        %7241 = vmatprep.subr.mxu0 0.0
        %7242 = vmatpush1.msra.mxu0 0.0
        %7243 = vmatprep.subr.mxu0 0.0
        %7244 = vmatpush1.msra.mxu0 0.0
        %7245 = vmatprep.subr.mxu0 0.0
        %7246 = vmatpush1.msra.mxu0 0.0
        %7247 = vmatprep.subr.mxu0 0.0
        %7248 = vmatpush1.msra.mxu0 0.0
        %7249 = vmatprep.subr.mxu0 0.0
        %7250 = vmatpush1.msra.mxu0 0.0
        %7251 = vmatprep.subr.mxu0 0.0
        %7252 = vmatpush1.msra.mxu0 0.0
        %7253 = vmatprep.subr.mxu0 0.0
        %7254 = vmatpush1.msra.mxu0 0.0
        %7255 = vmatprep.subr.mxu0 0.0
        %7256 = vmatpush1.msra.mxu0 0.0
        %7257 = vmatprep.subr.mxu0 0.0
        %7258 = vmatpush1.msra.mxu0 0.0
        %7259 = vmatprep.subr.mxu0 0.0
        %7260 = vmatpush1.msra.mxu0 0.0
        %7261 = vmatprep.subr.mxu0 0.0
        %7262 = vmatpush1.msra.mxu0 0.0
        %7263 = vmatprep.subr.mxu0 0.0
        %7264 = vmatpush1.msra.mxu0 0.0
        %7265 = vmatprep.subr.mxu0 0.0
        %7266 = vmatpush1.msra.mxu0 0.0
        %7267 = vmatprep.subr.mxu0 0.0
        %7268 = vmatpush1.msra.mxu0 0.0
        %7269 = vmatprep.subr.mxu0 0.0
        %7270 = vmatpush1.msra.mxu0 0.0
        %7271 = vmatprep.subr.mxu0 0.0
        %7272 = vmatpush1.msra.mxu0 0.0
        %7273 = vmatprep.subr.mxu0 0.0
        %7274 = vmatpush1.msra.mxu0 0.0
        %7275 = vmatprep.subr.mxu0 0.0
        %7276 = vmatpush1.msra.mxu0 0.0
        %7277 = vmatprep.subr.mxu0 0.0
        %7278 = vmatpush1.msra.mxu0 0.0
        %7279 = vmatprep.subr.mxu0 0.0
        %7280 = vmatpush1.msra.mxu0 0.0
        %7281 = vmatprep.subr.mxu0 0.0
        %7282 = vmatpush1.msra.mxu0 0.0
        %7283 = vmatprep.subr.mxu0 0.0
        %7284 = vmatpush1.msra.mxu0 0.0
        %7285 = vmatprep.subr.mxu0 0.0
        %7286 = vmatpush1.msra.mxu0 0.0
        %7287 = vmatprep.subr.mxu0 0.0
        %7288 = vmatpush1.msra.mxu0 0.0
        %7289 = vmatprep.subr.mxu0 0.0
        %7290 = vmatpush1.msra.mxu0 0.0
        %7291 = vmatprep.mubr.f32.mxu0 0.0
        %7292 = vmatmul.mubr.f32.gmra.mrb[0].mxu0 %v7225
        %v7293 = vpop.f32.mrb[0].mxu0
        %v7294 = vadd.f32 0.0, %v7293
        %v7295 = vpop.f32.mrb[0].mxu0
        %7296 = vdwg.mxu0
        %v7298 = vsel %vm3330, %v3665, 0
        %7300 = vmatprep.subr.mxu0 0.0
        %7301 = vmatpush1.msra.mxu0 %v841
        %7302 = vmatprep.subr.mxu0 0.0
        %7303 = vmatpush1.msra.mxu0 0.0
        %7304 = vmatprep.subr.mxu0 0.0
        %7305 = vmatpush1.msra.mxu0 0.0
        %7306 = vmatprep.subr.mxu0 0.0
        %7307 = vmatpush1.msra.mxu0 0.0
        %7308 = vmatprep.subr.mxu0 0.0
        %7309 = vmatpush1.msra.mxu0 0.0
        %7310 = vmatprep.subr.mxu0 0.0
        %7311 = vmatpush1.msra.mxu0 0.0
        %7312 = vmatprep.subr.mxu0 0.0
        %7313 = vmatpush1.msra.mxu0 0.0
        %7314 = vmatprep.subr.mxu0 0.0
        %7315 = vmatpush1.msra.mxu0 0.0
        %7316 = vmatprep.subr.mxu0 0.0
        %7317 = vmatpush1.msra.mxu0 0.0
        %7318 = vmatprep.subr.mxu0 0.0
        %7319 = vmatpush1.msra.mxu0 0.0
        %7320 = vmatprep.subr.mxu0 0.0
        %7321 = vmatpush1.msra.mxu0 0.0
        %7322 = vmatprep.subr.mxu0 0.0
        %7323 = vmatpush1.msra.mxu0 0.0
        %7324 = vmatprep.subr.mxu0 0.0
        %7325 = vmatpush1.msra.mxu0 0.0
        %7326 = vmatprep.subr.mxu0 0.0
        %7327 = vmatpush1.msra.mxu0 0.0
        %7328 = vmatprep.subr.mxu0 0.0
        %7329 = vmatpush1.msra.mxu0 0.0
        %7330 = vmatprep.subr.mxu0 0.0
        %7331 = vmatpush1.msra.mxu0 0.0
        %7332 = vmatprep.subr.mxu0 0.0
        %7333 = vmatpush1.msra.mxu0 0.0
        %7334 = vmatprep.subr.mxu0 0.0
        %7335 = vmatpush1.msra.mxu0 0.0
        %7336 = vmatprep.subr.mxu0 0.0
        %7337 = vmatpush1.msra.mxu0 0.0
        %7338 = vmatprep.subr.mxu0 0.0
        %7339 = vmatpush1.msra.mxu0 0.0
        %7340 = vmatprep.subr.mxu0 0.0
        %7341 = vmatpush1.msra.mxu0 0.0
        %7342 = vmatprep.subr.mxu0 0.0
        %7343 = vmatpush1.msra.mxu0 0.0
        %7344 = vmatprep.subr.mxu0 0.0
        %7345 = vmatpush1.msra.mxu0 0.0
        %7346 = vmatprep.subr.mxu0 0.0
        %7347 = vmatpush1.msra.mxu0 0.0
        %7348 = vmatprep.subr.mxu0 0.0
        %7349 = vmatpush1.msra.mxu0 0.0
        %7350 = vmatprep.subr.mxu0 0.0
        %7351 = vmatpush1.msra.mxu0 0.0
        %7352 = vmatprep.subr.mxu0 0.0
        %7353 = vmatpush1.msra.mxu0 0.0
        %7354 = vmatprep.subr.mxu0 0.0
        %7355 = vmatpush1.msra.mxu0 0.0
        %7356 = vmatprep.subr.mxu0 0.0
        %7357 = vmatpush1.msra.mxu0 0.0
        %7358 = vmatprep.subr.mxu0 0.0
        %7359 = vmatpush1.msra.mxu0 0.0
        %7360 = vmatprep.subr.mxu0 0.0
        %7361 = vmatpush1.msra.mxu0 0.0
        %7362 = vmatprep.subr.mxu0 0.0
        %7363 = vmatpush1.msra.mxu0 0.0
        %7364 = vmatprep.mubr.f32.mxu0 0.0
        %7365 = vmatmul.mubr.f32.gmra.mrb[0].mxu0 %v7298
        %v7366 = vpop.f32.mrb[0].mxu0
        %v7367 = vadd.f32 0.0, %v7366
        %v7368 = vpop.f32.mrb[0].mxu0
        %7369 = vdwg.mxu0
        %v7371 = vsel %vm3330, %v3666, 0
        %7373 = vmatprep.subr.mxu0 0.0
        %7374 = vmatpush1.msra.mxu0 %v845
        %7375 = vmatprep.subr.mxu0 0.0
        %7376 = vmatpush1.msra.mxu0 0.0
        %7377 = vmatprep.subr.mxu0 0.0
        %7378 = vmatpush1.msra.mxu0 0.0
        %7379 = vmatprep.subr.mxu0 0.0
        %7380 = vmatpush1.msra.mxu0 0.0
        %7381 = vmatprep.subr.mxu0 0.0
        %7382 = vmatpush1.msra.mxu0 0.0
        %7383 = vmatprep.subr.mxu0 0.0
        %7384 = vmatpush1.msra.mxu0 0.0
        %7385 = vmatprep.subr.mxu0 0.0
        %7386 = vmatpush1.msra.mxu0 0.0
        %7387 = vmatprep.subr.mxu0 0.0
        %7388 = vmatpush1.msra.mxu0 0.0
        %7389 = vmatprep.subr.mxu0 0.0
        %7390 = vmatpush1.msra.mxu0 0.0
        %7391 = vmatprep.subr.mxu0 0.0
        %7392 = vmatpush1.msra.mxu0 0.0
        %7393 = vmatprep.subr.mxu0 0.0
        %7394 = vmatpush1.msra.mxu0 0.0
        %7395 = vmatprep.subr.mxu0 0.0
        %7396 = vmatpush1.msra.mxu0 0.0
        %7397 = vmatprep.subr.mxu0 0.0
        %7398 = vmatpush1.msra.mxu0 0.0
        %7399 = vmatprep.subr.mxu0 0.0
        %7400 = vmatpush1.msra.mxu0 0.0
        %7401 = vmatprep.subr.mxu0 0.0
        %7402 = vmatpush1.msra.mxu0 0.0
        %7403 = vmatprep.subr.mxu0 0.0
        %7404 = vmatpush1.msra.mxu0 0.0
        %7405 = vmatprep.subr.mxu0 0.0
        %7406 = vmatpush1.msra.mxu0 0.0
        %7407 = vmatprep.subr.mxu0 0.0
        %7408 = vmatpush1.msra.mxu0 0.0
        %7409 = vmatprep.subr.mxu0 0.0
        %7410 = vmatpush1.msra.mxu0 0.0
        %7411 = vmatprep.subr.mxu0 0.0
        %7412 = vmatpush1.msra.mxu0 0.0
        %7413 = vmatprep.subr.mxu0 0.0
        %7414 = vmatpush1.msra.mxu0 0.0
        %7415 = vmatprep.subr.mxu0 0.0
        %7416 = vmatpush1.msra.mxu0 0.0
        %7417 = vmatprep.subr.mxu0 0.0
        %7418 = vmatpush1.msra.mxu0 0.0
        %7419 = vmatprep.subr.mxu0 0.0
        %7420 = vmatpush1.msra.mxu0 0.0
        %7421 = vmatprep.subr.mxu0 0.0
        %7422 = vmatpush1.msra.mxu0 0.0
        %7423 = vmatprep.subr.mxu0 0.0
        %7424 = vmatpush1.msra.mxu0 0.0
        %7425 = vmatprep.subr.mxu0 0.0
        %7426 = vmatpush1.msra.mxu0 0.0
        %7427 = vmatprep.subr.mxu0 0.0
        %7428 = vmatpush1.msra.mxu0 0.0
        %7429 = vmatprep.subr.mxu0 0.0
        %7430 = vmatpush1.msra.mxu0 0.0
        %7431 = vmatprep.subr.mxu0 0.0
        %7432 = vmatpush1.msra.mxu0 0.0
        %7433 = vmatprep.subr.mxu0 0.0
        %7434 = vmatpush1.msra.mxu0 0.0
        %7435 = vmatprep.subr.mxu0 0.0
        %7436 = vmatpush1.msra.mxu0 0.0
        %7437 = vmatprep.mubr.f32.mxu0 0.0
        %7438 = vmatmul.mubr.f32.gmra.mrb[0].mxu0 %v7371
        %v7439 = vpop.f32.mrb[0].mxu0
        %v7440 = vadd.f32 0.0, %v7439
        %v7441 = vpop.f32.mrb[0].mxu0
        %7442 = vdwg.mxu0
        %v7444 = vsel %vm3330, %v3667, 0
        %7446 = vmatprep.subr.mxu0 0.0
        %7447 = vmatpush1.msra.mxu0 %v851
        %7448 = vmatprep.subr.mxu0 0.0
        %7449 = vmatpush1.msra.mxu0 0.0
        %7450 = vmatprep.subr.mxu0 0.0
        %7451 = vmatpush1.msra.mxu0 0.0
        %7452 = vmatprep.subr.mxu0 0.0
        %7453 = vmatpush1.msra.mxu0 0.0
        %7454 = vmatprep.subr.mxu0 0.0
        %7455 = vmatpush1.msra.mxu0 0.0
        %7456 = vmatprep.subr.mxu0 0.0
        %7457 = vmatpush1.msra.mxu0 0.0
        %7458 = vmatprep.subr.mxu0 0.0
        %7459 = vmatpush1.msra.mxu0 0.0
        %7460 = vmatprep.subr.mxu0 0.0
        %7461 = vmatpush1.msra.mxu0 0.0
        %7462 = vmatprep.subr.mxu0 0.0
        %7463 = vmatpush1.msra.mxu0 0.0
        %7464 = vmatprep.subr.mxu0 0.0
        %7465 = vmatpush1.msra.mxu0 0.0
        %7466 = vmatprep.subr.mxu0 0.0
        %7467 = vmatpush1.msra.mxu0 0.0
        %7468 = vmatprep.subr.mxu0 0.0
        %7469 = vmatpush1.msra.mxu0 0.0
        %7470 = vmatprep.subr.mxu0 0.0
        %7471 = vmatpush1.msra.mxu0 0.0
        %7472 = vmatprep.subr.mxu0 0.0
        %7473 = vmatpush1.msra.mxu0 0.0
        %7474 = vmatprep.subr.mxu0 0.0
        %7475 = vmatpush1.msra.mxu0 0.0
        %7476 = vmatprep.subr.mxu0 0.0
        %7477 = vmatpush1.msra.mxu0 0.0
        %7478 = vmatprep.subr.mxu0 0.0
        %7479 = vmatpush1.msra.mxu0 0.0
        %7480 = vmatprep.subr.mxu0 0.0
        %7481 = vmatpush1.msra.mxu0 0.0
        %7482 = vmatprep.subr.mxu0 0.0
        %7483 = vmatpush1.msra.mxu0 0.0
        %7484 = vmatprep.subr.mxu0 0.0
        %7485 = vmatpush1.msra.mxu0 0.0
        %7486 = vmatprep.subr.mxu0 0.0
        %7487 = vmatpush1.msra.mxu0 0.0
        %7488 = vmatprep.subr.mxu0 0.0
        %7489 = vmatpush1.msra.mxu0 0.0
        %7490 = vmatprep.subr.mxu0 0.0
        %7491 = vmatpush1.msra.mxu0 0.0
        %7492 = vmatprep.subr.mxu0 0.0
        %7493 = vmatpush1.msra.mxu0 0.0
        %7494 = vmatprep.subr.mxu0 0.0
        %7495 = vmatpush1.msra.mxu0 0.0
        %7496 = vmatprep.subr.mxu0 0.0
        %7497 = vmatpush1.msra.mxu0 0.0
        %7498 = vmatprep.subr.mxu0 0.0
        %7499 = vmatpush1.msra.mxu0 0.0
        %7500 = vmatprep.subr.mxu0 0.0
        %7501 = vmatpush1.msra.mxu0 0.0
        %7502 = vmatprep.subr.mxu0 0.0
        %7503 = vmatpush1.msra.mxu0 0.0
        %7504 = vmatprep.subr.mxu0 0.0
        %7505 = vmatpush1.msra.mxu0 0.0
        %7506 = vmatprep.subr.mxu0 0.0
        %7507 = vmatpush1.msra.mxu0 0.0
        %7508 = vmatprep.subr.mxu0 0.0
        %7509 = vmatpush1.msra.mxu0 0.0
        %7510 = vmatprep.mubr.f32.mxu0 0.0
        %7511 = vmatmul.mubr.f32.gmra.mrb[0].mxu0 %v7444
        %v7512 = vpop.f32.mrb[0].mxu0
        %v7513 = vadd.f32 0.0, %v7512
        %v7514 = vpop.f32.mrb[0].mxu0
        %7515 = vdwg.mxu0
        %v7517 = vsel %vm3330, %v3668, 0
        %7519 = vmatprep.subr.mxu0 0.0
        %7520 = vmatpush1.msra.mxu0 %v855
        %7521 = vmatprep.subr.mxu0 0.0
        %7522 = vmatpush1.msra.mxu0 0.0
        %7523 = vmatprep.subr.mxu0 0.0
        %7524 = vmatpush1.msra.mxu0 0.0
        %7525 = vmatprep.subr.mxu0 0.0
        %7526 = vmatpush1.msra.mxu0 0.0
        %7527 = vmatprep.subr.mxu0 0.0
        %7528 = vmatpush1.msra.mxu0 0.0
        %7529 = vmatprep.subr.mxu0 0.0
        %7530 = vmatpush1.msra.mxu0 0.0
        %7531 = vmatprep.subr.mxu0 0.0
        %7532 = vmatpush1.msra.mxu0 0.0
        %7533 = vmatprep.subr.mxu0 0.0
        %7534 = vmatpush1.msra.mxu0 0.0
        %7535 = vmatprep.subr.mxu0 0.0
        %7536 = vmatpush1.msra.mxu0 0.0
        %7537 = vmatprep.subr.mxu0 0.0
        %7538 = vmatpush1.msra.mxu0 0.0
        %7539 = vmatprep.subr.mxu0 0.0
        %7540 = vmatpush1.msra.mxu0 0.0
        %7541 = vmatprep.subr.mxu0 0.0
        %7542 = vmatpush1.msra.mxu0 0.0
        %7543 = vmatprep.subr.mxu0 0.0
        %7544 = vmatpush1.msra.mxu0 0.0
        %7545 = vmatprep.subr.mxu0 0.0
        %7546 = vmatpush1.msra.mxu0 0.0
        %7547 = vmatprep.subr.mxu0 0.0
        %7548 = vmatpush1.msra.mxu0 0.0
        %7549 = vmatprep.subr.mxu0 0.0
        %7550 = vmatpush1.msra.mxu0 0.0
        %7551 = vmatprep.subr.mxu0 0.0
        %7552 = vmatpush1.msra.mxu0 0.0
        %7553 = vmatprep.subr.mxu0 0.0
        %7554 = vmatpush1.msra.mxu0 0.0
        %7555 = vmatprep.subr.mxu0 0.0
        %7556 = vmatpush1.msra.mxu0 0.0
        %7557 = vmatprep.subr.mxu0 0.0
        %7558 = vmatpush1.msra.mxu0 0.0
        %7559 = vmatprep.subr.mxu0 0.0
        %7560 = vmatpush1.msra.mxu0 0.0
        %7561 = vmatprep.subr.mxu0 0.0
        %7562 = vmatpush1.msra.mxu0 0.0
        %7563 = vmatprep.subr.mxu0 0.0
        %7564 = vmatpush1.msra.mxu0 0.0
        %7565 = vmatprep.subr.mxu0 0.0
        %7566 = vmatpush1.msra.mxu0 0.0
        %7567 = vmatprep.subr.mxu0 0.0
        %7568 = vmatpush1.msra.mxu0 0.0
        %7569 = vmatprep.subr.mxu0 0.0
        %7570 = vmatpush1.msra.mxu0 0.0
        %7571 = vmatprep.subr.mxu0 0.0
        %7572 = vmatpush1.msra.mxu0 0.0
        %7573 = vmatprep.subr.mxu0 0.0
        %7574 = vmatpush1.msra.mxu0 0.0
        %7575 = vmatprep.subr.mxu0 0.0
        %7576 = vmatpush1.msra.mxu0 0.0
        %7577 = vmatprep.subr.mxu0 0.0
        %7578 = vmatpush1.msra.mxu0 0.0
        %7579 = vmatprep.subr.mxu0 0.0
        %7580 = vmatpush1.msra.mxu0 0.0
        %7581 = vmatprep.subr.mxu0 0.0
        %7582 = vmatpush1.msra.mxu0 0.0
        %7583 = vmatprep.mubr.f32.mxu0 0.0
        %7584 = vmatmul.mubr.f32.gmra.mrb[0].mxu0 %v7517
        %v7585 = vpop.f32.mrb[0].mxu0
        %v7586 = vadd.f32 0.0, %v7585
        %v7587 = vpop.f32.mrb[0].mxu0
        %7588 = vdwg.mxu0
        %v7590 = vsel %vm3330, %v3669, 0
        %7592 = vmatprep.subr.mxu0 0.0
        %7593 = vmatpush1.msra.mxu0 %v861
        %7594 = vmatprep.subr.mxu0 0.0
        %7595 = vmatpush1.msra.mxu0 0.0
        %7596 = vmatprep.subr.mxu0 0.0
        %7597 = vmatpush1.msra.mxu0 0.0
        %7598 = vmatprep.subr.mxu0 0.0
        %7599 = vmatpush1.msra.mxu0 0.0
        %7600 = vmatprep.subr.mxu0 0.0
        %7601 = vmatpush1.msra.mxu0 0.0
        %7602 = vmatprep.subr.mxu0 0.0
        %7603 = vmatpush1.msra.mxu0 0.0
        %7604 = vmatprep.subr.mxu0 0.0
        %7605 = vmatpush1.msra.mxu0 0.0
        %7606 = vmatprep.subr.mxu0 0.0
        %7607 = vmatpush1.msra.mxu0 0.0
        %7608 = vmatprep.subr.mxu0 0.0
        %7609 = vmatpush1.msra.mxu0 0.0
        %7610 = vmatprep.subr.mxu0 0.0
        %7611 = vmatpush1.msra.mxu0 0.0
        %7612 = vmatprep.subr.mxu0 0.0
        %7613 = vmatpush1.msra.mxu0 0.0
        %7614 = vmatprep.subr.mxu0 0.0
        %7615 = vmatpush1.msra.mxu0 0.0
        %7616 = vmatprep.subr.mxu0 0.0
        %7617 = vmatpush1.msra.mxu0 0.0
        %7618 = vmatprep.subr.mxu0 0.0
        %7619 = vmatpush1.msra.mxu0 0.0
        %7620 = vmatprep.subr.mxu0 0.0
        %7621 = vmatpush1.msra.mxu0 0.0
        %7622 = vmatprep.subr.mxu0 0.0
        %7623 = vmatpush1.msra.mxu0 0.0
        %7624 = vmatprep.subr.mxu0 0.0
        %7625 = vmatpush1.msra.mxu0 0.0
        %7626 = vmatprep.subr.mxu0 0.0
        %7627 = vmatpush1.msra.mxu0 0.0
        %7628 = vmatprep.subr.mxu0 0.0
        %7629 = vmatpush1.msra.mxu0 0.0
        %7630 = vmatprep.subr.mxu0 0.0
        %7631 = vmatpush1.msra.mxu0 0.0
        %7632 = vmatprep.subr.mxu0 0.0
        %7633 = vmatpush1.msra.mxu0 0.0
        %7634 = vmatprep.subr.mxu0 0.0
        %7635 = vmatpush1.msra.mxu0 0.0
        %7636 = vmatprep.subr.mxu0 0.0
        %7637 = vmatpush1.msra.mxu0 0.0
        %7638 = vmatprep.subr.mxu0 0.0
        %7639 = vmatpush1.msra.mxu0 0.0
        %7640 = vmatprep.subr.mxu0 0.0
        %7641 = vmatpush1.msra.mxu0 0.0
        %7642 = vmatprep.subr.mxu0 0.0
        %7643 = vmatpush1.msra.mxu0 0.0
        %7644 = vmatprep.subr.mxu0 0.0
        %7645 = vmatpush1.msra.mxu0 0.0
        %7646 = vmatprep.subr.mxu0 0.0
        %7647 = vmatpush1.msra.mxu0 0.0
        %7648 = vmatprep.subr.mxu0 0.0
        %7649 = vmatpush1.msra.mxu0 0.0
        %7650 = vmatprep.subr.mxu0 0.0
        %7651 = vmatpush1.msra.mxu0 0.0
        %7652 = vmatprep.subr.mxu0 0.0
        %7653 = vmatpush1.msra.mxu0 0.0
        %7654 = vmatprep.subr.mxu0 0.0
        %7655 = vmatpush1.msra.mxu0 0.0
        %7656 = vmatprep.mubr.f32.mxu0 0.0
        %7657 = vmatmul.mubr.f32.gmra.mrb[0].mxu0 %v7590
        %v7658 = vpop.f32.mrb[0].mxu0
        %v7659 = vadd.f32 0.0, %v7658
        %v7660 = vpop.f32.mrb[0].mxu0
        %7661 = vdwg.mxu0
        %v7663 = vsel %vm3330, %v3670, 0
        %7665 = vmatprep.subr.mxu0 0.0
        %7666 = vmatpush1.msra.mxu0 %v865
        %7667 = vmatprep.subr.mxu0 0.0
        %7668 = vmatpush1.msra.mxu0 0.0
        %7669 = vmatprep.subr.mxu0 0.0
        %7670 = vmatpush1.msra.mxu0 0.0
        %7671 = vmatprep.subr.mxu0 0.0
        %7672 = vmatpush1.msra.mxu0 0.0
        %7673 = vmatprep.subr.mxu0 0.0
        %7674 = vmatpush1.msra.mxu0 0.0
        %7675 = vmatprep.subr.mxu0 0.0
        %7676 = vmatpush1.msra.mxu0 0.0
        %7677 = vmatprep.subr.mxu0 0.0
        %7678 = vmatpush1.msra.mxu0 0.0
        %7679 = vmatprep.subr.mxu0 0.0
        %7680 = vmatpush1.msra.mxu0 0.0
        %7681 = vmatprep.subr.mxu0 0.0
        %7682 = vmatpush1.msra.mxu0 0.0
        %7683 = vmatprep.subr.mxu0 0.0
        %7684 = vmatpush1.msra.mxu0 0.0
        %7685 = vmatprep.subr.mxu0 0.0
        %7686 = vmatpush1.msra.mxu0 0.0
        %7687 = vmatprep.subr.mxu0 0.0
        %7688 = vmatpush1.msra.mxu0 0.0
        %7689 = vmatprep.subr.mxu0 0.0
        %7690 = vmatpush1.msra.mxu0 0.0
        %7691 = vmatprep.subr.mxu0 0.0
        %7692 = vmatpush1.msra.mxu0 0.0
        %7693 = vmatprep.subr.mxu0 0.0
        %7694 = vmatpush1.msra.mxu0 0.0
        %7695 = vmatprep.subr.mxu0 0.0
        %7696 = vmatpush1.msra.mxu0 0.0
        %7697 = vmatprep.subr.mxu0 0.0
        %7698 = vmatpush1.msra.mxu0 0.0
        %7699 = vmatprep.subr.mxu0 0.0
        %7700 = vmatpush1.msra.mxu0 0.0
        %7701 = vmatprep.subr.mxu0 0.0
        %7702 = vmatpush1.msra.mxu0 0.0
        %7703 = vmatprep.subr.mxu0 0.0
        %7704 = vmatpush1.msra.mxu0 0.0
        %7705 = vmatprep.subr.mxu0 0.0
        %7706 = vmatpush1.msra.mxu0 0.0
        %7707 = vmatprep.subr.mxu0 0.0
        %7708 = vmatpush1.msra.mxu0 0.0
        %7709 = vmatprep.subr.mxu0 0.0
        %7710 = vmatpush1.msra.mxu0 0.0
        %7711 = vmatprep.subr.mxu0 0.0
        %7712 = vmatpush1.msra.mxu0 0.0
        %7713 = vmatprep.subr.mxu0 0.0
        %7714 = vmatpush1.msra.mxu0 0.0
        %7715 = vmatprep.subr.mxu0 0.0
        %7716 = vmatpush1.msra.mxu0 0.0
        %7717 = vmatprep.subr.mxu0 0.0
        %7718 = vmatpush1.msra.mxu0 0.0
        %7719 = vmatprep.subr.mxu0 0.0
        %7720 = vmatpush1.msra.mxu0 0.0
        %7721 = vmatprep.subr.mxu0 0.0
        %7722 = vmatpush1.msra.mxu0 0.0
        %7723 = vmatprep.subr.mxu0 0.0
        %7724 = vmatpush1.msra.mxu0 0.0
        %7725 = vmatprep.subr.mxu0 0.0
        %7726 = vmatpush1.msra.mxu0 0.0
        %7727 = vmatprep.subr.mxu0 0.0
        %7728 = vmatpush1.msra.mxu0 0.0
        %7729 = vmatprep.mubr.f32.mxu0 0.0
        %7730 = vmatmul.mubr.f32.gmra.mrb[0].mxu0 %v7663
        %v7731 = vpop.f32.mrb[0].mxu0
        %v7732 = vadd.f32 0.0, %v7731
        %v7733 = vpop.f32.mrb[0].mxu0
        %7734 = vdwg.mxu0
        %v7736 = vsel %vm3330, %v3671, 0
        %7738 = vmatprep.subr.mxu0 0.0
        %7739 = vmatpush1.msra.mxu0 %v871
        %7740 = vmatprep.subr.mxu0 0.0
        %7741 = vmatpush1.msra.mxu0 0.0
        %7742 = vmatprep.subr.mxu0 0.0
        %7743 = vmatpush1.msra.mxu0 0.0
        %7744 = vmatprep.subr.mxu0 0.0
        %7745 = vmatpush1.msra.mxu0 0.0
        %7746 = vmatprep.subr.mxu0 0.0
        %7747 = vmatpush1.msra.mxu0 0.0
        %7748 = vmatprep.subr.mxu0 0.0
        %7749 = vmatpush1.msra.mxu0 0.0
        %7750 = vmatprep.subr.mxu0 0.0
        %7751 = vmatpush1.msra.mxu0 0.0
        %7752 = vmatprep.subr.mxu0 0.0
        %7753 = vmatpush1.msra.mxu0 0.0
        %7754 = vmatprep.subr.mxu0 0.0
        %7755 = vmatpush1.msra.mxu0 0.0
        %7756 = vmatprep.subr.mxu0 0.0
        %7757 = vmatpush1.msra.mxu0 0.0
        %7758 = vmatprep.subr.mxu0 0.0
        %7759 = vmatpush1.msra.mxu0 0.0
        %7760 = vmatprep.subr.mxu0 0.0
        %7761 = vmatpush1.msra.mxu0 0.0
        %7762 = vmatprep.subr.mxu0 0.0
        %7763 = vmatpush1.msra.mxu0 0.0
        %7764 = vmatprep.subr.mxu0 0.0
        %7765 = vmatpush1.msra.mxu0 0.0
        %7766 = vmatprep.subr.mxu0 0.0
        %7767 = vmatpush1.msra.mxu0 0.0
        %7768 = vmatprep.subr.mxu0 0.0
        %7769 = vmatpush1.msra.mxu0 0.0
        %7770 = vmatprep.subr.mxu0 0.0
        %7771 = vmatpush1.msra.mxu0 0.0
        %7772 = vmatprep.subr.mxu0 0.0
        %7773 = vmatpush1.msra.mxu0 0.0
        %7774 = vmatprep.subr.mxu0 0.0
        %7775 = vmatpush1.msra.mxu0 0.0
        %7776 = vmatprep.subr.mxu0 0.0
        %7777 = vmatpush1.msra.mxu0 0.0
        %7778 = vmatprep.subr.mxu0 0.0
        %7779 = vmatpush1.msra.mxu0 0.0
        %7780 = vmatprep.subr.mxu0 0.0
        %7781 = vmatpush1.msra.mxu0 0.0
        %7782 = vmatprep.subr.mxu0 0.0
        %7783 = vmatpush1.msra.mxu0 0.0
        %7784 = vmatprep.subr.mxu0 0.0
        %7785 = vmatpush1.msra.mxu0 0.0
        %7786 = vmatprep.subr.mxu0 0.0
        %7787 = vmatpush1.msra.mxu0 0.0
        %7788 = vmatprep.subr.mxu0 0.0
        %7789 = vmatpush1.msra.mxu0 0.0
        %7790 = vmatprep.subr.mxu0 0.0
        %7791 = vmatpush1.msra.mxu0 0.0
        %7792 = vmatprep.subr.mxu0 0.0
        %7793 = vmatpush1.msra.mxu0 0.0
        %7794 = vmatprep.subr.mxu0 0.0
        %7795 = vmatpush1.msra.mxu0 0.0
        %7796 = vmatprep.subr.mxu0 0.0
        %7797 = vmatpush1.msra.mxu0 0.0
        %7798 = vmatprep.subr.mxu0 0.0
        %7799 = vmatpush1.msra.mxu0 0.0
        %7800 = vmatprep.subr.mxu0 0.0
        %7801 = vmatpush1.msra.mxu0 0.0
        %7802 = vmatprep.mubr.f32.mxu0 0.0
        %7803 = vmatmul.mubr.f32.gmra.mrb[0].mxu0 %v7736
        %v7804 = vpop.f32.mrb[0].mxu0
        %v7805 = vadd.f32 0.0, %v7804
        %v7806 = vpop.f32.mrb[0].mxu0
        %7807 = vdwg.mxu0
        %v7809 = vsel %vm3330, %v3672, 0
        %7811 = vmatprep.subr.mxu0 0.0
        %7812 = vmatpush1.msra.mxu0 %v875
        %7813 = vmatprep.subr.mxu0 0.0
        %7814 = vmatpush1.msra.mxu0 0.0
        %7815 = vmatprep.subr.mxu0 0.0
        %7816 = vmatpush1.msra.mxu0 0.0
        %7817 = vmatprep.subr.mxu0 0.0
        %7818 = vmatpush1.msra.mxu0 0.0
        %7819 = vmatprep.subr.mxu0 0.0
        %7820 = vmatpush1.msra.mxu0 0.0
        %7821 = vmatprep.subr.mxu0 0.0
        %7822 = vmatpush1.msra.mxu0 0.0
        %7823 = vmatprep.subr.mxu0 0.0
        %7824 = vmatpush1.msra.mxu0 0.0
        %7825 = vmatprep.subr.mxu0 0.0
        %7826 = vmatpush1.msra.mxu0 0.0
        %7827 = vmatprep.subr.mxu0 0.0
        %7828 = vmatpush1.msra.mxu0 0.0
        %7829 = vmatprep.subr.mxu0 0.0
        %7830 = vmatpush1.msra.mxu0 0.0
        %7831 = vmatprep.subr.mxu0 0.0
        %7832 = vmatpush1.msra.mxu0 0.0
        %7833 = vmatprep.subr.mxu0 0.0
        %7834 = vmatpush1.msra.mxu0 0.0
        %7835 = vmatprep.subr.mxu0 0.0
        %7836 = vmatpush1.msra.mxu0 0.0
        %7837 = vmatprep.subr.mxu0 0.0
        %7838 = vmatpush1.msra.mxu0 0.0
        %7839 = vmatprep.subr.mxu0 0.0
        %7840 = vmatpush1.msra.mxu0 0.0
        %7841 = vmatprep.subr.mxu0 0.0
        %7842 = vmatpush1.msra.mxu0 0.0
        %7843 = vmatprep.subr.mxu0 0.0
        %7844 = vmatpush1.msra.mxu0 0.0
        %7845 = vmatprep.subr.mxu0 0.0
        %7846 = vmatpush1.msra.mxu0 0.0
        %7847 = vmatprep.subr.mxu0 0.0
        %7848 = vmatpush1.msra.mxu0 0.0
        %7849 = vmatprep.subr.mxu0 0.0
        %7850 = vmatpush1.msra.mxu0 0.0
        %7851 = vmatprep.subr.mxu0 0.0
        %7852 = vmatpush1.msra.mxu0 0.0
        %7853 = vmatprep.subr.mxu0 0.0
        %7854 = vmatpush1.msra.mxu0 0.0
        %7855 = vmatprep.subr.mxu0 0.0
        %7856 = vmatpush1.msra.mxu0 0.0
        %7857 = vmatprep.subr.mxu0 0.0
        %7858 = vmatpush1.msra.mxu0 0.0
        %7859 = vmatprep.subr.mxu0 0.0
        %7860 = vmatpush1.msra.mxu0 0.0
        %7861 = vmatprep.subr.mxu0 0.0
        %7862 = vmatpush1.msra.mxu0 0.0
        %7863 = vmatprep.subr.mxu0 0.0
        %7864 = vmatpush1.msra.mxu0 0.0
        %7865 = vmatprep.subr.mxu0 0.0
        %7866 = vmatpush1.msra.mxu0 0.0
        %7867 = vmatprep.subr.mxu0 0.0
        %7868 = vmatpush1.msra.mxu0 0.0
        %7869 = vmatprep.subr.mxu0 0.0
        %7870 = vmatpush1.msra.mxu0 0.0
        %7871 = vmatprep.subr.mxu0 0.0
        %7872 = vmatpush1.msra.mxu0 0.0
        %7873 = vmatprep.subr.mxu0 0.0
        %7874 = vmatpush1.msra.mxu0 0.0
        %7875 = vmatprep.mubr.f32.mxu0 0.0
        %7876 = vmatmul.mubr.f32.gmra.mrb[0].mxu0 %v7809
        %v7877 = vpop.f32.mrb[0].mxu0
        %v7878 = vadd.f32 0.0, %v7877
        %v7879 = vpop.f32.mrb[0].mxu0
        %7880 = vdwg.mxu0
        %v7882 = vsel %vm3330, %v3673, 0
        %7884 = vmatprep.subr.mxu0 0.0
        %7885 = vmatpush1.msra.mxu0 %v881
        %7886 = vmatprep.subr.mxu0 0.0
        %7887 = vmatpush1.msra.mxu0 0.0
        %7888 = vmatprep.subr.mxu0 0.0
        %7889 = vmatpush1.msra.mxu0 0.0
        %7890 = vmatprep.subr.mxu0 0.0
        %7891 = vmatpush1.msra.mxu0 0.0
        %7892 = vmatprep.subr.mxu0 0.0
        %7893 = vmatpush1.msra.mxu0 0.0
        %7894 = vmatprep.subr.mxu0 0.0
        %7895 = vmatpush1.msra.mxu0 0.0
        %7896 = vmatprep.subr.mxu0 0.0
        %7897 = vmatpush1.msra.mxu0 0.0
        %7898 = vmatprep.subr.mxu0 0.0
        %7899 = vmatpush1.msra.mxu0 0.0
        %7900 = vmatprep.subr.mxu0 0.0
        %7901 = vmatpush1.msra.mxu0 0.0
        %7902 = vmatprep.subr.mxu0 0.0
        %7903 = vmatpush1.msra.mxu0 0.0
        %7904 = vmatprep.subr.mxu0 0.0
        %7905 = vmatpush1.msra.mxu0 0.0
        %7906 = vmatprep.subr.mxu0 0.0
        %7907 = vmatpush1.msra.mxu0 0.0
        %7908 = vmatprep.subr.mxu0 0.0
        %7909 = vmatpush1.msra.mxu0 0.0
        %7910 = vmatprep.subr.mxu0 0.0
        %7911 = vmatpush1.msra.mxu0 0.0
        %7912 = vmatprep.subr.mxu0 0.0
        %7913 = vmatpush1.msra.mxu0 0.0
        %7914 = vmatprep.subr.mxu0 0.0
        %7915 = vmatpush1.msra.mxu0 0.0
        %7916 = vmatprep.subr.mxu0 0.0
        %7917 = vmatpush1.msra.mxu0 0.0
        %7918 = vmatprep.subr.mxu0 0.0
        %7919 = vmatpush1.msra.mxu0 0.0
        %7920 = vmatprep.subr.mxu0 0.0
        %7921 = vmatpush1.msra.mxu0 0.0
        %7922 = vmatprep.subr.mxu0 0.0
        %7923 = vmatpush1.msra.mxu0 0.0
        %7924 = vmatprep.subr.mxu0 0.0
        %7925 = vmatpush1.msra.mxu0 0.0
        %7926 = vmatprep.subr.mxu0 0.0
        %7927 = vmatpush1.msra.mxu0 0.0
        %7928 = vmatprep.subr.mxu0 0.0
        %7929 = vmatpush1.msra.mxu0 0.0
        %7930 = vmatprep.subr.mxu0 0.0
        %7931 = vmatpush1.msra.mxu0 0.0
        %7932 = vmatprep.subr.mxu0 0.0
        %7933 = vmatpush1.msra.mxu0 0.0
        %7934 = vmatprep.subr.mxu0 0.0
        %7935 = vmatpush1.msra.mxu0 0.0
        %7936 = vmatprep.subr.mxu0 0.0
        %7937 = vmatpush1.msra.mxu0 0.0
        %7938 = vmatprep.subr.mxu0 0.0
        %7939 = vmatpush1.msra.mxu0 0.0
        %7940 = vmatprep.subr.mxu0 0.0
        %7941 = vmatpush1.msra.mxu0 0.0
        %7942 = vmatprep.subr.mxu0 0.0
        %7943 = vmatpush1.msra.mxu0 0.0
        %7944 = vmatprep.subr.mxu0 0.0
        %7945 = vmatpush1.msra.mxu0 0.0
        %7946 = vmatprep.subr.mxu0 0.0
        %7947 = vmatpush1.msra.mxu0 0.0
        %7948 = vmatprep.mubr.f32.mxu0 0.0
        %7949 = vmatmul.mubr.f32.gmra.mrb[0].mxu0 %v7882
        %v7950 = vpop.f32.mrb[0].mxu0
        %v7951 = vadd.f32 0.0, %v7950
        %v7952 = vpop.f32.mrb[0].mxu0
        %7953 = vdwg.mxu0
        %v7955 = vsel %vm3330, %v3674, 0
        %7957 = vmatprep.subr.mxu0 0.0
        %7958 = vmatpush1.msra.mxu0 %v885
        %7959 = vmatprep.subr.mxu0 0.0
        %7960 = vmatpush1.msra.mxu0 0.0
        %7961 = vmatprep.subr.mxu0 0.0
        %7962 = vmatpush1.msra.mxu0 0.0
        %7963 = vmatprep.subr.mxu0 0.0
        %7964 = vmatpush1.msra.mxu0 0.0
        %7965 = vmatprep.subr.mxu0 0.0
        %7966 = vmatpush1.msra.mxu0 0.0
        %7967 = vmatprep.subr.mxu0 0.0
        %7968 = vmatpush1.msra.mxu0 0.0
        %7969 = vmatprep.subr.mxu0 0.0
        %7970 = vmatpush1.msra.mxu0 0.0
        %7971 = vmatprep.subr.mxu0 0.0
        %7972 = vmatpush1.msra.mxu0 0.0
        %7973 = vmatprep.subr.mxu0 0.0
        %7974 = vmatpush1.msra.mxu0 0.0
        %7975 = vmatprep.subr.mxu0 0.0
        %7976 = vmatpush1.msra.mxu0 0.0
        %7977 = vmatprep.subr.mxu0 0.0
        %7978 = vmatpush1.msra.mxu0 0.0
        %7979 = vmatprep.subr.mxu0 0.0
        %7980 = vmatpush1.msra.mxu0 0.0
        %7981 = vmatprep.subr.mxu0 0.0
        %7982 = vmatpush1.msra.mxu0 0.0
        %7983 = vmatprep.subr.mxu0 0.0
        %7984 = vmatpush1.msra.mxu0 0.0
        %7985 = vmatprep.subr.mxu0 0.0
        %7986 = vmatpush1.msra.mxu0 0.0
        %7987 = vmatprep.subr.mxu0 0.0
        %7988 = vmatpush1.msra.mxu0 0.0
        %7989 = vmatprep.subr.mxu0 0.0
        %7990 = vmatpush1.msra.mxu0 0.0
        %7991 = vmatprep.subr.mxu0 0.0
        %7992 = vmatpush1.msra.mxu0 0.0
        %7993 = vmatprep.subr.mxu0 0.0
        %7994 = vmatpush1.msra.mxu0 0.0
        %7995 = vmatprep.subr.mxu0 0.0
        %7996 = vmatpush1.msra.mxu0 0.0
        %7997 = vmatprep.subr.mxu0 0.0
        %7998 = vmatpush1.msra.mxu0 0.0
        %7999 = vmatprep.subr.mxu0 0.0
        %8000 = vmatpush1.msra.mxu0 0.0
        %8001 = vmatprep.subr.mxu0 0.0
        %8002 = vmatpush1.msra.mxu0 0.0
        %8003 = vmatprep.subr.mxu0 0.0
        %8004 = vmatpush1.msra.mxu0 0.0
        %8005 = vmatprep.subr.mxu0 0.0
        %8006 = vmatpush1.msra.mxu0 0.0
        %8007 = vmatprep.subr.mxu0 0.0
        %8008 = vmatpush1.msra.mxu0 0.0
        %8009 = vmatprep.subr.mxu0 0.0
        %8010 = vmatpush1.msra.mxu0 0.0
        %8011 = vmatprep.subr.mxu0 0.0
        %8012 = vmatpush1.msra.mxu0 0.0
        %8013 = vmatprep.subr.mxu0 0.0
        %8014 = vmatpush1.msra.mxu0 0.0
        %8015 = vmatprep.subr.mxu0 0.0
        %8016 = vmatpush1.msra.mxu0 0.0
        %8017 = vmatprep.subr.mxu0 0.0
        %8018 = vmatpush1.msra.mxu0 0.0
        %8019 = vmatprep.subr.mxu0 0.0
        %8020 = vmatpush1.msra.mxu0 0.0
        %8021 = vmatprep.mubr.f32.mxu0 0.0
        %8022 = vmatmul.mubr.f32.gmra.mrb[0].mxu0 %v7955
        %v8023 = vpop.f32.mrb[0].mxu0
        %v8024 = vadd.f32 0.0, %v8023
        %v8025 = vpop.f32.mrb[0].mxu0
        %8026 = vdwg.mxu0
        %v8028 = vsel %vm3330, %v3675, 0
        %8030 = vmatprep.subr.mxu0 0.0
        %8031 = vmatpush1.msra.mxu0 %v891
        %8032 = vmatprep.subr.mxu0 0.0
        %8033 = vmatpush1.msra.mxu0 0.0
        %8034 = vmatprep.subr.mxu0 0.0
        %8035 = vmatpush1.msra.mxu0 0.0
        %8036 = vmatprep.subr.mxu0 0.0
        %8037 = vmatpush1.msra.mxu0 0.0
        %8038 = vmatprep.subr.mxu0 0.0
        %8039 = vmatpush1.msra.mxu0 0.0
        %8040 = vmatprep.subr.mxu0 0.0
        %8041 = vmatpush1.msra.mxu0 0.0
        %8042 = vmatprep.subr.mxu0 0.0
        %8043 = vmatpush1.msra.mxu0 0.0
        %8044 = vmatprep.subr.mxu0 0.0
        %8045 = vmatpush1.msra.mxu0 0.0
        %8046 = vmatprep.subr.mxu0 0.0
        %8047 = vmatpush1.msra.mxu0 0.0
        %8048 = vmatprep.subr.mxu0 0.0
        %8049 = vmatpush1.msra.mxu0 0.0
        %8050 = vmatprep.subr.mxu0 0.0
        %8051 = vmatpush1.msra.mxu0 0.0
        %8052 = vmatprep.subr.mxu0 0.0
        %8053 = vmatpush1.msra.mxu0 0.0
        %8054 = vmatprep.subr.mxu0 0.0
        %8055 = vmatpush1.msra.mxu0 0.0
        %8056 = vmatprep.subr.mxu0 0.0
        %8057 = vmatpush1.msra.mxu0 0.0
        %8058 = vmatprep.subr.mxu0 0.0
        %8059 = vmatpush1.msra.mxu0 0.0
        %8060 = vmatprep.subr.mxu0 0.0
        %8061 = vmatpush1.msra.mxu0 0.0
        %8062 = vmatprep.subr.mxu0 0.0
        %8063 = vmatpush1.msra.mxu0 0.0
        %8064 = vmatprep.subr.mxu0 0.0
        %8065 = vmatpush1.msra.mxu0 0.0
        %8066 = vmatprep.subr.mxu0 0.0
        %8067 = vmatpush1.msra.mxu0 0.0
        %8068 = vmatprep.subr.mxu0 0.0
        %8069 = vmatpush1.msra.mxu0 0.0
        %8070 = vmatprep.subr.mxu0 0.0
        %8071 = vmatpush1.msra.mxu0 0.0
        %8072 = vmatprep.subr.mxu0 0.0
        %8073 = vmatpush1.msra.mxu0 0.0
        %8074 = vmatprep.subr.mxu0 0.0
        %8075 = vmatpush1.msra.mxu0 0.0
        %8076 = vmatprep.subr.mxu0 0.0
        %8077 = vmatpush1.msra.mxu0 0.0
        %8078 = vmatprep.subr.mxu0 0.0
        %8079 = vmatpush1.msra.mxu0 0.0
        %8080 = vmatprep.subr.mxu0 0.0
        %8081 = vmatpush1.msra.mxu0 0.0
        %8082 = vmatprep.subr.mxu0 0.0
        %8083 = vmatpush1.msra.mxu0 0.0
        %8084 = vmatprep.subr.mxu0 0.0
        %8085 = vmatpush1.msra.mxu0 0.0
        %8086 = vmatprep.subr.mxu0 0.0
        %8087 = vmatpush1.msra.mxu0 0.0
        %8088 = vmatprep.subr.mxu0 0.0
        %8089 = vmatpush1.msra.mxu0 0.0
        %8090 = vmatprep.subr.mxu0 0.0
        %8091 = vmatpush1.msra.mxu0 0.0
        %8092 = vmatprep.subr.mxu0 0.0
        %8093 = vmatpush1.msra.mxu0 0.0
        %8094 = vmatprep.mubr.f32.mxu0 0.0
        %8095 = vmatmul.mubr.f32.gmra.mrb[0].mxu0 %v8028
        %v8096 = vpop.f32.mrb[0].mxu0
        %v8097 = vadd.f32 0.0, %v8096
        %v8098 = vpop.f32.mrb[0].mxu0
        %8099 = vdwg.mxu0
        %v8101 = vsel %vm3330, %v3676, 0
        %8103 = vmatprep.subr.mxu0 0.0
        %8104 = vmatpush1.msra.mxu0 %v895
        %8105 = vmatprep.subr.mxu0 0.0
        %8106 = vmatpush1.msra.mxu0 0.0
        %8107 = vmatprep.subr.mxu0 0.0
        %8108 = vmatpush1.msra.mxu0 0.0
        %8109 = vmatprep.subr.mxu0 0.0
        %8110 = vmatpush1.msra.mxu0 0.0
        %8111 = vmatprep.subr.mxu0 0.0
        %8112 = vmatpush1.msra.mxu0 0.0
        %8113 = vmatprep.subr.mxu0 0.0
        %8114 = vmatpush1.msra.mxu0 0.0
        %8115 = vmatprep.subr.mxu0 0.0
        %8116 = vmatpush1.msra.mxu0 0.0
        %8117 = vmatprep.subr.mxu0 0.0
        %8118 = vmatpush1.msra.mxu0 0.0
        %8119 = vmatprep.subr.mxu0 0.0
        %8120 = vmatpush1.msra.mxu0 0.0
        %8121 = vmatprep.subr.mxu0 0.0
        %8122 = vmatpush1.msra.mxu0 0.0
        %8123 = vmatprep.subr.mxu0 0.0
        %8124 = vmatpush1.msra.mxu0 0.0
        %8125 = vmatprep.subr.mxu0 0.0
        %8126 = vmatpush1.msra.mxu0 0.0
        %8127 = vmatprep.subr.mxu0 0.0
        %8128 = vmatpush1.msra.mxu0 0.0
        %8129 = vmatprep.subr.mxu0 0.0
        %8130 = vmatpush1.msra.mxu0 0.0
        %8131 = vmatprep.subr.mxu0 0.0
        %8132 = vmatpush1.msra.mxu0 0.0
        %8133 = vmatprep.subr.mxu0 0.0
        %8134 = vmatpush1.msra.mxu0 0.0
        %8135 = vmatprep.subr.mxu0 0.0
        %8136 = vmatpush1.msra.mxu0 0.0
        %8137 = vmatprep.subr.mxu0 0.0
        %8138 = vmatpush1.msra.mxu0 0.0
        %8139 = vmatprep.subr.mxu0 0.0
        %8140 = vmatpush1.msra.mxu0 0.0
        %8141 = vmatprep.subr.mxu0 0.0
        %8142 = vmatpush1.msra.mxu0 0.0
        %8143 = vmatprep.subr.mxu0 0.0
        %8144 = vmatpush1.msra.mxu0 0.0
        %8145 = vmatprep.subr.mxu0 0.0
        %8146 = vmatpush1.msra.mxu0 0.0
        %8147 = vmatprep.subr.mxu0 0.0
        %8148 = vmatpush1.msra.mxu0 0.0
        %8149 = vmatprep.subr.mxu0 0.0
        %8150 = vmatpush1.msra.mxu0 0.0
        %8151 = vmatprep.subr.mxu0 0.0
        %8152 = vmatpush1.msra.mxu0 0.0
        %8153 = vmatprep.subr.mxu0 0.0
        %8154 = vmatpush1.msra.mxu0 0.0
        %8155 = vmatprep.subr.mxu0 0.0
        %8156 = vmatpush1.msra.mxu0 0.0
        %8157 = vmatprep.subr.mxu0 0.0
        %8158 = vmatpush1.msra.mxu0 0.0
        %8159 = vmatprep.subr.mxu0 0.0
        %8160 = vmatpush1.msra.mxu0 0.0
        %8161 = vmatprep.subr.mxu0 0.0
        %8162 = vmatpush1.msra.mxu0 0.0
        %8163 = vmatprep.subr.mxu0 0.0
        %8164 = vmatpush1.msra.mxu0 0.0
        %8165 = vmatprep.subr.mxu0 0.0
        %8166 = vmatpush1.msra.mxu0 0.0
        %8167 = vmatprep.mubr.f32.mxu0 0.0
        %8168 = vmatmul.mubr.f32.gmra.mrb[0].mxu0 %v8101
        %v8169 = vpop.f32.mrb[0].mxu0
        %v8170 = vadd.f32 0.0, %v8169
        %v8171 = vpop.f32.mrb[0].mxu0
        %8172 = vdwg.mxu0
        %v8174 = vsel %vm3330, %v3677, 0
        %8176 = vmatprep.subr.mxu0 0.0
        %8177 = vmatpush1.msra.mxu0 %v901
        %8178 = vmatprep.subr.mxu0 0.0
        %8179 = vmatpush1.msra.mxu0 0.0
        %8180 = vmatprep.subr.mxu0 0.0
        %8181 = vmatpush1.msra.mxu0 0.0
        %8182 = vmatprep.subr.mxu0 0.0
        %8183 = vmatpush1.msra.mxu0 0.0
        %8184 = vmatprep.subr.mxu0 0.0
        %8185 = vmatpush1.msra.mxu0 0.0
        %8186 = vmatprep.subr.mxu0 0.0
        %8187 = vmatpush1.msra.mxu0 0.0
        %8188 = vmatprep.subr.mxu0 0.0
        %8189 = vmatpush1.msra.mxu0 0.0
        %8190 = vmatprep.subr.mxu0 0.0
        %8191 = vmatpush1.msra.mxu0 0.0
        %8192 = vmatprep.subr.mxu0 0.0
        %8193 = vmatpush1.msra.mxu0 0.0
        %8194 = vmatprep.subr.mxu0 0.0
        %8195 = vmatpush1.msra.mxu0 0.0
        %8196 = vmatprep.subr.mxu0 0.0
        %8197 = vmatpush1.msra.mxu0 0.0
        %8198 = vmatprep.subr.mxu0 0.0
        %8199 = vmatpush1.msra.mxu0 0.0
        %8200 = vmatprep.subr.mxu0 0.0
        %8201 = vmatpush1.msra.mxu0 0.0
        %8202 = vmatprep.subr.mxu0 0.0
        %8203 = vmatpush1.msra.mxu0 0.0
        %8204 = vmatprep.subr.mxu0 0.0
        %8205 = vmatpush1.msra.mxu0 0.0
        %8206 = vmatprep.subr.mxu0 0.0
        %8207 = vmatpush1.msra.mxu0 0.0
        %8208 = vmatprep.subr.mxu0 0.0
        %8209 = vmatpush1.msra.mxu0 0.0
        %8210 = vmatprep.subr.mxu0 0.0
        %8211 = vmatpush1.msra.mxu0 0.0
        %8212 = vmatprep.subr.mxu0 0.0
        %8213 = vmatpush1.msra.mxu0 0.0
        %8214 = vmatprep.subr.mxu0 0.0
        %8215 = vmatpush1.msra.mxu0 0.0
        %8216 = vmatprep.subr.mxu0 0.0
        %8217 = vmatpush1.msra.mxu0 0.0
        %8218 = vmatprep.subr.mxu0 0.0
        %8219 = vmatpush1.msra.mxu0 0.0
        %8220 = vmatprep.subr.mxu0 0.0
        %8221 = vmatpush1.msra.mxu0 0.0
        %8222 = vmatprep.subr.mxu0 0.0
        %8223 = vmatpush1.msra.mxu0 0.0
        %8224 = vmatprep.subr.mxu0 0.0
        %8225 = vmatpush1.msra.mxu0 0.0
        %8226 = vmatprep.subr.mxu0 0.0
        %8227 = vmatpush1.msra.mxu0 0.0
        %8228 = vmatprep.subr.mxu0 0.0
        %8229 = vmatpush1.msra.mxu0 0.0
        %8230 = vmatprep.subr.mxu0 0.0
        %8231 = vmatpush1.msra.mxu0 0.0
        %8232 = vmatprep.subr.mxu0 0.0
        %8233 = vmatpush1.msra.mxu0 0.0
        %8234 = vmatprep.subr.mxu0 0.0
        %8235 = vmatpush1.msra.mxu0 0.0
        %8236 = vmatprep.subr.mxu0 0.0
        %8237 = vmatpush1.msra.mxu0 0.0
        %8238 = vmatprep.subr.mxu0 0.0
        %8239 = vmatpush1.msra.mxu0 0.0
        %8240 = vmatprep.mubr.f32.mxu0 0.0
        %8241 = vmatmul.mubr.f32.gmra.mrb[0].mxu0 %v8174
        %v8242 = vpop.f32.mrb[0].mxu0
        %v8243 = vadd.f32 0.0, %v8242
        %v8244 = vpop.f32.mrb[0].mxu0
        %8245 = vdwg.mxu0
        %v8247 = vsel %vm3330, %v3678, 0
        %8249 = vmatprep.subr.mxu0 0.0
        %8250 = vmatpush1.msra.mxu0 %v905
        %8251 = vmatprep.subr.mxu0 0.0
        %8252 = vmatpush1.msra.mxu0 0.0
        %8253 = vmatprep.subr.mxu0 0.0
        %8254 = vmatpush1.msra.mxu0 0.0
        %8255 = vmatprep.subr.mxu0 0.0
        %8256 = vmatpush1.msra.mxu0 0.0
        %8257 = vmatprep.subr.mxu0 0.0
        %8258 = vmatpush1.msra.mxu0 0.0
        %8259 = vmatprep.subr.mxu0 0.0
        %8260 = vmatpush1.msra.mxu0 0.0
        %8261 = vmatprep.subr.mxu0 0.0
        %8262 = vmatpush1.msra.mxu0 0.0
        %8263 = vmatprep.subr.mxu0 0.0
        %8264 = vmatpush1.msra.mxu0 0.0
        %8265 = vmatprep.subr.mxu0 0.0
        %8266 = vmatpush1.msra.mxu0 0.0
        %8267 = vmatprep.subr.mxu0 0.0
        %8268 = vmatpush1.msra.mxu0 0.0
        %8269 = vmatprep.subr.mxu0 0.0
        %8270 = vmatpush1.msra.mxu0 0.0
        %8271 = vmatprep.subr.mxu0 0.0
        %8272 = vmatpush1.msra.mxu0 0.0
        %8273 = vmatprep.subr.mxu0 0.0
        %8274 = vmatpush1.msra.mxu0 0.0
        %8275 = vmatprep.subr.mxu0 0.0
        %8276 = vmatpush1.msra.mxu0 0.0
        %8277 = vmatprep.subr.mxu0 0.0
        %8278 = vmatpush1.msra.mxu0 0.0
        %8279 = vmatprep.subr.mxu0 0.0
        %8280 = vmatpush1.msra.mxu0 0.0
        %8281 = vmatprep.subr.mxu0 0.0
        %8282 = vmatpush1.msra.mxu0 0.0
        %8283 = vmatprep.subr.mxu0 0.0
        %8284 = vmatpush1.msra.mxu0 0.0
        %8285 = vmatprep.subr.mxu0 0.0
        %8286 = vmatpush1.msra.mxu0 0.0
        %8287 = vmatprep.subr.mxu0 0.0
        %8288 = vmatpush1.msra.mxu0 0.0
        %8289 = vmatprep.subr.mxu0 0.0
        %8290 = vmatpush1.msra.mxu0 0.0
        %8291 = vmatprep.subr.mxu0 0.0
        %8292 = vmatpush1.msra.mxu0 0.0
        %8293 = vmatprep.subr.mxu0 0.0
        %8294 = vmatpush1.msra.mxu0 0.0
        %8295 = vmatprep.subr.mxu0 0.0
        %8296 = vmatpush1.msra.mxu0 0.0
        %8297 = vmatprep.subr.mxu0 0.0
        %8298 = vmatpush1.msra.mxu0 0.0
        %8299 = vmatprep.subr.mxu0 0.0
        %8300 = vmatpush1.msra.mxu0 0.0
        %8301 = vmatprep.subr.mxu0 0.0
        %8302 = vmatpush1.msra.mxu0 0.0
        %8303 = vmatprep.subr.mxu0 0.0
        %8304 = vmatpush1.msra.mxu0 0.0
        %8305 = vmatprep.subr.mxu0 0.0
        %8306 = vmatpush1.msra.mxu0 0.0
        %8307 = vmatprep.subr.mxu0 0.0
        %8308 = vmatpush1.msra.mxu0 0.0
        %8309 = vmatprep.subr.mxu0 0.0
        %8310 = vmatpush1.msra.mxu0 0.0
        %8311 = vmatprep.subr.mxu0 0.0
        %8312 = vmatpush1.msra.mxu0 0.0
        %8313 = vmatprep.mubr.f32.mxu0 0.0
        %8314 = vmatmul.mubr.f32.gmra.mrb[0].mxu0 %v8247
        %v8315 = vpop.f32.mrb[0].mxu0
        %v8316 = vadd.f32 0.0, %v8315
        %v8317 = vpop.f32.mrb[0].mxu0
        %8318 = vdwg.mxu0
        %v8320 = vsel %vm3330, %v3679, 0
        %8322 = vmatprep.subr.mxu0 0.0
        %8323 = vmatpush1.msra.mxu0 %v911
        %8324 = vmatprep.subr.mxu0 0.0
        %8325 = vmatpush1.msra.mxu0 0.0
        %8326 = vmatprep.subr.mxu0 0.0
        %8327 = vmatpush1.msra.mxu0 0.0
        %8328 = vmatprep.subr.mxu0 0.0
        %8329 = vmatpush1.msra.mxu0 0.0
        %8330 = vmatprep.subr.mxu0 0.0
        %8331 = vmatpush1.msra.mxu0 0.0
        %8332 = vmatprep.subr.mxu0 0.0
        %8333 = vmatpush1.msra.mxu0 0.0
        %8334 = vmatprep.subr.mxu0 0.0
        %8335 = vmatpush1.msra.mxu0 0.0
        %8336 = vmatprep.subr.mxu0 0.0
        %8337 = vmatpush1.msra.mxu0 0.0
        %8338 = vmatprep.subr.mxu0 0.0
        %8339 = vmatpush1.msra.mxu0 0.0
        %8340 = vmatprep.subr.mxu0 0.0
        %8341 = vmatpush1.msra.mxu0 0.0
        %8342 = vmatprep.subr.mxu0 0.0
        %8343 = vmatpush1.msra.mxu0 0.0
        %8344 = vmatprep.subr.mxu0 0.0
        %8345 = vmatpush1.msra.mxu0 0.0
        %8346 = vmatprep.subr.mxu0 0.0
        %8347 = vmatpush1.msra.mxu0 0.0
        %8348 = vmatprep.subr.mxu0 0.0
        %8349 = vmatpush1.msra.mxu0 0.0
        %8350 = vmatprep.subr.mxu0 0.0
        %8351 = vmatpush1.msra.mxu0 0.0
        %8352 = vmatprep.subr.mxu0 0.0
        %8353 = vmatpush1.msra.mxu0 0.0
        %8354 = vmatprep.subr.mxu0 0.0
        %8355 = vmatpush1.msra.mxu0 0.0
        %8356 = vmatprep.subr.mxu0 0.0
        %8357 = vmatpush1.msra.mxu0 0.0
        %8358 = vmatprep.subr.mxu0 0.0
        %8359 = vmatpush1.msra.mxu0 0.0
        %8360 = vmatprep.subr.mxu0 0.0
        %8361 = vmatpush1.msra.mxu0 0.0
        %8362 = vmatprep.subr.mxu0 0.0
        %8363 = vmatpush1.msra.mxu0 0.0
        %8364 = vmatprep.subr.mxu0 0.0
        %8365 = vmatpush1.msra.mxu0 0.0
        %8366 = vmatprep.subr.mxu0 0.0
        %8367 = vmatpush1.msra.mxu0 0.0
        %8368 = vmatprep.subr.mxu0 0.0
        %8369 = vmatpush1.msra.mxu0 0.0
        %8370 = vmatprep.subr.mxu0 0.0
        %8371 = vmatpush1.msra.mxu0 0.0
        %8372 = vmatprep.subr.mxu0 0.0
        %8373 = vmatpush1.msra.mxu0 0.0
        %8374 = vmatprep.subr.mxu0 0.0
        %8375 = vmatpush1.msra.mxu0 0.0
        %8376 = vmatprep.subr.mxu0 0.0
        %8377 = vmatpush1.msra.mxu0 0.0
        %8378 = vmatprep.subr.mxu0 0.0
        %8379 = vmatpush1.msra.mxu0 0.0
        %8380 = vmatprep.subr.mxu0 0.0
        %8381 = vmatpush1.msra.mxu0 0.0
        %8382 = vmatprep.subr.mxu0 0.0
        %8383 = vmatpush1.msra.mxu0 0.0
        %8384 = vmatprep.subr.mxu0 0.0
        %8385 = vmatpush1.msra.mxu0 0.0
        %8386 = vmatprep.mubr.f32.mxu0 0.0
        %8387 = vmatmul.mubr.f32.gmra.mrb[0].mxu0 %v8320
        %v8388 = vpop.f32.mrb[0].mxu0
        %v8389 = vadd.f32 0.0, %v8388
        %v8390 = vpop.f32.mrb[0].mxu0
        %8391 = vdwg.mxu0
        %v8393 = vsel %vm3330, %v3680, 0
        %8395 = vmatprep.subr.mxu0 0.0
        %8396 = vmatpush1.msra.mxu0 %v915
        %8397 = vmatprep.subr.mxu0 0.0
        %8398 = vmatpush1.msra.mxu0 0.0
        %8399 = vmatprep.subr.mxu0 0.0
        %8400 = vmatpush1.msra.mxu0 0.0
        %8401 = vmatprep.subr.mxu0 0.0
        %8402 = vmatpush1.msra.mxu0 0.0
        %8403 = vmatprep.subr.mxu0 0.0
        %8404 = vmatpush1.msra.mxu0 0.0
        %8405 = vmatprep.subr.mxu0 0.0
        %8406 = vmatpush1.msra.mxu0 0.0
        %8407 = vmatprep.subr.mxu0 0.0
        %8408 = vmatpush1.msra.mxu0 0.0
        %8409 = vmatprep.subr.mxu0 0.0
        %8410 = vmatpush1.msra.mxu0 0.0
        %8411 = vmatprep.subr.mxu0 0.0
        %8412 = vmatpush1.msra.mxu0 0.0
        %8413 = vmatprep.subr.mxu0 0.0
        %8414 = vmatpush1.msra.mxu0 0.0
        %8415 = vmatprep.subr.mxu0 0.0
        %8416 = vmatpush1.msra.mxu0 0.0
        %8417 = vmatprep.subr.mxu0 0.0
        %8418 = vmatpush1.msra.mxu0 0.0
        %8419 = vmatprep.subr.mxu0 0.0
        %8420 = vmatpush1.msra.mxu0 0.0
        %8421 = vmatprep.subr.mxu0 0.0
        %8422 = vmatpush1.msra.mxu0 0.0
        %8423 = vmatprep.subr.mxu0 0.0
        %8424 = vmatpush1.msra.mxu0 0.0
        %8425 = vmatprep.subr.mxu0 0.0
        %8426 = vmatpush1.msra.mxu0 0.0
        %8427 = vmatprep.subr.mxu0 0.0
        %8428 = vmatpush1.msra.mxu0 0.0
        %8429 = vmatprep.subr.mxu0 0.0
        %8430 = vmatpush1.msra.mxu0 0.0
        %8431 = vmatprep.subr.mxu0 0.0
        %8432 = vmatpush1.msra.mxu0 0.0
        %8433 = vmatprep.subr.mxu0 0.0
        %8434 = vmatpush1.msra.mxu0 0.0
        %8435 = vmatprep.subr.mxu0 0.0
        %8436 = vmatpush1.msra.mxu0 0.0
        %8437 = vmatprep.subr.mxu0 0.0
        %8438 = vmatpush1.msra.mxu0 0.0
        %8439 = vmatprep.subr.mxu0 0.0
        %8440 = vmatpush1.msra.mxu0 0.0
        %8441 = vmatprep.subr.mxu0 0.0
        %8442 = vmatpush1.msra.mxu0 0.0
        %8443 = vmatprep.subr.mxu0 0.0
        %8444 = vmatpush1.msra.mxu0 0.0
        %8445 = vmatprep.subr.mxu0 0.0
        %8446 = vmatpush1.msra.mxu0 0.0
        %8447 = vmatprep.subr.mxu0 0.0
        %8448 = vmatpush1.msra.mxu0 0.0
        %8449 = vmatprep.subr.mxu0 0.0
        %8450 = vmatpush1.msra.mxu0 0.0
        %8451 = vmatprep.subr.mxu0 0.0
        %8452 = vmatpush1.msra.mxu0 0.0
        %8453 = vmatprep.subr.mxu0 0.0
        %8454 = vmatpush1.msra.mxu0 0.0
        %8455 = vmatprep.subr.mxu0 0.0
        %8456 = vmatpush1.msra.mxu0 0.0
        %8457 = vmatprep.subr.mxu0 0.0
        %8458 = vmatpush1.msra.mxu0 0.0
        %8459 = vmatprep.mubr.f32.mxu0 0.0
        %8460 = vmatmul.mubr.f32.gmra.mrb[0].mxu0 %v8393
        %v8461 = vpop.f32.mrb[0].mxu0
        %v8462 = vadd.f32 0.0, %v8461
        %v8463 = vpop.f32.mrb[0].mxu0
        %8464 = vdwg.mxu0
        %v8466 = vsel %vm3330, %v3681, 0
        %8468 = vmatprep.subr.mxu0 0.0
        %8469 = vmatpush1.msra.mxu0 %v921
        %8470 = vmatprep.subr.mxu0 0.0
        %8471 = vmatpush1.msra.mxu0 0.0
        %8472 = vmatprep.subr.mxu0 0.0
        %8473 = vmatpush1.msra.mxu0 0.0
        %8474 = vmatprep.subr.mxu0 0.0
        %8475 = vmatpush1.msra.mxu0 0.0
        %8476 = vmatprep.subr.mxu0 0.0
        %8477 = vmatpush1.msra.mxu0 0.0
        %8478 = vmatprep.subr.mxu0 0.0
        %8479 = vmatpush1.msra.mxu0 0.0
        %8480 = vmatprep.subr.mxu0 0.0
        %8481 = vmatpush1.msra.mxu0 0.0
        %8482 = vmatprep.subr.mxu0 0.0
        %8483 = vmatpush1.msra.mxu0 0.0
        %8484 = vmatprep.subr.mxu0 0.0
        %8485 = vmatpush1.msra.mxu0 0.0
        %8486 = vmatprep.subr.mxu0 0.0
        %8487 = vmatpush1.msra.mxu0 0.0
        %8488 = vmatprep.subr.mxu0 0.0
        %8489 = vmatpush1.msra.mxu0 0.0
        %8490 = vmatprep.subr.mxu0 0.0
        %8491 = vmatpush1.msra.mxu0 0.0
        %8492 = vmatprep.subr.mxu0 0.0
        %8493 = vmatpush1.msra.mxu0 0.0
        %8494 = vmatprep.subr.mxu0 0.0
        %8495 = vmatpush1.msra.mxu0 0.0
        %8496 = vmatprep.subr.mxu0 0.0
        %8497 = vmatpush1.msra.mxu0 0.0
        %8498 = vmatprep.subr.mxu0 0.0
        %8499 = vmatpush1.msra.mxu0 0.0
        %8500 = vmatprep.subr.mxu0 0.0
        %8501 = vmatpush1.msra.mxu0 0.0
        %8502 = vmatprep.subr.mxu0 0.0
        %8503 = vmatpush1.msra.mxu0 0.0
        %8504 = vmatprep.subr.mxu0 0.0
        %8505 = vmatpush1.msra.mxu0 0.0
        %8506 = vmatprep.subr.mxu0 0.0
        %8507 = vmatpush1.msra.mxu0 0.0
        %8508 = vmatprep.subr.mxu0 0.0
        %8509 = vmatpush1.msra.mxu0 0.0
        %8510 = vmatprep.subr.mxu0 0.0
        %8511 = vmatpush1.msra.mxu0 0.0
        %8512 = vmatprep.subr.mxu0 0.0
        %8513 = vmatpush1.msra.mxu0 0.0
        %8514 = vmatprep.subr.mxu0 0.0
        %8515 = vmatpush1.msra.mxu0 0.0
        %8516 = vmatprep.subr.mxu0 0.0
        %8517 = vmatpush1.msra.mxu0 0.0
        %8518 = vmatprep.subr.mxu0 0.0
        %8519 = vmatpush1.msra.mxu0 0.0
        %8520 = vmatprep.subr.mxu0 0.0
        %8521 = vmatpush1.msra.mxu0 0.0
        %8522 = vmatprep.subr.mxu0 0.0
        %8523 = vmatpush1.msra.mxu0 0.0
        %8524 = vmatprep.subr.mxu0 0.0
        %8525 = vmatpush1.msra.mxu0 0.0
        %8526 = vmatprep.subr.mxu0 0.0
        %8527 = vmatpush1.msra.mxu0 0.0
        %8528 = vmatprep.subr.mxu0 0.0
        %8529 = vmatpush1.msra.mxu0 0.0
        %8530 = vmatprep.subr.mxu0 0.0
        %8531 = vmatpush1.msra.mxu0 0.0
        %8532 = vmatprep.mubr.f32.mxu0 0.0
        %8533 = vmatmul.mubr.f32.gmra.mrb[0].mxu0 %v8466
        %v8534 = vpop.f32.mrb[0].mxu0
        %v8535 = vadd.f32 0.0, %v8534
        %v8536 = vpop.f32.mrb[0].mxu0
        %8537 = vdwg.mxu0
        %v8539 = vsel %vm3330, %v3682, 0
        %8541 = vmatprep.subr.mxu0 0.0
        %8542 = vmatpush1.msra.mxu0 %v925
        %8543 = vmatprep.subr.mxu0 0.0
        %8544 = vmatpush1.msra.mxu0 0.0
        %8545 = vmatprep.subr.mxu0 0.0
        %8546 = vmatpush1.msra.mxu0 0.0
        %8547 = vmatprep.subr.mxu0 0.0
        %8548 = vmatpush1.msra.mxu0 0.0
        %8549 = vmatprep.subr.mxu0 0.0
        %8550 = vmatpush1.msra.mxu0 0.0
        %8551 = vmatprep.subr.mxu0 0.0
        %8552 = vmatpush1.msra.mxu0 0.0
        %8553 = vmatprep.subr.mxu0 0.0
        %8554 = vmatpush1.msra.mxu0 0.0
        %8555 = vmatprep.subr.mxu0 0.0
        %8556 = vmatpush1.msra.mxu0 0.0
        %8557 = vmatprep.subr.mxu0 0.0
        %8558 = vmatpush1.msra.mxu0 0.0
        %8559 = vmatprep.subr.mxu0 0.0
        %8560 = vmatpush1.msra.mxu0 0.0
        %8561 = vmatprep.subr.mxu0 0.0
        %8562 = vmatpush1.msra.mxu0 0.0
        %8563 = vmatprep.subr.mxu0 0.0
        %8564 = vmatpush1.msra.mxu0 0.0
        %8565 = vmatprep.subr.mxu0 0.0
        %8566 = vmatpush1.msra.mxu0 0.0
        %8567 = vmatprep.subr.mxu0 0.0
        %8568 = vmatpush1.msra.mxu0 0.0
        %8569 = vmatprep.subr.mxu0 0.0
        %8570 = vmatpush1.msra.mxu0 0.0
        %8571 = vmatprep.subr.mxu0 0.0
        %8572 = vmatpush1.msra.mxu0 0.0
        %8573 = vmatprep.subr.mxu0 0.0
        %8574 = vmatpush1.msra.mxu0 0.0
        %8575 = vmatprep.subr.mxu0 0.0
        %8576 = vmatpush1.msra.mxu0 0.0
        %8577 = vmatprep.subr.mxu0 0.0
        %8578 = vmatpush1.msra.mxu0 0.0
        %8579 = vmatprep.subr.mxu0 0.0
        %8580 = vmatpush1.msra.mxu0 0.0
        %8581 = vmatprep.subr.mxu0 0.0
        %8582 = vmatpush1.msra.mxu0 0.0
        %8583 = vmatprep.subr.mxu0 0.0
        %8584 = vmatpush1.msra.mxu0 0.0
        %8585 = vmatprep.subr.mxu0 0.0
        %8586 = vmatpush1.msra.mxu0 0.0
        %8587 = vmatprep.subr.mxu0 0.0
        %8588 = vmatpush1.msra.mxu0 0.0
        %8589 = vmatprep.subr.mxu0 0.0
        %8590 = vmatpush1.msra.mxu0 0.0
        %8591 = vmatprep.subr.mxu0 0.0
        %8592 = vmatpush1.msra.mxu0 0.0
        %8593 = vmatprep.subr.mxu0 0.0
        %8594 = vmatpush1.msra.mxu0 0.0
        %8595 = vmatprep.subr.mxu0 0.0
        %8596 = vmatpush1.msra.mxu0 0.0
        %8597 = vmatprep.subr.mxu0 0.0
        %8598 = vmatpush1.msra.mxu0 0.0
        %8599 = vmatprep.subr.mxu0 0.0
        %8600 = vmatpush1.msra.mxu0 0.0
        %8601 = vmatprep.subr.mxu0 0.0
        %8602 = vmatpush1.msra.mxu0 0.0
        %8603 = vmatprep.subr.mxu0 0.0
        %8604 = vmatpush1.msra.mxu0 0.0
        %8605 = vmatprep.mubr.f32.mxu0 0.0
        %8606 = vmatmul.mubr.f32.gmra.mrb[0].mxu0 %v8539
        %v8607 = vpop.f32.mrb[0].mxu0
        %v8608 = vadd.f32 0.0, %v8607
        %v8609 = vpop.f32.mrb[0].mxu0
        %8610 = vdwg.mxu0
        %v8611 = vld [vmem:[%s3] sm:$0xff]
        %v8612 = vld [vmem:[%s3 + $0x8] sm:$0xff]
        %v8613 = vld [vmem:[%s3 + $0x10] sm:$0xff]
        %v8614 = vld [vmem:[%s3 + $0x18] sm:$0xff]
        %v8615 = vld [vmem:[%s3 + $0x20] sm:$0xff]
        %v8616 = vld [vmem:[%s3 + $0x28] sm:$0xff]
        %v8617 = vld [vmem:[%s3 + $0x30] sm:$0xff]
        %v8618 = vld [vmem:[%s3 + $0x38] sm:$0xff]
        %v8619 = vld [vmem:[%s3 + $0x40] sm:$0xff]
        %v8620 = vld [vmem:[%s3 + $0x48] sm:$0xff]
        %v8621 = vld [vmem:[%s3 + $0x50] sm:$0xff]
        %v8622 = vld [vmem:[%s3 + $0x58] sm:$0xff]
        %v8623 = vld [vmem:[%s3 + $0x60] sm:$0xff]
        %v8624 = vld [vmem:[%s3 + $0x68] sm:$0xff]
        %v8625 = vld [vmem:[%s3 + $0x70] sm:$0xff]
        %v8626 = vld [vmem:[%s3 + $0x78] sm:$0xff]
        %v8627 = vld [vmem:[%s4] sm:$0x1]
        %v8629 = vlaneseq
        %v8630 = vshrl.u32 %v8629, 7
        %v8631 = vsub.s32 0, %v8630
        %v8632 = vrot.slane %v8627, %v8631
        %8634 = vmatprep.subr.mxu0 0.0
        %8635 = vmatpush1.msra.mxu0 %v8611
        %8636 = vmatprep.subr.mxu0 0.0
        %8637 = vmatpush1.msra.mxu0 %v8612
        %8638 = vmatprep.subr.mxu0 0.0
        %8639 = vmatpush1.msra.mxu0 %v8613
        %8640 = vmatprep.subr.mxu0 0.0
        %8641 = vmatpush1.msra.mxu0 %v8614
        %8642 = vmatprep.subr.mxu0 0.0
        %8643 = vmatpush1.msra.mxu0 %v8615
        %8644 = vmatprep.subr.mxu0 0.0
        %8645 = vmatpush1.msra.mxu0 %v8616
        %8646 = vmatprep.subr.mxu0 0.0
        %8647 = vmatpush1.msra.mxu0 %v8617
        %8648 = vmatprep.subr.mxu0 0.0
        %8649 = vmatpush1.msra.mxu0 %v8618
        %8650 = vmatprep.subr.mxu0 0.0
        %8651 = vmatpush1.msra.mxu0 %v8619
        %8652 = vmatprep.subr.mxu0 0.0
        %8653 = vmatpush1.msra.mxu0 %v8620
        %8654 = vmatprep.subr.mxu0 0.0
        %8655 = vmatpush1.msra.mxu0 %v8621
        %8656 = vmatprep.subr.mxu0 0.0
        %8657 = vmatpush1.msra.mxu0 %v8622
        %8658 = vmatprep.subr.mxu0 0.0
        %8659 = vmatpush1.msra.mxu0 %v8623
        %8660 = vmatprep.subr.mxu0 0.0
        %8661 = vmatpush1.msra.mxu0 %v8624
        %8662 = vmatprep.subr.mxu0 0.0
        %8663 = vmatpush1.msra.mxu0 %v8625
        %8664 = vmatprep.subr.mxu0 0.0
        %8665 = vmatpush1.msra.mxu0 %v8626
        %8666 = vmatprep.subr.mxu0 0.0
        %8667 = vmatpush1.msra.mxu0 0.0
        %8668 = vmatprep.subr.mxu0 0.0
        %8669 = vmatpush1.msra.mxu0 0.0
        %8670 = vmatprep.subr.mxu0 0.0
        %8671 = vmatpush1.msra.mxu0 0.0
        %8672 = vmatprep.subr.mxu0 0.0
        %8673 = vmatpush1.msra.mxu0 0.0
        %8674 = vmatprep.subr.mxu0 0.0
        %8675 = vmatpush1.msra.mxu0 0.0
        %8676 = vmatprep.subr.mxu0 0.0
        %8677 = vmatpush1.msra.mxu0 0.0
        %8678 = vmatprep.subr.mxu0 0.0
        %8679 = vmatpush1.msra.mxu0 0.0
        %8680 = vmatprep.subr.mxu0 0.0
        %8681 = vmatpush1.msra.mxu0 0.0
        %8682 = vmatprep.subr.mxu0 0.0
        %8683 = vmatpush1.msra.mxu0 0.0
        %8684 = vmatprep.subr.mxu0 0.0
        %8685 = vmatpush1.msra.mxu0 0.0
        %8686 = vmatprep.subr.mxu0 0.0
        %8687 = vmatpush1.msra.mxu0 0.0
        %8688 = vmatprep.subr.mxu0 0.0
        %8689 = vmatpush1.msra.mxu0 0.0
        %8690 = vmatprep.subr.mxu0 0.0
        %8691 = vmatpush1.msra.mxu0 0.0
        %8692 = vmatprep.subr.mxu0 0.0
        %8693 = vmatpush1.msra.mxu0 0.0
        %8694 = vmatprep.subr.mxu0 0.0
        %8695 = vmatpush1.msra.mxu0 0.0
        %8696 = vmatprep.subr.mxu0 0.0
        %8697 = vmatpush1.msra.mxu0 0.0
        %8698 = vmatprep.mubr.f32.mxu0 0.0
        %8699 = vmatmul.mubr.f32.gmra.mrb[0].mxu0 %v6345
        %v8700 = vpop.f32.mrb[0].mxu0
        %v8701 = vadd.f32 %v8632, %v8700
        %v8702 = vpop.f32.mrb[0].mxu0
        %8703 = vmatprep.mubr.f32.mxu0 0.0
        %8704 = vmatmul.mubr.f32.gmra.mrb[0].mxu0 %v6418
        %v8705 = vpop.f32.mrb[0].mxu0
        %v8706 = vadd.f32 %v8632, %v8705
        %v8707 = vpop.f32.mrb[0].mxu0
        %8708 = vmatprep.mubr.f32.mxu0 0.0
        %8709 = vmatmul.mubr.f32.gmra.mrb[0].mxu0 %v6491
        %v8710 = vpop.f32.mrb[0].mxu0
        %v8711 = vadd.f32 %v8632, %v8710
        %v8712 = vpop.f32.mrb[0].mxu0
        %8713 = vmatprep.mubr.f32.mxu0 0.0
        %8714 = vmatmul.mubr.f32.gmra.mrb[0].mxu0 %v6564
        %v8715 = vpop.f32.mrb[0].mxu0
        %v8716 = vadd.f32 %v8632, %v8715
        %v8717 = vpop.f32.mrb[0].mxu0
        %8718 = vmatprep.mubr.f32.mxu0 0.0
        %8719 = vmatmul.mubr.f32.gmra.mrb[0].mxu0 %v6637
        %v8720 = vpop.f32.mrb[0].mxu0
        %v8721 = vadd.f32 %v8632, %v8720
        %v8722 = vpop.f32.mrb[0].mxu0
        %8723 = vmatprep.mubr.f32.mxu0 0.0
        %8724 = vmatmul.mubr.f32.gmra.mrb[0].mxu0 %v6710
        %v8725 = vpop.f32.mrb[0].mxu0
        %v8726 = vadd.f32 %v8632, %v8725
        %v8727 = vpop.f32.mrb[0].mxu0
        %8728 = vmatprep.mubr.f32.mxu0 0.0
        %8729 = vmatmul.mubr.f32.gmra.mrb[0].mxu0 %v6783
        %v8730 = vpop.f32.mrb[0].mxu0
        %v8731 = vadd.f32 %v8632, %v8730
        %v8732 = vpop.f32.mrb[0].mxu0
        %8733 = vmatprep.mubr.f32.mxu0 0.0
        %8734 = vmatmul.mubr.f32.gmra.mrb[0].mxu0 %v6856
        %v8735 = vpop.f32.mrb[0].mxu0
        %v8736 = vadd.f32 %v8632, %v8735
        %v8737 = vpop.f32.mrb[0].mxu0
        %8738 = vmatprep.mubr.f32.mxu0 0.0
        %8739 = vmatmul.mubr.f32.gmra.mrb[0].mxu0 %v6929
        %v8740 = vpop.f32.mrb[0].mxu0
        %v8741 = vadd.f32 %v8632, %v8740
        %v8742 = vpop.f32.mrb[0].mxu0
        %8743 = vmatprep.mubr.f32.mxu0 0.0
        %8744 = vmatmul.mubr.f32.gmra.mrb[0].mxu0 %v7002
        %v8745 = vpop.f32.mrb[0].mxu0
        %v8746 = vadd.f32 %v8632, %v8745
        %v8747 = vpop.f32.mrb[0].mxu0
        %8748 = vmatprep.mubr.f32.mxu0 0.0
        %8749 = vmatmul.mubr.f32.gmra.mrb[0].mxu0 %v7075
        %v8750 = vpop.f32.mrb[0].mxu0
        %v8751 = vadd.f32 %v8632, %v8750
        %v8752 = vpop.f32.mrb[0].mxu0
        %8753 = vmatprep.mubr.f32.mxu0 0.0
        %8754 = vmatmul.mubr.f32.gmra.mrb[0].mxu0 %v7148
        %v8755 = vpop.f32.mrb[0].mxu0
        %v8756 = vadd.f32 %v8632, %v8755
        %v8757 = vpop.f32.mrb[0].mxu0
        %8758 = vmatprep.mubr.f32.mxu0 0.0
        %8759 = vmatmul.mubr.f32.gmra.mrb[0].mxu0 %v7221
        %v8760 = vpop.f32.mrb[0].mxu0
        %v8761 = vadd.f32 %v8632, %v8760
        %v8762 = vpop.f32.mrb[0].mxu0
        %8763 = vmatprep.mubr.f32.mxu0 0.0
        %8764 = vmatmul.mubr.f32.gmra.mrb[0].mxu0 %v7294
        %v8765 = vpop.f32.mrb[0].mxu0
        %v8766 = vadd.f32 %v8632, %v8765
        %v8767 = vpop.f32.mrb[0].mxu0
        %8768 = vmatprep.mubr.f32.mxu0 0.0
        %8769 = vmatmul.mubr.f32.gmra.mrb[0].mxu0 %v7367
        %v8770 = vpop.f32.mrb[0].mxu0
        %v8771 = vadd.f32 %v8632, %v8770
        %v8772 = vpop.f32.mrb[0].mxu0
        %8773 = vmatprep.mubr.f32.mxu0 0.0
        %8774 = vmatmul.mubr.f32.gmra.mrb[0].mxu0 %v7440
        %v8775 = vpop.f32.mrb[0].mxu0
        %v8776 = vadd.f32 %v8632, %v8775
        %v8777 = vpop.f32.mrb[0].mxu0
        %8778 = vmatprep.mubr.f32.mxu0 0.0
        %8779 = vmatmul.mubr.f32.gmra.mrb[0].mxu0 %v7513
        %v8780 = vpop.f32.mrb[0].mxu0
        %v8781 = vadd.f32 %v8632, %v8780
        %v8782 = vpop.f32.mrb[0].mxu0
        %8783 = vmatprep.mubr.f32.mxu0 0.0
        %8784 = vmatmul.mubr.f32.gmra.mrb[0].mxu0 %v7586
        %v8785 = vpop.f32.mrb[0].mxu0
        %v8786 = vadd.f32 %v8632, %v8785
        %v8787 = vpop.f32.mrb[0].mxu0
        %8788 = vmatprep.mubr.f32.mxu0 0.0
        %8789 = vmatmul.mubr.f32.gmra.mrb[0].mxu0 %v7659
        %v8790 = vpop.f32.mrb[0].mxu0
        %v8791 = vadd.f32 %v8632, %v8790
        %v8792 = vpop.f32.mrb[0].mxu0
        %8793 = vmatprep.mubr.f32.mxu0 0.0
        %8794 = vmatmul.mubr.f32.gmra.mrb[0].mxu0 %v7732
        %v8795 = vpop.f32.mrb[0].mxu0
        %v8796 = vadd.f32 %v8632, %v8795
        %v8797 = vpop.f32.mrb[0].mxu0
        %8798 = vmatprep.mubr.f32.mxu0 0.0
        %8799 = vmatmul.mubr.f32.gmra.mrb[0].mxu0 %v7805
        %v8800 = vpop.f32.mrb[0].mxu0
        %v8801 = vadd.f32 %v8632, %v8800
        %v8802 = vpop.f32.mrb[0].mxu0
        %8803 = vmatprep.mubr.f32.mxu0 0.0
        %8804 = vmatmul.mubr.f32.gmra.mrb[0].mxu0 %v7878
        %v8805 = vpop.f32.mrb[0].mxu0
        %v8806 = vadd.f32 %v8632, %v8805
        %v8807 = vpop.f32.mrb[0].mxu0
        %8808 = vmatprep.mubr.f32.mxu0 0.0
        %8809 = vmatmul.mubr.f32.gmra.mrb[0].mxu0 %v7951
        %v8810 = vpop.f32.mrb[0].mxu0
        %v8811 = vadd.f32 %v8632, %v8810
        %v8812 = vpop.f32.mrb[0].mxu0
        %8813 = vmatprep.mubr.f32.mxu0 0.0
        %8814 = vmatmul.mubr.f32.gmra.mrb[0].mxu0 %v8024
        %v8815 = vpop.f32.mrb[0].mxu0
        %v8816 = vadd.f32 %v8632, %v8815
        %v8817 = vpop.f32.mrb[0].mxu0
        %8818 = vmatprep.mubr.f32.mxu0 0.0
        %8819 = vmatmul.mubr.f32.gmra.mrb[0].mxu0 %v8097
        %v8820 = vpop.f32.mrb[0].mxu0
        %v8821 = vadd.f32 %v8632, %v8820
        %v8822 = vpop.f32.mrb[0].mxu0
        %8823 = vmatprep.mubr.f32.mxu0 0.0
        %8824 = vmatmul.mubr.f32.gmra.mrb[0].mxu0 %v8170
        %v8825 = vpop.f32.mrb[0].mxu0
        %v8826 = vadd.f32 %v8632, %v8825
        %v8827 = vpop.f32.mrb[0].mxu0
        %8828 = vmatprep.mubr.f32.mxu0 0.0
        %8829 = vmatmul.mubr.f32.gmra.mrb[0].mxu0 %v8243
        %v8830 = vpop.f32.mrb[0].mxu0
        %v8831 = vadd.f32 %v8632, %v8830
        %v8832 = vpop.f32.mrb[0].mxu0
        %8833 = vmatprep.mubr.f32.mxu0 0.0
        %8834 = vmatmul.mubr.f32.gmra.mrb[0].mxu0 %v8316
        %v8835 = vpop.f32.mrb[0].mxu0
        %v8836 = vadd.f32 %v8632, %v8835
        %v8837 = vpop.f32.mrb[0].mxu0
        %8838 = vmatprep.mubr.f32.mxu0 0.0
        %8839 = vmatmul.mubr.f32.gmra.mrb[0].mxu0 %v8389
        %v8840 = vpop.f32.mrb[0].mxu0
        %v8841 = vadd.f32 %v8632, %v8840
        %v8842 = vpop.f32.mrb[0].mxu0
        %8843 = vmatprep.mubr.f32.mxu0 0.0
        %8844 = vmatmul.mubr.f32.gmra.mrb[0].mxu0 %v8462
        %v8845 = vpop.f32.mrb[0].mxu0
        %v8846 = vadd.f32 %v8632, %v8845
        %v8847 = vpop.f32.mrb[0].mxu0
        %8848 = vmatprep.mubr.f32.mxu0 0.0
        %8849 = vmatmul.mubr.f32.gmra.mrb[0].mxu0 %v8535
        %v8850 = vpop.f32.mrb[0].mxu0
        %v8851 = vadd.f32 %v8632, %v8850
        %v8852 = vpop.f32.mrb[0].mxu0
        %8853 = vmatprep.mubr.f32.mxu0 0.0
        %8854 = vmatmul.mubr.f32.gmra.mrb[0].mxu0 %v8608
        %v8855 = vpop.f32.mrb[0].mxu0
        %v8856 = vadd.f32 %v8632, %v8855
        %v8857 = vpop.f32.mrb[0].mxu0
        %8858 = vdwg.mxu0
        %v8859 = vsub.f32 1.0, %v6243
        %v8860 = vsub.f32 1.0, %v6244
        %v8861 = vsub.f32 1.0, %v6245
        %v8862 = vsub.f32 1.0, %v6246
        %v8863 = vsub.f32 1.0, %v6247
        %v8864 = vsub.f32 1.0, %v6248
        %v8865 = vsub.f32 1.0, %v6249
        %v8866 = vsub.f32 1.0, %v6250
        %v8867 = vsub.f32 1.0, %v6251
        %v8868 = vsub.f32 1.0, %v6252
        %v8869 = vsub.f32 1.0, %v6253
        %v8870 = vsub.f32 1.0, %v6254
        %v8871 = vsub.f32 1.0, %v6255
        %v8872 = vsub.f32 1.0, %v6256
        %v8873 = vsub.f32 1.0, %v6257
        %v8874 = vsub.f32 1.0, %v6258
        %v8875 = vsub.f32 1.0, %v6259
        %v8876 = vsub.f32 1.0, %v6260
        %v8877 = vsub.f32 1.0, %v6261
        %v8878 = vsub.f32 1.0, %v6262
        %v8879 = vsub.f32 1.0, %v6263
        %v8880 = vsub.f32 1.0, %v6264
        %v8881 = vsub.f32 1.0, %v6265
        %v8882 = vsub.f32 1.0, %v6266
        %v8883 = vsub.f32 1.0, %v6267
        %v8884 = vsub.f32 1.0, %v6268
        %v8885 = vsub.f32 1.0, %v6269
        %v8886 = vsub.f32 1.0, %v6270
        %v8887 = vsub.f32 1.0, %v6271
        %v8888 = vsub.f32 1.0, %v6272
        %v8889 = vsub.f32 1.0, %v6273
        %v8890 = vsub.f32 1.0, %v6274
        %8891 = vrot.lane.b32.xlu0 %v3651, 4
        %v8892 = vpop.permute.xlu0 %8891
        %8893 = vrot.lane.b32.xlu0 %v3652, 4
        %v8894 = vpop.permute.xlu0 %8893
        %8895 = vrot.lane.b32.xlu0 %v3653, 4
        %v8896 = vpop.permute.xlu0 %8895
        %8897 = vrot.lane.b32.xlu0 %v3654, 4
        %v8898 = vpop.permute.xlu0 %8897
        %8899 = vrot.lane.b32.xlu0 %v3655, 4
        %v8900 = vpop.permute.xlu0 %8899
        %8901 = vrot.lane.b32.xlu0 %v3656, 4
        %v8902 = vpop.permute.xlu0 %8901
        %8903 = vrot.lane.b32.xlu0 %v3657, 4
        %v8904 = vpop.permute.xlu0 %8903
        %8905 = vrot.lane.b32.xlu0 %v3658, 4
        %v8906 = vpop.permute.xlu0 %8905
        %8907 = vrot.lane.b32.xlu0 %v3659, 4
        %v8908 = vpop.permute.xlu0 %8907
        %8909 = vrot.lane.b32.xlu0 %v3660, 4
        %v8910 = vpop.permute.xlu0 %8909
        %8911 = vrot.lane.b32.xlu0 %v3661, 4
        %v8912 = vpop.permute.xlu0 %8911
        %8913 = vrot.lane.b32.xlu0 %v3662, 4
        %v8914 = vpop.permute.xlu0 %8913
        %8915 = vrot.lane.b32.xlu0 %v3663, 4
        %v8916 = vpop.permute.xlu0 %8915
        %8917 = vrot.lane.b32.xlu0 %v3664, 4
        %v8918 = vpop.permute.xlu0 %8917
        %8919 = vrot.lane.b32.xlu0 %v3665, 4
        %v8920 = vpop.permute.xlu0 %8919
        %8921 = vrot.lane.b32.xlu0 %v3666, 4
        %v8922 = vpop.permute.xlu0 %8921
        %8923 = vrot.lane.b32.xlu0 %v3667, 4
        %v8924 = vpop.permute.xlu0 %8923
        %8925 = vrot.lane.b32.xlu0 %v3668, 4
        %v8926 = vpop.permute.xlu0 %8925
        %8927 = vrot.lane.b32.xlu0 %v3669, 4
        %v8928 = vpop.permute.xlu0 %8927
        %8929 = vrot.lane.b32.xlu0 %v3670, 4
        %v8930 = vpop.permute.xlu0 %8929
        %8931 = vrot.lane.b32.xlu0 %v3671, 4
        %v8932 = vpop.permute.xlu0 %8931
        %8933 = vrot.lane.b32.xlu0 %v3672, 4
        %v8934 = vpop.permute.xlu0 %8933
        %8935 = vrot.lane.b32.xlu0 %v3673, 4
        %v8936 = vpop.permute.xlu0 %8935
        %8937 = vrot.lane.b32.xlu0 %v3674, 4
        %v8938 = vpop.permute.xlu0 %8937
        %8939 = vrot.lane.b32.xlu0 %v3675, 4
        %v8940 = vpop.permute.xlu0 %8939
        %8941 = vrot.lane.b32.xlu0 %v3676, 4
        %v8942 = vpop.permute.xlu0 %8941
        %8943 = vrot.lane.b32.xlu0 %v3677, 4
        %v8944 = vpop.permute.xlu0 %8943
        %8945 = vrot.lane.b32.xlu0 %v3678, 4
        %v8946 = vpop.permute.xlu0 %8945
        %8947 = vrot.lane.b32.xlu0 %v3679, 4
        %v8948 = vpop.permute.xlu0 %8947
        %8949 = vrot.lane.b32.xlu0 %v3680, 4
        %v8950 = vpop.permute.xlu0 %8949
        %8951 = vrot.lane.b32.xlu0 %v3681, 4
        %v8952 = vpop.permute.xlu0 %8951
        %8953 = vrot.lane.b32.xlu0 %v3682, 4
        %v8954 = vpop.permute.xlu0 %8953
        %9019 = vrot.lane.b32.xlu0 %v8859, 12
        %v9020 = vpop.permute.xlu0 %9019
        %9021 = vrot.lane.b32.xlu0 %v8860, 12
        %v9022 = vpop.permute.xlu0 %9021
        %9023 = vrot.lane.b32.xlu0 %v8861, 12
        %v9024 = vpop.permute.xlu0 %9023
        %9025 = vrot.lane.b32.xlu0 %v8862, 12
        %v9026 = vpop.permute.xlu0 %9025
        %9027 = vrot.lane.b32.xlu0 %v8863, 12
        %v9028 = vpop.permute.xlu0 %9027
        %9029 = vrot.lane.b32.xlu0 %v8864, 12
        %v9030 = vpop.permute.xlu0 %9029
        %9031 = vrot.lane.b32.xlu0 %v8865, 12
        %v9032 = vpop.permute.xlu0 %9031
        %9033 = vrot.lane.b32.xlu0 %v8866, 12
        %v9034 = vpop.permute.xlu0 %9033
        %9035 = vrot.lane.b32.xlu0 %v8867, 12
        %v9036 = vpop.permute.xlu0 %9035
        %9037 = vrot.lane.b32.xlu0 %v8868, 12
        %v9038 = vpop.permute.xlu0 %9037
        %9039 = vrot.lane.b32.xlu0 %v8869, 12
        %v9040 = vpop.permute.xlu0 %9039
        %9041 = vrot.lane.b32.xlu0 %v8870, 12
        %v9042 = vpop.permute.xlu0 %9041
        %9043 = vrot.lane.b32.xlu0 %v8871, 12
        %v9044 = vpop.permute.xlu0 %9043
        %9045 = vrot.lane.b32.xlu0 %v8872, 12
        %v9046 = vpop.permute.xlu0 %9045
        %9047 = vrot.lane.b32.xlu0 %v8873, 12
        %v9048 = vpop.permute.xlu0 %9047
        %9049 = vrot.lane.b32.xlu0 %v8874, 12
        %v9050 = vpop.permute.xlu0 %9049
        %9051 = vrot.lane.b32.xlu0 %v8875, 12
        %v9052 = vpop.permute.xlu0 %9051
        %9053 = vrot.lane.b32.xlu0 %v8876, 12
        %v9054 = vpop.permute.xlu0 %9053
        %9055 = vrot.lane.b32.xlu0 %v8877, 12
        %v9056 = vpop.permute.xlu0 %9055
        %9057 = vrot.lane.b32.xlu0 %v8878, 12
        %v9058 = vpop.permute.xlu0 %9057
        %9059 = vrot.lane.b32.xlu0 %v8879, 12
        %v9060 = vpop.permute.xlu0 %9059
        %9061 = vrot.lane.b32.xlu0 %v8880, 12
        %v9062 = vpop.permute.xlu0 %9061
        %9063 = vrot.lane.b32.xlu0 %v8881, 12
        %v9064 = vpop.permute.xlu0 %9063
        %9065 = vrot.lane.b32.xlu0 %v8882, 12
        %v9066 = vpop.permute.xlu0 %9065
        %9067 = vrot.lane.b32.xlu0 %v8883, 12
        %v9068 = vpop.permute.xlu0 %9067
        %9069 = vrot.lane.b32.xlu0 %v8884, 12
        %v9070 = vpop.permute.xlu0 %9069
        %9071 = vrot.lane.b32.xlu0 %v8885, 12
        %v9072 = vpop.permute.xlu0 %9071
        %9073 = vrot.lane.b32.xlu0 %v8886, 12
        %v9074 = vpop.permute.xlu0 %9073
        %9075 = vrot.lane.b32.xlu0 %v8887, 12
        %v9076 = vpop.permute.xlu0 %9075
        %9077 = vrot.lane.b32.xlu0 %v8888, 12
        %v9078 = vpop.permute.xlu0 %9077
        %9079 = vrot.lane.b32.xlu0 %v8889, 12
        %v9080 = vpop.permute.xlu0 %9079
        %9081 = vrot.lane.b32.xlu0 %v8890, 12
        %v9082 = vpop.permute.xlu0 %9081
        %vm9115 = vcmask 31744
        %v9116 = vsel %vm9115, %v8701, %v8892
        %v9117 = vsel %vm9115, %v8706, %v8894
        %v9118 = vsel %vm9115, %v8711, %v8896
        %v9119 = vsel %vm9115, %v8716, %v8898
        %v9120 = vsel %vm9115, %v8721, %v8900
        %v9121 = vsel %vm9115, %v8726, %v8902
        %v9122 = vsel %vm9115, %v8731, %v8904
        %v9123 = vsel %vm9115, %v8736, %v8906
        %v9124 = vsel %vm9115, %v8741, %v8908
        %v9125 = vsel %vm9115, %v8746, %v8910
        %v9126 = vsel %vm9115, %v8751, %v8912
        %v9127 = vsel %vm9115, %v8756, %v8914
        %v9128 = vsel %vm9115, %v8761, %v8916
        %v9129 = vsel %vm9115, %v8766, %v8918
        %v9130 = vsel %vm9115, %v8771, %v8920
        %v9131 = vsel %vm9115, %v8776, %v8922
        %v9132 = vsel %vm9115, %v8781, %v8924
        %v9133 = vsel %vm9115, %v8786, %v8926
        %v9134 = vsel %vm9115, %v8791, %v8928
        %v9135 = vsel %vm9115, %v8796, %v8930
        %v9136 = vsel %vm9115, %v8801, %v8932
        %v9137 = vsel %vm9115, %v8806, %v8934
        %v9138 = vsel %vm9115, %v8811, %v8936
        %v9139 = vsel %vm9115, %v8816, %v8938
        %v9140 = vsel %vm9115, %v8821, %v8940
        %v9141 = vsel %vm9115, %v8826, %v8942
        %v9142 = vsel %vm9115, %v8831, %v8944
        %v9143 = vsel %vm9115, %v8836, %v8946
        %v9144 = vsel %vm9115, %v8841, %v8948
        %v9145 = vsel %vm9115, %v8846, %v8950
        %v9146 = vsel %vm9115, %v8851, %v8952
        %v9147 = vsel %vm9115, %v8856, %v8954
        %vm9148 = vcmask 97280
        %v9149 = vsel %vm9148, %v9116, %v9020
        %v9150 = vsel %vm9148, %v9117, %v9022
        %v9151 = vsel %vm9148, %v9118, %v9024
        %v9152 = vsel %vm9148, %v9119, %v9026
        %v9153 = vsel %vm9148, %v9120, %v9028
        %v9154 = vsel %vm9148, %v9121, %v9030
        %v9155 = vsel %vm9148, %v9122, %v9032
        %v9156 = vsel %vm9148, %v9123, %v9034
        %v9157 = vsel %vm9148, %v9124, %v9036
        %v9158 = vsel %vm9148, %v9125, %v9038
        %v9159 = vsel %vm9148, %v9126, %v9040
        %v9160 = vsel %vm9148, %v9127, %v9042
        %v9161 = vsel %vm9148, %v9128, %v9044
        %v9162 = vsel %vm9148, %v9129, %v9046
        %v9163 = vsel %vm9148, %v9130, %v9048
        %v9164 = vsel %vm9148, %v9131, %v9050
        %v9165 = vsel %vm9148, %v9132, %v9052
        %v9166 = vsel %vm9148, %v9133, %v9054
        %v9167 = vsel %vm9148, %v9134, %v9056
        %v9168 = vsel %vm9148, %v9135, %v9058
        %v9169 = vsel %vm9148, %v9136, %v9060
        %v9170 = vsel %vm9148, %v9137, %v9062
        %v9171 = vsel %vm9148, %v9138, %v9064
        %v9172 = vsel %vm9148, %v9139, %v9066
        %v9173 = vsel %vm9148, %v9140, %v9068
        %v9174 = vsel %vm9148, %v9141, %v9070
        %v9175 = vsel %vm9148, %v9142, %v9072
        %v9176 = vsel %vm9148, %v9143, %v9074
        %v9177 = vsel %vm9148, %v9144, %v9076
        %v9178 = vsel %vm9148, %v9145, %v9078
        %v9179 = vsel %vm9148, %v9146, %v9080
        %v9180 = vsel %vm9148, %v9147, %v9082
        %vm9181 = vcmask 162816
        %v9182 = vsel %vm9181, %v9149, 0.0
        %v9183 = vsel %vm9181, %v9150, 0.0
        %v9184 = vsel %vm9181, %v9151, 0.0
        %v9185 = vsel %vm9181, %v9152, 0.0
        %v9186 = vsel %vm9181, %v9153, 0.0
        %v9187 = vsel %vm9181, %v9154, 0.0
        %v9188 = vsel %vm9181, %v9155, 0.0
        %v9189 = vsel %vm9181, %v9156, 0.0
        %v9190 = vsel %vm9181, %v9157, 0.0
        %v9191 = vsel %vm9181, %v9158, 0.0
        %v9192 = vsel %vm9181, %v9159, 0.0
        %v9193 = vsel %vm9181, %v9160, 0.0
        %v9194 = vsel %vm9181, %v9161, 0.0
        %v9195 = vsel %vm9181, %v9162, 0.0
        %v9196 = vsel %vm9181, %v9163, 0.0
        %v9197 = vsel %vm9181, %v9164, 0.0
        %v9198 = vsel %vm9181, %v9165, 0.0
        %v9199 = vsel %vm9181, %v9166, 0.0
        %v9200 = vsel %vm9181, %v9167, 0.0
        %v9201 = vsel %vm9181, %v9168, 0.0
        %v9202 = vsel %vm9181, %v9169, 0.0
        %v9203 = vsel %vm9181, %v9170, 0.0
        %v9204 = vsel %vm9181, %v9171, 0.0
        %v9205 = vsel %vm9181, %v9172, 0.0
        %v9206 = vsel %vm9181, %v9173, 0.0
        %v9207 = vsel %vm9181, %v9174, 0.0
        %v9208 = vsel %vm9181, %v9175, 0.0
        %v9209 = vsel %vm9181, %v9176, 0.0
        %v9210 = vsel %vm9181, %v9177, 0.0
        %v9211 = vsel %vm9181, %v9178, 0.0
        %v9212 = vsel %vm9181, %v9179, 0.0
        %v9213 = vsel %vm9181, %v9180, 0.0
        %9214 = vst [vmem:[%s218] sm:$0xff] %v9182
        %9215 = vst [vmem:[%s218 + $0x8] sm:$0xff] %v9183
        %9216 = vst [vmem:[%s218 + $0x10] sm:$0xff] %v9184
        %9217 = vst [vmem:[%s218 + $0x18] sm:$0xff] %v9185
        %9218 = vst [vmem:[%s218 + $0x20] sm:$0xff] %v9186
        %9219 = vst [vmem:[%s218 + $0x28] sm:$0xff] %v9187
        %9220 = vst [vmem:[%s218 + $0x30] sm:$0xff] %v9188
        %9221 = vst [vmem:[%s218 + $0x38] sm:$0xff] %v9189
        %9222 = vst [vmem:[%s218 + $0x40] sm:$0xff] %v9190
        %9223 = vst [vmem:[%s218 + $0x48] sm:$0xff] %v9191
        %9224 = vst [vmem:[%s218 + $0x50] sm:$0xff] %v9192
        %9225 = vst [vmem:[%s218 + $0x58] sm:$0xff] %v9193
        %9226 = vst [vmem:[%s218 + $0x60] sm:$0xff] %v9194
        %9227 = vst [vmem:[%s218 + $0x68] sm:$0xff] %v9195
        %9228 = vst [vmem:[%s218 + $0x70] sm:$0xff] %v9196
        %9229 = vst [vmem:[%s218 + $0x78] sm:$0xff] %v9197
        %9230 = vst [vmem:[%s218 + $0x80] sm:$0xff] %v9198
        %9231 = vst [vmem:[%s218 + $0x88] sm:$0xff] %v9199
        %9232 = vst [vmem:[%s218 + $0x90] sm:$0xff] %v9200
        %9233 = vst [vmem:[%s218 + $0x98] sm:$0xff] %v9201
        %9234 = vst [vmem:[%s218 + $0xa0] sm:$0xff] %v9202
        %9235 = vst [vmem:[%s218 + $0xa8] sm:$0xff] %v9203
        %9236 = vst [vmem:[%s218 + $0xb0] sm:$0xff] %v9204
        %9237 = vst [vmem:[%s218 + $0xb8] sm:$0xff] %v9205
        %9238 = vst [vmem:[%s218 + $0xc0] sm:$0xff] %v9206
        %9239 = vst [vmem:[%s218 + $0xc8] sm:$0xff] %v9207
        %9240 = vst [vmem:[%s218 + $0xd0] sm:$0xff] %v9208
        %9241 = vst [vmem:[%s218 + $0xd8] sm:$0xff] %v9209
        %9242 = vst [vmem:[%s218 + $0xe0] sm:$0xff] %v9210
        %9243 = vst [vmem:[%s218 + $0xe8] sm:$0xff] %v9211
        %9244 = vst [vmem:[%s218 + $0xf0] sm:$0xff] %v9212
        %9245 = vst [vmem:[%s218 + $0xf8] sm:$0xff] %v9213
        %s9246 = sand.u32 %s137, 1
        %s9247 = scalar_lea.sflag [#allocation3], %s9246
        %s9248 = sand.u32 %s137, 1
        %s9249 = smul.addr %s9248, 256
        %s9250 = scalar_lea.vmem [#allocation2], %s9249
        // Predicated region
        $region41: #{tpu_custom_call.1} parent=39 // pred_check
          %p9251 = pneg %p147
        $region42: #{tpu_custom_call.1} parent=39 // pred_check_branch
          %9253 = sbr.rel (%p9251) target = $region44
        $region43: #{tpu_custom_call.1} parent=39 // pred_region
          %s9254 = smul.u32 32, %s19
          %s9256 = ssub.s32 4096, 4096
          %9257 = vsyncadd %s9247, %s9256
          %s9258 = smul.addr %s9254, 128
          %s9259 = scalar_lea.hbm %s5, %s9258
          %s9260 = sshll.u32 %s9250, 4
          %s9261 = int_to_ptr.vmem [resolvable:$true] %s9260
          %9266 = dma.vmem_to_hbm [thread:$0]  %s9261, 4096, %s9259, %s9247, 128, 128, 8
        $region44: #{tpu_custom_call.1} parent=39 // pred_fallthru
          _
      $region40: #{tpu_custom_call.1} parent=5 // pred_fallthru
        _
      %p9267 = scmp.le.s32.totalorder 2, %s14
      // Predicated region
      $region45: #{tpu_custom_call.1} parent=5 // pred_check
        %p9268 = pneg %p9267
      $region46: #{tpu_custom_call.1} parent=5 // pred_check_branch
        %9270 = sbr.rel (%p9268) target = $region48
      $region47: #{tpu_custom_call.1} parent=5 // pred_region
        %s9271 = ssub.s32 %s14, 2
        // Predicated region
        $region49: #{tpu_custom_call.1} parent=47 // pred_check
          %p9272 = pneg %p153
        $region50: #{tpu_custom_call.1} parent=47 // pred_check_branch
          %9274 = sbr.rel (%p9272) target = $region52
        $region51: #{tpu_custom_call.1} parent=47 // pred_region
          %s9275 = sand.u32 %s138, 1
          %s9276 = scalar_lea.sflag [#allocation3], %s9275
          %s9277 = sand.u32 %s138, 1
          %s9278 = smul.addr %s9277, 256
          %s9279 = scalar_lea.vmem [#allocation2], %s9278
          %9280 = dma.done %s9276, 4096
        $region52: #{tpu_custom_call.1} parent=47 // pred_fallthru
          _
      $region48: #{tpu_custom_call.1} parent=5 // pred_fallthru
        _
    $region6: #{tpu_custom_call.1} parent=1 // loop_footer
      %s18 = sadd.s32 1, %s14
    $region7: #{tpu_custom_call.1} parent=1 // loop_footer_branch
      %13 = sbr.rel target = $region3
    $region8: #{tpu_custom_call.1} parent=1 // loop_exit
      _
    %9281 = vsyncpa [#allocation3], 1
    %s9282 = scalar_lea.sflag [#allocation3], 1
    %9283 = vsyncpa %s9282, 1

</llo_original>
